<compile_context>
chip_gen: v7x
topology: tpu7x:2x2x1
jax: 0.10.0
libtpu: 0.0.40
codegen_flags: <defaults>
</compile_context>

<pallas_src>
import functools
import math

import jax
import jax.numpy as jnp
from jax.experimental import pallas as pl
from jax.experimental.pallas import tpu as pltpu


_LANE = 128
_VMEM_LIMIT_BYTES = 48 * 1024 * 1024   # explicit, safe on v5e / v6e / v7x
_VMEM_TILE_BUDGET = 24 * 1024 * 1024   # working-set budget used to pick row tiles


# ----------------------------------------------------------------------------
# Pallas kernels
# ----------------------------------------------------------------------------
def _mm_bias_act_kernel(a_ref, w_ref, b_ref, o_ref, *, activation):
    """o = act(a @ w + b); bf16 operands, f32 MXU accumulation, f32 epilogue."""
    acc = jnp.dot(a_ref[...], w_ref[...], preferred_element_type=jnp.float32)
    acc = acc + b_ref[...]                       # (1, Cp) broadcasts over rows
    if activation == "relu":
        acc = jnp.maximum(acc, 0.0)
    elif activation == "tanh":
        acc = jnp.tanh(acc)
    o_ref[...] = acc.astype(o_ref.dtype)


def _bias_act_kernel(x_ref, b_ref, o_ref, *, activation):
    """Elementwise bias + activation (used as the up-path epilogue)."""
    v = x_ref[...] + b_ref[...]
    if activation == "relu":
        v = jnp.maximum(v, 0.0)
    elif activation == "tanh":
        v = jnp.tanh(v)
    o_ref[...] = v.astype(o_ref.dtype)


# ----------------------------------------------------------------------------
# Fused matmul + bias + activation wrapper (lane-dense, bf16, adaptive tiling)
# ----------------------------------------------------------------------------
def _choose_tm(M, K, Cp):
    """Row tile: small M -> one full block; else largest power-of-two tile fitting the
    VMEM budget, halved (down to 128) until the grid has >= 2 steps (v7x has 2 TCs)."""
    if M <= 256:
        return M
    per_row = 2 * K * 2 + 2 * Cp * 4            # dbl-buffered bf16 A rows + f32 out rows
    fixed = 2 * K * Cp * 2 + 2 * Cp * 4         # dbl-buffered bf16 W + f32 bias
    max_rows = max(128, (_VMEM_TILE_BUDGET - fixed) // per_row)
    tm = 128
    for cand in (2048, 1024, 512, 256, 128):
        if cand <= max_rows:
            tm = cand
            break
    while tm > 128 and -(-M // tm) < 2:
        tm //= 2
    return tm


def _matmul_bias_act(a, wmat, bias, activation):
    """act(a @ wmat + bias) on the MXU.

    a: (M, K) f32, wmat: (K, C) f32, bias: (C,) f32 or None -> (M, C) f32.
    Operands are fed to the kernel as bf16 (f32 accumulation); C is zero-padded to a
    multiple of 128 so the output block and its epilogue stores are lane-dense.
    """
    M, K = a.shape
    C = wmat.shape[1]
    Cp = -(-C // _LANE) * _LANE
    if bias is None:
        bias = jnp.zeros((C,), jnp.float32)
    if Cp != C:
        wmat = jnp.pad(wmat, ((0, 0), (0, Cp - C)))
        bias = jnp.pad(bias, (0, Cp - C))
    a_bf = a.astype(jnp.bfloat16)
    w_bf = wmat.astype(jnp.bfloat16)
    b2d = bias.reshape(1, Cp).astype(jnp.float32)

    tm = _choose_tm(M, K, Cp)
    Mp = -(-M // tm) * tm
    if Mp != M:
        a_bf = jnp.pad(a_bf, ((0, Mp - M), (0, 0)))

    out = pl.pallas_call(
        functools.partial(_mm_bias_act_kernel, activation=activation),
        out_shape=jax.ShapeDtypeStruct((Mp, Cp), jnp.float32),
        grid=(Mp // tm,),
        in_specs=[
            pl.BlockSpec((tm, K), lambda i: (i, 0)),     # row tile of A
            pl.BlockSpec((K, Cp), lambda i: (0, 0)),     # full weight matrix
            pl.BlockSpec((1, Cp), lambda i: (0, 0)),     # bias row
        ],
        out_specs=pl.BlockSpec((tm, Cp), lambda i: (i, 0)),
        compiler_params=pltpu.CompilerParams(
            dimension_semantics=("parallel",),
            vmem_limit_bytes=_VMEM_LIMIT_BYTES,
        ),
    )(a_bf, w_bf, b2d)
    return out[:M, :C]


def _bias_act(x, bias, activation):
    """Fused bias + activation for channels-last tensors (up-path epilogue).

    When the channel count divides 128 the tensor is re-flattened so channels pack
    densely into the 128-lane dimension (bias tiled to match) -> unmasked stores even
    for Cout = 1/8/16/32.  Sizes in this network are tiny, so a single block suffices.
    """
    shape = x.shape
    C = shape[-1]
    if C <= _LANE and _LANE % C == 0:
        width = _LANE
        b_row = jnp.tile(bias.astype(jnp.float32), width // C)
    else:
        width = C
        b_row = bias.astype(jnp.float32)
    flat = x.reshape(-1).astype(jnp.float32)
    n = flat.shape[0]
    rows = -(-n // width)
    if rows * width != n:
        flat = jnp.pad(flat, (0, rows * width - n))
    x2 = flat.reshape(rows, width)

    out = pl.pallas_call(
        functools.partial(_bias_act_kernel, activation=activation),
        out_shape=jax.ShapeDtypeStruct((rows, width), jnp.float32),
        grid=(1,),
        in_specs=[
            pl.BlockSpec((rows, width), lambda i: (0, 0)),
            pl.BlockSpec((1, width), lambda i: (0, 0)),
        ],
        out_specs=pl.BlockSpec((rows, width), lambda i: (0, 0)),
        compiler_params=pltpu.CompilerParams(vmem_limit_bytes=_VMEM_LIMIT_BYTES),
    )(x2, b_row.reshape(1, width))
    return out.reshape(-1)[:n].reshape(shape)


# ----------------------------------------------------------------------------
# Glue: patch extraction (down path), conv3d, conv_transpose3d (matmul + col2im)
# ----------------------------------------------------------------------------
def _im2col(xpad, ksize, stride):
    """xpad: (N, Dp, Hp, Wp, C) already padded -> (M, K) patch matrix."""
    N, Dp, Hp, Wp, C = xpad.shape
    kd, kh, kw = ksize
    s = stride
    Do = (Dp - kd) // s + 1
    Ho = (Hp - kh) // s + 1
    Wo = (Wp - kw) // s + 1
    cols = []
    for a in range(kd):
        for b in range(kh):
            for c in range(kw):
                cols.append(
                    xpad[:, a:a + s * (Do - 1) + 1:s,
                            b:b + s * (Ho - 1) + 1:s,
                            c:c + s * (Wo - 1) + 1:s, :]
                )
    patches = jnp.stack(cols, axis=4)                       # (N, Do, Ho, Wo, taps, C)
    patches = patches.reshape(N * Do * Ho * Wo, kd * kh * kw * C)
    return patches, (N, Do, Ho, Wo)


def conv3d(x, w, b, *, stride, padding, activation):
    """x: (N, D, H, W, Cin) channels-last; w: PyTorch layout (Cout, Cin, kd, kh, kw)."""
    Cout, Cin, kd, kh, kw = w.shape
    p = padding
    xpad = jnp.pad(x, ((0, 0), (p, p), (p, p), (p, p), (0, 0)))
    patches, (N, Do, Ho, Wo) = _im2col(xpad, (kd, kh, kw), stride)
    wmat = jnp.transpose(w, (2, 3, 4, 1, 0)).reshape(kd * kh * kw * Cin, Cout)
    out = _matmul_bias_act(patches, wmat, b, activation)
    return out.reshape(N, Do, Ho, Wo, Cout)


def conv_transpose3d(x, w, b, *, stride, padding, activation):
    """x: (N, D, H, W, Cin) channels-last; w: PyTorch layout (Cin, Cout, kd, kh, kw).

    out_full[n, d*s+a, h*s+b, w*s+c, co] += x[n,d,h,w,ci] * w[ci,co,a,b,c]; then crop
    `padding` from each side and apply bias + activation.  The per-tap products are one
    dense MXU matmul (no zero-dilation, no im2col duplication).
    """
    Cin, Cout, kd, kh, kw = w.shape
    N, D, H, W, _ = x.shape
    s, p = stride, padding

    wmat = jnp.transpose(w, (0, 2, 3, 4, 1)).reshape(Cin, kd * kh * kw * Cout)
    cols = _matmul_bias_act(x.reshape(N * D * H * W, Cin), wmat, None, None)
    cols = cols.reshape(N, D, H, W, kd, kh, kw, Cout)

    Df, Hf, Wf = (D - 1) * s + kd, (H - 1) * s + kh, (W - 1) * s + kw
    out_full = jnp.zeros((N, Df, Hf, Wf, Cout), jnp.float32)
    # TODO(synk): the col2im overlap-add (overlapping strided accumulation) has no clean
    # single-kernel Pallas equivalent; it stays in XLA as pure data movement + adds.
    for a in range(kd):
        for bb in range(kh):
            for c in range(kw):
                out_full = out_full.at[:, a:a + (D - 1) * s + 1:s,
                                          bb:bb + (H - 1) * s + 1:s,
                                          c:c + (W - 1) * s + 1:s, :].add(
                    cols[:, :, :, :, a, bb, c, :])
    out = out_full[:, p:Df - p, p:Hf - p, p:Wf - p, :]
    return _bias_act(out, b, activation)


# ----------------------------------------------------------------------------
# Generator: parameter init (deterministic) + forward pass
# ----------------------------------------------------------------------------
def init_generator_params(key, out_channels=8, kernel_size=4):
    oc, k = out_channels, kernel_size
    down_specs = [(3, oc), (oc, 2 * oc), (2 * oc, 4 * oc), (4 * oc, 8 * oc)]
    up_specs = [
        (8 * oc, 4 * oc, (k, k + 1, k)),
        (4 * oc, 2 * oc, (k, k, k)),
        (2 * oc, oc, (k, k, k)),
        (oc, 1, (k + 1, k, k + 1)),
    ]
    params = {"down": [], "up": []}
    for cin, cout in down_specs:
        key, kw_, kb_ = jax.random.split(key, 3)
        bound = 1.0 / math.sqrt(cin * k * k * k)
        w = jax.random.uniform(kw_, (cout, cin, k, k, k), jnp.float32, -bound, bound)
        b = jax.random.uniform(kb_, (cout,), jnp.float32, -bound, bound)
        params["down"].append((w, b))
    for cin, cout, ks in up_specs:
        key, kw_, kb_ = jax.random.split(key, 3)
        bound = 1.0 / math.sqrt(cin * ks[0] * ks[1] * ks[2])
        w = jax.random.uniform(kw_, (cin, cout) + ks, jnp.float32, -bound, bound)
        b = jax.random.uniform(kb_, (cout,), jnp.float32, -bound, bound)
        params["up"].append((w, b))
    return params


def generator_forward(params, img_ncdhw):
    """img_ncdhw: (N, 3, D, H, W) like PyTorch; returns (N, 1, D', H', W')."""
    x = jnp.transpose(img_ncdhw, (0, 2, 3, 4, 1)).astype(jnp.float32)
    for (w, b) in params["down"]:
        x = conv3d(x, w, b, stride=2, padding=1, activation="relu")
    ups = params["up"]
    for i, (w, b) in enumerate(ups):
        act = "tanh" if i == len(ups) - 1 else "relu"
        x = conv_transpose3d(x, w, b, stride=2, padding=1, activation=act)
    return jnp.transpose(x, (0, 4, 1, 2, 3))


# ----------------------------------------------------------------------------
# Pure-XLA reference (f32, HIGHEST precision) for a numerical cross-check
# ----------------------------------------------------------------------------
def _reference_forward(params, img_ncdhw):
    x = jnp.transpose(img_ncdhw, (0, 2, 3, 4, 1)).astype(jnp.float32)
    dn = ("NDHWC", "DHWIO", "NDHWC")
    for (w, b) in params["down"]:
        wt = jnp.transpose(w, (2, 3, 4, 1, 0))
        x = jax.lax.conv_general_dilated(
            x, wt, window_strides=(2, 2, 2), padding=[(1, 1)] * 3,
            dimension_numbers=dn, precision=jax.lax.Precision.HIGHEST)
        x = jnp.maximum(x + b, 0.0)
    ups = params["up"]
    for i, (w, b) in enumerate(ups):
        kd, kh, kw = w.shape[2:]
        wt = jnp.transpose(w[:, :, ::-1, ::-1, ::-1], (2, 3, 4, 0, 1))
        x = jax.lax.conv_general_dilated(
            x, wt, window_strides=(1, 1, 1),
            padding=[(kd - 2, kd - 2), (kh - 2, kh - 2), (kw - 2, kw - 2)],
            lhs_dilation=(2, 2, 2),
            dimension_numbers=dn, precision=jax.lax.Precision.HIGHEST)
        x = x + b
        x = jnp.tanh(x) if i == len(ups) - 1 else jnp.maximum(x, 0.0)
    return jnp.transpose(x, (0, 4, 1, 2, 3))


if __name__ == "__main__":
    key = jax.random.PRNGKey(0)
    pkey, xkey = jax.random.split(key)
    # Small but structurally faithful config: out_channels=8, 16^3 volume, batch 2.
    params = init_generator_params(pkey, out_channels=8, kernel_size=4)
    img = jax.random.normal(xkey, (2, 3, 16, 16, 16), dtype=jnp.float32)

    fwd = jax.jit(generator_forward)
    out = jax.block_until_ready(fwd(params, img))

    # PyTorch shape for this config: (2, 1, 17, 24, 17)
    assert out.shape == (2, 1, 17, 24, 17), out.shape
    assert bool(jnp.all(jnp.isfinite(out)))
    assert bool(jnp.all(jnp.abs(out) <= 1.0 + 1e-6))  # final Tanh

    # Cross-check against the f32 XLA reference.  The Pallas path feeds bf16 operands
    # to the MXU, so use a loose tolerance (catches structural/layout bugs).
    ref = jax.block_until_ready(jax.jit(_reference_forward)(params, img))
    err = float(jnp.max(jnp.abs(out - ref)))
    scale = float(jnp.max(jnp.abs(ref))) + 1e-6
    assert err <= 5e-3 + 0.1 * scale, (err, scale)

    print("KERNEL_OK")
</pallas_src>

<mosaic_0001>
module attributes {stable_mosaic.version = 11 : i64} {
  func.func @_mm_bias_act_kernel(%arg0: i32, %arg1: memref<512x192xbf16, #tpu.memory_space<vmem>>, %arg2: memref<192x128xbf16, #tpu.memory_space<vmem>>, %arg3: memref<1x128xf32, #tpu.memory_space<vmem>>, %arg4: memref<512x128xf32, #tpu.memory_space<vmem>>) attributes {dimension_semantics = [#tpu.dimension_semantics<parallel>], iteration_bounds = array<i64: 2>, scalar_prefetch = 0 : i64, scratch_operands = 0 : i64, tpu.core_type = #tpu.core_type<tc>, window_params = [{transform_indices = @transform_0, window_bounds = array<i64: 512, 192>}, {pipeline_mode = #tpu.pipeline_mode<synchronous>, transform_indices = @transform_1, window_bounds = array<i64: 192, 128>}, {pipeline_mode = #tpu.pipeline_mode<synchronous>, transform_indices = @transform_2, window_bounds = array<i64: 1, 128>}, {transform_indices = @transform_3, window_bounds = array<i64: 512, 128>}]} {
    %c0 = arith.constant 0 : index
    %c0_0 = arith.constant 0 : index
    %0 = vector.load %arg1[%c0, %c0_0] : memref<512x192xbf16, #tpu.memory_space<vmem>>, vector<512x192xbf16>
    %c0_1 = arith.constant 0 : index
    %c0_2 = arith.constant 0 : index
    %1 = vector.load %arg2[%c0_1, %c0_2] : memref<192x128xbf16, #tpu.memory_space<vmem>>, vector<192x128xbf16>
    %cst = arith.constant dense<0.000000e+00> : vector<512x128xf32>
    %2 = tpu.matmul %0, %1, %cst {dimension_numbers = #tpu.dot_dimension_numbers<[1], [0], [0], [1], [0, 0, 1, 1], [], []>} : vector<512x192xbf16>, vector<192x128xbf16>, vector<512x128xf32> -> vector<512x128xf32>
    %c0_3 = arith.constant 0 : index
    %c0_4 = arith.constant 0 : index
    %3 = vector.load %arg3[%c0_3, %c0_4] : memref<1x128xf32, #tpu.memory_space<vmem>>, vector<1x128xf32>
    %4 = vector.broadcast %3 : vector<1x128xf32> to vector<512x128xf32>
    %5 = arith.addf %2, %4 : vector<512x128xf32>
    %cst_5 = arith.constant 0.000000e+00 : f32
    %6 = vector.broadcast %cst_5 : f32 to vector<512x128xf32>
    %7 = arith.maximumf %5, %6 : vector<512x128xf32>
    %c0_6 = arith.constant 0 : index
    %c0_7 = arith.constant 0 : index
    %8 = vector.load %arg4[%c0_6, %c0_7] : memref<512x128xf32, #tpu.memory_space<vmem>>, vector<512x128xf32>
    tpu.vector_store %arg4[%c0_6, %c0_7], %7 {strides = array<i32>} : memref<512x128xf32, #tpu.memory_space<vmem>>, vector<512x128xf32>,
    return
  }
  func.func @transform_0(%arg0: i32) -> (i32, i32) {
    %c0_i32 = arith.constant 0 : i32
    %c0_i32_0 = arith.constant 0 : i32
    return %arg0, %c0_i32 : i32, i32
  }
  func.func @transform_1(%arg0: i32) -> (i32, i32) {
    %c0_i32 = arith.constant 0 : i32
    %c0_i32_0 = arith.constant 0 : i32
    %c0_i32_1 = arith.constant 0 : i32
    return %c0_i32, %c0_i32_0 : i32, i32
  }
  func.func @transform_2(%arg0: i32) -> (i32, i32) {
    %c0_i32 = arith.constant 0 : i32
    %c0_i32_0 = arith.constant 0 : i32
    %c0_i32_1 = arith.constant 0 : i32
    return %c0_i32, %c0_i32_0 : i32, i32
  }
  func.func @transform_3(%arg0: i32) -> (i32, i32) {
    %c0_i32 = arith.constant 0 : i32
    %c0_i32_0 = arith.constant 0 : i32
    return %arg0, %c0_i32 : i32, i32
  }
}

module attributes {stable_mosaic.version = 11 : i64} {
  func.func @_mm_bias_act_kernel(%arg0: i32, %arg1: memref<128x512xbf16, #tpu.memory_space<vmem>>, %arg2: memref<512x128xbf16, #tpu.memory_space<vmem>>, %arg3: memref<1x128xf32, #tpu.memory_space<vmem>>, %arg4: memref<128x128xf32, #tpu.memory_space<vmem>>) attributes {dimension_semantics = [#tpu.dimension_semantics<parallel>], iteration_bounds = array<i64: 1>, scalar_prefetch = 0 : i64, scratch_operands = 0 : i64, tpu.core_type = #tpu.core_type<tc>, window_params = [{transform_indices = @transform_0, window_bounds = array<i64: 128, 512>}, {pipeline_mode = #tpu.pipeline_mode<synchronous>, transform_indices = @transform_1, window_bounds = array<i64: 512, 128>}, {pipeline_mode = #tpu.pipeline_mode<synchronous>, transform_indices = @transform_2, window_bounds = array<i64: 1, 128>}, {transform_indices = @transform_3, window_bounds = array<i64: 128, 128>}]} {
    %c0 = arith.constant 0 : index
    %c0_0 = arith.constant 0 : index
    %0 = vector.load %arg1[%c0, %c0_0] : memref<128x512xbf16, #tpu.memory_space<vmem>>, vector<128x512xbf16>
    %c0_1 = arith.constant 0 : index
    %c0_2 = arith.constant 0 : index
    %1 = vector.load %arg2[%c0_1, %c0_2] : memref<512x128xbf16, #tpu.memory_space<vmem>>, vector<512x128xbf16>
    %cst = arith.constant dense<0.000000e+00> : vector<128x128xf32>
    %2 = tpu.matmul %0, %1, %cst {dimension_numbers = #tpu.dot_dimension_numbers<[1], [0], [0], [1], [0, 0, 1, 1], [], []>} : vector<128x512xbf16>, vector<512x128xbf16>, vector<128x128xf32> -> vector<128x128xf32>
    %c0_3 = arith.constant 0 : index
    %c0_4 = arith.constant 0 : index
    %3 = vector.load %arg3[%c0_3, %c0_4] : memref<1x128xf32, #tpu.memory_space<vmem>>, vector<1x128xf32>
    %4 = vector.broadcast %3 : vector<1x128xf32> to vector<128x128xf32>
    %5 = arith.addf %2, %4 : vector<128x128xf32>
    %cst_5 = arith.constant 0.000000e+00 : f32
    %6 = vector.broadcast %cst_5 : f32 to vector<128x128xf32>
    %7 = arith.maximumf %5, %6 : vector<128x128xf32>
    %c0_6 = arith.constant 0 : index
    %c0_7 = arith.constant 0 : index
    %8 = vector.load %arg4[%c0_6, %c0_7] : memref<128x128xf32, #tpu.memory_space<vmem>>, vector<128x128xf32>
    tpu.vector_store %arg4[%c0_6, %c0_7], %7 {strides = array<i32>} : memref<128x128xf32, #tpu.memory_space<vmem>>, vector<128x128xf32>,
    return
  }
  func.func @transform_0(%arg0: i32) -> (i32, i32) {
    %c0_i32 = arith.constant 0 : i32
    %c0_i32_0 = arith.constant 0 : i32
    return %arg0, %c0_i32 : i32, i32
  }
  func.func @transform_1(%arg0: i32) -> (i32, i32) {
    %c0_i32 = arith.constant 0 : i32
    %c0_i32_0 = arith.constant 0 : i32
    %c0_i32_1 = arith.constant 0 : i32
    return %c0_i32, %c0_i32_0 : i32, i32
  }
  func.func @transform_2(%arg0: i32) -> (i32, i32) {
    %c0_i32 = arith.constant 0 : i32
    %c0_i32_0 = arith.constant 0 : i32
    %c0_i32_1 = arith.constant 0 : i32
    return %c0_i32, %c0_i32_0 : i32, i32
  }
  func.func @transform_3(%arg0: i32) -> (i32, i32) {
    %c0_i32 = arith.constant 0 : i32
    %c0_i32_0 = arith.constant 0 : i32
    return %arg0, %c0_i32 : i32, i32
  }
}

module attributes {stable_mosaic.version = 11 : i64} {
  func.func @_mm_bias_act_kernel(%arg0: i32, %arg1: memref<16x1024xbf16, #tpu.memory_space<vmem>>, %arg2: memref<1024x128xbf16, #tpu.memory_space<vmem>>, %arg3: memref<1x128xf32, #tpu.memory_space<vmem>>, %arg4: memref<16x128xf32, #tpu.memory_space<vmem>>) attributes {dimension_semantics = [#tpu.dimension_semantics<parallel>], iteration_bounds = array<i64: 1>, scalar_prefetch = 0 : i64, scratch_operands = 0 : i64, tpu.core_type = #tpu.core_type<tc>, window_params = [{transform_indices = @transform_0, window_bounds = array<i64: 16, 1024>}, {pipeline_mode = #tpu.pipeline_mode<synchronous>, transform_indices = @transform_1, window_bounds = array<i64: 1024, 128>}, {pipeline_mode = #tpu.pipeline_mode<synchronous>, transform_indices = @transform_2, window_bounds = array<i64: 1, 128>}, {transform_indices = @transform_3, window_bounds = array<i64: 16, 128>}]} {
    %c0 = arith.constant 0 : index
    %c0_0 = arith.constant 0 : index
    %0 = vector.load %arg1[%c0, %c0_0] : memref<16x1024xbf16, #tpu.memory_space<vmem>>, vector<16x1024xbf16>
    %c0_1 = arith.constant 0 : index
    %c0_2 = arith.constant 0 : index
    %1 = vector.load %arg2[%c0_1, %c0_2] : memref<1024x128xbf16, #tpu.memory_space<vmem>>, vector<1024x128xbf16>
    %cst = arith.constant dense<0.000000e+00> : vector<16x128xf32>
    %2 = tpu.matmul %0, %1, %cst {dimension_numbers = #tpu.dot_dimension_numbers<[1], [0], [0], [1], [0, 0, 1, 1], [], []>} : vector<16x1024xbf16>, vector<1024x128xbf16>, vector<16x128xf32> -> vector<16x128xf32>
    %c0_3 = arith.constant 0 : index
    %c0_4 = arith.constant 0 : index
    %3 = vector.load %arg3[%c0_3, %c0_4] : memref<1x128xf32, #tpu.memory_space<vmem>>, vector<1x128xf32>
    %4 = vector.broadcast %3 : vector<1x128xf32> to vector<16x128xf32>
    %5 = arith.addf %2, %4 : vector<16x128xf32>
    %cst_5 = arith.constant 0.000000e+00 : f32
    %6 = vector.broadcast %cst_5 : f32 to vector<16x128xf32>
    %7 = arith.maximumf %5, %6 : vector<16x128xf32>
    %c0_6 = arith.constant 0 : index
    %c0_7 = arith.constant 0 : index
    %8 = vector.load %arg4[%c0_6, %c0_7] : memref<16x128xf32, #tpu.memory_space<vmem>>, vector<16x128xf32>
    tpu.vector_store %arg4[%c0_6, %c0_7], %7 {strides = array<i32>} : memref<16x128xf32, #tpu.memory_space<vmem>>, vector<16x128xf32>,
    return
  }
  func.func @transform_0(%arg0: i32) -> (i32, i32) {
    %c0_i32 = arith.constant 0 : i32
    %c0_i32_0 = arith.constant 0 : i32
    return %arg0, %c0_i32 : i32, i32
  }
  func.func @transform_1(%arg0: i32) -> (i32, i32) {
    %c0_i32 = arith.constant 0 : i32
    %c0_i32_0 = arith.constant 0 : i32
    %c0_i32_1 = arith.constant 0 : i32
    return %c0_i32, %c0_i32_0 : i32, i32
  }
  func.func @transform_2(%arg0: i32) -> (i32, i32) {
    %c0_i32 = arith.constant 0 : i32
    %c0_i32_0 = arith.constant 0 : i32
    %c0_i32_1 = arith.constant 0 : i32
    return %c0_i32, %c0_i32_0 : i32, i32
  }
  func.func @transform_3(%arg0: i32) -> (i32, i32) {
    %c0_i32 = arith.constant 0 : i32
    %c0_i32_0 = arith.constant 0 : i32
    return %arg0, %c0_i32 : i32, i32
  }
}

module attributes {stable_mosaic.version = 11 : i64} {
  func.func @_mm_bias_act_kernel(%arg0: i32, %arg1: memref<2x2048xbf16, #tpu.memory_space<vmem>>, %arg2: memref<2048x128xbf16, #tpu.memory_space<vmem>>, %arg3: memref<1x128xf32, #tpu.memory_space<vmem>>, %arg4: memref<2x128xf32, #tpu.memory_space<vmem>>) attributes {dimension_semantics = [#tpu.dimension_semantics<parallel>], iteration_bounds = array<i64: 1>, scalar_prefetch = 0 : i64, scratch_operands = 0 : i64, tpu.core_type = #tpu.core_type<tc>, window_params = [{transform_indices = @transform_0, window_bounds = array<i64: 2, 2048>}, {pipeline_mode = #tpu.pipeline_mode<synchronous>, transform_indices = @transform_1, window_bounds = array<i64: 2048, 128>}, {pipeline_mode = #tpu.pipeline_mode<synchronous>, transform_indices = @transform_2, window_bounds = array<i64: 1, 128>}, {transform_indices = @transform_3, window_bounds = array<i64: 2, 128>}]} {
    %c0 = arith.constant 0 : index
    %c0_0 = arith.constant 0 : index
    %0 = vector.load %arg1[%c0, %c0_0] : memref<2x2048xbf16, #tpu.memory_space<vmem>>, vector<2x2048xbf16>
    %c0_1 = arith.constant 0 : index
    %c0_2 = arith.constant 0 : index
    %1 = vector.load %arg2[%c0_1, %c0_2] : memref<2048x128xbf16, #tpu.memory_space<vmem>>, vector<2048x128xbf16>
    %cst = arith.constant dense<0.000000e+00> : vector<2x128xf32>
    %2 = tpu.matmul %0, %1, %cst {dimension_numbers = #tpu.dot_dimension_numbers<[1], [0], [0], [1], [0, 0, 1, 1], [], []>} : vector<2x2048xbf16>, vector<2048x128xbf16>, vector<2x128xf32> -> vector<2x128xf32>
    %c0_3 = arith.constant 0 : index
    %c0_4 = arith.constant 0 : index
    %3 = vector.load %arg3[%c0_3, %c0_4] : memref<1x128xf32, #tpu.memory_space<vmem>>, vector<1x128xf32>
    %4 = vector.broadcast %3 : vector<1x128xf32> to vector<2x128xf32>
    %5 = arith.addf %2, %4 : vector<2x128xf32>
    %cst_5 = arith.constant 0.000000e+00 : f32
    %6 = vector.broadcast %cst_5 : f32 to vector<2x128xf32>
    %7 = arith.maximumf %5, %6 : vector<2x128xf32>
    %c0_6 = arith.constant 0 : index
    %c0_7 = arith.constant 0 : index
    %8 = vector.load %arg4[%c0_6, %c0_7] : memref<2x128xf32, #tpu.memory_space<vmem>>, vector<2x128xf32>
    tpu.vector_store %arg4[%c0_6, %c0_7], %7 {strides = array<i32>} : memref<2x128xf32, #tpu.memory_space<vmem>>, vector<2x128xf32>,
    return
  }
  func.func @transform_0(%arg0: i32) -> (i32, i32) {
    %c0_i32 = arith.constant 0 : i32
    %c0_i32_0 = arith.constant 0 : i32
    return %arg0, %c0_i32 : i32, i32
  }
  func.func @transform_1(%arg0: i32) -> (i32, i32) {
    %c0_i32 = arith.constant 0 : i32
    %c0_i32_0 = arith.constant 0 : i32
    %c0_i32_1 = arith.constant 0 : i32
    return %c0_i32, %c0_i32_0 : i32, i32
  }
  func.func @transform_2(%arg0: i32) -> (i32, i32) {
    %c0_i32 = arith.constant 0 : i32
    %c0_i32_0 = arith.constant 0 : i32
    %c0_i32_1 = arith.constant 0 : i32
    return %c0_i32, %c0_i32_0 : i32, i32
  }
  func.func @transform_3(%arg0: i32) -> (i32, i32) {
    %c0_i32 = arith.constant 0 : i32
    %c0_i32_0 = arith.constant 0 : i32
    return %arg0, %c0_i32 : i32, i32
  }
}

module attributes {stable_mosaic.version = 11 : i64} {
  func.func @_mm_bias_act_kernel(%arg0: i32, %arg1: memref<2x64xbf16, #tpu.memory_space<vmem>>, %arg2: memref<64x2560xbf16, #tpu.memory_space<vmem>>, %arg3: memref<1x2560xf32, #tpu.memory_space<vmem>>, %arg4: memref<2x2560xf32, #tpu.memory_space<vmem>>) attributes {dimension_semantics = [#tpu.dimension_semantics<parallel>], iteration_bounds = array<i64: 1>, scalar_prefetch = 0 : i64, scratch_operands = 0 : i64, tpu.core_type = #tpu.core_type<tc>, window_params = [{transform_indices = @transform_0, window_bounds = array<i64: 2, 64>}, {pipeline_mode = #tpu.pipeline_mode<synchronous>, transform_indices = @transform_1, window_bounds = array<i64: 64, 2560>}, {pipeline_mode = #tpu.pipeline_mode<synchronous>, transform_indices = @transform_2, window_bounds = array<i64: 1, 2560>}, {transform_indices = @transform_3, window_bounds = array<i64: 2, 2560>}]} {
    %c0 = arith.constant 0 : index
    %c0_0 = arith.constant 0 : index
    %0 = vector.load %arg1[%c0, %c0_0] : memref<2x64xbf16, #tpu.memory_space<vmem>>, vector<2x64xbf16>
    %c0_1 = arith.constant 0 : index
    %c0_2 = arith.constant 0 : index
    %1 = vector.load %arg2[%c0_1, %c0_2] : memref<64x2560xbf16, #tpu.memory_space<vmem>>, vector<64x2560xbf16>
    %cst = arith.constant dense<0.000000e+00> : vector<2x2560xf32>
    %2 = tpu.matmul %0, %1, %cst {dimension_numbers = #tpu.dot_dimension_numbers<[1], [0], [0], [1], [0, 0, 1, 1], [], []>} : vector<2x64xbf16>, vector<64x2560xbf16>, vector<2x2560xf32> -> vector<2x2560xf32>
    %c0_3 = arith.constant 0 : index
    %c0_4 = arith.constant 0 : index
    %3 = vector.load %arg3[%c0_3, %c0_4] : memref<1x2560xf32, #tpu.memory_space<vmem>>, vector<1x2560xf32>
    %4 = vector.broadcast %3 : vector<1x2560xf32> to vector<2x2560xf32>
    %5 = arith.addf %2, %4 : vector<2x2560xf32>
    %c0_5 = arith.constant 0 : index
    %c0_6 = arith.constant 0 : index
    %6 = vector.load %arg4[%c0_5, %c0_6] : memref<2x2560xf32, #tpu.memory_space<vmem>>, vector<2x2560xf32>
    tpu.vector_store %arg4[%c0_5, %c0_6], %5 {strides = array<i32>} : memref<2x2560xf32, #tpu.memory_space<vmem>>, vector<2x2560xf32>,
    return
  }
  func.func @transform_0(%arg0: i32) -> (i32, i32) {
    %c0_i32 = arith.constant 0 : i32
    %c0_i32_0 = arith.constant 0 : i32
    return %arg0, %c0_i32 : i32, i32
  }
  func.func @transform_1(%arg0: i32) -> (i32, i32) {
    %c0_i32 = arith.constant 0 : i32
    %c0_i32_0 = arith.constant 0 : i32
    %c0_i32_1 = arith.constant 0 : i32
    return %c0_i32, %c0_i32_0 : i32, i32
  }
  func.func @transform_2(%arg0: i32) -> (i32, i32) {
    %c0_i32 = arith.constant 0 : i32
    %c0_i32_0 = arith.constant 0 : i32
    %c0_i32_1 = arith.constant 0 : i32
    return %c0_i32, %c0_i32_0 : i32, i32
  }
  func.func @transform_3(%arg0: i32) -> (i32, i32) {
    %c0_i32 = arith.constant 0 : i32
    %c0_i32_0 = arith.constant 0 : i32
    return %arg0, %c0_i32 : i32, i32
  }
}

module attributes {stable_mosaic.version = 11 : i64} {
  func.func @_bias_act_kernel(%arg0: i32, %arg1: memref<6x128xf32, #tpu.memory_space<vmem>>, %arg2: memref<1x128xf32, #tpu.memory_space<vmem>>, %arg3: memref<6x128xf32, #tpu.memory_space<vmem>>) attributes {dimension_semantics = [#tpu.dimension_semantics<arbitrary>], iteration_bounds = array<i64: 1>, scalar_prefetch = 0 : i64, scratch_operands = 0 : i64, tpu.core_type = #tpu.core_type<tc>, window_params = [{pipeline_mode = #tpu.pipeline_mode<synchronous>, transform_indices = @transform_0, window_bounds = array<i64: 6, 128>}, {pipeline_mode = #tpu.pipeline_mode<synchronous>, transform_indices = @transform_1, window_bounds = array<i64: 1, 128>}, {pipeline_mode = #tpu.pipeline_mode<synchronous>, transform_indices = @transform_2, window_bounds = array<i64: 6, 128>}]} {
    %c0 = arith.constant 0 : index
    %c0_0 = arith.constant 0 : index
    %0 = vector.load %arg1[%c0, %c0_0] : memref<6x128xf32, #tpu.memory_space<vmem>>, vector<6x128xf32>
    %c0_1 = arith.constant 0 : index
    %c0_2 = arith.constant 0 : index
    %1 = vector.load %arg2[%c0_1, %c0_2] : memref<1x128xf32, #tpu.memory_space<vmem>>, vector<1x128xf32>
    %2 = vector.broadcast %1 : vector<1x128xf32> to vector<6x128xf32>
    %3 = arith.addf %0, %2 : vector<6x128xf32>
    %cst = arith.constant 0.000000e+00 : f32
    %4 = vector.broadcast %cst : f32 to vector<6x128xf32>
    %5 = arith.maximumf %3, %4 : vector<6x128xf32>
    %c0_3 = arith.constant 0 : index
    %c0_4 = arith.constant 0 : index
    %6 = vector.load %arg3[%c0_3, %c0_4] : memref<6x128xf32, #tpu.memory_space<vmem>>, vector<6x128xf32>
    tpu.vector_store %arg3[%c0_3, %c0_4], %5 {strides = array<i32>} : memref<6x128xf32, #tpu.memory_space<vmem>>, vector<6x128xf32>,
    return
  }
  func.func @transform_0(%arg0: i32) -> (i32, i32) {
    %c0_i32 = arith.constant 0 : i32
    %c0_i32_0 = arith.constant 0 : i32
    %c0_i32_1 = arith.constant 0 : i32
    return %c0_i32, %c0_i32_0 : i32, i32
  }
  func.func @transform_1(%arg0: i32) -> (i32, i32) {
    %c0_i32 = arith.constant 0 : i32
    %c0_i32_0 = arith.constant 0 : i32
    %c0_i32_1 = arith.constant 0 : i32
    return %c0_i32, %c0_i32_0 : i32, i32
  }
  func.func @transform_2(%arg0: i32) -> (i32, i32) {
    %c0_i32 = arith.constant 0 : i32
    %c0_i32_0 = arith.constant 0 : i32
    %c0_i32_1 = arith.constant 0 : i32
    return %c0_i32, %c0_i32_0 : i32, i32
  }
}

module attributes {stable_mosaic.version = 11 : i64} {
  func.func @_mm_bias_act_kernel(%arg0: i32, %arg1: memref<24x32xbf16, #tpu.memory_space<vmem>>, %arg2: memref<32x1024xbf16, #tpu.memory_space<vmem>>, %arg3: memref<1x1024xf32, #tpu.memory_space<vmem>>, %arg4: memref<24x1024xf32, #tpu.memory_space<vmem>>) attributes {dimension_semantics = [#tpu.dimension_semantics<parallel>], iteration_bounds = array<i64: 1>, scalar_prefetch = 0 : i64, scratch_operands = 0 : i64, tpu.core_type = #tpu.core_type<tc>, window_params = [{transform_indices = @transform_0, window_bounds = array<i64: 24, 32>}, {pipeline_mode = #tpu.pipeline_mode<synchronous>, transform_indices = @transform_1, window_bounds = array<i64: 32, 1024>}, {pipeline_mode = #tpu.pipeline_mode<synchronous>, transform_indices = @transform_2, window_bounds = array<i64: 1, 1024>}, {transform_indices = @transform_3, window_bounds = array<i64: 24, 1024>}]} {
    %c0 = arith.constant 0 : index
    %c0_0 = arith.constant 0 : index
    %0 = vector.load %arg1[%c0, %c0_0] : memref<24x32xbf16, #tpu.memory_space<vmem>>, vector<24x32xbf16>
    %c0_1 = arith.constant 0 : index
    %c0_2 = arith.constant 0 : index
    %1 = vector.load %arg2[%c0_1, %c0_2] : memref<32x1024xbf16, #tpu.memory_space<vmem>>, vector<32x1024xbf16>
    %cst = arith.constant dense<0.000000e+00> : vector<24x1024xf32>
    %2 = tpu.matmul %0, %1, %cst {dimension_numbers = #tpu.dot_dimension_numbers<[1], [0], [0], [1], [0, 0, 1, 1], [], []>} : vector<24x32xbf16>, vector<32x1024xbf16>, vector<24x1024xf32> -> vector<24x1024xf32>
    %c0_3 = arith.constant 0 : index
    %c0_4 = arith.constant 0 : index
    %3 = vector.load %arg3[%c0_3, %c0_4] : memref<1x1024xf32, #tpu.memory_space<vmem>>, vector<1x1024xf32>
    %4 = vector.broadcast %3 : vector<1x1024xf32> to vector<24x1024xf32>
    %5 = arith.addf %2, %4 : vector<24x1024xf32>
    %c0_5 = arith.constant 0 : index
    %c0_6 = arith.constant 0 : index
    %6 = vector.load %arg4[%c0_5, %c0_6] : memref<24x1024xf32, #tpu.memory_space<vmem>>, vector<24x1024xf32>
    tpu.vector_store %arg4[%c0_5, %c0_6], %5 {strides = array<i32>} : memref<24x1024xf32, #tpu.memory_space<vmem>>, vector<24x1024xf32>,
    return
  }
  func.func @transform_0(%arg0: i32) -> (i32, i32) {
    %c0_i32 = arith.constant 0 : i32
    %c0_i32_0 = arith.constant 0 : i32
    return %arg0, %c0_i32 : i32, i32
  }
  func.func @transform_1(%arg0: i32) -> (i32, i32) {
    %c0_i32 = arith.constant 0 : i32
    %c0_i32_0 = arith.constant 0 : i32
    %c0_i32_1 = arith.constant 0 : i32
    return %c0_i32, %c0_i32_0 : i32, i32
  }
  func.func @transform_2(%arg0: i32) -> (i32, i32) {
    %c0_i32 = arith.constant 0 : i32
    %c0_i32_0 = arith.constant 0 : i32
    %c0_i32_1 = arith.constant 0 : i32
    return %c0_i32, %c0_i32_0 : i32, i32
  }
  func.func @transform_3(%arg0: i32) -> (i32, i32) {
    %c0_i32 = arith.constant 0 : i32
    %c0_i32_0 = arith.constant 0 : i32
    return %arg0, %c0_i32 : i32, i32
  }
}

module attributes {stable_mosaic.version = 11 : i64} {
  func.func @_bias_act_kernel(%arg0: i32, %arg1: memref<24x128xf32, #tpu.memory_space<vmem>>, %arg2: memref<1x128xf32, #tpu.memory_space<vmem>>, %arg3: memref<24x128xf32, #tpu.memory_space<vmem>>) attributes {dimension_semantics = [#tpu.dimension_semantics<arbitrary>], iteration_bounds = array<i64: 1>, scalar_prefetch = 0 : i64, scratch_operands = 0 : i64, tpu.core_type = #tpu.core_type<tc>, window_params = [{pipeline_mode = #tpu.pipeline_mode<synchronous>, transform_indices = @transform_0, window_bounds = array<i64: 24, 128>}, {pipeline_mode = #tpu.pipeline_mode<synchronous>, transform_indices = @transform_1, window_bounds = array<i64: 1, 128>}, {pipeline_mode = #tpu.pipeline_mode<synchronous>, transform_indices = @transform_2, window_bounds = array<i64: 24, 128>}]} {
    %c0 = arith.constant 0 : index
    %c0_0 = arith.constant 0 : index
    %0 = vector.load %arg1[%c0, %c0_0] : memref<24x128xf32, #tpu.memory_space<vmem>>, vector<24x128xf32>
    %c0_1 = arith.constant 0 : index
    %c0_2 = arith.constant 0 : index
    %1 = vector.load %arg2[%c0_1, %c0_2] : memref<1x128xf32, #tpu.memory_space<vmem>>, vector<1x128xf32>
    %2 = vector.broadcast %1 : vector<1x128xf32> to vector<24x128xf32>
    %3 = arith.addf %0, %2 : vector<24x128xf32>
    %cst = arith.constant 0.000000e+00 : f32
    %4 = vector.broadcast %cst : f32 to vector<24x128xf32>
    %5 = arith.maximumf %3, %4 : vector<24x128xf32>
    %c0_3 = arith.constant 0 : index
    %c0_4 = arith.constant 0 : index
    %6 = vector.load %arg3[%c0_3, %c0_4] : memref<24x128xf32, #tpu.memory_space<vmem>>, vector<24x128xf32>
    tpu.vector_store %arg3[%c0_3, %c0_4], %5 {strides = array<i32>} : memref<24x128xf32, #tpu.memory_space<vmem>>, vector<24x128xf32>,
    return
  }
  func.func @transform_0(%arg0: i32) -> (i32, i32) {
    %c0_i32 = arith.constant 0 : i32
    %c0_i32_0 = arith.constant 0 : i32
    %c0_i32_1 = arith.constant 0 : i32
    return %c0_i32, %c0_i32_0 : i32, i32
  }
  func.func @transform_1(%arg0: i32) -> (i32, i32) {
    %c0_i32 = arith.constant 0 : i32
    %c0_i32_0 = arith.constant 0 : i32
    %c0_i32_1 = arith.constant 0 : i32
    return %c0_i32, %c0_i32_0 : i32, i32
  }
  func.func @transform_2(%arg0: i32) -> (i32, i32) {
    %c0_i32 = arith.constant 0 : i32
    %c0_i32_0 = arith.constant 0 : i32
    %c0_i32_1 = arith.constant 0 : i32
    return %c0_i32, %c0_i32_0 : i32, i32
  }
}

module attributes {stable_mosaic.version = 11 : i64} {
  func.func @_mm_bias_act_kernel(%arg0: i32, %arg1: memref<192x16xbf16, #tpu.memory_space<vmem>>, %arg2: memref<16x512xbf16, #tpu.memory_space<vmem>>, %arg3: memref<1x512xf32, #tpu.memory_space<vmem>>, %arg4: memref<192x512xf32, #tpu.memory_space<vmem>>) attributes {dimension_semantics = [#tpu.dimension_semantics<parallel>], iteration_bounds = array<i64: 1>, scalar_prefetch = 0 : i64, scratch_operands = 0 : i64, tpu.core_type = #tpu.core_type<tc>, window_params = [{transform_indices = @transform_0, window_bounds = array<i64: 192, 16>}, {pipeline_mode = #tpu.pipeline_mode<synchronous>, transform_indices = @transform_1, window_bounds = array<i64: 16, 512>}, {pipeline_mode = #tpu.pipeline_mode<synchronous>, transform_indices = @transform_2, window_bounds = array<i64: 1, 512>}, {transform_indices = @transform_3, window_bounds = array<i64: 192, 512>}]} {
    %c0 = arith.constant 0 : index
    %c0_0 = arith.constant 0 : index
    %0 = vector.load %arg1[%c0, %c0_0] : memref<192x16xbf16, #tpu.memory_space<vmem>>, vector<192x16xbf16>
    %c0_1 = arith.constant 0 : index
    %c0_2 = arith.constant 0 : index
    %1 = vector.load %arg2[%c0_1, %c0_2] : memref<16x512xbf16, #tpu.memory_space<vmem>>, vector<16x512xbf16>
    %cst = arith.constant dense<0.000000e+00> : vector<192x512xf32>
    %2 = tpu.matmul %0, %1, %cst {dimension_numbers = #tpu.dot_dimension_numbers<[1], [0], [0], [1], [0, 0, 1, 1], [], []>} : vector<192x16xbf16>, vector<16x512xbf16>, vector<192x512xf32> -> vector<192x512xf32>
    %c0_3 = arith.constant 0 : index
    %c0_4 = arith.constant 0 : index
    %3 = vector.load %arg3[%c0_3, %c0_4] : memref<1x512xf32, #tpu.memory_space<vmem>>, vector<1x512xf32>
    %4 = vector.broadcast %3 : vector<1x512xf32> to vector<192x512xf32>
    %5 = arith.addf %2, %4 : vector<192x512xf32>
    %c0_5 = arith.constant 0 : index
    %c0_6 = arith.constant 0 : index
    %6 = vector.load %arg4[%c0_5, %c0_6] : memref<192x512xf32, #tpu.memory_space<vmem>>, vector<192x512xf32>
    tpu.vector_store %arg4[%c0_5, %c0_6], %5 {strides = array<i32>} : memref<192x512xf32, #tpu.memory_space<vmem>>, vector<192x512xf32>,
    return
  }
  func.func @transform_0(%arg0: i32) -> (i32, i32) {
    %c0_i32 = arith.constant 0 : i32
    %c0_i32_0 = arith.constant 0 : i32
    return %arg0, %c0_i32 : i32, i32
  }
  func.func @transform_1(%arg0: i32) -> (i32, i32) {
    %c0_i32 = arith.constant 0 : i32
    %c0_i32_0 = arith.constant 0 : i32
    %c0_i32_1 = arith.constant 0 : i32
    return %c0_i32, %c0_i32_0 : i32, i32
  }
  func.func @transform_2(%arg0: i32) -> (i32, i32) {
    %c0_i32 = arith.constant 0 : i32
    %c0_i32_0 = arith.constant 0 : i32
    %c0_i32_1 = arith.constant 0 : i32
    return %c0_i32, %c0_i32_0 : i32, i32
  }
  func.func @transform_3(%arg0: i32) -> (i32, i32) {
    %c0_i32 = arith.constant 0 : i32
    %c0_i32_0 = arith.constant 0 : i32
    return %arg0, %c0_i32 : i32, i32
  }
}

module attributes {stable_mosaic.version = 11 : i64} {
  func.func @_bias_act_kernel(%arg0: i32, %arg1: memref<96x128xf32, #tpu.memory_space<vmem>>, %arg2: memref<1x128xf32, #tpu.memory_space<vmem>>, %arg3: memref<96x128xf32, #tpu.memory_space<vmem>>) attributes {dimension_semantics = [#tpu.dimension_semantics<arbitrary>], iteration_bounds = array<i64: 1>, scalar_prefetch = 0 : i64, scratch_operands = 0 : i64, tpu.core_type = #tpu.core_type<tc>, window_params = [{pipeline_mode = #tpu.pipeline_mode<synchronous>, transform_indices = @transform_0, window_bounds = array<i64: 96, 128>}, {pipeline_mode = #tpu.pipeline_mode<synchronous>, transform_indices = @transform_1, window_bounds = array<i64: 1, 128>}, {pipeline_mode = #tpu.pipeline_mode<synchronous>, transform_indices = @transform_2, window_bounds = array<i64: 96, 128>}]} {
    %c0 = arith.constant 0 : index
    %c0_0 = arith.constant 0 : index
    %0 = vector.load %arg1[%c0, %c0_0] : memref<96x128xf32, #tpu.memory_space<vmem>>, vector<96x128xf32>
    %c0_1 = arith.constant 0 : index
    %c0_2 = arith.constant 0 : index
    %1 = vector.load %arg2[%c0_1, %c0_2] : memref<1x128xf32, #tpu.memory_space<vmem>>, vector<1x128xf32>
    %2 = vector.broadcast %1 : vector<1x128xf32> to vector<96x128xf32>
    %3 = arith.addf %0, %2 : vector<96x128xf32>
    %cst = arith.constant 0.000000e+00 : f32
    %4 = vector.broadcast %cst : f32 to vector<96x128xf32>
    %5 = arith.maximumf %3, %4 : vector<96x128xf32>
    %c0_3 = arith.constant 0 : index
    %c0_4 = arith.constant 0 : index
    %6 = vector.load %arg3[%c0_3, %c0_4] : memref<96x128xf32, #tpu.memory_space<vmem>>, vector<96x128xf32>
    tpu.vector_store %arg3[%c0_3, %c0_4], %5 {strides = array<i32>} : memref<96x128xf32, #tpu.memory_space<vmem>>, vector<96x128xf32>,
    return
  }
  func.func @transform_0(%arg0: i32) -> (i32, i32) {
    %c0_i32 = arith.constant 0 : i32
    %c0_i32_0 = arith.constant 0 : i32
    %c0_i32_1 = arith.constant 0 : i32
    return %c0_i32, %c0_i32_0 : i32, i32
  }
  func.func @transform_1(%arg0: i32) -> (i32, i32) {
    %c0_i32 = arith.constant 0 : i32
    %c0_i32_0 = arith.constant 0 : i32
    %c0_i32_1 = arith.constant 0 : i32
    return %c0_i32, %c0_i32_0 : i32, i32
  }
  func.func @transform_2(%arg0: i32) -> (i32, i32) {
    %c0_i32 = arith.constant 0 : i32
    %c0_i32_0 = arith.constant 0 : i32
    %c0_i32_1 = arith.constant 0 : i32
    return %c0_i32, %c0_i32_0 : i32, i32
  }
}

module attributes {stable_mosaic.version = 11 : i64} {
  func.func @_mm_bias_act_kernel(%arg0: i32, %arg1: memref<1024x8xbf16, #tpu.memory_space<vmem>>, %arg2: memref<8x128xbf16, #tpu.memory_space<vmem>>, %arg3: memref<1x128xf32, #tpu.memory_space<vmem>>, %arg4: memref<1024x128xf32, #tpu.memory_space<vmem>>) attributes {dimension_semantics = [#tpu.dimension_semantics<parallel>], iteration_bounds = array<i64: 2>, scalar_prefetch = 0 : i64, scratch_operands = 0 : i64, tpu.core_type = #tpu.core_type<tc>, window_params = [{transform_indices = @transform_0, window_bounds = array<i64: 1024, 8>}, {pipeline_mode = #tpu.pipeline_mode<synchronous>, transform_indices = @transform_1, window_bounds = array<i64: 8, 128>}, {pipeline_mode = #tpu.pipeline_mode<synchronous>, transform_indices = @transform_2, window_bounds = array<i64: 1, 128>}, {transform_indices = @transform_3, window_bounds = array<i64: 1024, 128>}]} {
    %c0 = arith.constant 0 : index
    %c0_0 = arith.constant 0 : index
    %0 = vector.load %arg1[%c0, %c0_0] : memref<1024x8xbf16, #tpu.memory_space<vmem>>, vector<1024x8xbf16>
    %c0_1 = arith.constant 0 : index
    %c0_2 = arith.constant 0 : index
    %1 = vector.load %arg2[%c0_1, %c0_2] : memref<8x128xbf16, #tpu.memory_space<vmem>>, vector<8x128xbf16>
    %cst = arith.constant dense<0.000000e+00> : vector<1024x128xf32>
    %2 = tpu.matmul %0, %1, %cst {dimension_numbers = #tpu.dot_dimension_numbers<[1], [0], [0], [1], [0, 0, 1, 1], [], []>} : vector<1024x8xbf16>, vector<8x128xbf16>, vector<1024x128xf32> -> vector<1024x128xf32>
    %c0_3 = arith.constant 0 : index
    %c0_4 = arith.constant 0 : index
    %3 = vector.load %arg3[%c0_3, %c0_4] : memref<1x128xf32, #tpu.memory_space<vmem>>, vector<1x128xf32>
    %4 = vector.broadcast %3 : vector<1x128xf32> to vector<1024x128xf32>
    %5 = arith.addf %2, %4 : vector<1024x128xf32>
    %c0_5 = arith.constant 0 : index
    %c0_6 = arith.constant 0 : index
    %6 = vector.load %arg4[%c0_5, %c0_6] : memref<1024x128xf32, #tpu.memory_space<vmem>>, vector<1024x128xf32>
    tpu.vector_store %arg4[%c0_5, %c0_6], %5 {strides = array<i32>} : memref<1024x128xf32, #tpu.memory_space<vmem>>, vector<1024x128xf32>,
    return
  }
  func.func @transform_0(%arg0: i32) -> (i32, i32) {
    %c0_i32 = arith.constant 0 : i32
    %c0_i32_0 = arith.constant 0 : i32
    return %arg0, %c0_i32 : i32, i32
  }
  func.func @transform_1(%arg0: i32) -> (i32, i32) {
    %c0_i32 = arith.constant 0 : i32
    %c0_i32_0 = arith.constant 0 : i32
    %c0_i32_1 = arith.constant 0 : i32
    return %c0_i32, %c0_i32_0 : i32, i32
  }
  func.func @transform_2(%arg0: i32) -> (i32, i32) {
    %c0_i32 = arith.constant 0 : i32
    %c0_i32_0 = arith.constant 0 : i32
    %c0_i32_1 = arith.constant 0 : i32
    return %c0_i32, %c0_i32_0 : i32, i32
  }
  func.func @transform_3(%arg0: i32) -> (i32, i32) {
    %c0_i32 = arith.constant 0 : i32
    %c0_i32_0 = arith.constant 0 : i32
    return %arg0, %c0_i32 : i32, i32
  }
}

module attributes {stable_mosaic.version = 11 : i64} {
  func.func @_bias_act_kernel(%arg0: i32, %arg1: memref<109x128xf32, #tpu.memory_space<vmem>>, %arg2: memref<1x128xf32, #tpu.memory_space<vmem>>, %arg3: memref<109x128xf32, #tpu.memory_space<vmem>>) attributes {dimension_semantics = [#tpu.dimension_semantics<arbitrary>], iteration_bounds = array<i64: 1>, scalar_prefetch = 0 : i64, scratch_operands = 0 : i64, tpu.core_type = #tpu.core_type<tc>, window_params = [{pipeline_mode = #tpu.pipeline_mode<synchronous>, transform_indices = @transform_0, window_bounds = array<i64: 109, 128>}, {pipeline_mode = #tpu.pipeline_mode<synchronous>, transform_indices = @transform_1, window_bounds = array<i64: 1, 128>}, {pipeline_mode = #tpu.pipeline_mode<synchronous>, transform_indices = @transform_2, window_bounds = array<i64: 109, 128>}]} {
    %c0 = arith.constant 0 : index
    %c0_0 = arith.constant 0 : index
    %0 = vector.load %arg1[%c0, %c0_0] : memref<109x128xf32, #tpu.memory_space<vmem>>, vector<109x128xf32>
    %c0_1 = arith.constant 0 : index
    %c0_2 = arith.constant 0 : index
    %1 = vector.load %arg2[%c0_1, %c0_2] : memref<1x128xf32, #tpu.memory_space<vmem>>, vector<1x128xf32>
    %2 = vector.broadcast %1 : vector<1x128xf32> to vector<109x128xf32>
    %3 = arith.addf %0, %2 : vector<109x128xf32>
    %4 = math.tanh %3 : vector<109x128xf32>
    %c0_3 = arith.constant 0 : index
    %c0_4 = arith.constant 0 : index
    %5 = vector.load %arg3[%c0_3, %c0_4] : memref<109x128xf32, #tpu.memory_space<vmem>>, vector<109x128xf32>
    tpu.vector_store %arg3[%c0_3, %c0_4], %4 {strides = array<i32>} : memref<109x128xf32, #tpu.memory_space<vmem>>, vector<109x128xf32>,
    return
  }
  func.func @transform_0(%arg0: i32) -> (i32, i32) {
    %c0_i32 = arith.constant 0 : i32
    %c0_i32_0 = arith.constant 0 : i32
    %c0_i32_1 = arith.constant 0 : i32
    return %c0_i32, %c0_i32_0 : i32, i32
  }
  func.func @transform_1(%arg0: i32) -> (i32, i32) {
    %c0_i32 = arith.constant 0 : i32
    %c0_i32_0 = arith.constant 0 : i32
    %c0_i32_1 = arith.constant 0 : i32
    return %c0_i32, %c0_i32_0 : i32, i32
  }
  func.func @transform_2(%arg0: i32) -> (i32, i32) {
    %c0_i32 = arith.constant 0 : i32
    %c0_i32_0 = arith.constant 0 : i32
    %c0_i32_1 = arith.constant 0 : i32
    return %c0_i32, %c0_i32_0 : i32, i32
  }
}

</mosaic_0001>

<llo_original>
// kernel: generator_forward.12
$region0: #{generator_forward.12}
  #allocation0 [shape = 'u32[]', space=smem, size = 0x4, offset = 0x4, fixed_abs, tag = 'smem constant byte address 0x4 - core index']
  #allocation1 [shape = 'u32[144,128]{1,0:T(1,128)}', space=vmem, size = 0x12000, scoped, tag = 'internal scratch']
  %s0 = inlined_call_operand.vmem [shape: bf16[1024,192], index: 0, kind: input, shape index: {}]
  %s1 = inlined_call_operand.vmem [shape: bf16[192,128], index: 1, kind: input, shape index: {}]
  %s2 = inlined_call_operand.vmem [shape: f32[1,128], index: 2, kind: input, shape index: {}]
  %s3 = inlined_call_operand.vmem [shape: f32[1024,128], index: 3, kind: output, shape index: {}]
  %s4 = sld [smem:[#allocation0]]
  $region45: #{generator_forward.12} parent=0
    _
  %s6 = ssub.s32 1, %s4
  %s7 = scalar_select 0, %s6, %s4
  loop: start=0, step=1, limit=4
  $region2: #{generator_forward.12} parent=0 // loop_pre_header
    _
  $region3: #{generator_forward.12} parent=0 // loop_header
    %s9 = sphi 0, %s13
    %p10 = scmp.ge.s32.totalorder %s9, 4
    %s19 = sphi 0, %s21
    %s22 = sphi 0, %s19
    %s23 = sphi 0, %s22
    %s39 = sphi 0, %s23
    %s43 = sphi 0, %s43
    %s45 = sphi 0, %s43
    %s46 = sphi 0, %s45
    %s60 = sphi 0, %s46
    %s64 = sphi 0, %s64
    %s66 = sphi 0, %s64
    %s67 = sphi 0, %s66
    %s81 = sphi 0, %s67
    %s87 = sphi 0, %s89
    %s90 = sphi 0, %s87
    %s91 = sphi 0, %s90
    %s107 = sphi 0, %s91
  $region4: #{generator_forward.12} parent=0 // loop_header_branch
    %12 = sbr.rel (%p10) target = $region8
  $region5: #{generator_forward.12} parent=0 // loop_body
    %s14 = ssub.s32 %s9, 1
    %s15 = ssub.s32 %s9, 2
    %s16 = sadd.s32 %s9, 1
    %s17 = ssub.s32 %s9, %s16
    %p18 = scmp.eq.s32.totalorder %s17, 0
    %s20 = sadd.s32 %s19, 1
    %s21 = scalar_select %p18, %s19, %s20
    %p24 = pneg %p18
    %p25 = scmp.eq.s32.totalorder %s9, 1
    %p26 = por %p24, %p25
    %p27 = scmp.ne.s32.totalorder %s19, %s22
    %p28 = scmp.eq.s32.totalorder %s9, 0
    %p29 = por %p27, %p28
    %p30 = scmp.ne.s32.totalorder %s19, %s22
    %p31 = scmp.eq.s32.totalorder %s14, 1
    %p32 = por %p30, %p31
    %p33 = scmp.ne.s32.totalorder %s22, %s23
    %p34 = scmp.eq.s32.totalorder %s14, 0
    %p35 = por %p33, %p34
    %p36 = scmp.ne.s32.totalorder %s22, %s23
    %p37 = scmp.eq.s32.totalorder %s15, 1
    %p38 = por %p36, %p37
    %p40 = scmp.ne.s32.totalorder %s23, %s39
    %p41 = scmp.eq.s32.totalorder %s15, 0
    %p42 = por %p40, %p41
    %s44 = sadd.s32 %s43, 1
    %p47 = scmp.eq.s32.totalorder %s9, 1
    %p48 = scmp.ne.s32.totalorder %s43, %s45
    %p49 = scmp.eq.s32.totalorder %s9, 0
    %p50 = por %p48, %p49
    %p51 = scmp.ne.s32.totalorder %s43, %s45
    %p52 = scmp.eq.s32.totalorder %s14, 1
    %p53 = por %p51, %p52
    %p54 = scmp.ne.s32.totalorder %s45, %s46
    %p55 = scmp.eq.s32.totalorder %s14, 0
    %p56 = por %p54, %p55
    %p57 = scmp.ne.s32.totalorder %s45, %s46
    %p58 = scmp.eq.s32.totalorder %s15, 1
    %p59 = por %p57, %p58
    %p61 = scmp.ne.s32.totalorder %s46, %s60
    %p62 = scmp.eq.s32.totalorder %s15, 0
    %p63 = por %p61, %p62
    %s65 = sadd.s32 %s64, 1
    %p68 = scmp.eq.s32.totalorder %s9, 1
    %p69 = scmp.ne.s32.totalorder %s64, %s66
    %p70 = scmp.eq.s32.totalorder %s9, 0
    %p71 = por %p69, %p70
    %p72 = scmp.ne.s32.totalorder %s64, %s66
    %p73 = scmp.eq.s32.totalorder %s14, 1
    %p74 = por %p72, %p73
    %p75 = scmp.ne.s32.totalorder %s66, %s67
    %p76 = scmp.eq.s32.totalorder %s14, 0
    %p77 = por %p75, %p76
    %p78 = scmp.ne.s32.totalorder %s66, %s67
    %p79 = scmp.eq.s32.totalorder %s15, 1
    %p80 = por %p78, %p79
    %p82 = scmp.ne.s32.totalorder %s67, %s81
    %p83 = scmp.eq.s32.totalorder %s15, 0
    %p84 = por %p82, %p83
    %s85 = ssub.s32 %s9, %s16
    %p86 = scmp.eq.s32.totalorder %s85, 0
    %s88 = sadd.s32 %s87, 1
    %s89 = scalar_select %p86, %s87, %s88
    %p92 = pneg %p86
    %p93 = scmp.eq.s32.totalorder %s9, 1
    %p94 = por %p92, %p93
    %p95 = scmp.ne.s32.totalorder %s87, %s90
    %p96 = scmp.eq.s32.totalorder %s9, 0
    %p97 = por %p95, %p96
    %p98 = scmp.ne.s32.totalorder %s87, %s90
    %p99 = scmp.eq.s32.totalorder %s14, 1
    %p100 = por %p98, %p99
    %p101 = scmp.ne.s32.totalorder %s90, %s91
    %p102 = scmp.eq.s32.totalorder %s14, 0
    %p103 = por %p101, %p102
    %p104 = scmp.ne.s32.totalorder %s90, %s91
    %p105 = scmp.eq.s32.totalorder %s15, 1
    %p106 = por %p104, %p105
    %p108 = scmp.ne.s32.totalorder %s91, %s107
    %p109 = scmp.eq.s32.totalorder %s15, 0
    %p110 = por %p108, %p109
    %p111 = scmp.le.s32.totalorder 1, %s9
    %p112 = scmp.lt.s32.totalorder %s9, 3
    %p113 = pnand %p111, %p112
    %p114 = pneg %p113
    // Predicated region
    $region9: #{generator_forward.12} parent=5 // pred_check
      _
    $region10: #{generator_forward.12} parent=5 // pred_check_branch
      %116 = sbr.rel (%p113) target = $region12
    $region11: #{generator_forward.12} parent=5 // pred_region
      %s117 = ssub.s32 %s9, 1
      // Predicated region
      $region13: #{generator_forward.12} parent=11 // pred_check
        %p118 = pneg %p56
      $region14: #{generator_forward.12} parent=11 // pred_check_branch
        %120 = sbr.rel (%p118) target = $region16
      $region15: #{generator_forward.12} parent=11 // pred_region
        _
      $region16: #{generator_forward.12} parent=11 // pred_fallthru
        _
      // Predicated region
      $region17: #{generator_forward.12} parent=11 // pred_check
        %p121 = pneg %p77
      $region18: #{generator_forward.12} parent=11 // pred_check_branch
        %123 = sbr.rel (%p121) target = $region20
      $region19: #{generator_forward.12} parent=11 // pred_region
        _
      $region20: #{generator_forward.12} parent=11 // pred_fallthru
        _
    $region12: #{generator_forward.12} parent=5 // pred_fallthru
      _
    %p124 = scmp.lt.s32.totalorder %s9, 2
    // Predicated region
    $region21: #{generator_forward.12} parent=5 // pred_check
      %p125 = pneg %p124
    $region22: #{generator_forward.12} parent=5 // pred_check_branch
      %127 = sbr.rel (%p125) target = $region24
    $region23: #{generator_forward.12} parent=5 // pred_region
      // Predicated region
      $region25: #{generator_forward.12} parent=23 // pred_check
        %p128 = pneg %p29
      $region26: #{generator_forward.12} parent=23 // pred_check_branch
        %130 = sbr.rel (%p128) target = $region28
      $region27: #{generator_forward.12} parent=23 // pred_region
        %s131 = smul.u32 64, %s9
        %p132 = scmp.lt.s32.totalorder %s131, 127
        %s133 = scalar_select %p132, %s131, 127
        %s134 = smul.addr %s133, 2
        %s135 = smul.addr %s134, 4
        %s136 = scalar_lea.vmem %s0, %s135
        %s137 = smul.u32 64, %s9
      $region28: #{generator_forward.12} parent=23 // pred_fallthru
        _
    $region24: #{generator_forward.12} parent=5 // pred_fallthru
      _
    %p138 = scmp.le.s32.totalorder 1, %s9
    %p139 = scmp.lt.s32.totalorder %s9, 3
    %p140 = pnand %p138, %p139
    %p141 = pneg %p140
    // Predicated region
    $region29: #{generator_forward.12} parent=5 // pred_check
      _
    $region30: #{generator_forward.12} parent=5 // pred_check_branch
      %143 = sbr.rel (%p140) target = $region32
    $region31: #{generator_forward.12} parent=5 // pred_region
      %s144 = ssub.s32 %s9, 1
      %s145 = smul.u32 64, %s14
      %p146 = scmp.lt.s32.totalorder %s145, 127
      %s147 = scalar_select %p146, %s145, 127
      %s148 = smul.addr %s147, 2
      %s149 = smul.addr %s148, 4
      %s150 = scalar_lea.vmem %s0, %s149
      %p151 = pneg %p35
      %p152 = pneg %p32
      %p153 = pneg %p56
      %p154 = pneg %p53
      %p155 = pneg %p77
      %p156 = pneg %p74
      %p157 = pneg %p103
      %p158 = pneg %p100
      %s159 = smul.u32 64, %s14
      %p160 = scmp.lt.s32.totalorder %s159, 127
      %s161 = scalar_select %p160, %s159, 127
      %s162 = smul.addr %s161, 8
      %s163 = scalar_lea.vmem %s3, %s162
      %s164 = smul.u32 64, %s14
      %p165 = scmp.lt.s32.totalorder %s164, 127
      %s166 = scalar_select %p165, %s164, 127
      %s167 = smul.addr %s166, 2
      %s168 = smul.addr %s167, 4
      %s169 = scalar_lea.vmem %s0, %s168
      %s170 = smul.u32 64, %s14
      %s171 = smul.u32 64, %s14
      %p172 = scmp.lt.s32.totalorder %s171, 127
      %s173 = scalar_select %p172, %s171, 127
      %s174 = smul.addr %s173, 8
      %s175 = scalar_lea.vmem %s3, %s174
      %s176 = smul.u32 64, %s14
      %v178 = vld [vmem:[%s169] sm:$0xff]
      %v179 = vld [vmem:[%s169 + $0x8] sm:$0xff]
      %v180 = vld [vmem:[%s169 + $0x10] sm:$0xff]
      %v181 = vld [vmem:[%s169 + $0x18] sm:$0xff]
      %v182 = vld [vmem:[%s169 + $0x20] sm:$0xff]
      %v183 = vld [vmem:[%s169 + $0x28] sm:$0xff]
      %v184 = vld [vmem:[%s169 + $0x30] sm:$0xff]
      %v185 = vld [vmem:[%s169 + $0x38] sm:$0xff]
      %v186 = vld [vmem:[%s169 + $0x40] sm:$0xff]
      %v187 = vld [vmem:[%s169 + $0x48] sm:$0xff]
      %v188 = vld [vmem:[%s169 + $0x50] sm:$0xff]
      %v189 = vld [vmem:[%s169 + $0x58] sm:$0xff]
      %v190 = vld [vmem:[%s169 + $0x60] sm:$0xff]
      %v191 = vld [vmem:[%s169 + $0x68] sm:$0xff]
      %v192 = vld [vmem:[%s169 + $0x70] sm:$0xff]
      %v193 = vld [vmem:[%s169 + $0x78] sm:$0xff]
      %v194 = vld [vmem:[%s169 + $0x80] sm:$0xff]
      %v195 = vld [vmem:[%s169 + $0x88] sm:$0xff]
      %v196 = vld [vmem:[%s169 + $0x90] sm:$0xff]
      %v197 = vld [vmem:[%s169 + $0x98] sm:$0xff]
      %v198 = vld [vmem:[%s169 + $0xa0] sm:$0xff]
      %v199 = vld [vmem:[%s169 + $0xa8] sm:$0xff]
      %v200 = vld [vmem:[%s169 + $0xb0] sm:$0xff]
      %v201 = vld [vmem:[%s169 + $0xb8] sm:$0xff]
      %v202 = vld [vmem:[%s169 + $0xc0] sm:$0xff]
      %v203 = vld [vmem:[%s169 + $0xc8] sm:$0xff]
      %v204 = vld [vmem:[%s169 + $0xd0] sm:$0xff]
      %v205 = vld [vmem:[%s169 + $0xd8] sm:$0xff]
      %v206 = vld [vmem:[%s169 + $0xe0] sm:$0xff]
      %v207 = vld [vmem:[%s169 + $0xe8] sm:$0xff]
      %v208 = vld [vmem:[%s169 + $0xf0] sm:$0xff]
      %v209 = vld [vmem:[%s169 + $0xf8] sm:$0xff]
      %v210 = vld [vmem:[%s169 + $0x100] sm:$0xff]
      %v211 = vld [vmem:[%s169 + $0x108] sm:$0xff]
      %v212 = vld [vmem:[%s169 + $0x110] sm:$0xff]
      %v213 = vld [vmem:[%s169 + $0x118] sm:$0xff]
      %v214 = vld [vmem:[%s169 + $0x120] sm:$0xff]
      %v215 = vld [vmem:[%s169 + $0x128] sm:$0xff]
      %v216 = vld [vmem:[%s169 + $0x130] sm:$0xff]
      %v217 = vld [vmem:[%s169 + $0x138] sm:$0xff]
      %v218 = vld [vmem:[%s169 + $0x140] sm:$0xff]
      %v219 = vld [vmem:[%s169 + $0x148] sm:$0xff]
      %v220 = vld [vmem:[%s169 + $0x150] sm:$0xff]
      %v221 = vld [vmem:[%s169 + $0x158] sm:$0xff]
      %v222 = vld [vmem:[%s169 + $0x160] sm:$0xff]
      %v223 = vld [vmem:[%s169 + $0x168] sm:$0xff]
      %v224 = vld [vmem:[%s169 + $0x170] sm:$0xff]
      %v225 = vld [vmem:[%s169 + $0x178] sm:$0xff]
      %v226 = vld [vmem:[%s169 + $0x180] sm:$0xff]
      %v227 = vld [vmem:[%s169 + $0x188] sm:$0xff]
      %v228 = vld [vmem:[%s169 + $0x190] sm:$0xff]
      %v229 = vld [vmem:[%s169 + $0x198] sm:$0xff]
      %v230 = vld [vmem:[%s169 + $0x1a0] sm:$0xff]
      %v231 = vld [vmem:[%s169 + $0x1a8] sm:$0xff]
      %v232 = vld [vmem:[%s169 + $0x1b0] sm:$0xff]
      %v233 = vld [vmem:[%s169 + $0x1b8] sm:$0xff]
      %v234 = vld [vmem:[%s169 + $0x1c0] sm:$0xff]
      %v235 = vld [vmem:[%s169 + $0x1c8] sm:$0xff]
      %v236 = vld [vmem:[%s169 + $0x1d0] sm:$0xff]
      %v237 = vld [vmem:[%s169 + $0x1d8] sm:$0xff]
      %v238 = vld [vmem:[%s169 + $0x1e0] sm:$0xff]
      %v239 = vld [vmem:[%s169 + $0x1e8] sm:$0xff]
      %v240 = vld [vmem:[%s169 + $0x1f0] sm:$0xff]
      %v241 = vld [vmem:[%s169 + $0x1f8] sm:$0xff]
      %v242 = vld [vmem:[%s1] sm:$0xf]
      %v243 = vld [vmem:[%s1 + $0x4] sm:$0xf]
      %v244 = vld [vmem:[%s1 + $0x8] sm:$0xf]
      %v245 = vld [vmem:[%s1 + $0xc] sm:$0xf]
      %v246 = vld [vmem:[%s1 + $0x10] sm:$0xf]
      %v247 = vld [vmem:[%s1 + $0x14] sm:$0xf]
      %v248 = vld [vmem:[%s1 + $0x18] sm:$0xf]
      %v249 = vld [vmem:[%s1 + $0x1c] sm:$0xf]
      %v250 = vld [vmem:[%s1 + $0x20] sm:$0xf]
      %v251 = vld [vmem:[%s1 + $0x24] sm:$0xf]
      %v252 = vld [vmem:[%s1 + $0x28] sm:$0xf]
      %v253 = vld [vmem:[%s1 + $0x2c] sm:$0xf]
      %v254 = vld [vmem:[%s1 + $0x30] sm:$0xf]
      %v255 = vld [vmem:[%s1 + $0x34] sm:$0xf]
      %v256 = vld [vmem:[%s1 + $0x38] sm:$0xf]
      %v257 = vld [vmem:[%s1 + $0x3c] sm:$0xf]
      %v258 = vld [vmem:[%s1 + $0x40] sm:$0xf]
      %v259 = vld [vmem:[%s1 + $0x44] sm:$0xf]
      %v260 = vld [vmem:[%s1 + $0x48] sm:$0xf]
      %v261 = vld [vmem:[%s1 + $0x4c] sm:$0xf]
      %v262 = vld [vmem:[%s1 + $0x50] sm:$0xf]
      %v263 = vld [vmem:[%s1 + $0x54] sm:$0xf]
      %v264 = vld [vmem:[%s1 + $0x58] sm:$0xf]
      %v265 = vld [vmem:[%s1 + $0x5c] sm:$0xf]
      %v266 = vld [vmem:[%s2] sm:$0x1]
      %v268 = vlaneseq
      %v269 = vshrl.u32 %v268, 7
      %v270 = vsub.s32 0, %v269
      %v271 = vrot.slane %v266, %v270
      %v337 = vunpack.c.l.b16 %v178
      %v338 = vunpack.c.h.b16 %v178
      %v339 = vunpack.c.l.b16 %v179
      %v340 = vunpack.c.h.b16 %v179
      %v341 = vunpack.c.l.b16 %v180
      %v342 = vunpack.c.h.b16 %v180
      %v343 = vunpack.c.l.b16 %v181
      %v344 = vunpack.c.h.b16 %v181
      %v345 = vunpack.c.l.b16 %v182
      %v346 = vunpack.c.h.b16 %v182
      %v347 = vunpack.c.l.b16 %v183
      %v348 = vunpack.c.h.b16 %v183
      %v349 = vunpack.c.l.b16 %v184
      %v350 = vunpack.c.h.b16 %v184
      %v351 = vunpack.c.l.b16 %v185
      %v352 = vunpack.c.h.b16 %v185
      %v353 = vunpack.c.l.b16 %v186
      %v354 = vunpack.c.h.b16 %v186
      %v355 = vunpack.c.l.b16 %v187
      %v356 = vunpack.c.h.b16 %v187
      %v357 = vunpack.c.l.b16 %v188
      %v358 = vunpack.c.h.b16 %v188
      %v359 = vunpack.c.l.b16 %v189
      %v360 = vunpack.c.h.b16 %v189
      %v361 = vunpack.c.l.b16 %v190
      %v362 = vunpack.c.h.b16 %v190
      %v363 = vunpack.c.l.b16 %v191
      %v364 = vunpack.c.h.b16 %v191
      %v365 = vunpack.c.l.b16 %v192
      %v366 = vunpack.c.h.b16 %v192
      %v367 = vunpack.c.l.b16 %v193
      %v368 = vunpack.c.h.b16 %v193
      %v369 = vunpack.c.l.b16 %v194
      %v370 = vunpack.c.h.b16 %v194
      %v371 = vunpack.c.l.b16 %v195
      %v372 = vunpack.c.h.b16 %v195
      %v373 = vunpack.c.l.b16 %v196
      %v374 = vunpack.c.h.b16 %v196
      %v375 = vunpack.c.l.b16 %v197
      %v376 = vunpack.c.h.b16 %v197
      %v377 = vunpack.c.l.b16 %v198
      %v378 = vunpack.c.h.b16 %v198
      %v379 = vunpack.c.l.b16 %v199
      %v380 = vunpack.c.h.b16 %v199
      %v381 = vunpack.c.l.b16 %v200
      %v382 = vunpack.c.h.b16 %v200
      %v383 = vunpack.c.l.b16 %v201
      %v384 = vunpack.c.h.b16 %v201
      %v385 = vunpack.c.l.b16 %v202
      %v386 = vunpack.c.h.b16 %v202
      %v387 = vunpack.c.l.b16 %v203
      %v388 = vunpack.c.h.b16 %v203
      %v389 = vunpack.c.l.b16 %v204
      %v390 = vunpack.c.h.b16 %v204
      %v391 = vunpack.c.l.b16 %v205
      %v392 = vunpack.c.h.b16 %v205
      %v393 = vunpack.c.l.b16 %v206
      %v394 = vunpack.c.h.b16 %v206
      %v395 = vunpack.c.l.b16 %v207
      %v396 = vunpack.c.h.b16 %v207
      %v397 = vunpack.c.l.b16 %v208
      %v398 = vunpack.c.h.b16 %v208
      %v399 = vunpack.c.l.b16 %v209
      %v400 = vunpack.c.h.b16 %v209
      %v401 = vunpack.c.l.b16 %v210
      %v402 = vunpack.c.h.b16 %v210
      %v403 = vunpack.c.l.b16 %v211
      %v404 = vunpack.c.h.b16 %v211
      %v405 = vunpack.c.l.b16 %v212
      %v406 = vunpack.c.h.b16 %v212
      %v407 = vunpack.c.l.b16 %v213
      %v408 = vunpack.c.h.b16 %v213
      %v409 = vunpack.c.l.b16 %v214
      %v410 = vunpack.c.h.b16 %v214
      %v411 = vunpack.c.l.b16 %v215
      %v412 = vunpack.c.h.b16 %v215
      %v413 = vunpack.c.l.b16 %v216
      %v414 = vunpack.c.h.b16 %v216
      %v415 = vunpack.c.l.b16 %v217
      %v416 = vunpack.c.h.b16 %v217
      %v417 = vunpack.c.l.b16 %v218
      %v418 = vunpack.c.h.b16 %v218
      %v419 = vunpack.c.l.b16 %v219
      %v420 = vunpack.c.h.b16 %v219
      %v421 = vunpack.c.l.b16 %v220
      %v422 = vunpack.c.h.b16 %v220
      %v423 = vunpack.c.l.b16 %v221
      %v424 = vunpack.c.h.b16 %v221
      %v425 = vunpack.c.l.b16 %v222
      %v426 = vunpack.c.h.b16 %v222
      %v427 = vunpack.c.l.b16 %v223
      %v428 = vunpack.c.h.b16 %v223
      %v429 = vunpack.c.l.b16 %v224
      %v430 = vunpack.c.h.b16 %v224
      %v431 = vunpack.c.l.b16 %v225
      %v432 = vunpack.c.h.b16 %v225
      %v433 = vunpack.c.l.b16 %v226
      %v434 = vunpack.c.h.b16 %v226
      %v435 = vunpack.c.l.b16 %v227
      %v436 = vunpack.c.h.b16 %v227
      %v437 = vunpack.c.l.b16 %v228
      %v438 = vunpack.c.h.b16 %v228
      %v439 = vunpack.c.l.b16 %v229
      %v440 = vunpack.c.h.b16 %v229
      %v441 = vunpack.c.l.b16 %v230
      %v442 = vunpack.c.h.b16 %v230
      %v443 = vunpack.c.l.b16 %v231
      %v444 = vunpack.c.h.b16 %v231
      %v445 = vunpack.c.l.b16 %v232
      %v446 = vunpack.c.h.b16 %v232
      %v447 = vunpack.c.l.b16 %v233
      %v448 = vunpack.c.h.b16 %v233
      %v449 = vunpack.c.l.b16 %v234
      %v450 = vunpack.c.h.b16 %v234
      %v451 = vunpack.c.l.b16 %v235
      %v452 = vunpack.c.h.b16 %v235
      %v453 = vunpack.c.l.b16 %v236
      %v454 = vunpack.c.h.b16 %v236
      %v455 = vunpack.c.l.b16 %v237
      %v456 = vunpack.c.h.b16 %v237
      %v457 = vunpack.c.l.b16 %v238
      %v458 = vunpack.c.h.b16 %v238
      %v459 = vunpack.c.l.b16 %v239
      %v460 = vunpack.c.h.b16 %v239
      %v461 = vunpack.c.l.b16 %v240
      %v462 = vunpack.c.h.b16 %v240
      %v463 = vunpack.c.l.b16 %v241
      %v464 = vunpack.c.h.b16 %v241
      %v465 = vpack.c.b16 %v339, %v337
      %v466 = vpack.c.b16 %v340, %v338
      %v467 = vpack.c.b16 %v343, %v341
      %v468 = vpack.c.b16 %v344, %v342
      %v469 = vpack.c.b16 %v347, %v345
      %v470 = vpack.c.b16 %v348, %v346
      %v471 = vpack.c.b16 %v351, %v349
      %v472 = vpack.c.b16 %v352, %v350
      %v473 = vpack.c.b16 %v355, %v353
      %v474 = vpack.c.b16 %v356, %v354
      %v475 = vpack.c.b16 %v359, %v357
      %v476 = vpack.c.b16 %v360, %v358
      %v477 = vpack.c.b16 %v363, %v361
      %v478 = vpack.c.b16 %v364, %v362
      %v479 = vpack.c.b16 %v367, %v365
      %v480 = vpack.c.b16 %v368, %v366
      %v481 = vpack.c.b16 %v371, %v369
      %v482 = vpack.c.b16 %v372, %v370
      %v483 = vpack.c.b16 %v375, %v373
      %v484 = vpack.c.b16 %v376, %v374
      %v485 = vpack.c.b16 %v379, %v377
      %v486 = vpack.c.b16 %v380, %v378
      %v487 = vpack.c.b16 %v383, %v381
      %v488 = vpack.c.b16 %v384, %v382
      %v489 = vpack.c.b16 %v387, %v385
      %v490 = vpack.c.b16 %v388, %v386
      %v491 = vpack.c.b16 %v391, %v389
      %v492 = vpack.c.b16 %v392, %v390
      %v493 = vpack.c.b16 %v395, %v393
      %v494 = vpack.c.b16 %v396, %v394
      %v495 = vpack.c.b16 %v399, %v397
      %v496 = vpack.c.b16 %v400, %v398
      %v497 = vpack.c.b16 %v403, %v401
      %v498 = vpack.c.b16 %v404, %v402
      %v499 = vpack.c.b16 %v407, %v405
      %v500 = vpack.c.b16 %v408, %v406
      %v501 = vpack.c.b16 %v411, %v409
      %v502 = vpack.c.b16 %v412, %v410
      %v503 = vpack.c.b16 %v415, %v413
      %v504 = vpack.c.b16 %v416, %v414
      %v505 = vpack.c.b16 %v419, %v417
      %v506 = vpack.c.b16 %v420, %v418
      %v507 = vpack.c.b16 %v423, %v421
      %v508 = vpack.c.b16 %v424, %v422
      %v509 = vpack.c.b16 %v427, %v425
      %v510 = vpack.c.b16 %v428, %v426
      %v511 = vpack.c.b16 %v431, %v429
      %v512 = vpack.c.b16 %v432, %v430
      %v513 = vpack.c.b16 %v435, %v433
      %v514 = vpack.c.b16 %v436, %v434
      %v515 = vpack.c.b16 %v439, %v437
      %v516 = vpack.c.b16 %v440, %v438
      %v517 = vpack.c.b16 %v443, %v441
      %v518 = vpack.c.b16 %v444, %v442
      %v519 = vpack.c.b16 %v447, %v445
      %v520 = vpack.c.b16 %v448, %v446
      %v521 = vpack.c.b16 %v451, %v449
      %v522 = vpack.c.b16 %v452, %v450
      %v523 = vpack.c.b16 %v455, %v453
      %v524 = vpack.c.b16 %v456, %v454
      %v525 = vpack.c.b16 %v459, %v457
      %v526 = vpack.c.b16 %v460, %v458
      %v527 = vpack.c.b16 %v463, %v461
      %v528 = vpack.c.b16 %v464, %v462
      %v585 = vunpack.c.l.b16 %v242
      %v586 = vunpack.c.l.b16 %v243
      %v587 = vunpack.c.l.b16 %v244
      %v588 = vunpack.c.l.b16 %v245
      %v589 = vunpack.c.l.b16 %v246
      %v590 = vunpack.c.l.b16 %v247
      %v591 = vunpack.c.l.b16 %v248
      %v592 = vunpack.c.l.b16 %v249
      %v593 = vunpack.c.l.b16 %v250
      %v594 = vunpack.c.l.b16 %v251
      %v595 = vunpack.c.l.b16 %v252
      %v596 = vunpack.c.l.b16 %v253
      %v597 = vunpack.c.l.b16 %v254
      %v598 = vunpack.c.l.b16 %v255
      %v599 = vunpack.c.l.b16 %v256
      %v600 = vunpack.c.l.b16 %v257
      %v601 = vunpack.c.l.b16 %v258
      %v602 = vunpack.c.l.b16 %v259
      %v603 = vunpack.c.l.b16 %v260
      %v604 = vunpack.c.l.b16 %v261
      %v605 = vunpack.c.l.b16 %v262
      %v606 = vunpack.c.l.b16 %v263
      %v607 = vunpack.c.l.b16 %v264
      %v608 = vunpack.c.l.b16 %v265
      %v609 = vpack.c.b16 %v586, %v585
      %v610 = vpack.c.b16 %v588, %v587
      %v611 = vpack.c.b16 %v590, %v589
      %v612 = vpack.c.b16 %v592, %v591
      %v613 = vpack.c.b16 %v594, %v593
      %v614 = vpack.c.b16 %v596, %v595
      %v615 = vpack.c.b16 %v598, %v597
      %v616 = vpack.c.b16 %v600, %v599
      %v617 = vpack.c.b16 %v602, %v601
      %v618 = vpack.c.b16 %v604, %v603
      %v619 = vpack.c.b16 %v606, %v605
      %v620 = vpack.c.b16 %v608, %v607
      %vm633 = vcmask 523264
      %v635 = vsel %vm633, %v466, 0
      %v638 = vsel %vm633, %v468, 0
      %v641 = vsel %vm633, %v470, 0
      %v644 = vsel %vm633, %v472, 0
      %v647 = vsel %vm633, %v474, 0
      %v650 = vsel %vm633, %v476, 0
      %v653 = vsel %vm633, %v478, 0
      %v656 = vsel %vm633, %v480, 0
      %v659 = vsel %vm633, %v482, 0
      %v662 = vsel %vm633, %v484, 0
      %v665 = vsel %vm633, %v486, 0
      %v668 = vsel %vm633, %v488, 0
      %v671 = vsel %vm633, %v490, 0
      %v674 = vsel %vm633, %v492, 0
      %v677 = vsel %vm633, %v494, 0
      %v680 = vsel %vm633, %v496, 0
      %v683 = vsel %vm633, %v498, 0
      %v686 = vsel %vm633, %v500, 0
      %v689 = vsel %vm633, %v502, 0
      %v692 = vsel %vm633, %v504, 0
      %v695 = vsel %vm633, %v506, 0
      %v698 = vsel %vm633, %v508, 0
      %v701 = vsel %vm633, %v510, 0
      %v704 = vsel %vm633, %v512, 0
      %v707 = vsel %vm633, %v514, 0
      %v710 = vsel %vm633, %v516, 0
      %v713 = vsel %vm633, %v518, 0
      %v716 = vsel %vm633, %v520, 0
      %v719 = vsel %vm633, %v522, 0
      %v722 = vsel %vm633, %v524, 0
      %v725 = vsel %vm633, %v526, 0
      %v728 = vsel %vm633, %v528, 0
      %730 = vmatprep.subr.bf16.mxu0 0
      %731 = vmatpush1.bf16.msra.mxu0 %v609
      %732 = vmatprep.subr.bf16.mxu0 0
      %733 = vmatpush1.bf16.msra.mxu0 %v610
      %734 = vmatprep.subr.bf16.mxu0 0
      %735 = vmatpush1.bf16.msra.mxu0 %v611
      %736 = vmatprep.subr.bf16.mxu0 0
      %737 = vmatpush1.bf16.msra.mxu0 %v612
      %738 = vmatprep.subr.bf16.mxu0 0
      %739 = vmatpush1.bf16.msra.mxu0 %v613
      %740 = vmatprep.subr.bf16.mxu0 0
      %741 = vmatpush1.bf16.msra.mxu0 %v614
      %742 = vmatprep.subr.bf16.mxu0 0
      %743 = vmatpush1.bf16.msra.mxu0 %v615
      %744 = vmatprep.subr.bf16.mxu0 0
      %745 = vmatpush1.bf16.msra.mxu0 %v616
      %746 = vmatprep.subr.bf16.mxu0 0
      %747 = vmatpush1.bf16.msra.mxu0 %v617
      %748 = vmatprep.subr.bf16.mxu0 0
      %749 = vmatpush1.bf16.msra.mxu0 %v618
      %750 = vmatprep.subr.bf16.mxu0 0
      %751 = vmatpush1.bf16.msra.mxu0 %v619
      %752 = vmatprep.subr.bf16.mxu0 0
      %753 = vmatpush1.bf16.msra.mxu0 %v620
      %754 = vmatprep.subr.bf16.mxu0 0
      %755 = vmatpush1.bf16.msra.mxu0 0
      %756 = vmatprep.subr.bf16.mxu0 0
      %757 = vmatpush1.bf16.msra.mxu0 0
      %758 = vmatprep.subr.bf16.mxu0 0
      %759 = vmatpush1.bf16.msra.mxu0 0
      %760 = vmatprep.subr.bf16.mxu0 0
      %761 = vmatpush1.bf16.msra.mxu0 0
      %762 = vmatprep.mubr.bf16.mxu0 %v635
      %763 = vmatmul.mubr.bf16.gmra.mrb[0].mxu0 %v465
      %v764 = vpop.f32.mrb[0].mxu0
      %v765 = vadd.f32 %v271, %v764
      %v766 = vpop.f32.mrb[0].mxu0
      %v767 = vpop.f32.mrb[0].mxu0
      %v768 = vadd.f32 %v271, %v767
      %v769 = vpop.f32.mrb[0].mxu0
      %770 = vmatprep.mubr.bf16.mxu0 %v638
      %771 = vmatmul.mubr.bf16.gmra.mrb[0].mxu0 %v467
      %v772 = vpop.f32.mrb[0].mxu0
      %v773 = vadd.f32 %v271, %v772
      %v774 = vpop.f32.mrb[0].mxu0
      %v775 = vpop.f32.mrb[0].mxu0
      %v776 = vadd.f32 %v271, %v775
      %v777 = vpop.f32.mrb[0].mxu0
      %778 = vmatprep.mubr.bf16.mxu0 %v641
      %779 = vmatmul.mubr.bf16.gmra.mrb[0].mxu0 %v469
      %v780 = vpop.f32.mrb[0].mxu0
      %v781 = vadd.f32 %v271, %v780
      %v782 = vpop.f32.mrb[0].mxu0
      %v783 = vpop.f32.mrb[0].mxu0
      %v784 = vadd.f32 %v271, %v783
      %v785 = vpop.f32.mrb[0].mxu0
      %786 = vmatprep.mubr.bf16.mxu0 %v644
      %787 = vmatmul.mubr.bf16.gmra.mrb[0].mxu0 %v471
      %v788 = vpop.f32.mrb[0].mxu0
      %v789 = vadd.f32 %v271, %v788
      %v790 = vpop.f32.mrb[0].mxu0
      %v791 = vpop.f32.mrb[0].mxu0
      %v792 = vadd.f32 %v271, %v791
      %v793 = vpop.f32.mrb[0].mxu0
      %794 = vmatprep.mubr.bf16.mxu0 %v647
      %795 = vmatmul.mubr.bf16.gmra.mrb[0].mxu0 %v473
      %v796 = vpop.f32.mrb[0].mxu0
      %v797 = vadd.f32 %v271, %v796
      %v798 = vpop.f32.mrb[0].mxu0
      %v799 = vpop.f32.mrb[0].mxu0
      %v800 = vadd.f32 %v271, %v799
      %v801 = vpop.f32.mrb[0].mxu0
      %802 = vmatprep.mubr.bf16.mxu0 %v650
      %803 = vmatmul.mubr.bf16.gmra.mrb[0].mxu0 %v475
      %v804 = vpop.f32.mrb[0].mxu0
      %v805 = vadd.f32 %v271, %v804
      %v806 = vpop.f32.mrb[0].mxu0
      %v807 = vpop.f32.mrb[0].mxu0
      %v808 = vadd.f32 %v271, %v807
      %v809 = vpop.f32.mrb[0].mxu0
      %810 = vmatprep.mubr.bf16.mxu0 %v653
      %811 = vmatmul.mubr.bf16.gmra.mrb[0].mxu0 %v477
      %v812 = vpop.f32.mrb[0].mxu0
      %v813 = vadd.f32 %v271, %v812
      %v814 = vpop.f32.mrb[0].mxu0
      %v815 = vpop.f32.mrb[0].mxu0
      %v816 = vadd.f32 %v271, %v815
      %v817 = vpop.f32.mrb[0].mxu0
      %818 = vmatprep.mubr.bf16.mxu0 %v656
      %819 = vmatmul.mubr.bf16.gmra.mrb[0].mxu0 %v479
      %v820 = vpop.f32.mrb[0].mxu0
      %v821 = vadd.f32 %v271, %v820
      %v822 = vpop.f32.mrb[0].mxu0
      %v823 = vpop.f32.mrb[0].mxu0
      %v824 = vadd.f32 %v271, %v823
      %v825 = vpop.f32.mrb[0].mxu0
      %826 = vmatprep.mubr.bf16.mxu0 %v659
      %827 = vmatmul.mubr.bf16.gmra.mrb[0].mxu0 %v481
      %v828 = vpop.f32.mrb[0].mxu0
      %v829 = vadd.f32 %v271, %v828
      %v830 = vpop.f32.mrb[0].mxu0
      %v831 = vpop.f32.mrb[0].mxu0
      %v832 = vadd.f32 %v271, %v831
      %v833 = vpop.f32.mrb[0].mxu0
      %834 = vmatprep.mubr.bf16.mxu0 %v662
      %835 = vmatmul.mubr.bf16.gmra.mrb[0].mxu0 %v483
      %v836 = vpop.f32.mrb[0].mxu0
      %v837 = vadd.f32 %v271, %v836
      %v838 = vpop.f32.mrb[0].mxu0
      %v839 = vpop.f32.mrb[0].mxu0
      %v840 = vadd.f32 %v271, %v839
      %v841 = vpop.f32.mrb[0].mxu0
      %842 = vmatprep.mubr.bf16.mxu0 %v665
      %843 = vmatmul.mubr.bf16.gmra.mrb[0].mxu0 %v485
      %v844 = vpop.f32.mrb[0].mxu0
      %v845 = vadd.f32 %v271, %v844
      %v846 = vpop.f32.mrb[0].mxu0
      %v847 = vpop.f32.mrb[0].mxu0
      %v848 = vadd.f32 %v271, %v847
      %v849 = vpop.f32.mrb[0].mxu0
      %850 = vmatprep.mubr.bf16.mxu0 %v668
      %851 = vmatmul.mubr.bf16.gmra.mrb[0].mxu0 %v487
      %v852 = vpop.f32.mrb[0].mxu0
      %v853 = vadd.f32 %v271, %v852
      %v854 = vpop.f32.mrb[0].mxu0
      %v855 = vpop.f32.mrb[0].mxu0
      %v856 = vadd.f32 %v271, %v855
      %v857 = vpop.f32.mrb[0].mxu0
      %858 = vmatprep.mubr.bf16.mxu0 %v671
      %859 = vmatmul.mubr.bf16.gmra.mrb[0].mxu0 %v489
      %v860 = vpop.f32.mrb[0].mxu0
      %v861 = vadd.f32 %v271, %v860
      %v862 = vpop.f32.mrb[0].mxu0
      %v863 = vpop.f32.mrb[0].mxu0
      %v864 = vadd.f32 %v271, %v863
      %v865 = vpop.f32.mrb[0].mxu0
      %866 = vmatprep.mubr.bf16.mxu0 %v674
      %867 = vmatmul.mubr.bf16.gmra.mrb[0].mxu0 %v491
      %v868 = vpop.f32.mrb[0].mxu0
      %v869 = vadd.f32 %v271, %v868
      %v870 = vpop.f32.mrb[0].mxu0
      %v871 = vpop.f32.mrb[0].mxu0
      %v872 = vadd.f32 %v271, %v871
      %v873 = vpop.f32.mrb[0].mxu0
      %874 = vmatprep.mubr.bf16.mxu0 %v677
      %875 = vmatmul.mubr.bf16.gmra.mrb[0].mxu0 %v493
      %v876 = vpop.f32.mrb[0].mxu0
      %v877 = vadd.f32 %v271, %v876
      %v878 = vpop.f32.mrb[0].mxu0
      %v879 = vpop.f32.mrb[0].mxu0
      %v880 = vadd.f32 %v271, %v879
      %v881 = vpop.f32.mrb[0].mxu0
      %882 = vmatprep.mubr.bf16.mxu0 %v680
      %883 = vmatmul.mubr.bf16.gmra.mrb[0].mxu0 %v495
      %v884 = vpop.f32.mrb[0].mxu0
      %v885 = vadd.f32 %v271, %v884
      %v886 = vpop.f32.mrb[0].mxu0
      %v887 = vpop.f32.mrb[0].mxu0
      %v888 = vadd.f32 %v271, %v887
      %v889 = vpop.f32.mrb[0].mxu0
      %890 = vmatprep.mubr.bf16.mxu0 %v683
      %891 = vmatmul.mubr.bf16.gmra.mrb[0].mxu0 %v497
      %v892 = vpop.f32.mrb[0].mxu0
      %v893 = vadd.f32 %v271, %v892
      %v894 = vpop.f32.mrb[0].mxu0
      %v895 = vpop.f32.mrb[0].mxu0
      %v896 = vadd.f32 %v271, %v895
      %v897 = vpop.f32.mrb[0].mxu0
      %898 = vmatprep.mubr.bf16.mxu0 %v686
      %899 = vmatmul.mubr.bf16.gmra.mrb[0].mxu0 %v499
      %v900 = vpop.f32.mrb[0].mxu0
      %v901 = vadd.f32 %v271, %v900
      %v902 = vpop.f32.mrb[0].mxu0
      %v903 = vpop.f32.mrb[0].mxu0
      %v904 = vadd.f32 %v271, %v903
      %v905 = vpop.f32.mrb[0].mxu0
      %906 = vmatprep.mubr.bf16.mxu0 %v689
      %907 = vmatmul.mubr.bf16.gmra.mrb[0].mxu0 %v501
      %v908 = vpop.f32.mrb[0].mxu0
      %v909 = vadd.f32 %v271, %v908
      %v910 = vpop.f32.mrb[0].mxu0
      %v911 = vpop.f32.mrb[0].mxu0
      %v912 = vadd.f32 %v271, %v911
      %v913 = vpop.f32.mrb[0].mxu0
      %914 = vmatprep.mubr.bf16.mxu0 %v692
      %915 = vmatmul.mubr.bf16.gmra.mrb[0].mxu0 %v503
      %v916 = vpop.f32.mrb[0].mxu0
      %v917 = vadd.f32 %v271, %v916
      %v918 = vpop.f32.mrb[0].mxu0
      %v919 = vpop.f32.mrb[0].mxu0
      %v920 = vadd.f32 %v271, %v919
      %v921 = vpop.f32.mrb[0].mxu0
      %922 = vmatprep.mubr.bf16.mxu0 %v695
      %923 = vmatmul.mubr.bf16.gmra.mrb[0].mxu0 %v505
      %v924 = vpop.f32.mrb[0].mxu0
      %v925 = vadd.f32 %v271, %v924
      %v926 = vpop.f32.mrb[0].mxu0
      %v927 = vpop.f32.mrb[0].mxu0
      %v928 = vadd.f32 %v271, %v927
      %v929 = vpop.f32.mrb[0].mxu0
      %930 = vmatprep.mubr.bf16.mxu0 %v698
      %931 = vmatmul.mubr.bf16.gmra.mrb[0].mxu0 %v507
      %v932 = vpop.f32.mrb[0].mxu0
      %v933 = vadd.f32 %v271, %v932
      %v934 = vpop.f32.mrb[0].mxu0
      %v935 = vpop.f32.mrb[0].mxu0
      %v936 = vadd.f32 %v271, %v935
      %v937 = vpop.f32.mrb[0].mxu0
      %938 = vmatprep.mubr.bf16.mxu0 %v701
      %939 = vmatmul.mubr.bf16.gmra.mrb[0].mxu0 %v509
      %v940 = vpop.f32.mrb[0].mxu0
      %v941 = vadd.f32 %v271, %v940
      %v942 = vpop.f32.mrb[0].mxu0
      %v943 = vpop.f32.mrb[0].mxu0
      %v944 = vadd.f32 %v271, %v943
      %v945 = vpop.f32.mrb[0].mxu0
      %946 = vmatprep.mubr.bf16.mxu0 %v704
      %947 = vmatmul.mubr.bf16.gmra.mrb[0].mxu0 %v511
      %v948 = vpop.f32.mrb[0].mxu0
      %v949 = vadd.f32 %v271, %v948
      %v950 = vpop.f32.mrb[0].mxu0
      %v951 = vpop.f32.mrb[0].mxu0
      %v952 = vadd.f32 %v271, %v951
      %v953 = vpop.f32.mrb[0].mxu0
      %954 = vmatprep.mubr.bf16.mxu0 %v707
      %955 = vmatmul.mubr.bf16.gmra.mrb[0].mxu0 %v513
      %v956 = vpop.f32.mrb[0].mxu0
      %v957 = vadd.f32 %v271, %v956
      %v958 = vpop.f32.mrb[0].mxu0
      %v959 = vpop.f32.mrb[0].mxu0
      %v960 = vadd.f32 %v271, %v959
      %v961 = vpop.f32.mrb[0].mxu0
      %962 = vmatprep.mubr.bf16.mxu0 %v710
      %963 = vmatmul.mubr.bf16.gmra.mrb[0].mxu0 %v515
      %v964 = vpop.f32.mrb[0].mxu0
      %v965 = vadd.f32 %v271, %v964
      %v966 = vpop.f32.mrb[0].mxu0
      %v967 = vpop.f32.mrb[0].mxu0
      %v968 = vadd.f32 %v271, %v967
      %v969 = vpop.f32.mrb[0].mxu0
      %970 = vmatprep.mubr.bf16.mxu0 %v713
      %971 = vmatmul.mubr.bf16.gmra.mrb[0].mxu0 %v517
      %v972 = vpop.f32.mrb[0].mxu0
      %v973 = vadd.f32 %v271, %v972
      %v974 = vpop.f32.mrb[0].mxu0
      %v975 = vpop.f32.mrb[0].mxu0
      %v976 = vadd.f32 %v271, %v975
      %v977 = vpop.f32.mrb[0].mxu0
      %978 = vmatprep.mubr.bf16.mxu0 %v716
      %979 = vmatmul.mubr.bf16.gmra.mrb[0].mxu0 %v519
      %v980 = vpop.f32.mrb[0].mxu0
      %v981 = vadd.f32 %v271, %v980
      %v982 = vpop.f32.mrb[0].mxu0
      %v983 = vpop.f32.mrb[0].mxu0
      %v984 = vadd.f32 %v271, %v983
      %v985 = vpop.f32.mrb[0].mxu0
      %986 = vmatprep.mubr.bf16.mxu0 %v719
      %987 = vmatmul.mubr.bf16.gmra.mrb[0].mxu0 %v521
      %v988 = vpop.f32.mrb[0].mxu0
      %v989 = vadd.f32 %v271, %v988
      %v990 = vpop.f32.mrb[0].mxu0
      %v991 = vpop.f32.mrb[0].mxu0
      %v992 = vadd.f32 %v271, %v991
      %v993 = vpop.f32.mrb[0].mxu0
      %994 = vmatprep.mubr.bf16.mxu0 %v722
      %995 = vmatmul.mubr.bf16.gmra.mrb[0].mxu0 %v523
      %v996 = vpop.f32.mrb[0].mxu0
      %v997 = vadd.f32 %v271, %v996
      %v998 = vpop.f32.mrb[0].mxu0
      %v999 = vpop.f32.mrb[0].mxu0
      %v1000 = vadd.f32 %v271, %v999
      %v1001 = vpop.f32.mrb[0].mxu0
      %1002 = vmatprep.mubr.bf16.mxu0 %v725
      %1003 = vmatmul.mubr.bf16.gmra.mrb[0].mxu0 %v525
      %v1004 = vpop.f32.mrb[0].mxu0
      %v1005 = vadd.f32 %v271, %v1004
      %v1006 = vpop.f32.mrb[0].mxu0
      %v1007 = vpop.f32.mrb[0].mxu0
      %v1008 = vadd.f32 %v271, %v1007
      %v1009 = vpop.f32.mrb[0].mxu0
      %1010 = vmatprep.mubr.bf16.mxu0 %v728
      %1011 = vmatmul.mubr.bf16.gmra.mrb[0].mxu0 %v527
      %v1012 = vpop.f32.mrb[0].mxu0
      %v1013 = vadd.f32 %v271, %v1012
      %v1014 = vpop.f32.mrb[0].mxu0
      %v1015 = vpop.f32.mrb[0].mxu0
      %v1016 = vadd.f32 %v271, %v1015
      %v1017 = vpop.f32.mrb[0].mxu0
      %1018 = vdwg.mxu0
      %v1019 = vmax.f32 %v765, 0.0
      %v1020 = vmax.f32 %v768, 0.0
      %v1021 = vmax.f32 %v773, 0.0
      %v1022 = vmax.f32 %v776, 0.0
      %v1023 = vmax.f32 %v781, 0.0
      %v1024 = vmax.f32 %v784, 0.0
      %v1025 = vmax.f32 %v789, 0.0
      %v1026 = vmax.f32 %v792, 0.0
      %v1027 = vmax.f32 %v797, 0.0
      %v1028 = vmax.f32 %v800, 0.0
      %v1029 = vmax.f32 %v805, 0.0
      %v1030 = vmax.f32 %v808, 0.0
      %v1031 = vmax.f32 %v813, 0.0
      %v1032 = vmax.f32 %v816, 0.0
      %v1033 = vmax.f32 %v821, 0.0
      %v1034 = vmax.f32 %v824, 0.0
      %v1035 = vmax.f32 %v829, 0.0
      %v1036 = vmax.f32 %v832, 0.0
      %v1037 = vmax.f32 %v837, 0.0
      %v1038 = vmax.f32 %v840, 0.0
      %v1039 = vmax.f32 %v845, 0.0
      %v1040 = vmax.f32 %v848, 0.0
      %v1041 = vmax.f32 %v853, 0.0
      %v1042 = vmax.f32 %v856, 0.0
      %v1043 = vmax.f32 %v861, 0.0
      %v1044 = vmax.f32 %v864, 0.0
      %v1045 = vmax.f32 %v869, 0.0
      %v1046 = vmax.f32 %v872, 0.0
      %v1047 = vmax.f32 %v877, 0.0
      %v1048 = vmax.f32 %v880, 0.0
      %v1049 = vmax.f32 %v885, 0.0
      %v1050 = vmax.f32 %v888, 0.0
      %v1051 = vmax.f32 %v893, 0.0
      %v1052 = vmax.f32 %v896, 0.0
      %v1053 = vmax.f32 %v901, 0.0
      %v1054 = vmax.f32 %v904, 0.0
      %v1055 = vmax.f32 %v909, 0.0
      %v1056 = vmax.f32 %v912, 0.0
      %v1057 = vmax.f32 %v917, 0.0
      %v1058 = vmax.f32 %v920, 0.0
      %v1059 = vmax.f32 %v925, 0.0
      %v1060 = vmax.f32 %v928, 0.0
      %v1061 = vmax.f32 %v933, 0.0
      %v1062 = vmax.f32 %v936, 0.0
      %v1063 = vmax.f32 %v941, 0.0
      %v1064 = vmax.f32 %v944, 0.0
      %v1065 = vmax.f32 %v949, 0.0
      %v1066 = vmax.f32 %v952, 0.0
      %v1067 = vmax.f32 %v957, 0.0
      %v1068 = vmax.f32 %v960, 0.0
      %v1069 = vmax.f32 %v965, 0.0
      %v1070 = vmax.f32 %v968, 0.0
      %v1071 = vmax.f32 %v973, 0.0
      %v1072 = vmax.f32 %v976, 0.0
      %v1073 = vmax.f32 %v981, 0.0
      %v1074 = vmax.f32 %v984, 0.0
      %v1075 = vmax.f32 %v989, 0.0
      %v1076 = vmax.f32 %v992, 0.0
      %v1077 = vmax.f32 %v997, 0.0
      %v1078 = vmax.f32 %v1000, 0.0
      %v1079 = vmax.f32 %v1005, 0.0
      %v1080 = vmax.f32 %v1008, 0.0
      %v1081 = vmax.f32 %v1013, 0.0
      %v1082 = vmax.f32 %v1016, 0.0
      %1083 = vst [vmem:[%s175] sm:$0xff] %v1019
      %1084 = vst [vmem:[%s175 + $0x8] sm:$0xff] %v1020
      %1085 = vst [vmem:[%s175 + $0x10] sm:$0xff] %v1021
      %1086 = vst [vmem:[%s175 + $0x18] sm:$0xff] %v1022
      %1087 = vst [vmem:[%s175 + $0x20] sm:$0xff] %v1023
      %1088 = vst [vmem:[%s175 + $0x28] sm:$0xff] %v1024
      %1089 = vst [vmem:[%s175 + $0x30] sm:$0xff] %v1025
      %1090 = vst [vmem:[%s175 + $0x38] sm:$0xff] %v1026
      %1091 = vst [vmem:[%s175 + $0x40] sm:$0xff] %v1027
      %1092 = vst [vmem:[%s175 + $0x48] sm:$0xff] %v1028
      %1093 = vst [vmem:[%s175 + $0x50] sm:$0xff] %v1029
      %1094 = vst [vmem:[%s175 + $0x58] sm:$0xff] %v1030
      %1095 = vst [vmem:[%s175 + $0x60] sm:$0xff] %v1031
      %1096 = vst [vmem:[%s175 + $0x68] sm:$0xff] %v1032
      %1097 = vst [vmem:[%s175 + $0x70] sm:$0xff] %v1033
      %1098 = vst [vmem:[%s175 + $0x78] sm:$0xff] %v1034
      %1099 = vst [vmem:[%s175 + $0x80] sm:$0xff] %v1035
      %1100 = vst [vmem:[%s175 + $0x88] sm:$0xff] %v1036
      %1101 = vst [vmem:[%s175 + $0x90] sm:$0xff] %v1037
      %1102 = vst [vmem:[%s175 + $0x98] sm:$0xff] %v1038
      %1103 = vst [vmem:[%s175 + $0xa0] sm:$0xff] %v1039
      %1104 = vst [vmem:[%s175 + $0xa8] sm:$0xff] %v1040
      %1105 = vst [vmem:[%s175 + $0xb0] sm:$0xff] %v1041
      %1106 = vst [vmem:[%s175 + $0xb8] sm:$0xff] %v1042
      %1107 = vst [vmem:[%s175 + $0xc0] sm:$0xff] %v1043
      %1108 = vst [vmem:[%s175 + $0xc8] sm:$0xff] %v1044
      %1109 = vst [vmem:[%s175 + $0xd0] sm:$0xff] %v1045
      %1110 = vst [vmem:[%s175 + $0xd8] sm:$0xff] %v1046
      %1111 = vst [vmem:[%s175 + $0xe0] sm:$0xff] %v1047
      %1112 = vst [vmem:[%s175 + $0xe8] sm:$0xff] %v1048
      %1113 = vst [vmem:[%s175 + $0xf0] sm:$0xff] %v1049
      %1114 = vst [vmem:[%s175 + $0xf8] sm:$0xff] %v1050
      %1115 = vst [vmem:[%s175 + $0x100] sm:$0xff] %v1051
      %1116 = vst [vmem:[%s175 + $0x108] sm:$0xff] %v1052
      %1117 = vst [vmem:[%s175 + $0x110] sm:$0xff] %v1053
      %1118 = vst [vmem:[%s175 + $0x118] sm:$0xff] %v1054
      %1119 = vst [vmem:[%s175 + $0x120] sm:$0xff] %v1055
      %1120 = vst [vmem:[%s175 + $0x128] sm:$0xff] %v1056
      %1121 = vst [vmem:[%s175 + $0x130] sm:$0xff] %v1057
      %1122 = vst [vmem:[%s175 + $0x138] sm:$0xff] %v1058
      %1123 = vst [vmem:[%s175 + $0x140] sm:$0xff] %v1059
      %1124 = vst [vmem:[%s175 + $0x148] sm:$0xff] %v1060
      %1125 = vst [vmem:[%s175 + $0x150] sm:$0xff] %v1061
      %1126 = vst [vmem:[%s175 + $0x158] sm:$0xff] %v1062
      %1127 = vst [vmem:[%s175 + $0x160] sm:$0xff] %v1063
      %1128 = vst [vmem:[%s175 + $0x168] sm:$0xff] %v1064
      %1129 = vst [vmem:[%s175 + $0x170] sm:$0xff] %v1065
      %1130 = vst [vmem:[%s175 + $0x178] sm:$0xff] %v1066
      %1131 = vst [vmem:[%s175 + $0x180] sm:$0xff] %v1067
      %1132 = vst [vmem:[%s175 + $0x188] sm:$0xff] %v1068
      %1133 = vst [vmem:[%s175 + $0x190] sm:$0xff] %v1069
      %1134 = vst [vmem:[%s175 + $0x198] sm:$0xff] %v1070
      %1135 = vst [vmem:[%s175 + $0x1a0] sm:$0xff] %v1071
      %1136 = vst [vmem:[%s175 + $0x1a8] sm:$0xff] %v1072
      %1137 = vst [vmem:[%s175 + $0x1b0] sm:$0xff] %v1073
      %1138 = vst [vmem:[%s175 + $0x1b8] sm:$0xff] %v1074
      %1139 = vst [vmem:[%s175 + $0x1c0] sm:$0xff] %v1075
      %1140 = vst [vmem:[%s175 + $0x1c8] sm:$0xff] %v1076
      %1141 = vst [vmem:[%s175 + $0x1d0] sm:$0xff] %v1077
      %1142 = vst [vmem:[%s175 + $0x1d8] sm:$0xff] %v1078
      %1143 = vst [vmem:[%s175 + $0x1e0] sm:$0xff] %v1079
      %1144 = vst [vmem:[%s175 + $0x1e8] sm:$0xff] %v1080
      %1145 = vst [vmem:[%s175 + $0x1f0] sm:$0xff] %v1081
      %1146 = vst [vmem:[%s175 + $0x1f8] sm:$0xff] %v1082
      %s1147 = smul.u32 64, %s14
      %p1148 = scmp.lt.s32.totalorder %s1147, 127
      %s1149 = scalar_select %p1148, %s1147, 127
      %s1150 = smul.addr %s1149, 8
      %s1151 = scalar_lea.vmem %s3, %s1150
      // Predicated region
      $region33: #{generator_forward.12} parent=31 // pred_check
        %p1152 = pneg %p100
      $region34: #{generator_forward.12} parent=31 // pred_check_branch
        %1154 = sbr.rel (%p1152) target = $region36
      $region35: #{generator_forward.12} parent=31 // pred_region
        %s1155 = smul.u32 64, %s14
      $region36: #{generator_forward.12} parent=31 // pred_fallthru
        _
    $region32: #{generator_forward.12} parent=5 // pred_fallthru
      _
    %p1156 = scmp.le.s32.totalorder 2, %s9
    // Predicated region
    $region37: #{generator_forward.12} parent=5 // pred_check
      %p1157 = pneg %p1156
    $region38: #{generator_forward.12} parent=5 // pred_check_branch
      %1159 = sbr.rel (%p1157) target = $region40
    $region39: #{generator_forward.12} parent=5 // pred_region
      %s1160 = ssub.s32 %s9, 2
      // Predicated region
      $region41: #{generator_forward.12} parent=39 // pred_check
        %p1161 = pneg %p106
      $region42: #{generator_forward.12} parent=39 // pred_check_branch
        %1163 = sbr.rel (%p1161) target = $region44
      $region43: #{generator_forward.12} parent=39 // pred_region
        %s1164 = smul.u32 64, %s15
        %p1165 = scmp.lt.s32.totalorder %s1164, 127
        %s1166 = scalar_select %p1165, %s1164, 127
        %s1167 = smul.addr %s1166, 8
        %s1168 = scalar_lea.vmem %s3, %s1167
      $region44: #{generator_forward.12} parent=39 // pred_fallthru
        _
    $region40: #{generator_forward.12} parent=5 // pred_fallthru
      _
  $region6: #{generator_forward.12} parent=0 // loop_footer
    %s13 = sadd.s32 1, %s9
  $region7: #{generator_forward.12} parent=0 // loop_footer_branch
    %8 = sbr.rel target = $region3
  $region8: #{generator_forward.12} parent=0 // loop_exit
    _

// kernel: generator_forward.13
$region0: #{generator_forward.13}
  #allocation0 [shape = 'u32[]', space=smem, size = 0x4, offset = 0x4, fixed_abs, tag = 'smem constant byte address 0x4 - core index']
  #allocation1 [shape = 'u32[144,128]{1,0:T(1,128)}', space=vmem, size = 0x12000, scoped, tag = 'internal scratch']
  %s0 = inlined_call_operand.vmem [shape: bf16[128,512], index: 0, kind: input, shape index: {}]
  %s1 = inlined_call_operand.vmem [shape: bf16[512,128], index: 1, kind: input, shape index: {}]
  %s2 = inlined_call_operand.vmem [shape: f32[1,128], index: 2, kind: input, shape index: {}]
  %s3 = inlined_call_operand.vmem [shape: f32[128,128], index: 3, kind: output, shape index: {}]
  %s4 = sld [smem:[#allocation0]]
  $region22: #{generator_forward.13} parent=0
    _
  %s6 = ssub.s32 1, %s4
  %s7 = scalar_select 0, %s6, %s4
  // Predicated region
  $region2: #{generator_forward.13} parent=0 // pred_check
    _
  $region3: #{generator_forward.13} parent=0 // pred_check_branch
    %9 = sbr.rel (0) target = $region5
  $region4: #{generator_forward.13} parent=0 // pred_region
    _
  $region5: #{generator_forward.13} parent=0 // pred_fallthru
    _
  // Predicated region
  $region6: #{generator_forward.13} parent=0 // pred_check
    _
  $region7: #{generator_forward.13} parent=0 // pred_check_branch
    %11 = sbr.rel (0) target = $region9
  $region8: #{generator_forward.13} parent=0 // pred_region
    _
  $region9: #{generator_forward.13} parent=0 // pred_fallthru
    _
  // Predicated region
  $region10: #{generator_forward.13} parent=0 // pred_check
    _
  $region11: #{generator_forward.13} parent=0 // pred_check_branch
    %13 = sbr.rel (0) target = $region13
  $region12: #{generator_forward.13} parent=0 // pred_region
    _
  $region13: #{generator_forward.13} parent=0 // pred_fallthru
    _
  %v15 = vld [vmem:[%s0] sm:$0xff]
  %v16 = vld [vmem:[%s0 + $0x8] sm:$0xff]
  %v17 = vld [vmem:[%s0 + $0x10] sm:$0xff]
  %v18 = vld [vmem:[%s0 + $0x18] sm:$0xff]
  %v19 = vld [vmem:[%s0 + $0x20] sm:$0xff]
  %v20 = vld [vmem:[%s0 + $0x28] sm:$0xff]
  %v21 = vld [vmem:[%s0 + $0x30] sm:$0xff]
  %v22 = vld [vmem:[%s0 + $0x38] sm:$0xff]
  %v23 = vld [vmem:[%s0 + $0x40] sm:$0xff]
  %v24 = vld [vmem:[%s0 + $0x48] sm:$0xff]
  %v25 = vld [vmem:[%s0 + $0x50] sm:$0xff]
  %v26 = vld [vmem:[%s0 + $0x58] sm:$0xff]
  %v27 = vld [vmem:[%s0 + $0x60] sm:$0xff]
  %v28 = vld [vmem:[%s0 + $0x68] sm:$0xff]
  %v29 = vld [vmem:[%s0 + $0x70] sm:$0xff]
  %v30 = vld [vmem:[%s0 + $0x78] sm:$0xff]
  %v31 = vld [vmem:[%s0 + $0x80] sm:$0xff]
  %v32 = vld [vmem:[%s0 + $0x88] sm:$0xff]
  %v33 = vld [vmem:[%s0 + $0x90] sm:$0xff]
  %v34 = vld [vmem:[%s0 + $0x98] sm:$0xff]
  %v35 = vld [vmem:[%s0 + $0xa0] sm:$0xff]
  %v36 = vld [vmem:[%s0 + $0xa8] sm:$0xff]
  %v37 = vld [vmem:[%s0 + $0xb0] sm:$0xff]
  %v38 = vld [vmem:[%s0 + $0xb8] sm:$0xff]
  %v39 = vld [vmem:[%s0 + $0xc0] sm:$0xff]
  %v40 = vld [vmem:[%s0 + $0xc8] sm:$0xff]
  %v41 = vld [vmem:[%s0 + $0xd0] sm:$0xff]
  %v42 = vld [vmem:[%s0 + $0xd8] sm:$0xff]
  %v43 = vld [vmem:[%s0 + $0xe0] sm:$0xff]
  %v44 = vld [vmem:[%s0 + $0xe8] sm:$0xff]
  %v45 = vld [vmem:[%s0 + $0xf0] sm:$0xff]
  %v46 = vld [vmem:[%s0 + $0xf8] sm:$0xff]
  %v47 = vld [vmem:[%s1] sm:$0xf]
  %v48 = vld [vmem:[%s1 + $0x4] sm:$0xf]
  %v49 = vld [vmem:[%s1 + $0x8] sm:$0xf]
  %v50 = vld [vmem:[%s1 + $0xc] sm:$0xf]
  %v51 = vld [vmem:[%s1 + $0x10] sm:$0xf]
  %v52 = vld [vmem:[%s1 + $0x14] sm:$0xf]
  %v53 = vld [vmem:[%s1 + $0x18] sm:$0xf]
  %v54 = vld [vmem:[%s1 + $0x1c] sm:$0xf]
  %v55 = vld [vmem:[%s1 + $0x20] sm:$0xf]
  %v56 = vld [vmem:[%s1 + $0x24] sm:$0xf]
  %v57 = vld [vmem:[%s1 + $0x28] sm:$0xf]
  %v58 = vld [vmem:[%s1 + $0x2c] sm:$0xf]
  %v59 = vld [vmem:[%s1 + $0x30] sm:$0xf]
  %v60 = vld [vmem:[%s1 + $0x34] sm:$0xf]
  %v61 = vld [vmem:[%s1 + $0x38] sm:$0xf]
  %v62 = vld [vmem:[%s1 + $0x3c] sm:$0xf]
  %v63 = vld [vmem:[%s1 + $0x40] sm:$0xf]
  %v64 = vld [vmem:[%s1 + $0x44] sm:$0xf]
  %v65 = vld [vmem:[%s1 + $0x48] sm:$0xf]
  %v66 = vld [vmem:[%s1 + $0x4c] sm:$0xf]
  %v67 = vld [vmem:[%s1 + $0x50] sm:$0xf]
  %v68 = vld [vmem:[%s1 + $0x54] sm:$0xf]
  %v69 = vld [vmem:[%s1 + $0x58] sm:$0xf]
  %v70 = vld [vmem:[%s1 + $0x5c] sm:$0xf]
  %v71 = vld [vmem:[%s1 + $0x60] sm:$0xf]
  %v72 = vld [vmem:[%s1 + $0x64] sm:$0xf]
  %v73 = vld [vmem:[%s1 + $0x68] sm:$0xf]
  %v74 = vld [vmem:[%s1 + $0x6c] sm:$0xf]
  %v75 = vld [vmem:[%s1 + $0x70] sm:$0xf]
  %v76 = vld [vmem:[%s1 + $0x74] sm:$0xf]
  %v77 = vld [vmem:[%s1 + $0x78] sm:$0xf]
  %v78 = vld [vmem:[%s1 + $0x7c] sm:$0xf]
  %v79 = vld [vmem:[%s1 + $0x80] sm:$0xf]
  %v80 = vld [vmem:[%s1 + $0x84] sm:$0xf]
  %v81 = vld [vmem:[%s1 + $0x88] sm:$0xf]
  %v82 = vld [vmem:[%s1 + $0x8c] sm:$0xf]
  %v83 = vld [vmem:[%s1 + $0x90] sm:$0xf]
  %v84 = vld [vmem:[%s1 + $0x94] sm:$0xf]
  %v85 = vld [vmem:[%s1 + $0x98] sm:$0xf]
  %v86 = vld [vmem:[%s1 + $0x9c] sm:$0xf]
  %v87 = vld [vmem:[%s1 + $0xa0] sm:$0xf]
  %v88 = vld [vmem:[%s1 + $0xa4] sm:$0xf]
  %v89 = vld [vmem:[%s1 + $0xa8] sm:$0xf]
  %v90 = vld [vmem:[%s1 + $0xac] sm:$0xf]
  %v91 = vld [vmem:[%s1 + $0xb0] sm:$0xf]
  %v92 = vld [vmem:[%s1 + $0xb4] sm:$0xf]
  %v93 = vld [vmem:[%s1 + $0xb8] sm:$0xf]
  %v94 = vld [vmem:[%s1 + $0xbc] sm:$0xf]
  %v95 = vld [vmem:[%s1 + $0xc0] sm:$0xf]
  %v96 = vld [vmem:[%s1 + $0xc4] sm:$0xf]
  %v97 = vld [vmem:[%s1 + $0xc8] sm:$0xf]
  %v98 = vld [vmem:[%s1 + $0xcc] sm:$0xf]
  %v99 = vld [vmem:[%s1 + $0xd0] sm:$0xf]
  %v100 = vld [vmem:[%s1 + $0xd4] sm:$0xf]
  %v101 = vld [vmem:[%s1 + $0xd8] sm:$0xf]
  %v102 = vld [vmem:[%s1 + $0xdc] sm:$0xf]
  %v103 = vld [vmem:[%s1 + $0xe0] sm:$0xf]
  %v104 = vld [vmem:[%s1 + $0xe4] sm:$0xf]
  %v105 = vld [vmem:[%s1 + $0xe8] sm:$0xf]
  %v106 = vld [vmem:[%s1 + $0xec] sm:$0xf]
  %v107 = vld [vmem:[%s1 + $0xf0] sm:$0xf]
  %v108 = vld [vmem:[%s1 + $0xf4] sm:$0xf]
  %v109 = vld [vmem:[%s1 + $0xf8] sm:$0xf]
  %v110 = vld [vmem:[%s1 + $0xfc] sm:$0xf]
  %v111 = vld [vmem:[%s2] sm:$0x1]
  %v113 = vlaneseq
  %v114 = vshrl.u32 %v113, 7
  %v115 = vsub.s32 0, %v114
  %v116 = vrot.slane %v111, %v115
  %v150 = vunpack.c.l.b16 %v15
  %v151 = vunpack.c.h.b16 %v15
  %v152 = vunpack.c.l.b16 %v16
  %v153 = vunpack.c.h.b16 %v16
  %v154 = vunpack.c.l.b16 %v17
  %v155 = vunpack.c.h.b16 %v17
  %v156 = vunpack.c.l.b16 %v18
  %v157 = vunpack.c.h.b16 %v18
  %v158 = vunpack.c.l.b16 %v19
  %v159 = vunpack.c.h.b16 %v19
  %v160 = vunpack.c.l.b16 %v20
  %v161 = vunpack.c.h.b16 %v20
  %v162 = vunpack.c.l.b16 %v21
  %v163 = vunpack.c.h.b16 %v21
  %v164 = vunpack.c.l.b16 %v22
  %v165 = vunpack.c.h.b16 %v22
  %v166 = vunpack.c.l.b16 %v23
  %v167 = vunpack.c.h.b16 %v23
  %v168 = vunpack.c.l.b16 %v24
  %v169 = vunpack.c.h.b16 %v24
  %v170 = vunpack.c.l.b16 %v25
  %v171 = vunpack.c.h.b16 %v25
  %v172 = vunpack.c.l.b16 %v26
  %v173 = vunpack.c.h.b16 %v26
  %v174 = vunpack.c.l.b16 %v27
  %v175 = vunpack.c.h.b16 %v27
  %v176 = vunpack.c.l.b16 %v28
  %v177 = vunpack.c.h.b16 %v28
  %v178 = vunpack.c.l.b16 %v29
  %v179 = vunpack.c.h.b16 %v29
  %v180 = vunpack.c.l.b16 %v30
  %v181 = vunpack.c.h.b16 %v30
  %v182 = vunpack.c.l.b16 %v31
  %v183 = vunpack.c.h.b16 %v31
  %v184 = vunpack.c.l.b16 %v32
  %v185 = vunpack.c.h.b16 %v32
  %v186 = vunpack.c.l.b16 %v33
  %v187 = vunpack.c.h.b16 %v33
  %v188 = vunpack.c.l.b16 %v34
  %v189 = vunpack.c.h.b16 %v34
  %v190 = vunpack.c.l.b16 %v35
  %v191 = vunpack.c.h.b16 %v35
  %v192 = vunpack.c.l.b16 %v36
  %v193 = vunpack.c.h.b16 %v36
  %v194 = vunpack.c.l.b16 %v37
  %v195 = vunpack.c.h.b16 %v37
  %v196 = vunpack.c.l.b16 %v38
  %v197 = vunpack.c.h.b16 %v38
  %v198 = vunpack.c.l.b16 %v39
  %v199 = vunpack.c.h.b16 %v39
  %v200 = vunpack.c.l.b16 %v40
  %v201 = vunpack.c.h.b16 %v40
  %v202 = vunpack.c.l.b16 %v41
  %v203 = vunpack.c.h.b16 %v41
  %v204 = vunpack.c.l.b16 %v42
  %v205 = vunpack.c.h.b16 %v42
  %v206 = vunpack.c.l.b16 %v43
  %v207 = vunpack.c.h.b16 %v43
  %v208 = vunpack.c.l.b16 %v44
  %v209 = vunpack.c.h.b16 %v44
  %v210 = vunpack.c.l.b16 %v45
  %v211 = vunpack.c.h.b16 %v45
  %v212 = vunpack.c.l.b16 %v46
  %v213 = vunpack.c.h.b16 %v46
  %v214 = vpack.c.b16 %v154, %v150
  %v215 = vpack.c.b16 %v155, %v151
  %v216 = vpack.c.b16 %v156, %v152
  %v217 = vpack.c.b16 %v157, %v153
  %v218 = vpack.c.b16 %v162, %v158
  %v219 = vpack.c.b16 %v163, %v159
  %v220 = vpack.c.b16 %v164, %v160
  %v221 = vpack.c.b16 %v165, %v161
  %v222 = vpack.c.b16 %v170, %v166
  %v223 = vpack.c.b16 %v171, %v167
  %v224 = vpack.c.b16 %v172, %v168
  %v225 = vpack.c.b16 %v173, %v169
  %v226 = vpack.c.b16 %v178, %v174
  %v227 = vpack.c.b16 %v179, %v175
  %v228 = vpack.c.b16 %v180, %v176
  %v229 = vpack.c.b16 %v181, %v177
  %v230 = vpack.c.b16 %v186, %v182
  %v231 = vpack.c.b16 %v187, %v183
  %v232 = vpack.c.b16 %v188, %v184
  %v233 = vpack.c.b16 %v189, %v185
  %v234 = vpack.c.b16 %v194, %v190
  %v235 = vpack.c.b16 %v195, %v191
  %v236 = vpack.c.b16 %v196, %v192
  %v237 = vpack.c.b16 %v197, %v193
  %v238 = vpack.c.b16 %v202, %v198
  %v239 = vpack.c.b16 %v203, %v199
  %v240 = vpack.c.b16 %v204, %v200
  %v241 = vpack.c.b16 %v205, %v201
  %v242 = vpack.c.b16 %v210, %v206
  %v243 = vpack.c.b16 %v211, %v207
  %v244 = vpack.c.b16 %v212, %v208
  %v245 = vpack.c.b16 %v213, %v209
  %v342 = vunpack.c.l.b16 %v47
  %v343 = vunpack.c.l.b16 %v48
  %v344 = vunpack.c.l.b16 %v49
  %v345 = vunpack.c.l.b16 %v50
  %v346 = vunpack.c.l.b16 %v51
  %v347 = vunpack.c.l.b16 %v52
  %v348 = vunpack.c.l.b16 %v53
  %v349 = vunpack.c.l.b16 %v54
  %v350 = vunpack.c.l.b16 %v55
  %v351 = vunpack.c.l.b16 %v56
  %v352 = vunpack.c.l.b16 %v57
  %v353 = vunpack.c.l.b16 %v58
  %v354 = vunpack.c.l.b16 %v59
  %v355 = vunpack.c.l.b16 %v60
  %v356 = vunpack.c.l.b16 %v61
  %v357 = vunpack.c.l.b16 %v62
  %v358 = vunpack.c.l.b16 %v63
  %v359 = vunpack.c.l.b16 %v64
  %v360 = vunpack.c.l.b16 %v65
  %v361 = vunpack.c.l.b16 %v66
  %v362 = vunpack.c.l.b16 %v67
  %v363 = vunpack.c.l.b16 %v68
  %v364 = vunpack.c.l.b16 %v69
  %v365 = vunpack.c.l.b16 %v70
  %v366 = vunpack.c.l.b16 %v71
  %v367 = vunpack.c.l.b16 %v72
  %v368 = vunpack.c.l.b16 %v73
  %v369 = vunpack.c.l.b16 %v74
  %v370 = vunpack.c.l.b16 %v75
  %v371 = vunpack.c.l.b16 %v76
  %v372 = vunpack.c.l.b16 %v77
  %v373 = vunpack.c.l.b16 %v78
  %v374 = vunpack.c.l.b16 %v79
  %v375 = vunpack.c.l.b16 %v80
  %v376 = vunpack.c.l.b16 %v81
  %v377 = vunpack.c.l.b16 %v82
  %v378 = vunpack.c.l.b16 %v83
  %v379 = vunpack.c.l.b16 %v84
  %v380 = vunpack.c.l.b16 %v85
  %v381 = vunpack.c.l.b16 %v86
  %v382 = vunpack.c.l.b16 %v87
  %v383 = vunpack.c.l.b16 %v88
  %v384 = vunpack.c.l.b16 %v89
  %v385 = vunpack.c.l.b16 %v90
  %v386 = vunpack.c.l.b16 %v91
  %v387 = vunpack.c.l.b16 %v92
  %v388 = vunpack.c.l.b16 %v93
  %v389 = vunpack.c.l.b16 %v94
  %v390 = vunpack.c.l.b16 %v95
  %v391 = vunpack.c.l.b16 %v96
  %v392 = vunpack.c.l.b16 %v97
  %v393 = vunpack.c.l.b16 %v98
  %v394 = vunpack.c.l.b16 %v99
  %v395 = vunpack.c.l.b16 %v100
  %v396 = vunpack.c.l.b16 %v101
  %v397 = vunpack.c.l.b16 %v102
  %v398 = vunpack.c.l.b16 %v103
  %v399 = vunpack.c.l.b16 %v104
  %v400 = vunpack.c.l.b16 %v105
  %v401 = vunpack.c.l.b16 %v106
  %v402 = vunpack.c.l.b16 %v107
  %v403 = vunpack.c.l.b16 %v108
  %v404 = vunpack.c.l.b16 %v109
  %v405 = vunpack.c.l.b16 %v110
  %v406 = vpack.c.b16 %v343, %v342
  %v407 = vpack.c.b16 %v345, %v344
  %v408 = vpack.c.b16 %v347, %v346
  %v409 = vpack.c.b16 %v349, %v348
  %v410 = vpack.c.b16 %v351, %v350
  %v411 = vpack.c.b16 %v353, %v352
  %v412 = vpack.c.b16 %v355, %v354
  %v413 = vpack.c.b16 %v357, %v356
  %v414 = vpack.c.b16 %v359, %v358
  %v415 = vpack.c.b16 %v361, %v360
  %v416 = vpack.c.b16 %v363, %v362
  %v417 = vpack.c.b16 %v365, %v364
  %v418 = vpack.c.b16 %v367, %v366
  %v419 = vpack.c.b16 %v369, %v368
  %v420 = vpack.c.b16 %v371, %v370
  %v421 = vpack.c.b16 %v373, %v372
  %v422 = vpack.c.b16 %v375, %v374
  %v423 = vpack.c.b16 %v377, %v376
  %v424 = vpack.c.b16 %v379, %v378
  %v425 = vpack.c.b16 %v381, %v380
  %v426 = vpack.c.b16 %v383, %v382
  %v427 = vpack.c.b16 %v385, %v384
  %v428 = vpack.c.b16 %v387, %v386
  %v429 = vpack.c.b16 %v389, %v388
  %v430 = vpack.c.b16 %v391, %v390
  %v431 = vpack.c.b16 %v393, %v392
  %v432 = vpack.c.b16 %v395, %v394
  %v433 = vpack.c.b16 %v397, %v396
  %v434 = vpack.c.b16 %v399, %v398
  %v435 = vpack.c.b16 %v401, %v400
  %v436 = vpack.c.b16 %v403, %v402
  %v437 = vpack.c.b16 %v405, %v404
  %470 = vmatprep.subr.bf16.mxu0 0
  %471 = vmatpush1.bf16.msra.mxu0 %v406
  %472 = vmatprep.subr.bf16.mxu0 0
  %473 = vmatpush1.bf16.msra.mxu0 %v407
  %474 = vmatprep.subr.bf16.mxu0 0
  %475 = vmatpush1.bf16.msra.mxu0 %v408
  %476 = vmatprep.subr.bf16.mxu0 0
  %477 = vmatpush1.bf16.msra.mxu0 %v409
  %478 = vmatprep.subr.bf16.mxu0 0
  %479 = vmatpush1.bf16.msra.mxu0 %v410
  %480 = vmatprep.subr.bf16.mxu0 0
  %481 = vmatpush1.bf16.msra.mxu0 %v411
  %482 = vmatprep.subr.bf16.mxu0 0
  %483 = vmatpush1.bf16.msra.mxu0 %v412
  %484 = vmatprep.subr.bf16.mxu0 0
  %485 = vmatpush1.bf16.msra.mxu0 %v413
  %486 = vmatprep.subr.bf16.mxu0 0
  %487 = vmatpush1.bf16.msra.mxu0 %v414
  %488 = vmatprep.subr.bf16.mxu0 0
  %489 = vmatpush1.bf16.msra.mxu0 %v415
  %490 = vmatprep.subr.bf16.mxu0 0
  %491 = vmatpush1.bf16.msra.mxu0 %v416
  %492 = vmatprep.subr.bf16.mxu0 0
  %493 = vmatpush1.bf16.msra.mxu0 %v417
  %494 = vmatprep.subr.bf16.mxu0 0
  %495 = vmatpush1.bf16.msra.mxu0 %v418
  %496 = vmatprep.subr.bf16.mxu0 0
  %497 = vmatpush1.bf16.msra.mxu0 %v419
  %498 = vmatprep.subr.bf16.mxu0 0
  %499 = vmatpush1.bf16.msra.mxu0 %v420
  %500 = vmatprep.subr.bf16.mxu0 0
  %501 = vmatpush1.bf16.msra.mxu0 %v421
  %502 = vmatprep.mubr.bf16.mxu0 %v215
  %503 = vmatmul.mubr.bf16.gmra.mrb[0].mxu0 %v214
  %v504 = vpop.f32.mrb[0].mxu0
  %v505 = vadd.f32 %v116, %v504
  %v506 = vpop.f32.mrb[0].mxu0
  %v507 = vpop.f32.mrb[0].mxu0
  %v508 = vadd.f32 %v116, %v507
  %v509 = vpop.f32.mrb[0].mxu0
  %510 = vmatprep.mubr.bf16.mxu0 %v219
  %511 = vmatmul.mubr.bf16.gmra.mrb[0].mxu0 %v218
  %v512 = vpop.f32.mrb[0].mxu0
  %v513 = vadd.f32 %v116, %v512
  %v514 = vpop.f32.mrb[0].mxu0
  %v515 = vpop.f32.mrb[0].mxu0
  %v516 = vadd.f32 %v116, %v515
  %v517 = vpop.f32.mrb[0].mxu0
  %518 = vmatprep.mubr.bf16.mxu0 %v223
  %519 = vmatmul.mubr.bf16.gmra.mrb[0].mxu0 %v222
  %v520 = vpop.f32.mrb[0].mxu0
  %v521 = vadd.f32 %v116, %v520
  %v522 = vpop.f32.mrb[0].mxu0
  %v523 = vpop.f32.mrb[0].mxu0
  %v524 = vadd.f32 %v116, %v523
  %v525 = vpop.f32.mrb[0].mxu0
  %526 = vmatprep.mubr.bf16.mxu0 %v227
  %527 = vmatmul.mubr.bf16.gmra.mrb[0].mxu0 %v226
  %v528 = vpop.f32.mrb[0].mxu0
  %v529 = vadd.f32 %v116, %v528
  %v530 = vpop.f32.mrb[0].mxu0
  %v531 = vpop.f32.mrb[0].mxu0
  %v532 = vadd.f32 %v116, %v531
  %v533 = vpop.f32.mrb[0].mxu0
  %534 = vmatprep.mubr.bf16.mxu0 %v231
  %535 = vmatmul.mubr.bf16.gmra.mrb[0].mxu0 %v230
  %v536 = vpop.f32.mrb[0].mxu0
  %v537 = vadd.f32 %v116, %v536
  %v538 = vpop.f32.mrb[0].mxu0
  %v539 = vpop.f32.mrb[0].mxu0
  %v540 = vadd.f32 %v116, %v539
  %v541 = vpop.f32.mrb[0].mxu0
  %542 = vmatprep.mubr.bf16.mxu0 %v235
  %543 = vmatmul.mubr.bf16.gmra.mrb[0].mxu0 %v234
  %v544 = vpop.f32.mrb[0].mxu0
  %v545 = vadd.f32 %v116, %v544
  %v546 = vpop.f32.mrb[0].mxu0
  %v547 = vpop.f32.mrb[0].mxu0
  %v548 = vadd.f32 %v116, %v547
  %v549 = vpop.f32.mrb[0].mxu0
  %550 = vmatprep.mubr.bf16.mxu0 %v239
  %551 = vmatmul.mubr.bf16.gmra.mrb[0].mxu0 %v238
  %v552 = vpop.f32.mrb[0].mxu0
  %v553 = vadd.f32 %v116, %v552
  %v554 = vpop.f32.mrb[0].mxu0
  %v555 = vpop.f32.mrb[0].mxu0
  %v556 = vadd.f32 %v116, %v555
  %v557 = vpop.f32.mrb[0].mxu0
  %558 = vmatprep.mubr.bf16.mxu0 %v243
  %559 = vmatmul.mubr.bf16.gmra.mrb[0].mxu0 %v242
  %v560 = vpop.f32.mrb[0].mxu0
  %v561 = vadd.f32 %v116, %v560
  %v562 = vpop.f32.mrb[0].mxu0
  %v563 = vpop.f32.mrb[0].mxu0
  %v564 = vadd.f32 %v116, %v563
  %v565 = vpop.f32.mrb[0].mxu0
  %566 = vdwg.mxu0
  %567 = vmatprep.subr.bf16.mxu0 0
  %568 = vmatpush1.bf16.msra.mxu0 %v422
  %569 = vmatprep.subr.bf16.mxu0 0
  %570 = vmatpush1.bf16.msra.mxu0 %v423
  %571 = vmatprep.subr.bf16.mxu0 0
  %572 = vmatpush1.bf16.msra.mxu0 %v424
  %573 = vmatprep.subr.bf16.mxu0 0
  %574 = vmatpush1.bf16.msra.mxu0 %v425
  %575 = vmatprep.subr.bf16.mxu0 0
  %576 = vmatpush1.bf16.msra.mxu0 %v426
  %577 = vmatprep.subr.bf16.mxu0 0
  %578 = vmatpush1.bf16.msra.mxu0 %v427
  %579 = vmatprep.subr.bf16.mxu0 0
  %580 = vmatpush1.bf16.msra.mxu0 %v428
  %581 = vmatprep.subr.bf16.mxu0 0
  %582 = vmatpush1.bf16.msra.mxu0 %v429
  %583 = vmatprep.subr.bf16.mxu0 0
  %584 = vmatpush1.bf16.msra.mxu0 %v430
  %585 = vmatprep.subr.bf16.mxu0 0
  %586 = vmatpush1.bf16.msra.mxu0 %v431
  %587 = vmatprep.subr.bf16.mxu0 0
  %588 = vmatpush1.bf16.msra.mxu0 %v432
  %589 = vmatprep.subr.bf16.mxu0 0
  %590 = vmatpush1.bf16.msra.mxu0 %v433
  %591 = vmatprep.subr.bf16.mxu0 0
  %592 = vmatpush1.bf16.msra.mxu0 %v434
  %593 = vmatprep.subr.bf16.mxu0 0
  %594 = vmatpush1.bf16.msra.mxu0 %v435
  %595 = vmatprep.subr.bf16.mxu0 0
  %596 = vmatpush1.bf16.msra.mxu0 %v436
  %597 = vmatprep.subr.bf16.mxu0 0
  %598 = vmatpush1.bf16.msra.mxu0 %v437
  %599 = vmatprep.mubr.bf16.mxu0 %v217
  %600 = vmatmul.mubr.bf16.gmra.mrb[0].mxu0 %v216
  %v601 = vpop.f32.mrb[0].mxu0
  %v602 = vadd.f32 %v505, %v601
  %v603 = vpop.f32.mrb[0].mxu0
  %v604 = vpop.f32.mrb[0].mxu0
  %v605 = vadd.f32 %v508, %v604
  %v606 = vpop.f32.mrb[0].mxu0
  %607 = vmatprep.mubr.bf16.mxu0 %v221
  %608 = vmatmul.mubr.bf16.gmra.mrb[0].mxu0 %v220
  %v609 = vpop.f32.mrb[0].mxu0
  %v610 = vadd.f32 %v513, %v609
  %v611 = vpop.f32.mrb[0].mxu0
  %v612 = vpop.f32.mrb[0].mxu0
  %v613 = vadd.f32 %v516, %v612
  %v614 = vpop.f32.mrb[0].mxu0
  %615 = vmatprep.mubr.bf16.mxu0 %v225
  %616 = vmatmul.mubr.bf16.gmra.mrb[0].mxu0 %v224
  %v617 = vpop.f32.mrb[0].mxu0
  %v618 = vadd.f32 %v521, %v617
  %v619 = vpop.f32.mrb[0].mxu0
  %v620 = vpop.f32.mrb[0].mxu0
  %v621 = vadd.f32 %v524, %v620
  %v622 = vpop.f32.mrb[0].mxu0
  %623 = vmatprep.mubr.bf16.mxu0 %v229
  %624 = vmatmul.mubr.bf16.gmra.mrb[0].mxu0 %v228
  %v625 = vpop.f32.mrb[0].mxu0
  %v626 = vadd.f32 %v529, %v625
  %v627 = vpop.f32.mrb[0].mxu0
  %v628 = vpop.f32.mrb[0].mxu0
  %v629 = vadd.f32 %v532, %v628
  %v630 = vpop.f32.mrb[0].mxu0
  %631 = vmatprep.mubr.bf16.mxu0 %v233
  %632 = vmatmul.mubr.bf16.gmra.mrb[0].mxu0 %v232
  %v633 = vpop.f32.mrb[0].mxu0
  %v634 = vadd.f32 %v537, %v633
  %v635 = vpop.f32.mrb[0].mxu0
  %v636 = vpop.f32.mrb[0].mxu0
  %v637 = vadd.f32 %v540, %v636
  %v638 = vpop.f32.mrb[0].mxu0
  %639 = vmatprep.mubr.bf16.mxu0 %v237
  %640 = vmatmul.mubr.bf16.gmra.mrb[0].mxu0 %v236
  %v641 = vpop.f32.mrb[0].mxu0
  %v642 = vadd.f32 %v545, %v641
  %v643 = vpop.f32.mrb[0].mxu0
  %v644 = vpop.f32.mrb[0].mxu0
  %v645 = vadd.f32 %v548, %v644
  %v646 = vpop.f32.mrb[0].mxu0
  %647 = vmatprep.mubr.bf16.mxu0 %v241
  %648 = vmatmul.mubr.bf16.gmra.mrb[0].mxu0 %v240
  %v649 = vpop.f32.mrb[0].mxu0
  %v650 = vadd.f32 %v553, %v649
  %v651 = vpop.f32.mrb[0].mxu0
  %v652 = vpop.f32.mrb[0].mxu0
  %v653 = vadd.f32 %v556, %v652
  %v654 = vpop.f32.mrb[0].mxu0
  %655 = vmatprep.mubr.bf16.mxu0 %v245
  %656 = vmatmul.mubr.bf16.gmra.mrb[0].mxu0 %v244
  %v657 = vpop.f32.mrb[0].mxu0
  %v658 = vadd.f32 %v561, %v657
  %v659 = vpop.f32.mrb[0].mxu0
  %v660 = vpop.f32.mrb[0].mxu0
  %v661 = vadd.f32 %v564, %v660
  %v662 = vpop.f32.mrb[0].mxu0
  %663 = vdwg.mxu0
  %v664 = vmax.f32 %v602, 0.0
  %v665 = vmax.f32 %v605, 0.0
  %v666 = vmax.f32 %v610, 0.0
  %v667 = vmax.f32 %v613, 0.0
  %v668 = vmax.f32 %v618, 0.0
  %v669 = vmax.f32 %v621, 0.0
  %v670 = vmax.f32 %v626, 0.0
  %v671 = vmax.f32 %v629, 0.0
  %v672 = vmax.f32 %v634, 0.0
  %v673 = vmax.f32 %v637, 0.0
  %v674 = vmax.f32 %v642, 0.0
  %v675 = vmax.f32 %v645, 0.0
  %v676 = vmax.f32 %v650, 0.0
  %v677 = vmax.f32 %v653, 0.0
  %v678 = vmax.f32 %v658, 0.0
  %v679 = vmax.f32 %v661, 0.0
  %680 = vst [vmem:[%s3] sm:$0xff] %v664
  %681 = vst [vmem:[%s3 + $0x8] sm:$0xff] %v665
  %682 = vst [vmem:[%s3 + $0x10] sm:$0xff] %v666
  %683 = vst [vmem:[%s3 + $0x18] sm:$0xff] %v667
  %684 = vst [vmem:[%s3 + $0x20] sm:$0xff] %v668
  %685 = vst [vmem:[%s3 + $0x28] sm:$0xff] %v669
  %686 = vst [vmem:[%s3 + $0x30] sm:$0xff] %v670
  %687 = vst [vmem:[%s3 + $0x38] sm:$0xff] %v671
  %688 = vst [vmem:[%s3 + $0x40] sm:$0xff] %v672
  %689 = vst [vmem:[%s3 + $0x48] sm:$0xff] %v673
  %690 = vst [vmem:[%s3 + $0x50] sm:$0xff] %v674
  %691 = vst [vmem:[%s3 + $0x58] sm:$0xff] %v675
  %692 = vst [vmem:[%s3 + $0x60] sm:$0xff] %v676
  %693 = vst [vmem:[%s3 + $0x68] sm:$0xff] %v677
  %694 = vst [vmem:[%s3 + $0x70] sm:$0xff] %v678
  %695 = vst [vmem:[%s3 + $0x78] sm:$0xff] %v679
  // Predicated region
  $region14: #{generator_forward.13} parent=0 // pred_check
    _
  $region15: #{generator_forward.13} parent=0 // pred_check_branch
    %697 = sbr.rel (0) target = $region17
  $region16: #{generator_forward.13} parent=0 // pred_region
    _
  $region17: #{generator_forward.13} parent=0 // pred_fallthru
    _
  // Predicated region
  $region18: #{generator_forward.13} parent=0 // pred_check
    _
  $region19: #{generator_forward.13} parent=0 // pred_check_branch
    %699 = sbr.rel (0) target = $region21
  $region20: #{generator_forward.13} parent=0 // pred_region
    _
  $region21: #{generator_forward.13} parent=0 // pred_fallthru
    _

// kernel: generator_forward.14
$region0: #{generator_forward.14}
  #allocation0 [shape = 'u32[]', space=smem, size = 0x4, offset = 0x4, fixed_abs, tag = 'smem constant byte address 0x4 - core index']
  #allocation1 [shape = 'u32[144,128]{1,0:T(1,128)}', space=vmem, size = 0x12000, scoped, tag = 'internal scratch']
  %s0 = inlined_call_operand.vmem [shape: bf16[16,1024], index: 0, kind: input, shape index: {}]
  %s1 = inlined_call_operand.vmem [shape: bf16[1024,128], index: 1, kind: input, shape index: {}]
  %s2 = inlined_call_operand.vmem [shape: f32[1,128], index: 2, kind: input, shape index: {}]
  %s3 = inlined_call_operand.vmem [shape: f32[16,128], index: 3, kind: output, shape index: {}]
  %s4 = sld [smem:[#allocation0]]
  $region22: #{generator_forward.14} parent=0
    _
  %s6 = ssub.s32 1, %s4
  %s7 = scalar_select 0, %s6, %s4
  // Predicated region
  $region2: #{generator_forward.14} parent=0 // pred_check
    _
  $region3: #{generator_forward.14} parent=0 // pred_check_branch
    %9 = sbr.rel (0) target = $region5
  $region4: #{generator_forward.14} parent=0 // pred_region
    _
  $region5: #{generator_forward.14} parent=0 // pred_fallthru
    _
  // Predicated region
  $region6: #{generator_forward.14} parent=0 // pred_check
    _
  $region7: #{generator_forward.14} parent=0 // pred_check_branch
    %11 = sbr.rel (0) target = $region9
  $region8: #{generator_forward.14} parent=0 // pred_region
    _
  $region9: #{generator_forward.14} parent=0 // pred_fallthru
    _
  // Predicated region
  $region10: #{generator_forward.14} parent=0 // pred_check
    _
  $region11: #{generator_forward.14} parent=0 // pred_check_branch
    %13 = sbr.rel (0) target = $region13
  $region12: #{generator_forward.14} parent=0 // pred_region
    _
  $region13: #{generator_forward.14} parent=0 // pred_fallthru
    _
  %v15 = vld [vmem:[%s0] sm:$0xff]
  %v16 = vld [vmem:[%s0 + $0x8] sm:$0xff]
  %v17 = vld [vmem:[%s0 + $0x10] sm:$0xff]
  %v18 = vld [vmem:[%s0 + $0x18] sm:$0xff]
  %v19 = vld [vmem:[%s0 + $0x20] sm:$0xff]
  %v20 = vld [vmem:[%s0 + $0x28] sm:$0xff]
  %v21 = vld [vmem:[%s0 + $0x30] sm:$0xff]
  %v22 = vld [vmem:[%s0 + $0x38] sm:$0xff]
  %v23 = vld [vmem:[%s1] sm:$0xf]
  %v24 = vld [vmem:[%s1 + $0x4] sm:$0xf]
  %v25 = vld [vmem:[%s1 + $0x8] sm:$0xf]
  %v26 = vld [vmem:[%s1 + $0xc] sm:$0xf]
  %v27 = vld [vmem:[%s1 + $0x10] sm:$0xf]
  %v28 = vld [vmem:[%s1 + $0x14] sm:$0xf]
  %v29 = vld [vmem:[%s1 + $0x18] sm:$0xf]
  %v30 = vld [vmem:[%s1 + $0x1c] sm:$0xf]
  %v31 = vld [vmem:[%s1 + $0x20] sm:$0xf]
  %v32 = vld [vmem:[%s1 + $0x24] sm:$0xf]
  %v33 = vld [vmem:[%s1 + $0x28] sm:$0xf]
  %v34 = vld [vmem:[%s1 + $0x2c] sm:$0xf]
  %v35 = vld [vmem:[%s1 + $0x30] sm:$0xf]
  %v36 = vld [vmem:[%s1 + $0x34] sm:$0xf]
  %v37 = vld [vmem:[%s1 + $0x38] sm:$0xf]
  %v38 = vld [vmem:[%s1 + $0x3c] sm:$0xf]
  %v39 = vld [vmem:[%s1 + $0x40] sm:$0xf]
  %v40 = vld [vmem:[%s1 + $0x44] sm:$0xf]
  %v41 = vld [vmem:[%s1 + $0x48] sm:$0xf]
  %v42 = vld [vmem:[%s1 + $0x4c] sm:$0xf]
  %v43 = vld [vmem:[%s1 + $0x50] sm:$0xf]
  %v44 = vld [vmem:[%s1 + $0x54] sm:$0xf]
  %v45 = vld [vmem:[%s1 + $0x58] sm:$0xf]
  %v46 = vld [vmem:[%s1 + $0x5c] sm:$0xf]
  %v47 = vld [vmem:[%s1 + $0x60] sm:$0xf]
  %v48 = vld [vmem:[%s1 + $0x64] sm:$0xf]
  %v49 = vld [vmem:[%s1 + $0x68] sm:$0xf]
  %v50 = vld [vmem:[%s1 + $0x6c] sm:$0xf]
  %v51 = vld [vmem:[%s1 + $0x70] sm:$0xf]
  %v52 = vld [vmem:[%s1 + $0x74] sm:$0xf]
  %v53 = vld [vmem:[%s1 + $0x78] sm:$0xf]
  %v54 = vld [vmem:[%s1 + $0x7c] sm:$0xf]
  %v55 = vld [vmem:[%s1 + $0x80] sm:$0xf]
  %v56 = vld [vmem:[%s1 + $0x84] sm:$0xf]
  %v57 = vld [vmem:[%s1 + $0x88] sm:$0xf]
  %v58 = vld [vmem:[%s1 + $0x8c] sm:$0xf]
  %v59 = vld [vmem:[%s1 + $0x90] sm:$0xf]
  %v60 = vld [vmem:[%s1 + $0x94] sm:$0xf]
  %v61 = vld [vmem:[%s1 + $0x98] sm:$0xf]
  %v62 = vld [vmem:[%s1 + $0x9c] sm:$0xf]
  %v63 = vld [vmem:[%s1 + $0xa0] sm:$0xf]
  %v64 = vld [vmem:[%s1 + $0xa4] sm:$0xf]
  %v65 = vld [vmem:[%s1 + $0xa8] sm:$0xf]
  %v66 = vld [vmem:[%s1 + $0xac] sm:$0xf]
  %v67 = vld [vmem:[%s1 + $0xb0] sm:$0xf]
  %v68 = vld [vmem:[%s1 + $0xb4] sm:$0xf]
  %v69 = vld [vmem:[%s1 + $0xb8] sm:$0xf]
  %v70 = vld [vmem:[%s1 + $0xbc] sm:$0xf]
  %v71 = vld [vmem:[%s1 + $0xc0] sm:$0xf]
  %v72 = vld [vmem:[%s1 + $0xc4] sm:$0xf]
  %v73 = vld [vmem:[%s1 + $0xc8] sm:$0xf]
  %v74 = vld [vmem:[%s1 + $0xcc] sm:$0xf]
  %v75 = vld [vmem:[%s1 + $0xd0] sm:$0xf]
  %v76 = vld [vmem:[%s1 + $0xd4] sm:$0xf]
  %v77 = vld [vmem:[%s1 + $0xd8] sm:$0xf]
  %v78 = vld [vmem:[%s1 + $0xdc] sm:$0xf]
  %v79 = vld [vmem:[%s1 + $0xe0] sm:$0xf]
  %v80 = vld [vmem:[%s1 + $0xe4] sm:$0xf]
  %v81 = vld [vmem:[%s1 + $0xe8] sm:$0xf]
  %v82 = vld [vmem:[%s1 + $0xec] sm:$0xf]
  %v83 = vld [vmem:[%s1 + $0xf0] sm:$0xf]
  %v84 = vld [vmem:[%s1 + $0xf4] sm:$0xf]
  %v85 = vld [vmem:[%s1 + $0xf8] sm:$0xf]
  %v86 = vld [vmem:[%s1 + $0xfc] sm:$0xf]
  %v87 = vld [vmem:[%s1 + $0x100] sm:$0xf]
  %v88 = vld [vmem:[%s1 + $0x104] sm:$0xf]
  %v89 = vld [vmem:[%s1 + $0x108] sm:$0xf]
  %v90 = vld [vmem:[%s1 + $0x10c] sm:$0xf]
  %v91 = vld [vmem:[%s1 + $0x110] sm:$0xf]
  %v92 = vld [vmem:[%s1 + $0x114] sm:$0xf]
  %v93 = vld [vmem:[%s1 + $0x118] sm:$0xf]
  %v94 = vld [vmem:[%s1 + $0x11c] sm:$0xf]
  %v95 = vld [vmem:[%s1 + $0x120] sm:$0xf]
  %v96 = vld [vmem:[%s1 + $0x124] sm:$0xf]
  %v97 = vld [vmem:[%s1 + $0x128] sm:$0xf]
  %v98 = vld [vmem:[%s1 + $0x12c] sm:$0xf]
  %v99 = vld [vmem:[%s1 + $0x130] sm:$0xf]
  %v100 = vld [vmem:[%s1 + $0x134] sm:$0xf]
  %v101 = vld [vmem:[%s1 + $0x138] sm:$0xf]
  %v102 = vld [vmem:[%s1 + $0x13c] sm:$0xf]
  %v103 = vld [vmem:[%s1 + $0x140] sm:$0xf]
  %v104 = vld [vmem:[%s1 + $0x144] sm:$0xf]
  %v105 = vld [vmem:[%s1 + $0x148] sm:$0xf]
  %v106 = vld [vmem:[%s1 + $0x14c] sm:$0xf]
  %v107 = vld [vmem:[%s1 + $0x150] sm:$0xf]
  %v108 = vld [vmem:[%s1 + $0x154] sm:$0xf]
  %v109 = vld [vmem:[%s1 + $0x158] sm:$0xf]
  %v110 = vld [vmem:[%s1 + $0x15c] sm:$0xf]
  %v111 = vld [vmem:[%s1 + $0x160] sm:$0xf]
  %v112 = vld [vmem:[%s1 + $0x164] sm:$0xf]
  %v113 = vld [vmem:[%s1 + $0x168] sm:$0xf]
  %v114 = vld [vmem:[%s1 + $0x16c] sm:$0xf]
  %v115 = vld [vmem:[%s1 + $0x170] sm:$0xf]
  %v116 = vld [vmem:[%s1 + $0x174] sm:$0xf]
  %v117 = vld [vmem:[%s1 + $0x178] sm:$0xf]
  %v118 = vld [vmem:[%s1 + $0x17c] sm:$0xf]
  %v119 = vld [vmem:[%s1 + $0x180] sm:$0xf]
  %v120 = vld [vmem:[%s1 + $0x184] sm:$0xf]
  %v121 = vld [vmem:[%s1 + $0x188] sm:$0xf]
  %v122 = vld [vmem:[%s1 + $0x18c] sm:$0xf]
  %v123 = vld [vmem:[%s1 + $0x190] sm:$0xf]
  %v124 = vld [vmem:[%s1 + $0x194] sm:$0xf]
  %v125 = vld [vmem:[%s1 + $0x198] sm:$0xf]
  %v126 = vld [vmem:[%s1 + $0x19c] sm:$0xf]
  %v127 = vld [vmem:[%s1 + $0x1a0] sm:$0xf]
  %v128 = vld [vmem:[%s1 + $0x1a4] sm:$0xf]
  %v129 = vld [vmem:[%s1 + $0x1a8] sm:$0xf]
  %v130 = vld [vmem:[%s1 + $0x1ac] sm:$0xf]
  %v131 = vld [vmem:[%s1 + $0x1b0] sm:$0xf]
  %v132 = vld [vmem:[%s1 + $0x1b4] sm:$0xf]
  %v133 = vld [vmem:[%s1 + $0x1b8] sm:$0xf]
  %v134 = vld [vmem:[%s1 + $0x1bc] sm:$0xf]
  %v135 = vld [vmem:[%s1 + $0x1c0] sm:$0xf]
  %v136 = vld [vmem:[%s1 + $0x1c4] sm:$0xf]
  %v137 = vld [vmem:[%s1 + $0x1c8] sm:$0xf]
  %v138 = vld [vmem:[%s1 + $0x1cc] sm:$0xf]
  %v139 = vld [vmem:[%s1 + $0x1d0] sm:$0xf]
  %v140 = vld [vmem:[%s1 + $0x1d4] sm:$0xf]
  %v141 = vld [vmem:[%s1 + $0x1d8] sm:$0xf]
  %v142 = vld [vmem:[%s1 + $0x1dc] sm:$0xf]
  %v143 = vld [vmem:[%s1 + $0x1e0] sm:$0xf]
  %v144 = vld [vmem:[%s1 + $0x1e4] sm:$0xf]
  %v145 = vld [vmem:[%s1 + $0x1e8] sm:$0xf]
  %v146 = vld [vmem:[%s1 + $0x1ec] sm:$0xf]
  %v147 = vld [vmem:[%s1 + $0x1f0] sm:$0xf]
  %v148 = vld [vmem:[%s1 + $0x1f4] sm:$0xf]
  %v149 = vld [vmem:[%s1 + $0x1f8] sm:$0xf]
  %v150 = vld [vmem:[%s1 + $0x1fc] sm:$0xf]
  %v151 = vld [vmem:[%s2] sm:$0x1]
  %v153 = vlaneseq
  %v154 = vshrl.u32 %v153, 7
  %v155 = vsub.s32 0, %v154
  %v156 = vrot.slane %v151, %v155
  %v166 = vunpack.c.l.b16 %v15
  %v167 = vunpack.c.h.b16 %v15
  %v168 = vunpack.c.l.b16 %v16
  %v169 = vunpack.c.h.b16 %v16
  %v170 = vunpack.c.l.b16 %v17
  %v171 = vunpack.c.h.b16 %v17
  %v172 = vunpack.c.l.b16 %v18
  %v173 = vunpack.c.h.b16 %v18
  %v174 = vunpack.c.l.b16 %v19
  %v175 = vunpack.c.h.b16 %v19
  %v176 = vunpack.c.l.b16 %v20
  %v177 = vunpack.c.h.b16 %v20
  %v178 = vunpack.c.l.b16 %v21
  %v179 = vunpack.c.h.b16 %v21
  %v180 = vunpack.c.l.b16 %v22
  %v181 = vunpack.c.h.b16 %v22
  %v182 = vpack.c.b16 %v174, %v166
  %v183 = vpack.c.b16 %v175, %v167
  %v184 = vpack.c.b16 %v176, %v168
  %v185 = vpack.c.b16 %v177, %v169
  %v186 = vpack.c.b16 %v178, %v170
  %v187 = vpack.c.b16 %v179, %v171
  %v188 = vpack.c.b16 %v180, %v172
  %v189 = vpack.c.b16 %v181, %v173
  %v326 = vunpack.c.l.b16 %v23
  %v327 = vunpack.c.l.b16 %v24
  %v328 = vunpack.c.l.b16 %v25
  %v329 = vunpack.c.l.b16 %v26
  %v330 = vunpack.c.l.b16 %v27
  %v331 = vunpack.c.l.b16 %v28
  %v332 = vunpack.c.l.b16 %v29
  %v333 = vunpack.c.l.b16 %v30
  %v334 = vunpack.c.l.b16 %v31
  %v335 = vunpack.c.l.b16 %v32
  %v336 = vunpack.c.l.b16 %v33
  %v337 = vunpack.c.l.b16 %v34
  %v338 = vunpack.c.l.b16 %v35
  %v339 = vunpack.c.l.b16 %v36
  %v340 = vunpack.c.l.b16 %v37
  %v341 = vunpack.c.l.b16 %v38
  %v342 = vunpack.c.l.b16 %v39
  %v343 = vunpack.c.l.b16 %v40
  %v344 = vunpack.c.l.b16 %v41
  %v345 = vunpack.c.l.b16 %v42
  %v346 = vunpack.c.l.b16 %v43
  %v347 = vunpack.c.l.b16 %v44
  %v348 = vunpack.c.l.b16 %v45
  %v349 = vunpack.c.l.b16 %v46
  %v350 = vunpack.c.l.b16 %v47
  %v351 = vunpack.c.l.b16 %v48
  %v352 = vunpack.c.l.b16 %v49
  %v353 = vunpack.c.l.b16 %v50
  %v354 = vunpack.c.l.b16 %v51
  %v355 = vunpack.c.l.b16 %v52
  %v356 = vunpack.c.l.b16 %v53
  %v357 = vunpack.c.l.b16 %v54
  %v358 = vunpack.c.l.b16 %v55
  %v359 = vunpack.c.l.b16 %v56
  %v360 = vunpack.c.l.b16 %v57
  %v361 = vunpack.c.l.b16 %v58
  %v362 = vunpack.c.l.b16 %v59
  %v363 = vunpack.c.l.b16 %v60
  %v364 = vunpack.c.l.b16 %v61
  %v365 = vunpack.c.l.b16 %v62
  %v366 = vunpack.c.l.b16 %v63
  %v367 = vunpack.c.l.b16 %v64
  %v368 = vunpack.c.l.b16 %v65
  %v369 = vunpack.c.l.b16 %v66
  %v370 = vunpack.c.l.b16 %v67
  %v371 = vunpack.c.l.b16 %v68
  %v372 = vunpack.c.l.b16 %v69
  %v373 = vunpack.c.l.b16 %v70
  %v374 = vunpack.c.l.b16 %v71
  %v375 = vunpack.c.l.b16 %v72
  %v376 = vunpack.c.l.b16 %v73
  %v377 = vunpack.c.l.b16 %v74
  %v378 = vunpack.c.l.b16 %v75
  %v379 = vunpack.c.l.b16 %v76
  %v380 = vunpack.c.l.b16 %v77
  %v381 = vunpack.c.l.b16 %v78
  %v382 = vunpack.c.l.b16 %v79
  %v383 = vunpack.c.l.b16 %v80
  %v384 = vunpack.c.l.b16 %v81
  %v385 = vunpack.c.l.b16 %v82
  %v386 = vunpack.c.l.b16 %v83
  %v387 = vunpack.c.l.b16 %v84
  %v388 = vunpack.c.l.b16 %v85
  %v389 = vunpack.c.l.b16 %v86
  %v390 = vunpack.c.l.b16 %v87
  %v391 = vunpack.c.l.b16 %v88
  %v392 = vunpack.c.l.b16 %v89
  %v393 = vunpack.c.l.b16 %v90
  %v394 = vunpack.c.l.b16 %v91
  %v395 = vunpack.c.l.b16 %v92
  %v396 = vunpack.c.l.b16 %v93
  %v397 = vunpack.c.l.b16 %v94
  %v398 = vunpack.c.l.b16 %v95
  %v399 = vunpack.c.l.b16 %v96
  %v400 = vunpack.c.l.b16 %v97
  %v401 = vunpack.c.l.b16 %v98
  %v402 = vunpack.c.l.b16 %v99
  %v403 = vunpack.c.l.b16 %v100
  %v404 = vunpack.c.l.b16 %v101
  %v405 = vunpack.c.l.b16 %v102
  %v406 = vunpack.c.l.b16 %v103
  %v407 = vunpack.c.l.b16 %v104
  %v408 = vunpack.c.l.b16 %v105
  %v409 = vunpack.c.l.b16 %v106
  %v410 = vunpack.c.l.b16 %v107
  %v411 = vunpack.c.l.b16 %v108
  %v412 = vunpack.c.l.b16 %v109
  %v413 = vunpack.c.l.b16 %v110
  %v414 = vunpack.c.l.b16 %v111
  %v415 = vunpack.c.l.b16 %v112
  %v416 = vunpack.c.l.b16 %v113
  %v417 = vunpack.c.l.b16 %v114
  %v418 = vunpack.c.l.b16 %v115
  %v419 = vunpack.c.l.b16 %v116
  %v420 = vunpack.c.l.b16 %v117
  %v421 = vunpack.c.l.b16 %v118
  %v422 = vunpack.c.l.b16 %v119
  %v423 = vunpack.c.l.b16 %v120
  %v424 = vunpack.c.l.b16 %v121
  %v425 = vunpack.c.l.b16 %v122
  %v426 = vunpack.c.l.b16 %v123
  %v427 = vunpack.c.l.b16 %v124
  %v428 = vunpack.c.l.b16 %v125
  %v429 = vunpack.c.l.b16 %v126
  %v430 = vunpack.c.l.b16 %v127
  %v431 = vunpack.c.l.b16 %v128
  %v432 = vunpack.c.l.b16 %v129
  %v433 = vunpack.c.l.b16 %v130
  %v434 = vunpack.c.l.b16 %v131
  %v435 = vunpack.c.l.b16 %v132
  %v436 = vunpack.c.l.b16 %v133
  %v437 = vunpack.c.l.b16 %v134
  %v438 = vunpack.c.l.b16 %v135
  %v439 = vunpack.c.l.b16 %v136
  %v440 = vunpack.c.l.b16 %v137
  %v441 = vunpack.c.l.b16 %v138
  %v442 = vunpack.c.l.b16 %v139
  %v443 = vunpack.c.l.b16 %v140
  %v444 = vunpack.c.l.b16 %v141
  %v445 = vunpack.c.l.b16 %v142
  %v446 = vunpack.c.l.b16 %v143
  %v447 = vunpack.c.l.b16 %v144
  %v448 = vunpack.c.l.b16 %v145
  %v449 = vunpack.c.l.b16 %v146
  %v450 = vunpack.c.l.b16 %v147
  %v451 = vunpack.c.l.b16 %v148
  %v452 = vunpack.c.l.b16 %v149
  %v453 = vunpack.c.l.b16 %v150
  %v454 = vpack.c.b16 %v327, %v326
  %v455 = vpack.c.b16 %v329, %v328
  %v456 = vpack.c.b16 %v331, %v330
  %v457 = vpack.c.b16 %v333, %v332
  %v458 = vpack.c.b16 %v335, %v334
  %v459 = vpack.c.b16 %v337, %v336
  %v460 = vpack.c.b16 %v339, %v338
  %v461 = vpack.c.b16 %v341, %v340
  %v462 = vpack.c.b16 %v343, %v342
  %v463 = vpack.c.b16 %v345, %v344
  %v464 = vpack.c.b16 %v347, %v346
  %v465 = vpack.c.b16 %v349, %v348
  %v466 = vpack.c.b16 %v351, %v350
  %v467 = vpack.c.b16 %v353, %v352
  %v468 = vpack.c.b16 %v355, %v354
  %v469 = vpack.c.b16 %v357, %v356
  %v470 = vpack.c.b16 %v359, %v358
  %v471 = vpack.c.b16 %v361, %v360
  %v472 = vpack.c.b16 %v363, %v362
  %v473 = vpack.c.b16 %v365, %v364
  %v474 = vpack.c.b16 %v367, %v366
  %v475 = vpack.c.b16 %v369, %v368
  %v476 = vpack.c.b16 %v371, %v370
  %v477 = vpack.c.b16 %v373, %v372
  %v478 = vpack.c.b16 %v375, %v374
  %v479 = vpack.c.b16 %v377, %v376
  %v480 = vpack.c.b16 %v379, %v378
  %v481 = vpack.c.b16 %v381, %v380
  %v482 = vpack.c.b16 %v383, %v382
  %v483 = vpack.c.b16 %v385, %v384
  %v484 = vpack.c.b16 %v387, %v386
  %v485 = vpack.c.b16 %v389, %v388
  %v486 = vpack.c.b16 %v391, %v390
  %v487 = vpack.c.b16 %v393, %v392
  %v488 = vpack.c.b16 %v395, %v394
  %v489 = vpack.c.b16 %v397, %v396
  %v490 = vpack.c.b16 %v399, %v398
  %v491 = vpack.c.b16 %v401, %v400
  %v492 = vpack.c.b16 %v403, %v402
  %v493 = vpack.c.b16 %v405, %v404
  %v494 = vpack.c.b16 %v407, %v406
  %v495 = vpack.c.b16 %v409, %v408
  %v496 = vpack.c.b16 %v411, %v410
  %v497 = vpack.c.b16 %v413, %v412
  %v498 = vpack.c.b16 %v415, %v414
  %v499 = vpack.c.b16 %v417, %v416
  %v500 = vpack.c.b16 %v419, %v418
  %v501 = vpack.c.b16 %v421, %v420
  %v502 = vpack.c.b16 %v423, %v422
  %v503 = vpack.c.b16 %v425, %v424
  %v504 = vpack.c.b16 %v427, %v426
  %v505 = vpack.c.b16 %v429, %v428
  %v506 = vpack.c.b16 %v431, %v430
  %v507 = vpack.c.b16 %v433, %v432
  %v508 = vpack.c.b16 %v435, %v434
  %v509 = vpack.c.b16 %v437, %v436
  %v510 = vpack.c.b16 %v439, %v438
  %v511 = vpack.c.b16 %v441, %v440
  %v512 = vpack.c.b16 %v443, %v442
  %v513 = vpack.c.b16 %v445, %v444
  %v514 = vpack.c.b16 %v447, %v446
  %v515 = vpack.c.b16 %v449, %v448
  %v516 = vpack.c.b16 %v451, %v450
  %v517 = vpack.c.b16 %v453, %v452
  %582 = vmatprep.subr.bf16.mxu0 0
  %583 = vmatpush1.bf16.msra.mxu0 %v454
  %584 = vmatprep.subr.bf16.mxu0 0
  %585 = vmatpush1.bf16.msra.mxu0 %v455
  %586 = vmatprep.subr.bf16.mxu0 0
  %587 = vmatpush1.bf16.msra.mxu0 %v456
  %588 = vmatprep.subr.bf16.mxu0 0
  %589 = vmatpush1.bf16.msra.mxu0 %v457
  %590 = vmatprep.subr.bf16.mxu0 0
  %591 = vmatpush1.bf16.msra.mxu0 %v458
  %592 = vmatprep.subr.bf16.mxu0 0
  %593 = vmatpush1.bf16.msra.mxu0 %v459
  %594 = vmatprep.subr.bf16.mxu0 0
  %595 = vmatpush1.bf16.msra.mxu0 %v460
  %596 = vmatprep.subr.bf16.mxu0 0
  %597 = vmatpush1.bf16.msra.mxu0 %v461
  %598 = vmatprep.subr.bf16.mxu0 0
  %599 = vmatpush1.bf16.msra.mxu0 %v462
  %600 = vmatprep.subr.bf16.mxu0 0
  %601 = vmatpush1.bf16.msra.mxu0 %v463
  %602 = vmatprep.subr.bf16.mxu0 0
  %603 = vmatpush1.bf16.msra.mxu0 %v464
  %604 = vmatprep.subr.bf16.mxu0 0
  %605 = vmatpush1.bf16.msra.mxu0 %v465
  %606 = vmatprep.subr.bf16.mxu0 0
  %607 = vmatpush1.bf16.msra.mxu0 %v466
  %608 = vmatprep.subr.bf16.mxu0 0
  %609 = vmatpush1.bf16.msra.mxu0 %v467
  %610 = vmatprep.subr.bf16.mxu0 0
  %611 = vmatpush1.bf16.msra.mxu0 %v468
  %612 = vmatprep.subr.bf16.mxu0 0
  %613 = vmatpush1.bf16.msra.mxu0 %v469
  %614 = vmatprep.mubr.bf16.mxu0 %v183
  %615 = vmatmul.mubr.bf16.gmra.mrb[0].mxu0 %v182
  %v616 = vpop.f32.mrb[0].mxu0
  %v617 = vadd.f32 %v156, %v616
  %v618 = vpop.f32.mrb[0].mxu0
  %v619 = vpop.f32.mrb[0].mxu0
  %v620 = vadd.f32 %v156, %v619
  %v621 = vpop.f32.mrb[0].mxu0
  %622 = vdwg.mxu0
  %623 = vmatprep.subr.bf16.mxu0 0
  %624 = vmatpush1.bf16.msra.mxu0 %v470
  %625 = vmatprep.subr.bf16.mxu0 0
  %626 = vmatpush1.bf16.msra.mxu0 %v471
  %627 = vmatprep.subr.bf16.mxu0 0
  %628 = vmatpush1.bf16.msra.mxu0 %v472
  %629 = vmatprep.subr.bf16.mxu0 0
  %630 = vmatpush1.bf16.msra.mxu0 %v473
  %631 = vmatprep.subr.bf16.mxu0 0
  %632 = vmatpush1.bf16.msra.mxu0 %v474
  %633 = vmatprep.subr.bf16.mxu0 0
  %634 = vmatpush1.bf16.msra.mxu0 %v475
  %635 = vmatprep.subr.bf16.mxu0 0
  %636 = vmatpush1.bf16.msra.mxu0 %v476
  %637 = vmatprep.subr.bf16.mxu0 0
  %638 = vmatpush1.bf16.msra.mxu0 %v477
  %639 = vmatprep.subr.bf16.mxu0 0
  %640 = vmatpush1.bf16.msra.mxu0 %v478
  %641 = vmatprep.subr.bf16.mxu0 0
  %642 = vmatpush1.bf16.msra.mxu0 %v479
  %643 = vmatprep.subr.bf16.mxu0 0
  %644 = vmatpush1.bf16.msra.mxu0 %v480
  %645 = vmatprep.subr.bf16.mxu0 0
  %646 = vmatpush1.bf16.msra.mxu0 %v481
  %647 = vmatprep.subr.bf16.mxu0 0
  %648 = vmatpush1.bf16.msra.mxu0 %v482
  %649 = vmatprep.subr.bf16.mxu0 0
  %650 = vmatpush1.bf16.msra.mxu0 %v483
  %651 = vmatprep.subr.bf16.mxu0 0
  %652 = vmatpush1.bf16.msra.mxu0 %v484
  %653 = vmatprep.subr.bf16.mxu0 0
  %654 = vmatpush1.bf16.msra.mxu0 %v485
  %655 = vmatprep.mubr.bf16.mxu0 %v185
  %656 = vmatmul.mubr.bf16.gmra.mrb[0].mxu0 %v184
  %v657 = vpop.f32.mrb[0].mxu0
  %v658 = vadd.f32 %v617, %v657
  %v659 = vpop.f32.mrb[0].mxu0
  %v660 = vpop.f32.mrb[0].mxu0
  %v661 = vadd.f32 %v620, %v660
  %v662 = vpop.f32.mrb[0].mxu0
  %663 = vdwg.mxu0
  %664 = vmatprep.subr.bf16.mxu0 0
  %665 = vmatpush1.bf16.msra.mxu0 %v486
  %666 = vmatprep.subr.bf16.mxu0 0
  %667 = vmatpush1.bf16.msra.mxu0 %v487
  %668 = vmatprep.subr.bf16.mxu0 0
  %669 = vmatpush1.bf16.msra.mxu0 %v488
  %670 = vmatprep.subr.bf16.mxu0 0
  %671 = vmatpush1.bf16.msra.mxu0 %v489
  %672 = vmatprep.subr.bf16.mxu0 0
  %673 = vmatpush1.bf16.msra.mxu0 %v490
  %674 = vmatprep.subr.bf16.mxu0 0
  %675 = vmatpush1.bf16.msra.mxu0 %v491
  %676 = vmatprep.subr.bf16.mxu0 0
  %677 = vmatpush1.bf16.msra.mxu0 %v492
  %678 = vmatprep.subr.bf16.mxu0 0
  %679 = vmatpush1.bf16.msra.mxu0 %v493
  %680 = vmatprep.subr.bf16.mxu0 0
  %681 = vmatpush1.bf16.msra.mxu0 %v494
  %682 = vmatprep.subr.bf16.mxu0 0
  %683 = vmatpush1.bf16.msra.mxu0 %v495
  %684 = vmatprep.subr.bf16.mxu0 0
  %685 = vmatpush1.bf16.msra.mxu0 %v496
  %686 = vmatprep.subr.bf16.mxu0 0
  %687 = vmatpush1.bf16.msra.mxu0 %v497
  %688 = vmatprep.subr.bf16.mxu0 0
  %689 = vmatpush1.bf16.msra.mxu0 %v498
  %690 = vmatprep.subr.bf16.mxu0 0
  %691 = vmatpush1.bf16.msra.mxu0 %v499
  %692 = vmatprep.subr.bf16.mxu0 0
  %693 = vmatpush1.bf16.msra.mxu0 %v500
  %694 = vmatprep.subr.bf16.mxu0 0
  %695 = vmatpush1.bf16.msra.mxu0 %v501
  %696 = vmatprep.mubr.bf16.mxu0 %v187
  %697 = vmatmul.mubr.bf16.gmra.mrb[0].mxu0 %v186
  %v698 = vpop.f32.mrb[0].mxu0
  %v699 = vadd.f32 %v658, %v698
  %v700 = vpop.f32.mrb[0].mxu0
  %v701 = vpop.f32.mrb[0].mxu0
  %v702 = vadd.f32 %v661, %v701
  %v703 = vpop.f32.mrb[0].mxu0
  %704 = vdwg.mxu0
  %705 = vmatprep.subr.bf16.mxu0 0
  %706 = vmatpush1.bf16.msra.mxu0 %v502
  %707 = vmatprep.subr.bf16.mxu0 0
  %708 = vmatpush1.bf16.msra.mxu0 %v503
  %709 = vmatprep.subr.bf16.mxu0 0
  %710 = vmatpush1.bf16.msra.mxu0 %v504
  %711 = vmatprep.subr.bf16.mxu0 0
  %712 = vmatpush1.bf16.msra.mxu0 %v505
  %713 = vmatprep.subr.bf16.mxu0 0
  %714 = vmatpush1.bf16.msra.mxu0 %v506
  %715 = vmatprep.subr.bf16.mxu0 0
  %716 = vmatpush1.bf16.msra.mxu0 %v507
  %717 = vmatprep.subr.bf16.mxu0 0
  %718 = vmatpush1.bf16.msra.mxu0 %v508
  %719 = vmatprep.subr.bf16.mxu0 0
  %720 = vmatpush1.bf16.msra.mxu0 %v509
  %721 = vmatprep.subr.bf16.mxu0 0
  %722 = vmatpush1.bf16.msra.mxu0 %v510
  %723 = vmatprep.subr.bf16.mxu0 0
  %724 = vmatpush1.bf16.msra.mxu0 %v511
  %725 = vmatprep.subr.bf16.mxu0 0
  %726 = vmatpush1.bf16.msra.mxu0 %v512
  %727 = vmatprep.subr.bf16.mxu0 0
  %728 = vmatpush1.bf16.msra.mxu0 %v513
  %729 = vmatprep.subr.bf16.mxu0 0
  %730 = vmatpush1.bf16.msra.mxu0 %v514
  %731 = vmatprep.subr.bf16.mxu0 0
  %732 = vmatpush1.bf16.msra.mxu0 %v515
  %733 = vmatprep.subr.bf16.mxu0 0
  %734 = vmatpush1.bf16.msra.mxu0 %v516
  %735 = vmatprep.subr.bf16.mxu0 0
  %736 = vmatpush1.bf16.msra.mxu0 %v517
  %737 = vmatprep.mubr.bf16.mxu0 %v189
  %738 = vmatmul.mubr.bf16.gmra.mrb[0].mxu0 %v188
  %v739 = vpop.f32.mrb[0].mxu0
  %v740 = vadd.f32 %v699, %v739
  %v741 = vpop.f32.mrb[0].mxu0
  %v742 = vpop.f32.mrb[0].mxu0
  %v743 = vadd.f32 %v702, %v742
  %v744 = vpop.f32.mrb[0].mxu0
  %745 = vdwg.mxu0
  %v746 = vmax.f32 %v740, 0.0
  %v747 = vmax.f32 %v743, 0.0
  %748 = vst [vmem:[%s3] sm:$0xff] %v746
  %749 = vst [vmem:[%s3 + $0x8] sm:$0xff] %v747
  // Predicated region
  $region14: #{generator_forward.14} parent=0 // pred_check
    _
  $region15: #{generator_forward.14} parent=0 // pred_check_branch
    %751 = sbr.rel (0) target = $region17
  $region16: #{generator_forward.14} parent=0 // pred_region
    _
  $region17: #{generator_forward.14} parent=0 // pred_fallthru
    _
  // Predicated region
  $region18: #{generator_forward.14} parent=0 // pred_check
    _
  $region19: #{generator_forward.14} parent=0 // pred_check_branch
    %753 = sbr.rel (0) target = $region21
  $region20: #{generator_forward.14} parent=0 // pred_region
    _
  $region21: #{generator_forward.14} parent=0 // pred_fallthru
    _

// kernel: generator_forward.15
$region0: #{generator_forward.15}
  #allocation0 [shape = 'u32[]', space=smem, size = 0x4, offset = 0x4, fixed_abs, tag = 'smem constant byte address 0x4 - core index']
  #allocation1 [shape = 'u32[144,128]{1,0:T(1,128)}', space=vmem, size = 0x12000, scoped, tag = 'internal scratch']
  %s0 = inlined_call_operand.vmem [shape: bf16[2,2048], index: 0, kind: input, shape index: {}]
  %s1 = inlined_call_operand.vmem [shape: bf16[2048,128], index: 1, kind: input, shape index: {}]
  %s2 = inlined_call_operand.vmem [shape: f32[1,128], index: 2, kind: input, shape index: {}]
  %s3 = inlined_call_operand.vmem [shape: f32[2,128], index: 3, kind: output, shape index: {}]
  %s4 = sld [smem:[#allocation0]]
  $region22: #{generator_forward.15} parent=0
    _
  %s6 = ssub.s32 1, %s4
  %s7 = scalar_select 0, %s6, %s4
  // Predicated region
  $region2: #{generator_forward.15} parent=0 // pred_check
    _
  $region3: #{generator_forward.15} parent=0 // pred_check_branch
    %9 = sbr.rel (0) target = $region5
  $region4: #{generator_forward.15} parent=0 // pred_region
    _
  $region5: #{generator_forward.15} parent=0 // pred_fallthru
    _
  // Predicated region
  $region6: #{generator_forward.15} parent=0 // pred_check
    _
  $region7: #{generator_forward.15} parent=0 // pred_check_branch
    %11 = sbr.rel (0) target = $region9
  $region8: #{generator_forward.15} parent=0 // pred_region
    _
  $region9: #{generator_forward.15} parent=0 // pred_fallthru
    _
  // Predicated region
  $region10: #{generator_forward.15} parent=0 // pred_check
    _
  $region11: #{generator_forward.15} parent=0 // pred_check_branch
    %13 = sbr.rel (0) target = $region13
  $region12: #{generator_forward.15} parent=0 // pred_region
    _
  $region13: #{generator_forward.15} parent=0 // pred_fallthru
    _
  %v15 = vld [vmem:[%s0] sm:$0xff]
  %v16 = vld [vmem:[%s0 + $0x8] sm:$0xff]
  %v17 = vld [vmem:[%s1] sm:$0xf]
  %v18 = vld [vmem:[%s1 + $0x4] sm:$0xf]
  %v19 = vld [vmem:[%s1 + $0x8] sm:$0xf]
  %v20 = vld [vmem:[%s1 + $0xc] sm:$0xf]
  %v21 = vld [vmem:[%s1 + $0x10] sm:$0xf]
  %v22 = vld [vmem:[%s1 + $0x14] sm:$0xf]
  %v23 = vld [vmem:[%s1 + $0x18] sm:$0xf]
  %v24 = vld [vmem:[%s1 + $0x1c] sm:$0xf]
  %v25 = vld [vmem:[%s1 + $0x20] sm:$0xf]
  %v26 = vld [vmem:[%s1 + $0x24] sm:$0xf]
  %v27 = vld [vmem:[%s1 + $0x28] sm:$0xf]
  %v28 = vld [vmem:[%s1 + $0x2c] sm:$0xf]
  %v29 = vld [vmem:[%s1 + $0x30] sm:$0xf]
  %v30 = vld [vmem:[%s1 + $0x34] sm:$0xf]
  %v31 = vld [vmem:[%s1 + $0x38] sm:$0xf]
  %v32 = vld [vmem:[%s1 + $0x3c] sm:$0xf]
  %v33 = vld [vmem:[%s1 + $0x40] sm:$0xf]
  %v34 = vld [vmem:[%s1 + $0x44] sm:$0xf]
  %v35 = vld [vmem:[%s1 + $0x48] sm:$0xf]
  %v36 = vld [vmem:[%s1 + $0x4c] sm:$0xf]
  %v37 = vld [vmem:[%s1 + $0x50] sm:$0xf]
  %v38 = vld [vmem:[%s1 + $0x54] sm:$0xf]
  %v39 = vld [vmem:[%s1 + $0x58] sm:$0xf]
  %v40 = vld [vmem:[%s1 + $0x5c] sm:$0xf]
  %v41 = vld [vmem:[%s1 + $0x60] sm:$0xf]
  %v42 = vld [vmem:[%s1 + $0x64] sm:$0xf]
  %v43 = vld [vmem:[%s1 + $0x68] sm:$0xf]
  %v44 = vld [vmem:[%s1 + $0x6c] sm:$0xf]
  %v45 = vld [vmem:[%s1 + $0x70] sm:$0xf]
  %v46 = vld [vmem:[%s1 + $0x74] sm:$0xf]
  %v47 = vld [vmem:[%s1 + $0x78] sm:$0xf]
  %v48 = vld [vmem:[%s1 + $0x7c] sm:$0xf]
  %v49 = vld [vmem:[%s1 + $0x80] sm:$0xf]
  %v50 = vld [vmem:[%s1 + $0x84] sm:$0xf]
  %v51 = vld [vmem:[%s1 + $0x88] sm:$0xf]
  %v52 = vld [vmem:[%s1 + $0x8c] sm:$0xf]
  %v53 = vld [vmem:[%s1 + $0x90] sm:$0xf]
  %v54 = vld [vmem:[%s1 + $0x94] sm:$0xf]
  %v55 = vld [vmem:[%s1 + $0x98] sm:$0xf]
  %v56 = vld [vmem:[%s1 + $0x9c] sm:$0xf]
  %v57 = vld [vmem:[%s1 + $0xa0] sm:$0xf]
  %v58 = vld [vmem:[%s1 + $0xa4] sm:$0xf]
  %v59 = vld [vmem:[%s1 + $0xa8] sm:$0xf]
  %v60 = vld [vmem:[%s1 + $0xac] sm:$0xf]
  %v61 = vld [vmem:[%s1 + $0xb0] sm:$0xf]
  %v62 = vld [vmem:[%s1 + $0xb4] sm:$0xf]
  %v63 = vld [vmem:[%s1 + $0xb8] sm:$0xf]
  %v64 = vld [vmem:[%s1 + $0xbc] sm:$0xf]
  %v65 = vld [vmem:[%s1 + $0xc0] sm:$0xf]
  %v66 = vld [vmem:[%s1 + $0xc4] sm:$0xf]
  %v67 = vld [vmem:[%s1 + $0xc8] sm:$0xf]
  %v68 = vld [vmem:[%s1 + $0xcc] sm:$0xf]
  %v69 = vld [vmem:[%s1 + $0xd0] sm:$0xf]
  %v70 = vld [vmem:[%s1 + $0xd4] sm:$0xf]
  %v71 = vld [vmem:[%s1 + $0xd8] sm:$0xf]
  %v72 = vld [vmem:[%s1 + $0xdc] sm:$0xf]
  %v73 = vld [vmem:[%s1 + $0xe0] sm:$0xf]
  %v74 = vld [vmem:[%s1 + $0xe4] sm:$0xf]
  %v75 = vld [vmem:[%s1 + $0xe8] sm:$0xf]
  %v76 = vld [vmem:[%s1 + $0xec] sm:$0xf]
  %v77 = vld [vmem:[%s1 + $0xf0] sm:$0xf]
  %v78 = vld [vmem:[%s1 + $0xf4] sm:$0xf]
  %v79 = vld [vmem:[%s1 + $0xf8] sm:$0xf]
  %v80 = vld [vmem:[%s1 + $0xfc] sm:$0xf]
  %v81 = vld [vmem:[%s1 + $0x100] sm:$0xf]
  %v82 = vld [vmem:[%s1 + $0x104] sm:$0xf]
  %v83 = vld [vmem:[%s1 + $0x108] sm:$0xf]
  %v84 = vld [vmem:[%s1 + $0x10c] sm:$0xf]
  %v85 = vld [vmem:[%s1 + $0x110] sm:$0xf]
  %v86 = vld [vmem:[%s1 + $0x114] sm:$0xf]
  %v87 = vld [vmem:[%s1 + $0x118] sm:$0xf]
  %v88 = vld [vmem:[%s1 + $0x11c] sm:$0xf]
  %v89 = vld [vmem:[%s1 + $0x120] sm:$0xf]
  %v90 = vld [vmem:[%s1 + $0x124] sm:$0xf]
  %v91 = vld [vmem:[%s1 + $0x128] sm:$0xf]
  %v92 = vld [vmem:[%s1 + $0x12c] sm:$0xf]
  %v93 = vld [vmem:[%s1 + $0x130] sm:$0xf]
  %v94 = vld [vmem:[%s1 + $0x134] sm:$0xf]
  %v95 = vld [vmem:[%s1 + $0x138] sm:$0xf]
  %v96 = vld [vmem:[%s1 + $0x13c] sm:$0xf]
  %v97 = vld [vmem:[%s1 + $0x140] sm:$0xf]
  %v98 = vld [vmem:[%s1 + $0x144] sm:$0xf]
  %v99 = vld [vmem:[%s1 + $0x148] sm:$0xf]
  %v100 = vld [vmem:[%s1 + $0x14c] sm:$0xf]
  %v101 = vld [vmem:[%s1 + $0x150] sm:$0xf]
  %v102 = vld [vmem:[%s1 + $0x154] sm:$0xf]
  %v103 = vld [vmem:[%s1 + $0x158] sm:$0xf]
  %v104 = vld [vmem:[%s1 + $0x15c] sm:$0xf]
  %v105 = vld [vmem:[%s1 + $0x160] sm:$0xf]
  %v106 = vld [vmem:[%s1 + $0x164] sm:$0xf]
  %v107 = vld [vmem:[%s1 + $0x168] sm:$0xf]
  %v108 = vld [vmem:[%s1 + $0x16c] sm:$0xf]
  %v109 = vld [vmem:[%s1 + $0x170] sm:$0xf]
  %v110 = vld [vmem:[%s1 + $0x174] sm:$0xf]
  %v111 = vld [vmem:[%s1 + $0x178] sm:$0xf]
  %v112 = vld [vmem:[%s1 + $0x17c] sm:$0xf]
  %v113 = vld [vmem:[%s1 + $0x180] sm:$0xf]
  %v114 = vld [vmem:[%s1 + $0x184] sm:$0xf]
  %v115 = vld [vmem:[%s1 + $0x188] sm:$0xf]
  %v116 = vld [vmem:[%s1 + $0x18c] sm:$0xf]
  %v117 = vld [vmem:[%s1 + $0x190] sm:$0xf]
  %v118 = vld [vmem:[%s1 + $0x194] sm:$0xf]
  %v119 = vld [vmem:[%s1 + $0x198] sm:$0xf]
  %v120 = vld [vmem:[%s1 + $0x19c] sm:$0xf]
  %v121 = vld [vmem:[%s1 + $0x1a0] sm:$0xf]
  %v122 = vld [vmem:[%s1 + $0x1a4] sm:$0xf]
  %v123 = vld [vmem:[%s1 + $0x1a8] sm:$0xf]
  %v124 = vld [vmem:[%s1 + $0x1ac] sm:$0xf]
  %v125 = vld [vmem:[%s1 + $0x1b0] sm:$0xf]
  %v126 = vld [vmem:[%s1 + $0x1b4] sm:$0xf]
  %v127 = vld [vmem:[%s1 + $0x1b8] sm:$0xf]
  %v128 = vld [vmem:[%s1 + $0x1bc] sm:$0xf]
  %v129 = vld [vmem:[%s1 + $0x1c0] sm:$0xf]
  %v130 = vld [vmem:[%s1 + $0x1c4] sm:$0xf]
  %v131 = vld [vmem:[%s1 + $0x1c8] sm:$0xf]
  %v132 = vld [vmem:[%s1 + $0x1cc] sm:$0xf]
  %v133 = vld [vmem:[%s1 + $0x1d0] sm:$0xf]
  %v134 = vld [vmem:[%s1 + $0x1d4] sm:$0xf]
  %v135 = vld [vmem:[%s1 + $0x1d8] sm:$0xf]
  %v136 = vld [vmem:[%s1 + $0x1dc] sm:$0xf]
  %v137 = vld [vmem:[%s1 + $0x1e0] sm:$0xf]
  %v138 = vld [vmem:[%s1 + $0x1e4] sm:$0xf]
  %v139 = vld [vmem:[%s1 + $0x1e8] sm:$0xf]
  %v140 = vld [vmem:[%s1 + $0x1ec] sm:$0xf]
  %v141 = vld [vmem:[%s1 + $0x1f0] sm:$0xf]
  %v142 = vld [vmem:[%s1 + $0x1f4] sm:$0xf]
  %v143 = vld [vmem:[%s1 + $0x1f8] sm:$0xf]
  %v144 = vld [vmem:[%s1 + $0x1fc] sm:$0xf]
  %v145 = vld [vmem:[%s1 + $0x200] sm:$0xf]
  %v146 = vld [vmem:[%s1 + $0x204] sm:$0xf]
  %v147 = vld [vmem:[%s1 + $0x208] sm:$0xf]
  %v148 = vld [vmem:[%s1 + $0x20c] sm:$0xf]
  %v149 = vld [vmem:[%s1 + $0x210] sm:$0xf]
  %v150 = vld [vmem:[%s1 + $0x214] sm:$0xf]
  %v151 = vld [vmem:[%s1 + $0x218] sm:$0xf]
  %v152 = vld [vmem:[%s1 + $0x21c] sm:$0xf]
  %v153 = vld [vmem:[%s1 + $0x220] sm:$0xf]
  %v154 = vld [vmem:[%s1 + $0x224] sm:$0xf]
  %v155 = vld [vmem:[%s1 + $0x228] sm:$0xf]
  %v156 = vld [vmem:[%s1 + $0x22c] sm:$0xf]
  %v157 = vld [vmem:[%s1 + $0x230] sm:$0xf]
  %v158 = vld [vmem:[%s1 + $0x234] sm:$0xf]
  %v159 = vld [vmem:[%s1 + $0x238] sm:$0xf]
  %v160 = vld [vmem:[%s1 + $0x23c] sm:$0xf]
  %v161 = vld [vmem:[%s1 + $0x240] sm:$0xf]
  %v162 = vld [vmem:[%s1 + $0x244] sm:$0xf]
  %v163 = vld [vmem:[%s1 + $0x248] sm:$0xf]
  %v164 = vld [vmem:[%s1 + $0x24c] sm:$0xf]
  %v165 = vld [vmem:[%s1 + $0x250] sm:$0xf]
  %v166 = vld [vmem:[%s1 + $0x254] sm:$0xf]
  %v167 = vld [vmem:[%s1 + $0x258] sm:$0xf]
  %v168 = vld [vmem:[%s1 + $0x25c] sm:$0xf]
  %v169 = vld [vmem:[%s1 + $0x260] sm:$0xf]
  %v170 = vld [vmem:[%s1 + $0x264] sm:$0xf]
  %v171 = vld [vmem:[%s1 + $0x268] sm:$0xf]
  %v172 = vld [vmem:[%s1 + $0x26c] sm:$0xf]
  %v173 = vld [vmem:[%s1 + $0x270] sm:$0xf]
  %v174 = vld [vmem:[%s1 + $0x274] sm:$0xf]
  %v175 = vld [vmem:[%s1 + $0x278] sm:$0xf]
  %v176 = vld [vmem:[%s1 + $0x27c] sm:$0xf]
  %v177 = vld [vmem:[%s1 + $0x280] sm:$0xf]
  %v178 = vld [vmem:[%s1 + $0x284] sm:$0xf]
  %v179 = vld [vmem:[%s1 + $0x288] sm:$0xf]
  %v180 = vld [vmem:[%s1 + $0x28c] sm:$0xf]
  %v181 = vld [vmem:[%s1 + $0x290] sm:$0xf]
  %v182 = vld [vmem:[%s1 + $0x294] sm:$0xf]
  %v183 = vld [vmem:[%s1 + $0x298] sm:$0xf]
  %v184 = vld [vmem:[%s1 + $0x29c] sm:$0xf]
  %v185 = vld [vmem:[%s1 + $0x2a0] sm:$0xf]
  %v186 = vld [vmem:[%s1 + $0x2a4] sm:$0xf]
  %v187 = vld [vmem:[%s1 + $0x2a8] sm:$0xf]
  %v188 = vld [vmem:[%s1 + $0x2ac] sm:$0xf]
  %v189 = vld [vmem:[%s1 + $0x2b0] sm:$0xf]
  %v190 = vld [vmem:[%s1 + $0x2b4] sm:$0xf]
  %v191 = vld [vmem:[%s1 + $0x2b8] sm:$0xf]
  %v192 = vld [vmem:[%s1 + $0x2bc] sm:$0xf]
  %v193 = vld [vmem:[%s1 + $0x2c0] sm:$0xf]
  %v194 = vld [vmem:[%s1 + $0x2c4] sm:$0xf]
  %v195 = vld [vmem:[%s1 + $0x2c8] sm:$0xf]
  %v196 = vld [vmem:[%s1 + $0x2cc] sm:$0xf]
  %v197 = vld [vmem:[%s1 + $0x2d0] sm:$0xf]
  %v198 = vld [vmem:[%s1 + $0x2d4] sm:$0xf]
  %v199 = vld [vmem:[%s1 + $0x2d8] sm:$0xf]
  %v200 = vld [vmem:[%s1 + $0x2dc] sm:$0xf]
  %v201 = vld [vmem:[%s1 + $0x2e0] sm:$0xf]
  %v202 = vld [vmem:[%s1 + $0x2e4] sm:$0xf]
  %v203 = vld [vmem:[%s1 + $0x2e8] sm:$0xf]
  %v204 = vld [vmem:[%s1 + $0x2ec] sm:$0xf]
  %v205 = vld [vmem:[%s1 + $0x2f0] sm:$0xf]
  %v206 = vld [vmem:[%s1 + $0x2f4] sm:$0xf]
  %v207 = vld [vmem:[%s1 + $0x2f8] sm:$0xf]
  %v208 = vld [vmem:[%s1 + $0x2fc] sm:$0xf]
  %v209 = vld [vmem:[%s1 + $0x300] sm:$0xf]
  %v210 = vld [vmem:[%s1 + $0x304] sm:$0xf]
  %v211 = vld [vmem:[%s1 + $0x308] sm:$0xf]
  %v212 = vld [vmem:[%s1 + $0x30c] sm:$0xf]
  %v213 = vld [vmem:[%s1 + $0x310] sm:$0xf]
  %v214 = vld [vmem:[%s1 + $0x314] sm:$0xf]
  %v215 = vld [vmem:[%s1 + $0x318] sm:$0xf]
  %v216 = vld [vmem:[%s1 + $0x31c] sm:$0xf]
  %v217 = vld [vmem:[%s1 + $0x320] sm:$0xf]
  %v218 = vld [vmem:[%s1 + $0x324] sm:$0xf]
  %v219 = vld [vmem:[%s1 + $0x328] sm:$0xf]
  %v220 = vld [vmem:[%s1 + $0x32c] sm:$0xf]
  %v221 = vld [vmem:[%s1 + $0x330] sm:$0xf]
  %v222 = vld [vmem:[%s1 + $0x334] sm:$0xf]
  %v223 = vld [vmem:[%s1 + $0x338] sm:$0xf]
  %v224 = vld [vmem:[%s1 + $0x33c] sm:$0xf]
  %v225 = vld [vmem:[%s1 + $0x340] sm:$0xf]
  %v226 = vld [vmem:[%s1 + $0x344] sm:$0xf]
  %v227 = vld [vmem:[%s1 + $0x348] sm:$0xf]
  %v228 = vld [vmem:[%s1 + $0x34c] sm:$0xf]
  %v229 = vld [vmem:[%s1 + $0x350] sm:$0xf]
  %v230 = vld [vmem:[%s1 + $0x354] sm:$0xf]
  %v231 = vld [vmem:[%s1 + $0x358] sm:$0xf]
  %v232 = vld [vmem:[%s1 + $0x35c] sm:$0xf]
  %v233 = vld [vmem:[%s1 + $0x360] sm:$0xf]
  %v234 = vld [vmem:[%s1 + $0x364] sm:$0xf]
  %v235 = vld [vmem:[%s1 + $0x368] sm:$0xf]
  %v236 = vld [vmem:[%s1 + $0x36c] sm:$0xf]
  %v237 = vld [vmem:[%s1 + $0x370] sm:$0xf]
  %v238 = vld [vmem:[%s1 + $0x374] sm:$0xf]
  %v239 = vld [vmem:[%s1 + $0x378] sm:$0xf]
  %v240 = vld [vmem:[%s1 + $0x37c] sm:$0xf]
  %v241 = vld [vmem:[%s1 + $0x380] sm:$0xf]
  %v242 = vld [vmem:[%s1 + $0x384] sm:$0xf]
  %v243 = vld [vmem:[%s1 + $0x388] sm:$0xf]
  %v244 = vld [vmem:[%s1 + $0x38c] sm:$0xf]
  %v245 = vld [vmem:[%s1 + $0x390] sm:$0xf]
  %v246 = vld [vmem:[%s1 + $0x394] sm:$0xf]
  %v247 = vld [vmem:[%s1 + $0x398] sm:$0xf]
  %v248 = vld [vmem:[%s1 + $0x39c] sm:$0xf]
  %v249 = vld [vmem:[%s1 + $0x3a0] sm:$0xf]
  %v250 = vld [vmem:[%s1 + $0x3a4] sm:$0xf]
  %v251 = vld [vmem:[%s1 + $0x3a8] sm:$0xf]
  %v252 = vld [vmem:[%s1 + $0x3ac] sm:$0xf]
  %v253 = vld [vmem:[%s1 + $0x3b0] sm:$0xf]
  %v254 = vld [vmem:[%s1 + $0x3b4] sm:$0xf]
  %v255 = vld [vmem:[%s1 + $0x3b8] sm:$0xf]
  %v256 = vld [vmem:[%s1 + $0x3bc] sm:$0xf]
  %v257 = vld [vmem:[%s1 + $0x3c0] sm:$0xf]
  %v258 = vld [vmem:[%s1 + $0x3c4] sm:$0xf]
  %v259 = vld [vmem:[%s1 + $0x3c8] sm:$0xf]
  %v260 = vld [vmem:[%s1 + $0x3cc] sm:$0xf]
  %v261 = vld [vmem:[%s1 + $0x3d0] sm:$0xf]
  %v262 = vld [vmem:[%s1 + $0x3d4] sm:$0xf]
  %v263 = vld [vmem:[%s1 + $0x3d8] sm:$0xf]
  %v264 = vld [vmem:[%s1 + $0x3dc] sm:$0xf]
  %v265 = vld [vmem:[%s1 + $0x3e0] sm:$0xf]
  %v266 = vld [vmem:[%s1 + $0x3e4] sm:$0xf]
  %v267 = vld [vmem:[%s1 + $0x3e8] sm:$0xf]
  %v268 = vld [vmem:[%s1 + $0x3ec] sm:$0xf]
  %v269 = vld [vmem:[%s1 + $0x3f0] sm:$0xf]
  %v270 = vld [vmem:[%s1 + $0x3f4] sm:$0xf]
  %v271 = vld [vmem:[%s1 + $0x3f8] sm:$0xf]
  %v272 = vld [vmem:[%s1 + $0x3fc] sm:$0xf]
  %v273 = vld [vmem:[%s2] sm:$0x1]
  %v275 = vlaneseq
  %v276 = vshrl.u32 %v275, 7
  %v277 = vsub.s32 0, %v276
  %v278 = vrot.slane %v273, %v277
  %v282 = vcombine.high %v15, %v15
  %v284 = vunpack.c.l.s4 1966171168
  %v285 = vunpack.c.0.s8 %v284
  %v286 = vlaneseq
  %v287 = vshrl.u32 %v286, 7
  %v288 = vsub.s32 %v285, %v287
  %v289 = vrot.slane %v15, %v288
  %v291 = vunpack.c.l.s4 1966171168
  %v292 = vunpack.c.0.s8 %v291
  %v293 = vlaneseq
  %v294 = vshrl.u32 %v293, 7
  %v295 = vsub.s32 %v292, %v294
  %v296 = vrot.slane %v282, %v295
  %v297 = vcombine.high %v289, %v289
  %v298 = vcombine.high %v296, %v296
  %v300 = vunpack.c.l.s4 1966171168
  %v301 = vunpack.c.0.s8 %v300
  %v302 = vlaneseq
  %v303 = vshrl.u32 %v302, 7
  %v304 = vsub.s32 %v301, %v303
  %v305 = vrot.slane %v289, %v304
  %v307 = vunpack.c.l.s4 1966171168
  %v308 = vunpack.c.0.s8 %v307
  %v309 = vlaneseq
  %v310 = vshrl.u32 %v309, 7
  %v311 = vsub.s32 %v308, %v310
  %v312 = vrot.slane %v296, %v311
  %v314 = vunpack.c.l.s4 1966171168
  %v315 = vunpack.c.0.s8 %v314
  %v316 = vlaneseq
  %v317 = vshrl.u32 %v316, 7
  %v318 = vsub.s32 %v315, %v317
  %v319 = vrot.slane %v297, %v318
  %v321 = vunpack.c.l.s4 1966171168
  %v322 = vunpack.c.0.s8 %v321
  %v323 = vlaneseq
  %v324 = vshrl.u32 %v323, 7
  %v325 = vsub.s32 %v322, %v324
  %v326 = vrot.slane %v298, %v325
  %v327 = vcombine.high %v305, %v305
  %v328 = vcombine.high %v312, %v312
  %v329 = vcombine.high %v319, %v319
  %v330 = vcombine.high %v326, %v326
  %v331 = vcombine.high %v16, %v16
  %v333 = vunpack.c.l.s4 1966171168
  %v334 = vunpack.c.0.s8 %v333
  %v335 = vlaneseq
  %v336 = vshrl.u32 %v335, 7
  %v337 = vsub.s32 %v334, %v336
  %v338 = vrot.slane %v16, %v337
  %v340 = vunpack.c.l.s4 1966171168
  %v341 = vunpack.c.0.s8 %v340
  %v342 = vlaneseq
  %v343 = vshrl.u32 %v342, 7
  %v344 = vsub.s32 %v341, %v343
  %v345 = vrot.slane %v331, %v344
  %v346 = vcombine.high %v338, %v338
  %v347 = vcombine.high %v345, %v345
  %v349 = vunpack.c.l.s4 1966171168
  %v350 = vunpack.c.0.s8 %v349
  %v351 = vlaneseq
  %v352 = vshrl.u32 %v351, 7
  %v353 = vsub.s32 %v350, %v352
  %v354 = vrot.slane %v338, %v353
  %v356 = vunpack.c.l.s4 1966171168
  %v357 = vunpack.c.0.s8 %v356
  %v358 = vlaneseq
  %v359 = vshrl.u32 %v358, 7
  %v360 = vsub.s32 %v357, %v359
  %v361 = vrot.slane %v345, %v360
  %v363 = vunpack.c.l.s4 1966171168
  %v364 = vunpack.c.0.s8 %v363
  %v365 = vlaneseq
  %v366 = vshrl.u32 %v365, 7
  %v367 = vsub.s32 %v364, %v366
  %v368 = vrot.slane %v346, %v367
  %v370 = vunpack.c.l.s4 1966171168
  %v371 = vunpack.c.0.s8 %v370
  %v372 = vlaneseq
  %v373 = vshrl.u32 %v372, 7
  %v374 = vsub.s32 %v371, %v373
  %v375 = vrot.slane %v347, %v374
  %v376 = vcombine.high %v354, %v354
  %v377 = vcombine.high %v361, %v361
  %v378 = vcombine.high %v368, %v368
  %v379 = vcombine.high %v375, %v375
  %v652 = vunpack.c.l.b16 %v17
  %v653 = vunpack.c.l.b16 %v18
  %v654 = vunpack.c.l.b16 %v19
  %v655 = vunpack.c.l.b16 %v20
  %v656 = vunpack.c.l.b16 %v21
  %v657 = vunpack.c.l.b16 %v22
  %v658 = vunpack.c.l.b16 %v23
  %v659 = vunpack.c.l.b16 %v24
  %v660 = vunpack.c.l.b16 %v25
  %v661 = vunpack.c.l.b16 %v26
  %v662 = vunpack.c.l.b16 %v27
  %v663 = vunpack.c.l.b16 %v28
  %v664 = vunpack.c.l.b16 %v29
  %v665 = vunpack.c.l.b16 %v30
  %v666 = vunpack.c.l.b16 %v31
  %v667 = vunpack.c.l.b16 %v32
  %v668 = vunpack.c.l.b16 %v33
  %v669 = vunpack.c.l.b16 %v34
  %v670 = vunpack.c.l.b16 %v35
  %v671 = vunpack.c.l.b16 %v36
  %v672 = vunpack.c.l.b16 %v37
  %v673 = vunpack.c.l.b16 %v38
  %v674 = vunpack.c.l.b16 %v39
  %v675 = vunpack.c.l.b16 %v40
  %v676 = vunpack.c.l.b16 %v41
  %v677 = vunpack.c.l.b16 %v42
  %v678 = vunpack.c.l.b16 %v43
  %v679 = vunpack.c.l.b16 %v44
  %v680 = vunpack.c.l.b16 %v45
  %v681 = vunpack.c.l.b16 %v46
  %v682 = vunpack.c.l.b16 %v47
  %v683 = vunpack.c.l.b16 %v48
  %v684 = vunpack.c.l.b16 %v49
  %v685 = vunpack.c.l.b16 %v50
  %v686 = vunpack.c.l.b16 %v51
  %v687 = vunpack.c.l.b16 %v52
  %v688 = vunpack.c.l.b16 %v53
  %v689 = vunpack.c.l.b16 %v54
  %v690 = vunpack.c.l.b16 %v55
  %v691 = vunpack.c.l.b16 %v56
  %v692 = vunpack.c.l.b16 %v57
  %v693 = vunpack.c.l.b16 %v58
  %v694 = vunpack.c.l.b16 %v59
  %v695 = vunpack.c.l.b16 %v60
  %v696 = vunpack.c.l.b16 %v61
  %v697 = vunpack.c.l.b16 %v62
  %v698 = vunpack.c.l.b16 %v63
  %v699 = vunpack.c.l.b16 %v64
  %v700 = vunpack.c.l.b16 %v65
  %v701 = vunpack.c.l.b16 %v66
  %v702 = vunpack.c.l.b16 %v67
  %v703 = vunpack.c.l.b16 %v68
  %v704 = vunpack.c.l.b16 %v69
  %v705 = vunpack.c.l.b16 %v70
  %v706 = vunpack.c.l.b16 %v71
  %v707 = vunpack.c.l.b16 %v72
  %v708 = vunpack.c.l.b16 %v73
  %v709 = vunpack.c.l.b16 %v74
  %v710 = vunpack.c.l.b16 %v75
  %v711 = vunpack.c.l.b16 %v76
  %v712 = vunpack.c.l.b16 %v77
  %v713 = vunpack.c.l.b16 %v78
  %v714 = vunpack.c.l.b16 %v79
  %v715 = vunpack.c.l.b16 %v80
  %v716 = vunpack.c.l.b16 %v81
  %v717 = vunpack.c.l.b16 %v82
  %v718 = vunpack.c.l.b16 %v83
  %v719 = vunpack.c.l.b16 %v84
  %v720 = vunpack.c.l.b16 %v85
  %v721 = vunpack.c.l.b16 %v86
  %v722 = vunpack.c.l.b16 %v87
  %v723 = vunpack.c.l.b16 %v88
  %v724 = vunpack.c.l.b16 %v89
  %v725 = vunpack.c.l.b16 %v90
  %v726 = vunpack.c.l.b16 %v91
  %v727 = vunpack.c.l.b16 %v92
  %v728 = vunpack.c.l.b16 %v93
  %v729 = vunpack.c.l.b16 %v94
  %v730 = vunpack.c.l.b16 %v95
  %v731 = vunpack.c.l.b16 %v96
  %v732 = vunpack.c.l.b16 %v97
  %v733 = vunpack.c.l.b16 %v98
  %v734 = vunpack.c.l.b16 %v99
  %v735 = vunpack.c.l.b16 %v100
  %v736 = vunpack.c.l.b16 %v101
  %v737 = vunpack.c.l.b16 %v102
  %v738 = vunpack.c.l.b16 %v103
  %v739 = vunpack.c.l.b16 %v104
  %v740 = vunpack.c.l.b16 %v105
  %v741 = vunpack.c.l.b16 %v106
  %v742 = vunpack.c.l.b16 %v107
  %v743 = vunpack.c.l.b16 %v108
  %v744 = vunpack.c.l.b16 %v109
  %v745 = vunpack.c.l.b16 %v110
  %v746 = vunpack.c.l.b16 %v111
  %v747 = vunpack.c.l.b16 %v112
  %v748 = vunpack.c.l.b16 %v113
  %v749 = vunpack.c.l.b16 %v114
  %v750 = vunpack.c.l.b16 %v115
  %v751 = vunpack.c.l.b16 %v116
  %v752 = vunpack.c.l.b16 %v117
  %v753 = vunpack.c.l.b16 %v118
  %v754 = vunpack.c.l.b16 %v119
  %v755 = vunpack.c.l.b16 %v120
  %v756 = vunpack.c.l.b16 %v121
  %v757 = vunpack.c.l.b16 %v122
  %v758 = vunpack.c.l.b16 %v123
  %v759 = vunpack.c.l.b16 %v124
  %v760 = vunpack.c.l.b16 %v125
  %v761 = vunpack.c.l.b16 %v126
  %v762 = vunpack.c.l.b16 %v127
  %v763 = vunpack.c.l.b16 %v128
  %v764 = vunpack.c.l.b16 %v129
  %v765 = vunpack.c.l.b16 %v130
  %v766 = vunpack.c.l.b16 %v131
  %v767 = vunpack.c.l.b16 %v132
  %v768 = vunpack.c.l.b16 %v133
  %v769 = vunpack.c.l.b16 %v134
  %v770 = vunpack.c.l.b16 %v135
  %v771 = vunpack.c.l.b16 %v136
  %v772 = vunpack.c.l.b16 %v137
  %v773 = vunpack.c.l.b16 %v138
  %v774 = vunpack.c.l.b16 %v139
  %v775 = vunpack.c.l.b16 %v140
  %v776 = vunpack.c.l.b16 %v141
  %v777 = vunpack.c.l.b16 %v142
  %v778 = vunpack.c.l.b16 %v143
  %v779 = vunpack.c.l.b16 %v144
  %v780 = vunpack.c.l.b16 %v145
  %v781 = vunpack.c.l.b16 %v146
  %v782 = vunpack.c.l.b16 %v147
  %v783 = vunpack.c.l.b16 %v148
  %v784 = vunpack.c.l.b16 %v149
  %v785 = vunpack.c.l.b16 %v150
  %v786 = vunpack.c.l.b16 %v151
  %v787 = vunpack.c.l.b16 %v152
  %v788 = vunpack.c.l.b16 %v153
  %v789 = vunpack.c.l.b16 %v154
  %v790 = vunpack.c.l.b16 %v155
  %v791 = vunpack.c.l.b16 %v156
  %v792 = vunpack.c.l.b16 %v157
  %v793 = vunpack.c.l.b16 %v158
  %v794 = vunpack.c.l.b16 %v159
  %v795 = vunpack.c.l.b16 %v160
  %v796 = vunpack.c.l.b16 %v161
  %v797 = vunpack.c.l.b16 %v162
  %v798 = vunpack.c.l.b16 %v163
  %v799 = vunpack.c.l.b16 %v164
  %v800 = vunpack.c.l.b16 %v165
  %v801 = vunpack.c.l.b16 %v166
  %v802 = vunpack.c.l.b16 %v167
  %v803 = vunpack.c.l.b16 %v168
  %v804 = vunpack.c.l.b16 %v169
  %v805 = vunpack.c.l.b16 %v170
  %v806 = vunpack.c.l.b16 %v171
  %v807 = vunpack.c.l.b16 %v172
  %v808 = vunpack.c.l.b16 %v173
  %v809 = vunpack.c.l.b16 %v174
  %v810 = vunpack.c.l.b16 %v175
  %v811 = vunpack.c.l.b16 %v176
  %v812 = vunpack.c.l.b16 %v177
  %v813 = vunpack.c.l.b16 %v178
  %v814 = vunpack.c.l.b16 %v179
  %v815 = vunpack.c.l.b16 %v180
  %v816 = vunpack.c.l.b16 %v181
  %v817 = vunpack.c.l.b16 %v182
  %v818 = vunpack.c.l.b16 %v183
  %v819 = vunpack.c.l.b16 %v184
  %v820 = vunpack.c.l.b16 %v185
  %v821 = vunpack.c.l.b16 %v186
  %v822 = vunpack.c.l.b16 %v187
  %v823 = vunpack.c.l.b16 %v188
  %v824 = vunpack.c.l.b16 %v189
  %v825 = vunpack.c.l.b16 %v190
  %v826 = vunpack.c.l.b16 %v191
  %v827 = vunpack.c.l.b16 %v192
  %v828 = vunpack.c.l.b16 %v193
  %v829 = vunpack.c.l.b16 %v194
  %v830 = vunpack.c.l.b16 %v195
  %v831 = vunpack.c.l.b16 %v196
  %v832 = vunpack.c.l.b16 %v197
  %v833 = vunpack.c.l.b16 %v198
  %v834 = vunpack.c.l.b16 %v199
  %v835 = vunpack.c.l.b16 %v200
  %v836 = vunpack.c.l.b16 %v201
  %v837 = vunpack.c.l.b16 %v202
  %v838 = vunpack.c.l.b16 %v203
  %v839 = vunpack.c.l.b16 %v204
  %v840 = vunpack.c.l.b16 %v205
  %v841 = vunpack.c.l.b16 %v206
  %v842 = vunpack.c.l.b16 %v207
  %v843 = vunpack.c.l.b16 %v208
  %v844 = vunpack.c.l.b16 %v209
  %v845 = vunpack.c.l.b16 %v210
  %v846 = vunpack.c.l.b16 %v211
  %v847 = vunpack.c.l.b16 %v212
  %v848 = vunpack.c.l.b16 %v213
  %v849 = vunpack.c.l.b16 %v214
  %v850 = vunpack.c.l.b16 %v215
  %v851 = vunpack.c.l.b16 %v216
  %v852 = vunpack.c.l.b16 %v217
  %v853 = vunpack.c.l.b16 %v218
  %v854 = vunpack.c.l.b16 %v219
  %v855 = vunpack.c.l.b16 %v220
  %v856 = vunpack.c.l.b16 %v221
  %v857 = vunpack.c.l.b16 %v222
  %v858 = vunpack.c.l.b16 %v223
  %v859 = vunpack.c.l.b16 %v224
  %v860 = vunpack.c.l.b16 %v225
  %v861 = vunpack.c.l.b16 %v226
  %v862 = vunpack.c.l.b16 %v227
  %v863 = vunpack.c.l.b16 %v228
  %v864 = vunpack.c.l.b16 %v229
  %v865 = vunpack.c.l.b16 %v230
  %v866 = vunpack.c.l.b16 %v231
  %v867 = vunpack.c.l.b16 %v232
  %v868 = vunpack.c.l.b16 %v233
  %v869 = vunpack.c.l.b16 %v234
  %v870 = vunpack.c.l.b16 %v235
  %v871 = vunpack.c.l.b16 %v236
  %v872 = vunpack.c.l.b16 %v237
  %v873 = vunpack.c.l.b16 %v238
  %v874 = vunpack.c.l.b16 %v239
  %v875 = vunpack.c.l.b16 %v240
  %v876 = vunpack.c.l.b16 %v241
  %v877 = vunpack.c.l.b16 %v242
  %v878 = vunpack.c.l.b16 %v243
  %v879 = vunpack.c.l.b16 %v244
  %v880 = vunpack.c.l.b16 %v245
  %v881 = vunpack.c.l.b16 %v246
  %v882 = vunpack.c.l.b16 %v247
  %v883 = vunpack.c.l.b16 %v248
  %v884 = vunpack.c.l.b16 %v249
  %v885 = vunpack.c.l.b16 %v250
  %v886 = vunpack.c.l.b16 %v251
  %v887 = vunpack.c.l.b16 %v252
  %v888 = vunpack.c.l.b16 %v253
  %v889 = vunpack.c.l.b16 %v254
  %v890 = vunpack.c.l.b16 %v255
  %v891 = vunpack.c.l.b16 %v256
  %v892 = vunpack.c.l.b16 %v257
  %v893 = vunpack.c.l.b16 %v258
  %v894 = vunpack.c.l.b16 %v259
  %v895 = vunpack.c.l.b16 %v260
  %v896 = vunpack.c.l.b16 %v261
  %v897 = vunpack.c.l.b16 %v262
  %v898 = vunpack.c.l.b16 %v263
  %v899 = vunpack.c.l.b16 %v264
  %v900 = vunpack.c.l.b16 %v265
  %v901 = vunpack.c.l.b16 %v266
  %v902 = vunpack.c.l.b16 %v267
  %v903 = vunpack.c.l.b16 %v268
  %v904 = vunpack.c.l.b16 %v269
  %v905 = vunpack.c.l.b16 %v270
  %v906 = vunpack.c.l.b16 %v271
  %v907 = vunpack.c.l.b16 %v272
  %v908 = vpack.c.b16 %v653, %v652
  %v909 = vpack.c.b16 %v655, %v654
  %v910 = vpack.c.b16 %v657, %v656
  %v911 = vpack.c.b16 %v659, %v658
  %v912 = vpack.c.b16 %v661, %v660
  %v913 = vpack.c.b16 %v663, %v662
  %v914 = vpack.c.b16 %v665, %v664
  %v915 = vpack.c.b16 %v667, %v666
  %v916 = vpack.c.b16 %v669, %v668
  %v917 = vpack.c.b16 %v671, %v670
  %v918 = vpack.c.b16 %v673, %v672
  %v919 = vpack.c.b16 %v675, %v674
  %v920 = vpack.c.b16 %v677, %v676
  %v921 = vpack.c.b16 %v679, %v678
  %v922 = vpack.c.b16 %v681, %v680
  %v923 = vpack.c.b16 %v683, %v682
  %v924 = vpack.c.b16 %v685, %v684
  %v925 = vpack.c.b16 %v687, %v686
  %v926 = vpack.c.b16 %v689, %v688
  %v927 = vpack.c.b16 %v691, %v690
  %v928 = vpack.c.b16 %v693, %v692
  %v929 = vpack.c.b16 %v695, %v694
  %v930 = vpack.c.b16 %v697, %v696
  %v931 = vpack.c.b16 %v699, %v698
  %v932 = vpack.c.b16 %v701, %v700
  %v933 = vpack.c.b16 %v703, %v702
  %v934 = vpack.c.b16 %v705, %v704
  %v935 = vpack.c.b16 %v707, %v706
  %v936 = vpack.c.b16 %v709, %v708
  %v937 = vpack.c.b16 %v711, %v710
  %v938 = vpack.c.b16 %v713, %v712
  %v939 = vpack.c.b16 %v715, %v714
  %v940 = vpack.c.b16 %v717, %v716
  %v941 = vpack.c.b16 %v719, %v718
  %v942 = vpack.c.b16 %v721, %v720
  %v943 = vpack.c.b16 %v723, %v722
  %v944 = vpack.c.b16 %v725, %v724
  %v945 = vpack.c.b16 %v727, %v726
  %v946 = vpack.c.b16 %v729, %v728
  %v947 = vpack.c.b16 %v731, %v730
  %v948 = vpack.c.b16 %v733, %v732
  %v949 = vpack.c.b16 %v735, %v734
  %v950 = vpack.c.b16 %v737, %v736
  %v951 = vpack.c.b16 %v739, %v738
  %v952 = vpack.c.b16 %v741, %v740
  %v953 = vpack.c.b16 %v743, %v742
  %v954 = vpack.c.b16 %v745, %v744
  %v955 = vpack.c.b16 %v747, %v746
  %v956 = vpack.c.b16 %v749, %v748
  %v957 = vpack.c.b16 %v751, %v750
  %v958 = vpack.c.b16 %v753, %v752
  %v959 = vpack.c.b16 %v755, %v754
  %v960 = vpack.c.b16 %v757, %v756
  %v961 = vpack.c.b16 %v759, %v758
  %v962 = vpack.c.b16 %v761, %v760
  %v963 = vpack.c.b16 %v763, %v762
  %v964 = vpack.c.b16 %v765, %v764
  %v965 = vpack.c.b16 %v767, %v766
  %v966 = vpack.c.b16 %v769, %v768
  %v967 = vpack.c.b16 %v771, %v770
  %v968 = vpack.c.b16 %v773, %v772
  %v969 = vpack.c.b16 %v775, %v774
  %v970 = vpack.c.b16 %v777, %v776
  %v971 = vpack.c.b16 %v779, %v778
  %v972 = vpack.c.b16 %v781, %v780
  %v973 = vpack.c.b16 %v783, %v782
  %v974 = vpack.c.b16 %v785, %v784
  %v975 = vpack.c.b16 %v787, %v786
  %v976 = vpack.c.b16 %v789, %v788
  %v977 = vpack.c.b16 %v791, %v790
  %v978 = vpack.c.b16 %v793, %v792
  %v979 = vpack.c.b16 %v795, %v794
  %v980 = vpack.c.b16 %v797, %v796
  %v981 = vpack.c.b16 %v799, %v798
  %v982 = vpack.c.b16 %v801, %v800
  %v983 = vpack.c.b16 %v803, %v802
  %v984 = vpack.c.b16 %v805, %v804
  %v985 = vpack.c.b16 %v807, %v806
  %v986 = vpack.c.b16 %v809, %v808
  %v987 = vpack.c.b16 %v811, %v810
  %v988 = vpack.c.b16 %v813, %v812
  %v989 = vpack.c.b16 %v815, %v814
  %v990 = vpack.c.b16 %v817, %v816
  %v991 = vpack.c.b16 %v819, %v818
  %v992 = vpack.c.b16 %v821, %v820
  %v993 = vpack.c.b16 %v823, %v822
  %v994 = vpack.c.b16 %v825, %v824
  %v995 = vpack.c.b16 %v827, %v826
  %v996 = vpack.c.b16 %v829, %v828
  %v997 = vpack.c.b16 %v831, %v830
  %v998 = vpack.c.b16 %v833, %v832
  %v999 = vpack.c.b16 %v835, %v834
  %v1000 = vpack.c.b16 %v837, %v836
  %v1001 = vpack.c.b16 %v839, %v838
  %v1002 = vpack.c.b16 %v841, %v840
  %v1003 = vpack.c.b16 %v843, %v842
  %v1004 = vpack.c.b16 %v845, %v844
  %v1005 = vpack.c.b16 %v847, %v846
  %v1006 = vpack.c.b16 %v849, %v848
  %v1007 = vpack.c.b16 %v851, %v850
  %v1008 = vpack.c.b16 %v853, %v852
  %v1009 = vpack.c.b16 %v855, %v854
  %v1010 = vpack.c.b16 %v857, %v856
  %v1011 = vpack.c.b16 %v859, %v858
  %v1012 = vpack.c.b16 %v861, %v860
  %v1013 = vpack.c.b16 %v863, %v862
  %v1014 = vpack.c.b16 %v865, %v864
  %v1015 = vpack.c.b16 %v867, %v866
  %v1016 = vpack.c.b16 %v869, %v868
  %v1017 = vpack.c.b16 %v871, %v870
  %v1018 = vpack.c.b16 %v873, %v872
  %v1019 = vpack.c.b16 %v875, %v874
  %v1020 = vpack.c.b16 %v877, %v876
  %v1021 = vpack.c.b16 %v879, %v878
  %v1022 = vpack.c.b16 %v881, %v880
  %v1023 = vpack.c.b16 %v883, %v882
  %v1024 = vpack.c.b16 %v885, %v884
  %v1025 = vpack.c.b16 %v887, %v886
  %v1026 = vpack.c.b16 %v889, %v888
  %v1027 = vpack.c.b16 %v891, %v890
  %v1028 = vpack.c.b16 %v893, %v892
  %v1029 = vpack.c.b16 %v895, %v894
  %v1030 = vpack.c.b16 %v897, %v896
  %v1031 = vpack.c.b16 %v899, %v898
  %v1032 = vpack.c.b16 %v901, %v900
  %v1033 = vpack.c.b16 %v903, %v902
  %v1034 = vpack.c.b16 %v905, %v904
  %v1035 = vpack.c.b16 %v907, %v906
  %1164 = vmatprep.subr.bf16.mxu0 0
  %1165 = vmatpush1.bf16.msra.mxu0 %v908
  %1166 = vmatprep.subr.bf16.mxu0 0
  %1167 = vmatpush1.bf16.msra.mxu0 %v909
  %1168 = vmatprep.subr.bf16.mxu0 0
  %1169 = vmatpush1.bf16.msra.mxu0 %v910
  %1170 = vmatprep.subr.bf16.mxu0 0
  %1171 = vmatpush1.bf16.msra.mxu0 %v911
  %1172 = vmatprep.subr.bf16.mxu0 0
  %1173 = vmatpush1.bf16.msra.mxu0 %v912
  %1174 = vmatprep.subr.bf16.mxu0 0
  %1175 = vmatpush1.bf16.msra.mxu0 %v913
  %1176 = vmatprep.subr.bf16.mxu0 0
  %1177 = vmatpush1.bf16.msra.mxu0 %v914
  %1178 = vmatprep.subr.bf16.mxu0 0
  %1179 = vmatpush1.bf16.msra.mxu0 %v915
  %1180 = vmatprep.subr.bf16.mxu0 0
  %1181 = vmatpush1.bf16.msra.mxu0 %v916
  %1182 = vmatprep.subr.bf16.mxu0 0
  %1183 = vmatpush1.bf16.msra.mxu0 %v917
  %1184 = vmatprep.subr.bf16.mxu0 0
  %1185 = vmatpush1.bf16.msra.mxu0 %v918
  %1186 = vmatprep.subr.bf16.mxu0 0
  %1187 = vmatpush1.bf16.msra.mxu0 %v919
  %1188 = vmatprep.subr.bf16.mxu0 0
  %1189 = vmatpush1.bf16.msra.mxu0 %v920
  %1190 = vmatprep.subr.bf16.mxu0 0
  %1191 = vmatpush1.bf16.msra.mxu0 %v921
  %1192 = vmatprep.subr.bf16.mxu0 0
  %1193 = vmatpush1.bf16.msra.mxu0 %v922
  %1194 = vmatprep.subr.bf16.mxu0 0
  %1195 = vmatpush1.bf16.msra.mxu0 %v923
  %1196 = vmatprep.mubr.bf16.mxu0 %v319
  %1197 = vmatmul.mubr.bf16.gmra.mrb[0].mxu0 %v305
  %v1198 = vpop.f32.mrb[0].mxu0
  %v1199 = vadd.f32 %v278, %v1198
  %v1200 = vpop.f32.mrb[0].mxu0
  %v1201 = vpop.f32.mrb[0].mxu0
  %v1202 = vpop.f32.mrb[0].mxu0
  %1203 = vdwg.mxu0
  %1204 = vmatprep.subr.bf16.mxu0 0
  %1205 = vmatpush1.bf16.msra.mxu0 %v924
  %1206 = vmatprep.subr.bf16.mxu0 0
  %1207 = vmatpush1.bf16.msra.mxu0 %v925
  %1208 = vmatprep.subr.bf16.mxu0 0
  %1209 = vmatpush1.bf16.msra.mxu0 %v926
  %1210 = vmatprep.subr.bf16.mxu0 0
  %1211 = vmatpush1.bf16.msra.mxu0 %v927
  %1212 = vmatprep.subr.bf16.mxu0 0
  %1213 = vmatpush1.bf16.msra.mxu0 %v928
  %1214 = vmatprep.subr.bf16.mxu0 0
  %1215 = vmatpush1.bf16.msra.mxu0 %v929
  %1216 = vmatprep.subr.bf16.mxu0 0
  %1217 = vmatpush1.bf16.msra.mxu0 %v930
  %1218 = vmatprep.subr.bf16.mxu0 0
  %1219 = vmatpush1.bf16.msra.mxu0 %v931
  %1220 = vmatprep.subr.bf16.mxu0 0
  %1221 = vmatpush1.bf16.msra.mxu0 %v932
  %1222 = vmatprep.subr.bf16.mxu0 0
  %1223 = vmatpush1.bf16.msra.mxu0 %v933
  %1224 = vmatprep.subr.bf16.mxu0 0
  %1225 = vmatpush1.bf16.msra.mxu0 %v934
  %1226 = vmatprep.subr.bf16.mxu0 0
  %1227 = vmatpush1.bf16.msra.mxu0 %v935
  %1228 = vmatprep.subr.bf16.mxu0 0
  %1229 = vmatpush1.bf16.msra.mxu0 %v936
  %1230 = vmatprep.subr.bf16.mxu0 0
  %1231 = vmatpush1.bf16.msra.mxu0 %v937
  %1232 = vmatprep.subr.bf16.mxu0 0
  %1233 = vmatpush1.bf16.msra.mxu0 %v938
  %1234 = vmatprep.subr.bf16.mxu0 0
  %1235 = vmatpush1.bf16.msra.mxu0 %v939
  %1236 = vmatprep.mubr.bf16.mxu0 %v329
  %1237 = vmatmul.mubr.bf16.gmra.mrb[0].mxu0 %v327
  %v1238 = vpop.f32.mrb[0].mxu0
  %v1239 = vadd.f32 %v1199, %v1238
  %v1240 = vpop.f32.mrb[0].mxu0
  %v1241 = vpop.f32.mrb[0].mxu0
  %v1242 = vpop.f32.mrb[0].mxu0
  %1243 = vdwg.mxu0
  %1244 = vmatprep.subr.bf16.mxu0 0
  %1245 = vmatpush1.bf16.msra.mxu0 %v940
  %1246 = vmatprep.subr.bf16.mxu0 0
  %1247 = vmatpush1.bf16.msra.mxu0 %v941
  %1248 = vmatprep.subr.bf16.mxu0 0
  %1249 = vmatpush1.bf16.msra.mxu0 %v942
  %1250 = vmatprep.subr.bf16.mxu0 0
  %1251 = vmatpush1.bf16.msra.mxu0 %v943
  %1252 = vmatprep.subr.bf16.mxu0 0
  %1253 = vmatpush1.bf16.msra.mxu0 %v944
  %1254 = vmatprep.subr.bf16.mxu0 0
  %1255 = vmatpush1.bf16.msra.mxu0 %v945
  %1256 = vmatprep.subr.bf16.mxu0 0
  %1257 = vmatpush1.bf16.msra.mxu0 %v946
  %1258 = vmatprep.subr.bf16.mxu0 0
  %1259 = vmatpush1.bf16.msra.mxu0 %v947
  %1260 = vmatprep.subr.bf16.mxu0 0
  %1261 = vmatpush1.bf16.msra.mxu0 %v948
  %1262 = vmatprep.subr.bf16.mxu0 0
  %1263 = vmatpush1.bf16.msra.mxu0 %v949
  %1264 = vmatprep.subr.bf16.mxu0 0
  %1265 = vmatpush1.bf16.msra.mxu0 %v950
  %1266 = vmatprep.subr.bf16.mxu0 0
  %1267 = vmatpush1.bf16.msra.mxu0 %v951
  %1268 = vmatprep.subr.bf16.mxu0 0
  %1269 = vmatpush1.bf16.msra.mxu0 %v952
  %1270 = vmatprep.subr.bf16.mxu0 0
  %1271 = vmatpush1.bf16.msra.mxu0 %v953
  %1272 = vmatprep.subr.bf16.mxu0 0
  %1273 = vmatpush1.bf16.msra.mxu0 %v954
  %1274 = vmatprep.subr.bf16.mxu0 0
  %1275 = vmatpush1.bf16.msra.mxu0 %v955
  %1276 = vmatprep.mubr.bf16.mxu0 %v326
  %1277 = vmatmul.mubr.bf16.gmra.mrb[0].mxu0 %v312
  %v1278 = vpop.f32.mrb[0].mxu0
  %v1279 = vadd.f32 %v1239, %v1278
  %v1280 = vpop.f32.mrb[0].mxu0
  %v1281 = vpop.f32.mrb[0].mxu0
  %v1282 = vpop.f32.mrb[0].mxu0
  %1283 = vdwg.mxu0
  %1284 = vmatprep.subr.bf16.mxu0 0
  %1285 = vmatpush1.bf16.msra.mxu0 %v956
  %1286 = vmatprep.subr.bf16.mxu0 0
  %1287 = vmatpush1.bf16.msra.mxu0 %v957
  %1288 = vmatprep.subr.bf16.mxu0 0
  %1289 = vmatpush1.bf16.msra.mxu0 %v958
  %1290 = vmatprep.subr.bf16.mxu0 0
  %1291 = vmatpush1.bf16.msra.mxu0 %v959
  %1292 = vmatprep.subr.bf16.mxu0 0
  %1293 = vmatpush1.bf16.msra.mxu0 %v960
  %1294 = vmatprep.subr.bf16.mxu0 0
  %1295 = vmatpush1.bf16.msra.mxu0 %v961
  %1296 = vmatprep.subr.bf16.mxu0 0
  %1297 = vmatpush1.bf16.msra.mxu0 %v962
  %1298 = vmatprep.subr.bf16.mxu0 0
  %1299 = vmatpush1.bf16.msra.mxu0 %v963
  %1300 = vmatprep.subr.bf16.mxu0 0
  %1301 = vmatpush1.bf16.msra.mxu0 %v964
  %1302 = vmatprep.subr.bf16.mxu0 0
  %1303 = vmatpush1.bf16.msra.mxu0 %v965
  %1304 = vmatprep.subr.bf16.mxu0 0
  %1305 = vmatpush1.bf16.msra.mxu0 %v966
  %1306 = vmatprep.subr.bf16.mxu0 0
  %1307 = vmatpush1.bf16.msra.mxu0 %v967
  %1308 = vmatprep.subr.bf16.mxu0 0
  %1309 = vmatpush1.bf16.msra.mxu0 %v968
  %1310 = vmatprep.subr.bf16.mxu0 0
  %1311 = vmatpush1.bf16.msra.mxu0 %v969
  %1312 = vmatprep.subr.bf16.mxu0 0
  %1313 = vmatpush1.bf16.msra.mxu0 %v970
  %1314 = vmatprep.subr.bf16.mxu0 0
  %1315 = vmatpush1.bf16.msra.mxu0 %v971
  %1316 = vmatprep.mubr.bf16.mxu0 %v330
  %1317 = vmatmul.mubr.bf16.gmra.mrb[0].mxu0 %v328
  %v1318 = vpop.f32.mrb[0].mxu0
  %v1319 = vadd.f32 %v1279, %v1318
  %v1320 = vpop.f32.mrb[0].mxu0
  %v1321 = vpop.f32.mrb[0].mxu0
  %v1322 = vpop.f32.mrb[0].mxu0
  %1323 = vdwg.mxu0
  %1324 = vmatprep.subr.bf16.mxu0 0
  %1325 = vmatpush1.bf16.msra.mxu0 %v972
  %1326 = vmatprep.subr.bf16.mxu0 0
  %1327 = vmatpush1.bf16.msra.mxu0 %v973
  %1328 = vmatprep.subr.bf16.mxu0 0
  %1329 = vmatpush1.bf16.msra.mxu0 %v974
  %1330 = vmatprep.subr.bf16.mxu0 0
  %1331 = vmatpush1.bf16.msra.mxu0 %v975
  %1332 = vmatprep.subr.bf16.mxu0 0
  %1333 = vmatpush1.bf16.msra.mxu0 %v976
  %1334 = vmatprep.subr.bf16.mxu0 0
  %1335 = vmatpush1.bf16.msra.mxu0 %v977
  %1336 = vmatprep.subr.bf16.mxu0 0
  %1337 = vmatpush1.bf16.msra.mxu0 %v978
  %1338 = vmatprep.subr.bf16.mxu0 0
  %1339 = vmatpush1.bf16.msra.mxu0 %v979
  %1340 = vmatprep.subr.bf16.mxu0 0
  %1341 = vmatpush1.bf16.msra.mxu0 %v980
  %1342 = vmatprep.subr.bf16.mxu0 0
  %1343 = vmatpush1.bf16.msra.mxu0 %v981
  %1344 = vmatprep.subr.bf16.mxu0 0
  %1345 = vmatpush1.bf16.msra.mxu0 %v982
  %1346 = vmatprep.subr.bf16.mxu0 0
  %1347 = vmatpush1.bf16.msra.mxu0 %v983
  %1348 = vmatprep.subr.bf16.mxu0 0
  %1349 = vmatpush1.bf16.msra.mxu0 %v984
  %1350 = vmatprep.subr.bf16.mxu0 0
  %1351 = vmatpush1.bf16.msra.mxu0 %v985
  %1352 = vmatprep.subr.bf16.mxu0 0
  %1353 = vmatpush1.bf16.msra.mxu0 %v986
  %1354 = vmatprep.subr.bf16.mxu0 0
  %1355 = vmatpush1.bf16.msra.mxu0 %v987
  %1356 = vmatprep.mubr.bf16.mxu0 %v368
  %1357 = vmatmul.mubr.bf16.gmra.mrb[0].mxu0 %v354
  %v1358 = vpop.f32.mrb[0].mxu0
  %v1359 = vadd.f32 %v1319, %v1358
  %v1360 = vpop.f32.mrb[0].mxu0
  %v1361 = vpop.f32.mrb[0].mxu0
  %v1362 = vpop.f32.mrb[0].mxu0
  %1363 = vdwg.mxu0
  %1364 = vmatprep.subr.bf16.mxu0 0
  %1365 = vmatpush1.bf16.msra.mxu0 %v988
  %1366 = vmatprep.subr.bf16.mxu0 0
  %1367 = vmatpush1.bf16.msra.mxu0 %v989
  %1368 = vmatprep.subr.bf16.mxu0 0
  %1369 = vmatpush1.bf16.msra.mxu0 %v990
  %1370 = vmatprep.subr.bf16.mxu0 0
  %1371 = vmatpush1.bf16.msra.mxu0 %v991
  %1372 = vmatprep.subr.bf16.mxu0 0
  %1373 = vmatpush1.bf16.msra.mxu0 %v992
  %1374 = vmatprep.subr.bf16.mxu0 0
  %1375 = vmatpush1.bf16.msra.mxu0 %v993
  %1376 = vmatprep.subr.bf16.mxu0 0
  %1377 = vmatpush1.bf16.msra.mxu0 %v994
  %1378 = vmatprep.subr.bf16.mxu0 0
  %1379 = vmatpush1.bf16.msra.mxu0 %v995
  %1380 = vmatprep.subr.bf16.mxu0 0
  %1381 = vmatpush1.bf16.msra.mxu0 %v996
  %1382 = vmatprep.subr.bf16.mxu0 0
  %1383 = vmatpush1.bf16.msra.mxu0 %v997
  %1384 = vmatprep.subr.bf16.mxu0 0
  %1385 = vmatpush1.bf16.msra.mxu0 %v998
  %1386 = vmatprep.subr.bf16.mxu0 0
  %1387 = vmatpush1.bf16.msra.mxu0 %v999
  %1388 = vmatprep.subr.bf16.mxu0 0
  %1389 = vmatpush1.bf16.msra.mxu0 %v1000
  %1390 = vmatprep.subr.bf16.mxu0 0
  %1391 = vmatpush1.bf16.msra.mxu0 %v1001
  %1392 = vmatprep.subr.bf16.mxu0 0
  %1393 = vmatpush1.bf16.msra.mxu0 %v1002
  %1394 = vmatprep.subr.bf16.mxu0 0
  %1395 = vmatpush1.bf16.msra.mxu0 %v1003
  %1396 = vmatprep.mubr.bf16.mxu0 %v378
  %1397 = vmatmul.mubr.bf16.gmra.mrb[0].mxu0 %v376
  %v1398 = vpop.f32.mrb[0].mxu0
  %v1399 = vadd.f32 %v1359, %v1398
  %v1400 = vpop.f32.mrb[0].mxu0
  %v1401 = vpop.f32.mrb[0].mxu0
  %v1402 = vpop.f32.mrb[0].mxu0
  %1403 = vdwg.mxu0
  %1404 = vmatprep.subr.bf16.mxu0 0
  %1405 = vmatpush1.bf16.msra.mxu0 %v1004
  %1406 = vmatprep.subr.bf16.mxu0 0
  %1407 = vmatpush1.bf16.msra.mxu0 %v1005
  %1408 = vmatprep.subr.bf16.mxu0 0
  %1409 = vmatpush1.bf16.msra.mxu0 %v1006
  %1410 = vmatprep.subr.bf16.mxu0 0
  %1411 = vmatpush1.bf16.msra.mxu0 %v1007
  %1412 = vmatprep.subr.bf16.mxu0 0
  %1413 = vmatpush1.bf16.msra.mxu0 %v1008
  %1414 = vmatprep.subr.bf16.mxu0 0
  %1415 = vmatpush1.bf16.msra.mxu0 %v1009
  %1416 = vmatprep.subr.bf16.mxu0 0
  %1417 = vmatpush1.bf16.msra.mxu0 %v1010
  %1418 = vmatprep.subr.bf16.mxu0 0
  %1419 = vmatpush1.bf16.msra.mxu0 %v1011
  %1420 = vmatprep.subr.bf16.mxu0 0
  %1421 = vmatpush1.bf16.msra.mxu0 %v1012
  %1422 = vmatprep.subr.bf16.mxu0 0
  %1423 = vmatpush1.bf16.msra.mxu0 %v1013
  %1424 = vmatprep.subr.bf16.mxu0 0
  %1425 = vmatpush1.bf16.msra.mxu0 %v1014
  %1426 = vmatprep.subr.bf16.mxu0 0
  %1427 = vmatpush1.bf16.msra.mxu0 %v1015
  %1428 = vmatprep.subr.bf16.mxu0 0
  %1429 = vmatpush1.bf16.msra.mxu0 %v1016
  %1430 = vmatprep.subr.bf16.mxu0 0
  %1431 = vmatpush1.bf16.msra.mxu0 %v1017
  %1432 = vmatprep.subr.bf16.mxu0 0
  %1433 = vmatpush1.bf16.msra.mxu0 %v1018
  %1434 = vmatprep.subr.bf16.mxu0 0
  %1435 = vmatpush1.bf16.msra.mxu0 %v1019
  %1436 = vmatprep.mubr.bf16.mxu0 %v375
  %1437 = vmatmul.mubr.bf16.gmra.mrb[0].mxu0 %v361
  %v1438 = vpop.f32.mrb[0].mxu0
  %v1439 = vadd.f32 %v1399, %v1438
  %v1440 = vpop.f32.mrb[0].mxu0
  %v1441 = vpop.f32.mrb[0].mxu0
  %v1442 = vpop.f32.mrb[0].mxu0
  %1443 = vdwg.mxu0
  %1444 = vmatprep.subr.bf16.mxu0 0
  %1445 = vmatpush1.bf16.msra.mxu0 %v1020
  %1446 = vmatprep.subr.bf16.mxu0 0
  %1447 = vmatpush1.bf16.msra.mxu0 %v1021
  %1448 = vmatprep.subr.bf16.mxu0 0
  %1449 = vmatpush1.bf16.msra.mxu0 %v1022
  %1450 = vmatprep.subr.bf16.mxu0 0
  %1451 = vmatpush1.bf16.msra.mxu0 %v1023
  %1452 = vmatprep.subr.bf16.mxu0 0
  %1453 = vmatpush1.bf16.msra.mxu0 %v1024
  %1454 = vmatprep.subr.bf16.mxu0 0
  %1455 = vmatpush1.bf16.msra.mxu0 %v1025
  %1456 = vmatprep.subr.bf16.mxu0 0
  %1457 = vmatpush1.bf16.msra.mxu0 %v1026
  %1458 = vmatprep.subr.bf16.mxu0 0
  %1459 = vmatpush1.bf16.msra.mxu0 %v1027
  %1460 = vmatprep.subr.bf16.mxu0 0
  %1461 = vmatpush1.bf16.msra.mxu0 %v1028
  %1462 = vmatprep.subr.bf16.mxu0 0
  %1463 = vmatpush1.bf16.msra.mxu0 %v1029
  %1464 = vmatprep.subr.bf16.mxu0 0
  %1465 = vmatpush1.bf16.msra.mxu0 %v1030
  %1466 = vmatprep.subr.bf16.mxu0 0
  %1467 = vmatpush1.bf16.msra.mxu0 %v1031
  %1468 = vmatprep.subr.bf16.mxu0 0
  %1469 = vmatpush1.bf16.msra.mxu0 %v1032
  %1470 = vmatprep.subr.bf16.mxu0 0
  %1471 = vmatpush1.bf16.msra.mxu0 %v1033
  %1472 = vmatprep.subr.bf16.mxu0 0
  %1473 = vmatpush1.bf16.msra.mxu0 %v1034
  %1474 = vmatprep.subr.bf16.mxu0 0
  %1475 = vmatpush1.bf16.msra.mxu0 %v1035
  %1476 = vmatprep.mubr.bf16.mxu0 %v379
  %1477 = vmatmul.mubr.bf16.gmra.mrb[0].mxu0 %v377
  %v1478 = vpop.f32.mrb[0].mxu0
  %v1479 = vadd.f32 %v1439, %v1478
  %v1480 = vpop.f32.mrb[0].mxu0
  %v1481 = vpop.f32.mrb[0].mxu0
  %v1482 = vpop.f32.mrb[0].mxu0
  %1483 = vdwg.mxu0
  %v1484 = vmax.f32 %v1479, 0.0
  %1485 = vst [vmem:[%s3] sm:$0x3] %v1484
  // Predicated region
  $region14: #{generator_forward.15} parent=0 // pred_check
    _
  $region15: #{generator_forward.15} parent=0 // pred_check_branch
    %1487 = sbr.rel (0) target = $region17
  $region16: #{generator_forward.15} parent=0 // pred_region
    _
  $region17: #{generator_forward.15} parent=0 // pred_fallthru
    _
  // Predicated region
  $region18: #{generator_forward.15} parent=0 // pred_check
    _
  $region19: #{generator_forward.15} parent=0 // pred_check_branch
    %1489 = sbr.rel (0) target = $region21
  $region20: #{generator_forward.15} parent=0 // pred_region
    _
  $region21: #{generator_forward.15} parent=0 // pred_fallthru
    _

// kernel: generator_forward.16
$region0: #{generator_forward.16}
  #allocation0 [shape = 'u32[]', space=smem, size = 0x4, offset = 0x4, fixed_abs, tag = 'smem constant byte address 0x4 - core index']
  #allocation1 [shape = 'u32[144,128]{1,0:T(1,128)}', space=vmem, size = 0x12000, scoped, tag = 'internal scratch']
  %s0 = inlined_call_operand.vmem [shape: bf16[2,64], index: 0, kind: input, shape index: {}]
  %s1 = inlined_call_operand.vmem [shape: bf16[64,2560], index: 1, kind: input, shape index: {}]
  %s2 = inlined_call_operand.vmem [shape: f32[1,2560], index: 2, kind: input, shape index: {}]
  %s3 = inlined_call_operand.vmem [shape: f32[2,2560], index: 3, kind: output, shape index: {}]
  %s4 = sld [smem:[#allocation0]]
  $region22: #{generator_forward.16} parent=0
    _
  %s6 = ssub.s32 1, %s4
  %s7 = scalar_select 0, %s6, %s4
  // Predicated region
  $region2: #{generator_forward.16} parent=0 // pred_check
    _
  $region3: #{generator_forward.16} parent=0 // pred_check_branch
    %9 = sbr.rel (0) target = $region5
  $region4: #{generator_forward.16} parent=0 // pred_region
    _
  $region5: #{generator_forward.16} parent=0 // pred_fallthru
    _
  // Predicated region
  $region6: #{generator_forward.16} parent=0 // pred_check
    _
  $region7: #{generator_forward.16} parent=0 // pred_check_branch
    %11 = sbr.rel (0) target = $region9
  $region8: #{generator_forward.16} parent=0 // pred_region
    _
  $region9: #{generator_forward.16} parent=0 // pred_fallthru
    _
  // Predicated region
  $region10: #{generator_forward.16} parent=0 // pred_check
    _
  $region11: #{generator_forward.16} parent=0 // pred_check_branch
    %13 = sbr.rel (0) target = $region13
  $region12: #{generator_forward.16} parent=0 // pred_region
    _
  $region13: #{generator_forward.16} parent=0 // pred_fallthru
    _
  %v15 = vld [vmem:[%s0] sm:$0x1]
  %v16 = vld [vmem:[%s1] sm:$0xff]
  %v17 = vld [vmem:[%s1 + $0x8] sm:$0xff]
  %v18 = vld [vmem:[%s1 + $0x10] sm:$0xff]
  %v19 = vld [vmem:[%s1 + $0x18] sm:$0xff]
  %v20 = vld [vmem:[%s1 + $0x20] sm:$0xff]
  %v21 = vld [vmem:[%s1 + $0x28] sm:$0xff]
  %v22 = vld [vmem:[%s1 + $0x30] sm:$0xff]
  %v23 = vld [vmem:[%s1 + $0x38] sm:$0xff]
  %v24 = vld [vmem:[%s1 + $0x40] sm:$0xff]
  %v25 = vld [vmem:[%s1 + $0x48] sm:$0xff]
  %v26 = vld [vmem:[%s1 + $0x50] sm:$0xff]
  %v27 = vld [vmem:[%s1 + $0x58] sm:$0xff]
  %v28 = vld [vmem:[%s1 + $0x60] sm:$0xff]
  %v29 = vld [vmem:[%s1 + $0x68] sm:$0xff]
  %v30 = vld [vmem:[%s1 + $0x70] sm:$0xff]
  %v31 = vld [vmem:[%s1 + $0x78] sm:$0xff]
  %v32 = vld [vmem:[%s1 + $0x80] sm:$0xff]
  %v33 = vld [vmem:[%s1 + $0x88] sm:$0xff]
  %v34 = vld [vmem:[%s1 + $0x90] sm:$0xff]
  %v35 = vld [vmem:[%s1 + $0x98] sm:$0xff]
  %v36 = vld [vmem:[%s1 + $0xa0] sm:$0xff]
  %v37 = vld [vmem:[%s1 + $0xa8] sm:$0xff]
  %v38 = vld [vmem:[%s1 + $0xb0] sm:$0xff]
  %v39 = vld [vmem:[%s1 + $0xb8] sm:$0xff]
  %v40 = vld [vmem:[%s1 + $0xc0] sm:$0xff]
  %v41 = vld [vmem:[%s1 + $0xc8] sm:$0xff]
  %v42 = vld [vmem:[%s1 + $0xd0] sm:$0xff]
  %v43 = vld [vmem:[%s1 + $0xd8] sm:$0xff]
  %v44 = vld [vmem:[%s1 + $0xe0] sm:$0xff]
  %v45 = vld [vmem:[%s1 + $0xe8] sm:$0xff]
  %v46 = vld [vmem:[%s1 + $0xf0] sm:$0xff]
  %v47 = vld [vmem:[%s1 + $0xf8] sm:$0xff]
  %v48 = vld [vmem:[%s1 + $0x100] sm:$0xff]
  %v49 = vld [vmem:[%s1 + $0x108] sm:$0xff]
  %v50 = vld [vmem:[%s1 + $0x110] sm:$0xff]
  %v51 = vld [vmem:[%s1 + $0x118] sm:$0xff]
  %v52 = vld [vmem:[%s1 + $0x120] sm:$0xff]
  %v53 = vld [vmem:[%s1 + $0x128] sm:$0xff]
  %v54 = vld [vmem:[%s1 + $0x130] sm:$0xff]
  %v55 = vld [vmem:[%s1 + $0x138] sm:$0xff]
  %v56 = vld [vmem:[%s1 + $0x140] sm:$0xff]
  %v57 = vld [vmem:[%s1 + $0x148] sm:$0xff]
  %v58 = vld [vmem:[%s1 + $0x150] sm:$0xff]
  %v59 = vld [vmem:[%s1 + $0x158] sm:$0xff]
  %v60 = vld [vmem:[%s1 + $0x160] sm:$0xff]
  %v61 = vld [vmem:[%s1 + $0x168] sm:$0xff]
  %v62 = vld [vmem:[%s1 + $0x170] sm:$0xff]
  %v63 = vld [vmem:[%s1 + $0x178] sm:$0xff]
  %v64 = vld [vmem:[%s1 + $0x180] sm:$0xff]
  %v65 = vld [vmem:[%s1 + $0x188] sm:$0xff]
  %v66 = vld [vmem:[%s1 + $0x190] sm:$0xff]
  %v67 = vld [vmem:[%s1 + $0x198] sm:$0xff]
  %v68 = vld [vmem:[%s1 + $0x1a0] sm:$0xff]
  %v69 = vld [vmem:[%s1 + $0x1a8] sm:$0xff]
  %v70 = vld [vmem:[%s1 + $0x1b0] sm:$0xff]
  %v71 = vld [vmem:[%s1 + $0x1b8] sm:$0xff]
  %v72 = vld [vmem:[%s1 + $0x1c0] sm:$0xff]
  %v73 = vld [vmem:[%s1 + $0x1c8] sm:$0xff]
  %v74 = vld [vmem:[%s1 + $0x1d0] sm:$0xff]
  %v75 = vld [vmem:[%s1 + $0x1d8] sm:$0xff]
  %v76 = vld [vmem:[%s1 + $0x1e0] sm:$0xff]
  %v77 = vld [vmem:[%s1 + $0x1e8] sm:$0xff]
  %v78 = vld [vmem:[%s1 + $0x1f0] sm:$0xff]
  %v79 = vld [vmem:[%s1 + $0x1f8] sm:$0xff]
  %v80 = vld [vmem:[%s1 + $0x200] sm:$0xff]
  %v81 = vld [vmem:[%s1 + $0x208] sm:$0xff]
  %v82 = vld [vmem:[%s1 + $0x210] sm:$0xff]
  %v83 = vld [vmem:[%s1 + $0x218] sm:$0xff]
  %v84 = vld [vmem:[%s1 + $0x220] sm:$0xff]
  %v85 = vld [vmem:[%s1 + $0x228] sm:$0xff]
  %v86 = vld [vmem:[%s1 + $0x230] sm:$0xff]
  %v87 = vld [vmem:[%s1 + $0x238] sm:$0xff]
  %v88 = vld [vmem:[%s1 + $0x240] sm:$0xff]
  %v89 = vld [vmem:[%s1 + $0x248] sm:$0xff]
  %v90 = vld [vmem:[%s1 + $0x250] sm:$0xff]
  %v91 = vld [vmem:[%s1 + $0x258] sm:$0xff]
  %v92 = vld [vmem:[%s1 + $0x260] sm:$0xff]
  %v93 = vld [vmem:[%s1 + $0x268] sm:$0xff]
  %v94 = vld [vmem:[%s1 + $0x270] sm:$0xff]
  %v95 = vld [vmem:[%s1 + $0x278] sm:$0xff]
  %v96 = vld [vmem:[%s2] sm:$0xff]
  %v97 = vld [vmem:[%s2 + $0x8] sm:$0xff]
  %v98 = vld [vmem:[%s2 + $0x10] sm:$0xf]
  %v102 = vlaneseq
  %v103 = vshrl.u32 %v102, 7
  %v104 = vsub.s32 0, %v103
  %v105 = vrot.slane %v96, %v104
  %v106 = vlaneseq
  %v107 = vshrl.u32 %v106, 7
  %v108 = vsub.s32 1, %v107
  %v109 = vrot.slane %v96, %v108
  %v110 = vlaneseq
  %v111 = vshrl.u32 %v110, 7
  %v112 = vsub.s32 2, %v111
  %v113 = vrot.slane %v96, %v112
  %v114 = vlaneseq
  %v115 = vshrl.u32 %v114, 7
  %v116 = vsub.s32 3, %v115
  %v117 = vrot.slane %v96, %v116
  %v118 = vlaneseq
  %v119 = vshrl.u32 %v118, 7
  %v120 = vsub.s32 4, %v119
  %v121 = vrot.slane %v96, %v120
  %v122 = vlaneseq
  %v123 = vshrl.u32 %v122, 7
  %v124 = vsub.s32 5, %v123
  %v125 = vrot.slane %v96, %v124
  %v126 = vlaneseq
  %v127 = vshrl.u32 %v126, 7
  %v128 = vsub.s32 6, %v127
  %v129 = vrot.slane %v96, %v128
  %v130 = vlaneseq
  %v131 = vshrl.u32 %v130, 7
  %v132 = vsub.s32 7, %v131
  %v133 = vrot.slane %v96, %v132
  %v134 = vlaneseq
  %v135 = vshrl.u32 %v134, 7
  %v136 = vsub.s32 0, %v135
  %v137 = vrot.slane %v97, %v136
  %v138 = vlaneseq
  %v139 = vshrl.u32 %v138, 7
  %v140 = vsub.s32 1, %v139
  %v141 = vrot.slane %v97, %v140
  %v142 = vlaneseq
  %v143 = vshrl.u32 %v142, 7
  %v144 = vsub.s32 2, %v143
  %v145 = vrot.slane %v97, %v144
  %v146 = vlaneseq
  %v147 = vshrl.u32 %v146, 7
  %v148 = vsub.s32 3, %v147
  %v149 = vrot.slane %v97, %v148
  %v150 = vlaneseq
  %v151 = vshrl.u32 %v150, 7
  %v152 = vsub.s32 4, %v151
  %v153 = vrot.slane %v97, %v152
  %v154 = vlaneseq
  %v155 = vshrl.u32 %v154, 7
  %v156 = vsub.s32 5, %v155
  %v157 = vrot.slane %v97, %v156
  %v158 = vlaneseq
  %v159 = vshrl.u32 %v158, 7
  %v160 = vsub.s32 6, %v159
  %v161 = vrot.slane %v97, %v160
  %v162 = vlaneseq
  %v163 = vshrl.u32 %v162, 7
  %v164 = vsub.s32 7, %v163
  %v165 = vrot.slane %v97, %v164
  %v166 = vlaneseq
  %v167 = vshrl.u32 %v166, 7
  %v168 = vsub.s32 0, %v167
  %v169 = vrot.slane %v98, %v168
  %v170 = vlaneseq
  %v171 = vshrl.u32 %v170, 7
  %v172 = vsub.s32 1, %v171
  %v173 = vrot.slane %v98, %v172
  %v174 = vlaneseq
  %v175 = vshrl.u32 %v174, 7
  %v176 = vsub.s32 2, %v175
  %v177 = vrot.slane %v98, %v176
  %v178 = vlaneseq
  %v179 = vshrl.u32 %v178, 7
  %v180 = vsub.s32 3, %v179
  %v181 = vrot.slane %v98, %v180
  %v282 = vunpack.c.l.b16 %v16
  %v283 = vunpack.c.h.b16 %v16
  %v284 = vunpack.c.l.b16 %v17
  %v285 = vunpack.c.h.b16 %v17
  %v286 = vunpack.c.l.b16 %v18
  %v287 = vunpack.c.h.b16 %v18
  %v288 = vunpack.c.l.b16 %v19
  %v289 = vunpack.c.h.b16 %v19
  %v290 = vunpack.c.l.b16 %v20
  %v291 = vunpack.c.h.b16 %v20
  %v292 = vunpack.c.l.b16 %v21
  %v293 = vunpack.c.h.b16 %v21
  %v294 = vunpack.c.l.b16 %v22
  %v295 = vunpack.c.h.b16 %v22
  %v296 = vunpack.c.l.b16 %v23
  %v297 = vunpack.c.h.b16 %v23
  %v298 = vunpack.c.l.b16 %v24
  %v299 = vunpack.c.h.b16 %v24
  %v300 = vunpack.c.l.b16 %v25
  %v301 = vunpack.c.h.b16 %v25
  %v302 = vunpack.c.l.b16 %v26
  %v303 = vunpack.c.h.b16 %v26
  %v304 = vunpack.c.l.b16 %v27
  %v305 = vunpack.c.h.b16 %v27
  %v306 = vunpack.c.l.b16 %v28
  %v307 = vunpack.c.h.b16 %v28
  %v308 = vunpack.c.l.b16 %v29
  %v309 = vunpack.c.h.b16 %v29
  %v310 = vunpack.c.l.b16 %v30
  %v311 = vunpack.c.h.b16 %v30
  %v312 = vunpack.c.l.b16 %v31
  %v313 = vunpack.c.h.b16 %v31
  %v314 = vunpack.c.l.b16 %v32
  %v315 = vunpack.c.h.b16 %v32
  %v316 = vunpack.c.l.b16 %v33
  %v317 = vunpack.c.h.b16 %v33
  %v318 = vunpack.c.l.b16 %v34
  %v319 = vunpack.c.h.b16 %v34
  %v320 = vunpack.c.l.b16 %v35
  %v321 = vunpack.c.h.b16 %v35
  %v322 = vunpack.c.l.b16 %v36
  %v323 = vunpack.c.h.b16 %v36
  %v324 = vunpack.c.l.b16 %v37
  %v325 = vunpack.c.h.b16 %v37
  %v326 = vunpack.c.l.b16 %v38
  %v327 = vunpack.c.h.b16 %v38
  %v328 = vunpack.c.l.b16 %v39
  %v329 = vunpack.c.h.b16 %v39
  %v330 = vunpack.c.l.b16 %v40
  %v331 = vunpack.c.h.b16 %v40
  %v332 = vunpack.c.l.b16 %v41
  %v333 = vunpack.c.h.b16 %v41
  %v334 = vunpack.c.l.b16 %v42
  %v335 = vunpack.c.h.b16 %v42
  %v336 = vunpack.c.l.b16 %v43
  %v337 = vunpack.c.h.b16 %v43
  %v338 = vunpack.c.l.b16 %v44
  %v339 = vunpack.c.h.b16 %v44
  %v340 = vunpack.c.l.b16 %v45
  %v341 = vunpack.c.h.b16 %v45
  %v342 = vunpack.c.l.b16 %v46
  %v343 = vunpack.c.h.b16 %v46
  %v344 = vunpack.c.l.b16 %v47
  %v345 = vunpack.c.h.b16 %v47
  %v346 = vunpack.c.l.b16 %v48
  %v347 = vunpack.c.h.b16 %v48
  %v348 = vunpack.c.l.b16 %v49
  %v349 = vunpack.c.h.b16 %v49
  %v350 = vunpack.c.l.b16 %v50
  %v351 = vunpack.c.h.b16 %v50
  %v352 = vunpack.c.l.b16 %v51
  %v353 = vunpack.c.h.b16 %v51
  %v354 = vunpack.c.l.b16 %v52
  %v355 = vunpack.c.h.b16 %v52
  %v356 = vunpack.c.l.b16 %v53
  %v357 = vunpack.c.h.b16 %v53
  %v358 = vunpack.c.l.b16 %v54
  %v359 = vunpack.c.h.b16 %v54
  %v360 = vunpack.c.l.b16 %v55
  %v361 = vunpack.c.h.b16 %v55
  %v362 = vunpack.c.l.b16 %v56
  %v363 = vunpack.c.h.b16 %v56
  %v364 = vunpack.c.l.b16 %v57
  %v365 = vunpack.c.h.b16 %v57
  %v366 = vunpack.c.l.b16 %v58
  %v367 = vunpack.c.h.b16 %v58
  %v368 = vunpack.c.l.b16 %v59
  %v369 = vunpack.c.h.b16 %v59
  %v370 = vunpack.c.l.b16 %v60
  %v371 = vunpack.c.h.b16 %v60
  %v372 = vunpack.c.l.b16 %v61
  %v373 = vunpack.c.h.b16 %v61
  %v374 = vunpack.c.l.b16 %v62
  %v375 = vunpack.c.h.b16 %v62
  %v376 = vunpack.c.l.b16 %v63
  %v377 = vunpack.c.h.b16 %v63
  %v378 = vunpack.c.l.b16 %v64
  %v379 = vunpack.c.h.b16 %v64
  %v380 = vunpack.c.l.b16 %v65
  %v381 = vunpack.c.h.b16 %v65
  %v382 = vunpack.c.l.b16 %v66
  %v383 = vunpack.c.h.b16 %v66
  %v384 = vunpack.c.l.b16 %v67
  %v385 = vunpack.c.h.b16 %v67
  %v386 = vunpack.c.l.b16 %v68
  %v387 = vunpack.c.h.b16 %v68
  %v388 = vunpack.c.l.b16 %v69
  %v389 = vunpack.c.h.b16 %v69
  %v390 = vunpack.c.l.b16 %v70
  %v391 = vunpack.c.h.b16 %v70
  %v392 = vunpack.c.l.b16 %v71
  %v393 = vunpack.c.h.b16 %v71
  %v394 = vunpack.c.l.b16 %v72
  %v395 = vunpack.c.h.b16 %v72
  %v396 = vunpack.c.l.b16 %v73
  %v397 = vunpack.c.h.b16 %v73
  %v398 = vunpack.c.l.b16 %v74
  %v399 = vunpack.c.h.b16 %v74
  %v400 = vunpack.c.l.b16 %v75
  %v401 = vunpack.c.h.b16 %v75
  %v402 = vunpack.c.l.b16 %v76
  %v403 = vunpack.c.h.b16 %v76
  %v404 = vunpack.c.l.b16 %v77
  %v405 = vunpack.c.h.b16 %v77
  %v406 = vunpack.c.l.b16 %v78
  %v407 = vunpack.c.h.b16 %v78
  %v408 = vunpack.c.l.b16 %v79
  %v409 = vunpack.c.h.b16 %v79
  %v410 = vunpack.c.l.b16 %v80
  %v411 = vunpack.c.h.b16 %v80
  %v412 = vunpack.c.l.b16 %v81
  %v413 = vunpack.c.h.b16 %v81
  %v414 = vunpack.c.l.b16 %v82
  %v415 = vunpack.c.h.b16 %v82
  %v416 = vunpack.c.l.b16 %v83
  %v417 = vunpack.c.h.b16 %v83
  %v418 = vunpack.c.l.b16 %v84
  %v419 = vunpack.c.h.b16 %v84
  %v420 = vunpack.c.l.b16 %v85
  %v421 = vunpack.c.h.b16 %v85
  %v422 = vunpack.c.l.b16 %v86
  %v423 = vunpack.c.h.b16 %v86
  %v424 = vunpack.c.l.b16 %v87
  %v425 = vunpack.c.h.b16 %v87
  %v426 = vunpack.c.l.b16 %v88
  %v427 = vunpack.c.h.b16 %v88
  %v428 = vunpack.c.l.b16 %v89
  %v429 = vunpack.c.h.b16 %v89
  %v430 = vunpack.c.l.b16 %v90
  %v431 = vunpack.c.h.b16 %v90
  %v432 = vunpack.c.l.b16 %v91
  %v433 = vunpack.c.h.b16 %v91
  %v434 = vunpack.c.l.b16 %v92
  %v435 = vunpack.c.h.b16 %v92
  %v436 = vunpack.c.l.b16 %v93
  %v437 = vunpack.c.h.b16 %v93
  %v438 = vunpack.c.l.b16 %v94
  %v439 = vunpack.c.h.b16 %v94
  %v440 = vunpack.c.l.b16 %v95
  %v441 = vunpack.c.h.b16 %v95
  %v442 = vpack.c.b16 %v302, %v282
  %v443 = vpack.c.b16 %v303, %v283
  %v444 = vpack.c.b16 %v304, %v284
  %v445 = vpack.c.b16 %v305, %v285
  %v446 = vpack.c.b16 %v306, %v286
  %v447 = vpack.c.b16 %v307, %v287
  %v448 = vpack.c.b16 %v308, %v288
  %v449 = vpack.c.b16 %v309, %v289
  %v450 = vpack.c.b16 %v310, %v290
  %v451 = vpack.c.b16 %v311, %v291
  %v452 = vpack.c.b16 %v312, %v292
  %v453 = vpack.c.b16 %v313, %v293
  %v454 = vpack.c.b16 %v314, %v294
  %v455 = vpack.c.b16 %v315, %v295
  %v456 = vpack.c.b16 %v316, %v296
  %v457 = vpack.c.b16 %v317, %v297
  %v458 = vpack.c.b16 %v318, %v298
  %v459 = vpack.c.b16 %v319, %v299
  %v460 = vpack.c.b16 %v320, %v300
  %v461 = vpack.c.b16 %v321, %v301
  %v462 = vpack.c.b16 %v342, %v322
  %v463 = vpack.c.b16 %v343, %v323
  %v464 = vpack.c.b16 %v344, %v324
  %v465 = vpack.c.b16 %v345, %v325
  %v466 = vpack.c.b16 %v346, %v326
  %v467 = vpack.c.b16 %v347, %v327
  %v468 = vpack.c.b16 %v348, %v328
  %v469 = vpack.c.b16 %v349, %v329
  %v470 = vpack.c.b16 %v350, %v330
  %v471 = vpack.c.b16 %v351, %v331
  %v472 = vpack.c.b16 %v352, %v332
  %v473 = vpack.c.b16 %v353, %v333
  %v474 = vpack.c.b16 %v354, %v334
  %v475 = vpack.c.b16 %v355, %v335
  %v476 = vpack.c.b16 %v356, %v336
  %v477 = vpack.c.b16 %v357, %v337
  %v478 = vpack.c.b16 %v358, %v338
  %v479 = vpack.c.b16 %v359, %v339
  %v480 = vpack.c.b16 %v360, %v340
  %v481 = vpack.c.b16 %v361, %v341
  %v482 = vpack.c.b16 %v382, %v362
  %v483 = vpack.c.b16 %v383, %v363
  %v484 = vpack.c.b16 %v384, %v364
  %v485 = vpack.c.b16 %v385, %v365
  %v486 = vpack.c.b16 %v386, %v366
  %v487 = vpack.c.b16 %v387, %v367
  %v488 = vpack.c.b16 %v388, %v368
  %v489 = vpack.c.b16 %v389, %v369
  %v490 = vpack.c.b16 %v390, %v370
  %v491 = vpack.c.b16 %v391, %v371
  %v492 = vpack.c.b16 %v392, %v372
  %v493 = vpack.c.b16 %v393, %v373
  %v494 = vpack.c.b16 %v394, %v374
  %v495 = vpack.c.b16 %v395, %v375
  %v496 = vpack.c.b16 %v396, %v376
  %v497 = vpack.c.b16 %v397, %v377
  %v498 = vpack.c.b16 %v398, %v378
  %v499 = vpack.c.b16 %v399, %v379
  %v500 = vpack.c.b16 %v400, %v380
  %v501 = vpack.c.b16 %v401, %v381
  %v502 = vpack.c.b16 %v422, %v402
  %v503 = vpack.c.b16 %v423, %v403
  %v504 = vpack.c.b16 %v424, %v404
  %v505 = vpack.c.b16 %v425, %v405
  %v506 = vpack.c.b16 %v426, %v406
  %v507 = vpack.c.b16 %v427, %v407
  %v508 = vpack.c.b16 %v428, %v408
  %v509 = vpack.c.b16 %v429, %v409
  %v510 = vpack.c.b16 %v430, %v410
  %v511 = vpack.c.b16 %v431, %v411
  %v512 = vpack.c.b16 %v432, %v412
  %v513 = vpack.c.b16 %v433, %v413
  %v514 = vpack.c.b16 %v434, %v414
  %v515 = vpack.c.b16 %v435, %v415
  %v516 = vpack.c.b16 %v436, %v416
  %v517 = vpack.c.b16 %v437, %v417
  %v518 = vpack.c.b16 %v438, %v418
  %v519 = vpack.c.b16 %v439, %v419
  %v520 = vpack.c.b16 %v440, %v420
  %v521 = vpack.c.b16 %v441, %v421
  %vm602 = vcmask 523264
  %v604 = vsel %vm602, %v15, 0
  %606 = vmatprep.subr.bf16.mxu0 %v443
  %607 = vmatpush1.bf16.msra.mxu0 %v442
  %608 = vmatprep.subr.bf16.mxu0 %v463
  %609 = vmatpush1.bf16.msra.mxu0 %v462
  %610 = vmatprep.subr.bf16.mxu0 %v483
  %611 = vmatpush1.bf16.msra.mxu0 %v482
  %612 = vmatprep.subr.bf16.mxu0 %v503
  %613 = vmatpush1.bf16.msra.mxu0 %v502
  %614 = vmatprep.subr.bf16.mxu0 0
  %615 = vmatpush1.bf16.msra.mxu0 0
  %616 = vmatprep.subr.bf16.mxu0 0
  %617 = vmatpush1.bf16.msra.mxu0 0
  %618 = vmatprep.subr.bf16.mxu0 0
  %619 = vmatpush1.bf16.msra.mxu0 0
  %620 = vmatprep.subr.bf16.mxu0 0
  %621 = vmatpush1.bf16.msra.mxu0 0
  %622 = vmatprep.subr.bf16.mxu0 0
  %623 = vmatpush1.bf16.msra.mxu0 0
  %624 = vmatprep.subr.bf16.mxu0 0
  %625 = vmatpush1.bf16.msra.mxu0 0
  %626 = vmatprep.subr.bf16.mxu0 0
  %627 = vmatpush1.bf16.msra.mxu0 0
  %628 = vmatprep.subr.bf16.mxu0 0
  %629 = vmatpush1.bf16.msra.mxu0 0
  %630 = vmatprep.subr.bf16.mxu0 0
  %631 = vmatpush1.bf16.msra.mxu0 0
  %632 = vmatprep.subr.bf16.mxu0 0
  %633 = vmatpush1.bf16.msra.mxu0 0
  %634 = vmatprep.subr.bf16.mxu0 0
  %635 = vmatpush1.bf16.msra.mxu0 0
  %636 = vmatprep.subr.bf16.mxu0 0
  %637 = vmatpush1.bf16.msra.mxu0 0
  %638 = vmatprep.mubr.bf16.mxu0 0
  %639 = vmatmul.mubr.bf16.gmra.mrb[0].mxu0 %v604
  %v640 = vpop.f32.mrb[0].mxu0
  %v641 = vadd.f32 %v105, %v640
  %v642 = vpop.f32.mrb[0].mxu0
  %v643 = vadd.f32 %v109, %v642
  %v644 = vpop.f32.mrb[0].mxu0
  %v645 = vpop.f32.mrb[0].mxu0
  %646 = vdwg.mxu0
  %647 = vmatprep.subr.bf16.mxu0 %v445
  %648 = vmatpush1.bf16.msra.mxu0 %v444
  %649 = vmatprep.subr.bf16.mxu0 %v465
  %650 = vmatpush1.bf16.msra.mxu0 %v464
  %651 = vmatprep.subr.bf16.mxu0 %v485
  %652 = vmatpush1.bf16.msra.mxu0 %v484
  %653 = vmatprep.subr.bf16.mxu0 %v505
  %654 = vmatpush1.bf16.msra.mxu0 %v504
  %655 = vmatprep.subr.bf16.mxu0 0
  %656 = vmatpush1.bf16.msra.mxu0 0
  %657 = vmatprep.subr.bf16.mxu0 0
  %658 = vmatpush1.bf16.msra.mxu0 0
  %659 = vmatprep.subr.bf16.mxu0 0
  %660 = vmatpush1.bf16.msra.mxu0 0
  %661 = vmatprep.subr.bf16.mxu0 0
  %662 = vmatpush1.bf16.msra.mxu0 0
  %663 = vmatprep.subr.bf16.mxu0 0
  %664 = vmatpush1.bf16.msra.mxu0 0
  %665 = vmatprep.subr.bf16.mxu0 0
  %666 = vmatpush1.bf16.msra.mxu0 0
  %667 = vmatprep.subr.bf16.mxu0 0
  %668 = vmatpush1.bf16.msra.mxu0 0
  %669 = vmatprep.subr.bf16.mxu0 0
  %670 = vmatpush1.bf16.msra.mxu0 0
  %671 = vmatprep.subr.bf16.mxu0 0
  %672 = vmatpush1.bf16.msra.mxu0 0
  %673 = vmatprep.subr.bf16.mxu0 0
  %674 = vmatpush1.bf16.msra.mxu0 0
  %675 = vmatprep.subr.bf16.mxu0 0
  %676 = vmatpush1.bf16.msra.mxu0 0
  %677 = vmatprep.subr.bf16.mxu0 0
  %678 = vmatpush1.bf16.msra.mxu0 0
  %679 = vmatprep.mubr.bf16.mxu0 0
  %680 = vmatmul.mubr.bf16.gmra.mrb[0].mxu0 %v604
  %v681 = vpop.f32.mrb[0].mxu0
  %v682 = vadd.f32 %v113, %v681
  %v683 = vpop.f32.mrb[0].mxu0
  %v684 = vadd.f32 %v117, %v683
  %v685 = vpop.f32.mrb[0].mxu0
  %v686 = vpop.f32.mrb[0].mxu0
  %687 = vdwg.mxu0
  %688 = vmatprep.subr.bf16.mxu0 %v447
  %689 = vmatpush1.bf16.msra.mxu0 %v446
  %690 = vmatprep.subr.bf16.mxu0 %v467
  %691 = vmatpush1.bf16.msra.mxu0 %v466
  %692 = vmatprep.subr.bf16.mxu0 %v487
  %693 = vmatpush1.bf16.msra.mxu0 %v486
  %694 = vmatprep.subr.bf16.mxu0 %v507
  %695 = vmatpush1.bf16.msra.mxu0 %v506
  %696 = vmatprep.subr.bf16.mxu0 0
  %697 = vmatpush1.bf16.msra.mxu0 0
  %698 = vmatprep.subr.bf16.mxu0 0
  %699 = vmatpush1.bf16.msra.mxu0 0
  %700 = vmatprep.subr.bf16.mxu0 0
  %701 = vmatpush1.bf16.msra.mxu0 0
  %702 = vmatprep.subr.bf16.mxu0 0
  %703 = vmatpush1.bf16.msra.mxu0 0
  %704 = vmatprep.subr.bf16.mxu0 0
  %705 = vmatpush1.bf16.msra.mxu0 0
  %706 = vmatprep.subr.bf16.mxu0 0
  %707 = vmatpush1.bf16.msra.mxu0 0
  %708 = vmatprep.subr.bf16.mxu0 0
  %709 = vmatpush1.bf16.msra.mxu0 0
  %710 = vmatprep.subr.bf16.mxu0 0
  %711 = vmatpush1.bf16.msra.mxu0 0
  %712 = vmatprep.subr.bf16.mxu0 0
  %713 = vmatpush1.bf16.msra.mxu0 0
  %714 = vmatprep.subr.bf16.mxu0 0
  %715 = vmatpush1.bf16.msra.mxu0 0
  %716 = vmatprep.subr.bf16.mxu0 0
  %717 = vmatpush1.bf16.msra.mxu0 0
  %718 = vmatprep.subr.bf16.mxu0 0
  %719 = vmatpush1.bf16.msra.mxu0 0
  %720 = vmatprep.mubr.bf16.mxu0 0
  %721 = vmatmul.mubr.bf16.gmra.mrb[0].mxu0 %v604
  %v722 = vpop.f32.mrb[0].mxu0
  %v723 = vadd.f32 %v121, %v722
  %v724 = vpop.f32.mrb[0].mxu0
  %v725 = vadd.f32 %v125, %v724
  %v726 = vpop.f32.mrb[0].mxu0
  %v727 = vpop.f32.mrb[0].mxu0
  %728 = vdwg.mxu0
  %729 = vmatprep.subr.bf16.mxu0 %v449
  %730 = vmatpush1.bf16.msra.mxu0 %v448
  %731 = vmatprep.subr.bf16.mxu0 %v469
  %732 = vmatpush1.bf16.msra.mxu0 %v468
  %733 = vmatprep.subr.bf16.mxu0 %v489
  %734 = vmatpush1.bf16.msra.mxu0 %v488
  %735 = vmatprep.subr.bf16.mxu0 %v509
  %736 = vmatpush1.bf16.msra.mxu0 %v508
  %737 = vmatprep.subr.bf16.mxu0 0
  %738 = vmatpush1.bf16.msra.mxu0 0
  %739 = vmatprep.subr.bf16.mxu0 0
  %740 = vmatpush1.bf16.msra.mxu0 0
  %741 = vmatprep.subr.bf16.mxu0 0
  %742 = vmatpush1.bf16.msra.mxu0 0
  %743 = vmatprep.subr.bf16.mxu0 0
  %744 = vmatpush1.bf16.msra.mxu0 0
  %745 = vmatprep.subr.bf16.mxu0 0
  %746 = vmatpush1.bf16.msra.mxu0 0
  %747 = vmatprep.subr.bf16.mxu0 0
  %748 = vmatpush1.bf16.msra.mxu0 0
  %749 = vmatprep.subr.bf16.mxu0 0
  %750 = vmatpush1.bf16.msra.mxu0 0
  %751 = vmatprep.subr.bf16.mxu0 0
  %752 = vmatpush1.bf16.msra.mxu0 0
  %753 = vmatprep.subr.bf16.mxu0 0
  %754 = vmatpush1.bf16.msra.mxu0 0
  %755 = vmatprep.subr.bf16.mxu0 0
  %756 = vmatpush1.bf16.msra.mxu0 0
  %757 = vmatprep.subr.bf16.mxu0 0
  %758 = vmatpush1.bf16.msra.mxu0 0
  %759 = vmatprep.subr.bf16.mxu0 0
  %760 = vmatpush1.bf16.msra.mxu0 0
  %761 = vmatprep.mubr.bf16.mxu0 0
  %762 = vmatmul.mubr.bf16.gmra.mrb[0].mxu0 %v604
  %v763 = vpop.f32.mrb[0].mxu0
  %v764 = vadd.f32 %v129, %v763
  %v765 = vpop.f32.mrb[0].mxu0
  %v766 = vadd.f32 %v133, %v765
  %v767 = vpop.f32.mrb[0].mxu0
  %v768 = vpop.f32.mrb[0].mxu0
  %769 = vdwg.mxu0
  %770 = vmatprep.subr.bf16.mxu0 %v451
  %771 = vmatpush1.bf16.msra.mxu0 %v450
  %772 = vmatprep.subr.bf16.mxu0 %v471
  %773 = vmatpush1.bf16.msra.mxu0 %v470
  %774 = vmatprep.subr.bf16.mxu0 %v491
  %775 = vmatpush1.bf16.msra.mxu0 %v490
  %776 = vmatprep.subr.bf16.mxu0 %v511
  %777 = vmatpush1.bf16.msra.mxu0 %v510
  %778 = vmatprep.subr.bf16.mxu0 0
  %779 = vmatpush1.bf16.msra.mxu0 0
  %780 = vmatprep.subr.bf16.mxu0 0
  %781 = vmatpush1.bf16.msra.mxu0 0
  %782 = vmatprep.subr.bf16.mxu0 0
  %783 = vmatpush1.bf16.msra.mxu0 0
  %784 = vmatprep.subr.bf16.mxu0 0
  %785 = vmatpush1.bf16.msra.mxu0 0
  %786 = vmatprep.subr.bf16.mxu0 0
  %787 = vmatpush1.bf16.msra.mxu0 0
  %788 = vmatprep.subr.bf16.mxu0 0
  %789 = vmatpush1.bf16.msra.mxu0 0
  %790 = vmatprep.subr.bf16.mxu0 0
  %791 = vmatpush1.bf16.msra.mxu0 0
  %792 = vmatprep.subr.bf16.mxu0 0
  %793 = vmatpush1.bf16.msra.mxu0 0
  %794 = vmatprep.subr.bf16.mxu0 0
  %795 = vmatpush1.bf16.msra.mxu0 0
  %796 = vmatprep.subr.bf16.mxu0 0
  %797 = vmatpush1.bf16.msra.mxu0 0
  %798 = vmatprep.subr.bf16.mxu0 0
  %799 = vmatpush1.bf16.msra.mxu0 0
  %800 = vmatprep.subr.bf16.mxu0 0
  %801 = vmatpush1.bf16.msra.mxu0 0
  %802 = vmatprep.mubr.bf16.mxu0 0
  %803 = vmatmul.mubr.bf16.gmra.mrb[0].mxu0 %v604
  %v804 = vpop.f32.mrb[0].mxu0
  %v805 = vadd.f32 %v137, %v804
  %v806 = vpop.f32.mrb[0].mxu0
  %v807 = vadd.f32 %v141, %v806
  %v808 = vpop.f32.mrb[0].mxu0
  %v809 = vpop.f32.mrb[0].mxu0
  %810 = vdwg.mxu0
  %811 = vmatprep.subr.bf16.mxu0 %v453
  %812 = vmatpush1.bf16.msra.mxu0 %v452
  %813 = vmatprep.subr.bf16.mxu0 %v473
  %814 = vmatpush1.bf16.msra.mxu0 %v472
  %815 = vmatprep.subr.bf16.mxu0 %v493
  %816 = vmatpush1.bf16.msra.mxu0 %v492
  %817 = vmatprep.subr.bf16.mxu0 %v513
  %818 = vmatpush1.bf16.msra.mxu0 %v512
  %819 = vmatprep.subr.bf16.mxu0 0
  %820 = vmatpush1.bf16.msra.mxu0 0
  %821 = vmatprep.subr.bf16.mxu0 0
  %822 = vmatpush1.bf16.msra.mxu0 0
  %823 = vmatprep.subr.bf16.mxu0 0
  %824 = vmatpush1.bf16.msra.mxu0 0
  %825 = vmatprep.subr.bf16.mxu0 0
  %826 = vmatpush1.bf16.msra.mxu0 0
  %827 = vmatprep.subr.bf16.mxu0 0
  %828 = vmatpush1.bf16.msra.mxu0 0
  %829 = vmatprep.subr.bf16.mxu0 0
  %830 = vmatpush1.bf16.msra.mxu0 0
  %831 = vmatprep.subr.bf16.mxu0 0
  %832 = vmatpush1.bf16.msra.mxu0 0
  %833 = vmatprep.subr.bf16.mxu0 0
  %834 = vmatpush1.bf16.msra.mxu0 0
  %835 = vmatprep.subr.bf16.mxu0 0
  %836 = vmatpush1.bf16.msra.mxu0 0
  %837 = vmatprep.subr.bf16.mxu0 0
  %838 = vmatpush1.bf16.msra.mxu0 0
  %839 = vmatprep.subr.bf16.mxu0 0
  %840 = vmatpush1.bf16.msra.mxu0 0
  %841 = vmatprep.subr.bf16.mxu0 0
  %842 = vmatpush1.bf16.msra.mxu0 0
  %843 = vmatprep.mubr.bf16.mxu0 0
  %844 = vmatmul.mubr.bf16.gmra.mrb[0].mxu0 %v604
  %v845 = vpop.f32.mrb[0].mxu0
  %v846 = vadd.f32 %v145, %v845
  %v847 = vpop.f32.mrb[0].mxu0
  %v848 = vadd.f32 %v149, %v847
  %v849 = vpop.f32.mrb[0].mxu0
  %v850 = vpop.f32.mrb[0].mxu0
  %851 = vdwg.mxu0
  %852 = vmatprep.subr.bf16.mxu0 %v455
  %853 = vmatpush1.bf16.msra.mxu0 %v454
  %854 = vmatprep.subr.bf16.mxu0 %v475
  %855 = vmatpush1.bf16.msra.mxu0 %v474
  %856 = vmatprep.subr.bf16.mxu0 %v495
  %857 = vmatpush1.bf16.msra.mxu0 %v494
  %858 = vmatprep.subr.bf16.mxu0 %v515
  %859 = vmatpush1.bf16.msra.mxu0 %v514
  %860 = vmatprep.subr.bf16.mxu0 0
  %861 = vmatpush1.bf16.msra.mxu0 0
  %862 = vmatprep.subr.bf16.mxu0 0
  %863 = vmatpush1.bf16.msra.mxu0 0
  %864 = vmatprep.subr.bf16.mxu0 0
  %865 = vmatpush1.bf16.msra.mxu0 0
  %866 = vmatprep.subr.bf16.mxu0 0
  %867 = vmatpush1.bf16.msra.mxu0 0
  %868 = vmatprep.subr.bf16.mxu0 0
  %869 = vmatpush1.bf16.msra.mxu0 0
  %870 = vmatprep.subr.bf16.mxu0 0
  %871 = vmatpush1.bf16.msra.mxu0 0
  %872 = vmatprep.subr.bf16.mxu0 0
  %873 = vmatpush1.bf16.msra.mxu0 0
  %874 = vmatprep.subr.bf16.mxu0 0
  %875 = vmatpush1.bf16.msra.mxu0 0
  %876 = vmatprep.subr.bf16.mxu0 0
  %877 = vmatpush1.bf16.msra.mxu0 0
  %878 = vmatprep.subr.bf16.mxu0 0
  %879 = vmatpush1.bf16.msra.mxu0 0
  %880 = vmatprep.subr.bf16.mxu0 0
  %881 = vmatpush1.bf16.msra.mxu0 0
  %882 = vmatprep.subr.bf16.mxu0 0
  %883 = vmatpush1.bf16.msra.mxu0 0
  %884 = vmatprep.mubr.bf16.mxu0 0
  %885 = vmatmul.mubr.bf16.gmra.mrb[0].mxu0 %v604
  %v886 = vpop.f32.mrb[0].mxu0
  %v887 = vadd.f32 %v153, %v886
  %v888 = vpop.f32.mrb[0].mxu0
  %v889 = vadd.f32 %v157, %v888
  %v890 = vpop.f32.mrb[0].mxu0
  %v891 = vpop.f32.mrb[0].mxu0
  %892 = vdwg.mxu0
  %893 = vmatprep.subr.bf16.mxu0 %v457
  %894 = vmatpush1.bf16.msra.mxu0 %v456
  %895 = vmatprep.subr.bf16.mxu0 %v477
  %896 = vmatpush1.bf16.msra.mxu0 %v476
  %897 = vmatprep.subr.bf16.mxu0 %v497
  %898 = vmatpush1.bf16.msra.mxu0 %v496
  %899 = vmatprep.subr.bf16.mxu0 %v517
  %900 = vmatpush1.bf16.msra.mxu0 %v516
  %901 = vmatprep.subr.bf16.mxu0 0
  %902 = vmatpush1.bf16.msra.mxu0 0
  %903 = vmatprep.subr.bf16.mxu0 0
  %904 = vmatpush1.bf16.msra.mxu0 0
  %905 = vmatprep.subr.bf16.mxu0 0
  %906 = vmatpush1.bf16.msra.mxu0 0
  %907 = vmatprep.subr.bf16.mxu0 0
  %908 = vmatpush1.bf16.msra.mxu0 0
  %909 = vmatprep.subr.bf16.mxu0 0
  %910 = vmatpush1.bf16.msra.mxu0 0
  %911 = vmatprep.subr.bf16.mxu0 0
  %912 = vmatpush1.bf16.msra.mxu0 0
  %913 = vmatprep.subr.bf16.mxu0 0
  %914 = vmatpush1.bf16.msra.mxu0 0
  %915 = vmatprep.subr.bf16.mxu0 0
  %916 = vmatpush1.bf16.msra.mxu0 0
  %917 = vmatprep.subr.bf16.mxu0 0
  %918 = vmatpush1.bf16.msra.mxu0 0
  %919 = vmatprep.subr.bf16.mxu0 0
  %920 = vmatpush1.bf16.msra.mxu0 0
  %921 = vmatprep.subr.bf16.mxu0 0
  %922 = vmatpush1.bf16.msra.mxu0 0
  %923 = vmatprep.subr.bf16.mxu0 0
  %924 = vmatpush1.bf16.msra.mxu0 0
  %925 = vmatprep.mubr.bf16.mxu0 0
  %926 = vmatmul.mubr.bf16.gmra.mrb[0].mxu0 %v604
  %v927 = vpop.f32.mrb[0].mxu0
  %v928 = vadd.f32 %v161, %v927
  %v929 = vpop.f32.mrb[0].mxu0
  %v930 = vadd.f32 %v165, %v929
  %v931 = vpop.f32.mrb[0].mxu0
  %v932 = vpop.f32.mrb[0].mxu0
  %933 = vdwg.mxu0
  %934 = vmatprep.subr.bf16.mxu0 %v459
  %935 = vmatpush1.bf16.msra.mxu0 %v458
  %936 = vmatprep.subr.bf16.mxu0 %v479
  %937 = vmatpush1.bf16.msra.mxu0 %v478
  %938 = vmatprep.subr.bf16.mxu0 %v499
  %939 = vmatpush1.bf16.msra.mxu0 %v498
  %940 = vmatprep.subr.bf16.mxu0 %v519
  %941 = vmatpush1.bf16.msra.mxu0 %v518
  %942 = vmatprep.subr.bf16.mxu0 0
  %943 = vmatpush1.bf16.msra.mxu0 0
  %944 = vmatprep.subr.bf16.mxu0 0
  %945 = vmatpush1.bf16.msra.mxu0 0
  %946 = vmatprep.subr.bf16.mxu0 0
  %947 = vmatpush1.bf16.msra.mxu0 0
  %948 = vmatprep.subr.bf16.mxu0 0
  %949 = vmatpush1.bf16.msra.mxu0 0
  %950 = vmatprep.subr.bf16.mxu0 0
  %951 = vmatpush1.bf16.msra.mxu0 0
  %952 = vmatprep.subr.bf16.mxu0 0
  %953 = vmatpush1.bf16.msra.mxu0 0
  %954 = vmatprep.subr.bf16.mxu0 0
  %955 = vmatpush1.bf16.msra.mxu0 0
  %956 = vmatprep.subr.bf16.mxu0 0
  %957 = vmatpush1.bf16.msra.mxu0 0
  %958 = vmatprep.subr.bf16.mxu0 0
  %959 = vmatpush1.bf16.msra.mxu0 0
  %960 = vmatprep.subr.bf16.mxu0 0
  %961 = vmatpush1.bf16.msra.mxu0 0
  %962 = vmatprep.subr.bf16.mxu0 0
  %963 = vmatpush1.bf16.msra.mxu0 0
  %964 = vmatprep.subr.bf16.mxu0 0
  %965 = vmatpush1.bf16.msra.mxu0 0
  %966 = vmatprep.mubr.bf16.mxu0 0
  %967 = vmatmul.mubr.bf16.gmra.mrb[0].mxu0 %v604
  %v968 = vpop.f32.mrb[0].mxu0
  %v969 = vadd.f32 %v169, %v968
  %v970 = vpop.f32.mrb[0].mxu0
  %v971 = vadd.f32 %v173, %v970
  %v972 = vpop.f32.mrb[0].mxu0
  %v973 = vpop.f32.mrb[0].mxu0
  %974 = vdwg.mxu0
  %975 = vmatprep.subr.bf16.mxu0 %v461
  %976 = vmatpush1.bf16.msra.mxu0 %v460
  %977 = vmatprep.subr.bf16.mxu0 %v481
  %978 = vmatpush1.bf16.msra.mxu0 %v480
  %979 = vmatprep.subr.bf16.mxu0 %v501
  %980 = vmatpush1.bf16.msra.mxu0 %v500
  %981 = vmatprep.subr.bf16.mxu0 %v521
  %982 = vmatpush1.bf16.msra.mxu0 %v520
  %983 = vmatprep.subr.bf16.mxu0 0
  %984 = vmatpush1.bf16.msra.mxu0 0
  %985 = vmatprep.subr.bf16.mxu0 0
  %986 = vmatpush1.bf16.msra.mxu0 0
  %987 = vmatprep.subr.bf16.mxu0 0
  %988 = vmatpush1.bf16.msra.mxu0 0
  %989 = vmatprep.subr.bf16.mxu0 0
  %990 = vmatpush1.bf16.msra.mxu0 0
  %991 = vmatprep.subr.bf16.mxu0 0
  %992 = vmatpush1.bf16.msra.mxu0 0
  %993 = vmatprep.subr.bf16.mxu0 0
  %994 = vmatpush1.bf16.msra.mxu0 0
  %995 = vmatprep.subr.bf16.mxu0 0
  %996 = vmatpush1.bf16.msra.mxu0 0
  %997 = vmatprep.subr.bf16.mxu0 0
  %998 = vmatpush1.bf16.msra.mxu0 0
  %999 = vmatprep.subr.bf16.mxu0 0
  %1000 = vmatpush1.bf16.msra.mxu0 0
  %1001 = vmatprep.subr.bf16.mxu0 0
  %1002 = vmatpush1.bf16.msra.mxu0 0
  %1003 = vmatprep.subr.bf16.mxu0 0
  %1004 = vmatpush1.bf16.msra.mxu0 0
  %1005 = vmatprep.subr.bf16.mxu0 0
  %1006 = vmatpush1.bf16.msra.mxu0 0
  %1007 = vmatprep.mubr.bf16.mxu0 0
  %1008 = vmatmul.mubr.bf16.gmra.mrb[0].mxu0 %v604
  %v1009 = vpop.f32.mrb[0].mxu0
  %v1010 = vadd.f32 %v177, %v1009
  %v1011 = vpop.f32.mrb[0].mxu0
  %v1012 = vadd.f32 %v181, %v1011
  %v1013 = vpop.f32.mrb[0].mxu0
  %v1014 = vpop.f32.mrb[0].mxu0
  %1015 = vdwg.mxu0
  %v1036 = vcombine.low %v641, %v643
  %v1037 = vcombine.low %v682, %v684
  %v1039 = vunpack.c.l.s4 1983009808
  %v1040 = vunpack.c.0.s8 %v1039
  %v1041 = vlaneseq
  %v1042 = vshrl.u32 %v1041, 7
  %v1043 = vsub.s32 %v1040, %v1042
  %v1044 = vrot.slane %v1036, %v1043
  %v1046 = vunpack.c.l.s4 1983009808
  %v1047 = vunpack.c.0.s8 %v1046
  %v1048 = vlaneseq
  %v1049 = vshrl.u32 %v1048, 7
  %v1050 = vsub.s32 %v1047, %v1049
  %v1051 = vrot.slane %v1037, %v1050
  %v1052 = vcombine.low %v1044, %v1051
  %v1053 = vcombine.low %v723, %v725
  %v1054 = vcombine.low %v764, %v766
  %v1056 = vunpack.c.l.s4 1983009808
  %v1057 = vunpack.c.0.s8 %v1056
  %v1058 = vlaneseq
  %v1059 = vshrl.u32 %v1058, 7
  %v1060 = vsub.s32 %v1057, %v1059
  %v1061 = vrot.slane %v1053, %v1060
  %v1063 = vunpack.c.l.s4 1983009808
  %v1064 = vunpack.c.0.s8 %v1063
  %v1065 = vlaneseq
  %v1066 = vshrl.u32 %v1065, 7
  %v1067 = vsub.s32 %v1064, %v1066
  %v1068 = vrot.slane %v1054, %v1067
  %v1069 = vcombine.low %v1061, %v1068
  %v1070 = vcombine.low %v805, %v807
  %v1071 = vcombine.low %v846, %v848
  %v1073 = vunpack.c.l.s4 1983009808
  %v1074 = vunpack.c.0.s8 %v1073
  %v1075 = vlaneseq
  %v1076 = vshrl.u32 %v1075, 7
  %v1077 = vsub.s32 %v1074, %v1076
  %v1078 = vrot.slane %v1070, %v1077
  %v1080 = vunpack.c.l.s4 1983009808
  %v1081 = vunpack.c.0.s8 %v1080
  %v1082 = vlaneseq
  %v1083 = vshrl.u32 %v1082, 7
  %v1084 = vsub.s32 %v1081, %v1083
  %v1085 = vrot.slane %v1071, %v1084
  %v1086 = vcombine.low %v1078, %v1085
  %v1087 = vcombine.low %v887, %v889
  %v1088 = vcombine.low %v928, %v930
  %v1090 = vunpack.c.l.s4 1983009808
  %v1091 = vunpack.c.0.s8 %v1090
  %v1092 = vlaneseq
  %v1093 = vshrl.u32 %v1092, 7
  %v1094 = vsub.s32 %v1091, %v1093
  %v1095 = vrot.slane %v1087, %v1094
  %v1097 = vunpack.c.l.s4 1983009808
  %v1098 = vunpack.c.0.s8 %v1097
  %v1099 = vlaneseq
  %v1100 = vshrl.u32 %v1099, 7
  %v1101 = vsub.s32 %v1098, %v1100
  %v1102 = vrot.slane %v1088, %v1101
  %v1103 = vcombine.low %v1095, %v1102
  %v1104 = vcombine.low %v969, %v971
  %v1105 = vcombine.low %v1010, %v1012
  %v1107 = vunpack.c.l.s4 1983009808
  %v1108 = vunpack.c.0.s8 %v1107
  %v1109 = vlaneseq
  %v1110 = vshrl.u32 %v1109, 7
  %v1111 = vsub.s32 %v1108, %v1110
  %v1112 = vrot.slane %v1104, %v1111
  %v1114 = vunpack.c.l.s4 1983009808
  %v1115 = vunpack.c.0.s8 %v1114
  %v1116 = vlaneseq
  %v1117 = vshrl.u32 %v1116, 7
  %v1118 = vsub.s32 %v1115, %v1117
  %v1119 = vrot.slane %v1105, %v1118
  %v1120 = vcombine.low %v1112, %v1119
  %1126 = vst [vmem:[%s3] sm:$0xff] %v1052
  %1127 = vst [vmem:[%s3 + $0x8] sm:$0xff] %v1069
  %1128 = vst [vmem:[%s3 + $0x10] sm:$0xff] %v1086
  %1129 = vst [vmem:[%s3 + $0x18] sm:$0xff] %v1103
  %1130 = vst [vmem:[%s3 + $0x20] sm:$0xff] %v1120
  // Predicated region
  $region14: #{generator_forward.16} parent=0 // pred_check
    _
  $region15: #{generator_forward.16} parent=0 // pred_check_branch
    %1132 = sbr.rel (0) target = $region17
  $region16: #{generator_forward.16} parent=0 // pred_region
    _
  $region17: #{generator_forward.16} parent=0 // pred_fallthru
    _
  // Predicated region
  $region18: #{generator_forward.16} parent=0 // pred_check
    _
  $region19: #{generator_forward.16} parent=0 // pred_check_branch
    %1134 = sbr.rel (0) target = $region21
  $region20: #{generator_forward.16} parent=0 // pred_region
    _
  $region21: #{generator_forward.16} parent=0 // pred_fallthru
    _

// kernel: tile.23
$region0: #{tile.23}
  #allocation0 [shape = 's32[1]{0}', space=sflag, size = 0x4, scoped, tag = 'scoped memory for tile.23']
  %s0 = inlined_call_operand.vmem [shape: f32[32], index: 0, kind: input, shape index: {}]
  %s1 = inlined_call_operand.vmem [shape: f32[4,32], index: 1, kind: output, shape index: {}]
  // Predicated region
  $region2: #{tile.23} parent=0 // pred_check
    _
  $region3: #{tile.23} parent=0 // pred_check_branch
    %3 = sbr.rel (0) target = $region5
  $region4: #{tile.23} parent=0 // pred_region
    _
  $region5: #{tile.23} parent=0 // pred_fallthru
    _
  %v4 = vld [vmem:[%s0] ss:$0 sm:$0xff]
  %5 = vst [vmem:[%s1] sm:$0xf] %v4

// kernel: tile.24
$region0: #{tile.24}
  %s0 = inlined_call_operand.vmem [shape: f32[4,32], index: 0, kind: input, shape index: {}]
  %s1 = inlined_call_operand.vmem [shape: f32[1,128], index: 1, kind: output, shape index: {}]
  $region1: #{tile.24} parent=0
    #allocation0 [shape = 'u8[4096]{0}', space=vmem, size = 0x1000, scoped, tag = 'scoped mem for output reshape']
    #allocation1 [shape = 'u8[4096]{0}', space=vmem, size = 0x1000, scoped, tag = 'scoped mem for input reshape']
    %s3 = sshllo.u32 0, 4
    %v4 = vld [vmem:[%s0] sm:%s3]
    %5 = vst [vmem:[#allocation1] sm:%s3] %v4
    %v6 = vld [vmem:[#allocation1] sm:$0x1]
    %vm7 = vcmask 261120
    %8 = vst.msk [vmem:[#allocation0] sm:$0x1] %vm7, %v6
    %s9 = scalar_lea.vmem [#allocation1], 3
    %v10 = vld [vmem:[%s9] sm:$0x1]
    %11 = vrot.lane.b32.xlu0 %v10, 96
    %v12 = vpop.permute.xlu0 %11
    %vm13 = vcmask 1048320
    %14 = vst.msk [vmem:[#allocation0] sm:$0x1] %vm13, %v12
    %s15 = scalar_lea.vmem [#allocation1], 2
    %v16 = vld [vmem:[%s15] sm:$0x1]
    %17 = vrot.lane.b32.xlu0 %v16, 64
    %v18 = vpop.permute.xlu0 %17
    %vm19 = vcmask 785920
    %20 = vst.msk [vmem:[#allocation0] sm:$0x1] %vm19, %v18
    %s21 = scalar_lea.vmem [#allocation1], 1
    %v22 = vld [vmem:[%s21] sm:$0x1]
    %23 = vrot.lane.b32.xlu0 %v22, 32
    %v24 = vpop.permute.xlu0 %23
    %vm25 = vcmask 523520
    %26 = vst.msk [vmem:[#allocation0] sm:$0x1] %vm25, %v24
    %s28 = sshllo.u32 0, 1
    %v30 = vld [vmem:[#allocation0] sm:%s28]
    %s31 = sshllo.u32 0, 1
    %32 = vst [vmem:[%s1] sm:%s31] %v30

// kernel: generator_forward.17
$region0: #{generator_forward.17}
  #allocation0 [shape = 'u32[]', space=smem, size = 0x4, offset = 0x4, fixed_abs, tag = 'smem constant byte address 0x4 - core index']
  #allocation1 [shape = 'u32[144,128]{1,0:T(1,128)}', space=vmem, size = 0x12000, scoped, tag = 'internal scratch']
  %s0 = inlined_call_operand.vmem [shape: f32[6,128], index: 0, kind: input, shape index: {}]
  %s1 = inlined_call_operand.vmem [shape: f32[1,128], index: 1, kind: input, shape index: {}]
  %s2 = inlined_call_operand.vmem [shape: f32[6,128], index: 2, kind: output, shape index: {}]
  %s3 = sld [smem:[#allocation0]]
  $region18: #{generator_forward.17} parent=0
    _
  %s5 = ssub.s32 1, %s3
  %s6 = scalar_select 0, %s5, %s3
  // Predicated region
  $region2: #{generator_forward.17} parent=0 // pred_check
    _
  $region3: #{generator_forward.17} parent=0 // pred_check_branch
    %8 = sbr.rel (0) target = $region5
  $region4: #{generator_forward.17} parent=0 // pred_region
    _
  $region5: #{generator_forward.17} parent=0 // pred_fallthru
    _
  // Predicated region
  $region6: #{generator_forward.17} parent=0 // pred_check
    _
  $region7: #{generator_forward.17} parent=0 // pred_check_branch
    %10 = sbr.rel (0) target = $region9
  $region8: #{generator_forward.17} parent=0 // pred_region
    _
  $region9: #{generator_forward.17} parent=0 // pred_fallthru
    _
  %v11 = vld [vmem:[%s0] sm:$0x3f]
  %v12 = vld [vmem:[%s1] sm:$0x1]
  %v14 = vlaneseq
  %v15 = vshrl.u32 %v14, 7
  %v16 = vsub.s32 0, %v15
  %v17 = vrot.slane %v12, %v16
  %v19 = vadd.f32 %v11, %v17
  %v20 = vmax.f32 %v19, 0.0
  %21 = vst [vmem:[%s2] sm:$0x3f] %v20
  // Predicated region
  $region10: #{generator_forward.17} parent=0 // pred_check
    _
  $region11: #{generator_forward.17} parent=0 // pred_check_branch
    %23 = sbr.rel (0) target = $region13
  $region12: #{generator_forward.17} parent=0 // pred_region
    _
  $region13: #{generator_forward.17} parent=0 // pred_fallthru
    _
  // Predicated region
  $region14: #{generator_forward.17} parent=0 // pred_check
    _
  $region15: #{generator_forward.17} parent=0 // pred_check_branch
    %25 = sbr.rel (0) target = $region17
  $region16: #{generator_forward.17} parent=0 // pred_region
    _
  $region17: #{generator_forward.17} parent=0 // pred_fallthru
    _

// kernel: generator_forward.18
$region0: #{generator_forward.18}
  #allocation0 [shape = 'u32[]', space=smem, size = 0x4, offset = 0x4, fixed_abs, tag = 'smem constant byte address 0x4 - core index']
  #allocation1 [shape = 'u32[144,128]{1,0:T(1,128)}', space=vmem, size = 0x12000, scoped, tag = 'internal scratch']
  %s0 = inlined_call_operand.vmem [shape: bf16[24,32], index: 0, kind: input, shape index: {}]
  %s1 = inlined_call_operand.vmem [shape: bf16[32,1024], index: 1, kind: input, shape index: {}]
  %s2 = inlined_call_operand.vmem [shape: f32[1,1024], index: 2, kind: input, shape index: {}]
  %s3 = inlined_call_operand.vmem [shape: f32[24,1024], index: 3, kind: output, shape index: {}]
  %s4 = sld [smem:[#allocation0]]
  $region22: #{generator_forward.18} parent=0
    _
  %s6 = ssub.s32 1, %s4
  %s7 = scalar_select 0, %s6, %s4
  // Predicated region
  $region2: #{generator_forward.18} parent=0 // pred_check
    _
  $region3: #{generator_forward.18} parent=0 // pred_check_branch
    %9 = sbr.rel (0) target = $region5
  $region4: #{generator_forward.18} parent=0 // pred_region
    _
  $region5: #{generator_forward.18} parent=0 // pred_fallthru
    _
  // Predicated region
  $region6: #{generator_forward.18} parent=0 // pred_check
    _
  $region7: #{generator_forward.18} parent=0 // pred_check_branch
    %11 = sbr.rel (0) target = $region9
  $region8: #{generator_forward.18} parent=0 // pred_region
    _
  $region9: #{generator_forward.18} parent=0 // pred_fallthru
    _
  // Predicated region
  $region10: #{generator_forward.18} parent=0 // pred_check
    _
  $region11: #{generator_forward.18} parent=0 // pred_check_branch
    %13 = sbr.rel (0) target = $region13
  $region12: #{generator_forward.18} parent=0 // pred_region
    _
  $region13: #{generator_forward.18} parent=0 // pred_fallthru
    _
  %v15 = vld [vmem:[%s0] sm:$0xf]
  %v16 = vld [vmem:[%s0 + $0x4] sm:$0xf]
  %v17 = vld [vmem:[%s0 + $0x8] sm:$0xf]
  %v18 = vld [vmem:[%s1] sm:$0xff]
  %v19 = vld [vmem:[%s1 + $0x8] sm:$0xff]
  %v20 = vld [vmem:[%s1 + $0x10] sm:$0xff]
  %v21 = vld [vmem:[%s1 + $0x18] sm:$0xff]
  %v22 = vld [vmem:[%s1 + $0x20] sm:$0xff]
  %v23 = vld [vmem:[%s1 + $0x28] sm:$0xff]
  %v24 = vld [vmem:[%s1 + $0x30] sm:$0xff]
  %v25 = vld [vmem:[%s1 + $0x38] sm:$0xff]
  %v26 = vld [vmem:[%s1 + $0x40] sm:$0xff]
  %v27 = vld [vmem:[%s1 + $0x48] sm:$0xff]
  %v28 = vld [vmem:[%s1 + $0x50] sm:$0xff]
  %v29 = vld [vmem:[%s1 + $0x58] sm:$0xff]
  %v30 = vld [vmem:[%s1 + $0x60] sm:$0xff]
  %v31 = vld [vmem:[%s1 + $0x68] sm:$0xff]
  %v32 = vld [vmem:[%s1 + $0x70] sm:$0xff]
  %v33 = vld [vmem:[%s1 + $0x78] sm:$0xff]
  %v34 = vld [vmem:[%s2] sm:$0xff]
  %v36 = vlaneseq
  %v37 = vshrl.u32 %v36, 7
  %v38 = vsub.s32 0, %v37
  %v39 = vrot.slane %v34, %v38
  %v40 = vlaneseq
  %v41 = vshrl.u32 %v40, 7
  %v42 = vsub.s32 1, %v41
  %v43 = vrot.slane %v34, %v42
  %v44 = vlaneseq
  %v45 = vshrl.u32 %v44, 7
  %v46 = vsub.s32 2, %v45
  %v47 = vrot.slane %v34, %v46
  %v48 = vlaneseq
  %v49 = vshrl.u32 %v48, 7
  %v50 = vsub.s32 3, %v49
  %v51 = vrot.slane %v34, %v50
  %v52 = vlaneseq
  %v53 = vshrl.u32 %v52, 7
  %v54 = vsub.s32 4, %v53
  %v55 = vrot.slane %v34, %v54
  %v56 = vlaneseq
  %v57 = vshrl.u32 %v56, 7
  %v58 = vsub.s32 5, %v57
  %v59 = vrot.slane %v34, %v58
  %v60 = vlaneseq
  %v61 = vshrl.u32 %v60, 7
  %v62 = vsub.s32 6, %v61
  %v63 = vrot.slane %v34, %v62
  %v64 = vlaneseq
  %v65 = vshrl.u32 %v64, 7
  %v66 = vsub.s32 7, %v65
  %v67 = vrot.slane %v34, %v66
  %v79 = vunpack.c.l.b16 %v15
  %v80 = vunpack.c.l.b16 %v16
  %v81 = vunpack.c.l.b16 %v17
  %v82 = vpack.c.b16 %v80, %v79
  %v83 = vpack.c.b16 %v81, %v81
  %v100 = vunpack.c.l.b16 %v18
  %v101 = vunpack.c.h.b16 %v18
  %v102 = vunpack.c.l.b16 %v19
  %v103 = vunpack.c.h.b16 %v19
  %v104 = vunpack.c.l.b16 %v20
  %v105 = vunpack.c.h.b16 %v20
  %v106 = vunpack.c.l.b16 %v21
  %v107 = vunpack.c.h.b16 %v21
  %v108 = vunpack.c.l.b16 %v22
  %v109 = vunpack.c.h.b16 %v22
  %v110 = vunpack.c.l.b16 %v23
  %v111 = vunpack.c.h.b16 %v23
  %v112 = vunpack.c.l.b16 %v24
  %v113 = vunpack.c.h.b16 %v24
  %v114 = vunpack.c.l.b16 %v25
  %v115 = vunpack.c.h.b16 %v25
  %v116 = vunpack.c.l.b16 %v26
  %v117 = vunpack.c.h.b16 %v26
  %v118 = vunpack.c.l.b16 %v27
  %v119 = vunpack.c.h.b16 %v27
  %v120 = vunpack.c.l.b16 %v28
  %v121 = vunpack.c.h.b16 %v28
  %v122 = vunpack.c.l.b16 %v29
  %v123 = vunpack.c.h.b16 %v29
  %v124 = vunpack.c.l.b16 %v30
  %v125 = vunpack.c.h.b16 %v30
  %v126 = vunpack.c.l.b16 %v31
  %v127 = vunpack.c.h.b16 %v31
  %v128 = vunpack.c.l.b16 %v32
  %v129 = vunpack.c.h.b16 %v32
  %v130 = vunpack.c.l.b16 %v33
  %v131 = vunpack.c.h.b16 %v33
  %v132 = vpack.c.b16 %v108, %v100
  %v133 = vpack.c.b16 %v109, %v101
  %v134 = vpack.c.b16 %v110, %v102
  %v135 = vpack.c.b16 %v111, %v103
  %v136 = vpack.c.b16 %v112, %v104
  %v137 = vpack.c.b16 %v113, %v105
  %v138 = vpack.c.b16 %v114, %v106
  %v139 = vpack.c.b16 %v115, %v107
  %v140 = vpack.c.b16 %v124, %v116
  %v141 = vpack.c.b16 %v125, %v117
  %v142 = vpack.c.b16 %v126, %v118
  %v143 = vpack.c.b16 %v127, %v119
  %v144 = vpack.c.b16 %v128, %v120
  %v145 = vpack.c.b16 %v129, %v121
  %v146 = vpack.c.b16 %v130, %v122
  %v147 = vpack.c.b16 %v131, %v123
  %vm164 = vcmask 261120
  %v166 = vsel %vm164, %v82, 0
  %v169 = vsel %vm164, %v83, 0
  %171 = vmatprep.subr.bf16.mxu0 %v133
  %172 = vmatpush1.bf16.msra.mxu0 %v132
  %173 = vmatprep.subr.bf16.mxu0 %v141
  %174 = vmatpush1.bf16.msra.mxu0 %v140
  %175 = vmatprep.subr.bf16.mxu0 0
  %176 = vmatpush1.bf16.msra.mxu0 0
  %177 = vmatprep.subr.bf16.mxu0 0
  %178 = vmatpush1.bf16.msra.mxu0 0
  %179 = vmatprep.subr.bf16.mxu0 0
  %180 = vmatpush1.bf16.msra.mxu0 0
  %181 = vmatprep.subr.bf16.mxu0 0
  %182 = vmatpush1.bf16.msra.mxu0 0
  %183 = vmatprep.subr.bf16.mxu0 0
  %184 = vmatpush1.bf16.msra.mxu0 0
  %185 = vmatprep.subr.bf16.mxu0 0
  %186 = vmatpush1.bf16.msra.mxu0 0
  %187 = vmatprep.subr.bf16.mxu0 0
  %188 = vmatpush1.bf16.msra.mxu0 0
  %189 = vmatprep.subr.bf16.mxu0 0
  %190 = vmatpush1.bf16.msra.mxu0 0
  %191 = vmatprep.subr.bf16.mxu0 0
  %192 = vmatpush1.bf16.msra.mxu0 0
  %193 = vmatprep.subr.bf16.mxu0 0
  %194 = vmatpush1.bf16.msra.mxu0 0
  %195 = vmatprep.subr.bf16.mxu0 0
  %196 = vmatpush1.bf16.msra.mxu0 0
  %197 = vmatprep.subr.bf16.mxu0 0
  %198 = vmatpush1.bf16.msra.mxu0 0
  %199 = vmatprep.subr.bf16.mxu0 0
  %200 = vmatpush1.bf16.msra.mxu0 0
  %201 = vmatprep.subr.bf16.mxu0 0
  %202 = vmatpush1.bf16.msra.mxu0 0
  %203 = vmatprep.mubr.bf16.mxu0 0
  %204 = vmatmul.mubr.bf16.gmra.mrb[0].mxu0 %v166
  %v205 = vpop.f32.mrb[0].mxu0
  %v206 = vadd.f32 %v39, %v205
  %v207 = vpop.f32.mrb[0].mxu0
  %v208 = vadd.f32 %v43, %v207
  %v209 = vpop.f32.mrb[0].mxu0
  %v210 = vadd.f32 %v39, %v209
  %v211 = vpop.f32.mrb[0].mxu0
  %v212 = vadd.f32 %v43, %v211
  %213 = vmatprep.mubr.bf16.mxu0 0
  %214 = vmatmul.mubr.bf16.gmra.mrb[0].mxu0 %v169
  %v215 = vpop.f32.mrb[0].mxu0
  %v216 = vadd.f32 %v39, %v215
  %v217 = vpop.f32.mrb[0].mxu0
  %v218 = vadd.f32 %v43, %v217
  %v219 = vpop.f32.mrb[0].mxu0
  %v220 = vpop.f32.mrb[0].mxu0
  %221 = vdwg.mxu0
  %222 = vmatprep.subr.bf16.mxu0 %v135
  %223 = vmatpush1.bf16.msra.mxu0 %v134
  %224 = vmatprep.subr.bf16.mxu0 %v143
  %225 = vmatpush1.bf16.msra.mxu0 %v142
  %226 = vmatprep.subr.bf16.mxu0 0
  %227 = vmatpush1.bf16.msra.mxu0 0
  %228 = vmatprep.subr.bf16.mxu0 0
  %229 = vmatpush1.bf16.msra.mxu0 0
  %230 = vmatprep.subr.bf16.mxu0 0
  %231 = vmatpush1.bf16.msra.mxu0 0
  %232 = vmatprep.subr.bf16.mxu0 0
  %233 = vmatpush1.bf16.msra.mxu0 0
  %234 = vmatprep.subr.bf16.mxu0 0
  %235 = vmatpush1.bf16.msra.mxu0 0
  %236 = vmatprep.subr.bf16.mxu0 0
  %237 = vmatpush1.bf16.msra.mxu0 0
  %238 = vmatprep.subr.bf16.mxu0 0
  %239 = vmatpush1.bf16.msra.mxu0 0
  %240 = vmatprep.subr.bf16.mxu0 0
  %241 = vmatpush1.bf16.msra.mxu0 0
  %242 = vmatprep.subr.bf16.mxu0 0
  %243 = vmatpush1.bf16.msra.mxu0 0
  %244 = vmatprep.subr.bf16.mxu0 0
  %245 = vmatpush1.bf16.msra.mxu0 0
  %246 = vmatprep.subr.bf16.mxu0 0
  %247 = vmatpush1.bf16.msra.mxu0 0
  %248 = vmatprep.subr.bf16.mxu0 0
  %249 = vmatpush1.bf16.msra.mxu0 0
  %250 = vmatprep.subr.bf16.mxu0 0
  %251 = vmatpush1.bf16.msra.mxu0 0
  %252 = vmatprep.subr.bf16.mxu0 0
  %253 = vmatpush1.bf16.msra.mxu0 0
  %254 = vmatprep.mubr.bf16.mxu0 0
  %255 = vmatmul.mubr.bf16.gmra.mrb[0].mxu0 %v166
  %v256 = vpop.f32.mrb[0].mxu0
  %v257 = vadd.f32 %v47, %v256
  %v258 = vpop.f32.mrb[0].mxu0
  %v259 = vadd.f32 %v51, %v258
  %v260 = vpop.f32.mrb[0].mxu0
  %v261 = vadd.f32 %v47, %v260
  %v262 = vpop.f32.mrb[0].mxu0
  %v263 = vadd.f32 %v51, %v262
  %264 = vmatprep.mubr.bf16.mxu0 0
  %265 = vmatmul.mubr.bf16.gmra.mrb[0].mxu0 %v169
  %v266 = vpop.f32.mrb[0].mxu0
  %v267 = vadd.f32 %v47, %v266
  %v268 = vpop.f32.mrb[0].mxu0
  %v269 = vadd.f32 %v51, %v268
  %v270 = vpop.f32.mrb[0].mxu0
  %v271 = vpop.f32.mrb[0].mxu0
  %272 = vdwg.mxu0
  %273 = vmatprep.subr.bf16.mxu0 %v137
  %274 = vmatpush1.bf16.msra.mxu0 %v136
  %275 = vmatprep.subr.bf16.mxu0 %v145
  %276 = vmatpush1.bf16.msra.mxu0 %v144
  %277 = vmatprep.subr.bf16.mxu0 0
  %278 = vmatpush1.bf16.msra.mxu0 0
  %279 = vmatprep.subr.bf16.mxu0 0
  %280 = vmatpush1.bf16.msra.mxu0 0
  %281 = vmatprep.subr.bf16.mxu0 0
  %282 = vmatpush1.bf16.msra.mxu0 0
  %283 = vmatprep.subr.bf16.mxu0 0
  %284 = vmatpush1.bf16.msra.mxu0 0
  %285 = vmatprep.subr.bf16.mxu0 0
  %286 = vmatpush1.bf16.msra.mxu0 0
  %287 = vmatprep.subr.bf16.mxu0 0
  %288 = vmatpush1.bf16.msra.mxu0 0
  %289 = vmatprep.subr.bf16.mxu0 0
  %290 = vmatpush1.bf16.msra.mxu0 0
  %291 = vmatprep.subr.bf16.mxu0 0
  %292 = vmatpush1.bf16.msra.mxu0 0
  %293 = vmatprep.subr.bf16.mxu0 0
  %294 = vmatpush1.bf16.msra.mxu0 0
  %295 = vmatprep.subr.bf16.mxu0 0
  %296 = vmatpush1.bf16.msra.mxu0 0
  %297 = vmatprep.subr.bf16.mxu0 0
  %298 = vmatpush1.bf16.msra.mxu0 0
  %299 = vmatprep.subr.bf16.mxu0 0
  %300 = vmatpush1.bf16.msra.mxu0 0
  %301 = vmatprep.subr.bf16.mxu0 0
  %302 = vmatpush1.bf16.msra.mxu0 0
  %303 = vmatprep.subr.bf16.mxu0 0
  %304 = vmatpush1.bf16.msra.mxu0 0
  %305 = vmatprep.mubr.bf16.mxu0 0
  %306 = vmatmul.mubr.bf16.gmra.mrb[0].mxu0 %v166
  %v307 = vpop.f32.mrb[0].mxu0
  %v308 = vadd.f32 %v55, %v307
  %v309 = vpop.f32.mrb[0].mxu0
  %v310 = vadd.f32 %v59, %v309
  %v311 = vpop.f32.mrb[0].mxu0
  %v312 = vadd.f32 %v55, %v311
  %v313 = vpop.f32.mrb[0].mxu0
  %v314 = vadd.f32 %v59, %v313
  %315 = vmatprep.mubr.bf16.mxu0 0
  %316 = vmatmul.mubr.bf16.gmra.mrb[0].mxu0 %v169
  %v317 = vpop.f32.mrb[0].mxu0
  %v318 = vadd.f32 %v55, %v317
  %v319 = vpop.f32.mrb[0].mxu0
  %v320 = vadd.f32 %v59, %v319
  %v321 = vpop.f32.mrb[0].mxu0
  %v322 = vpop.f32.mrb[0].mxu0
  %323 = vdwg.mxu0
  %324 = vmatprep.subr.bf16.mxu0 %v139
  %325 = vmatpush1.bf16.msra.mxu0 %v138
  %326 = vmatprep.subr.bf16.mxu0 %v147
  %327 = vmatpush1.bf16.msra.mxu0 %v146
  %328 = vmatprep.subr.bf16.mxu0 0
  %329 = vmatpush1.bf16.msra.mxu0 0
  %330 = vmatprep.subr.bf16.mxu0 0
  %331 = vmatpush1.bf16.msra.mxu0 0
  %332 = vmatprep.subr.bf16.mxu0 0
  %333 = vmatpush1.bf16.msra.mxu0 0
  %334 = vmatprep.subr.bf16.mxu0 0
  %335 = vmatpush1.bf16.msra.mxu0 0
  %336 = vmatprep.subr.bf16.mxu0 0
  %337 = vmatpush1.bf16.msra.mxu0 0
  %338 = vmatprep.subr.bf16.mxu0 0
  %339 = vmatpush1.bf16.msra.mxu0 0
  %340 = vmatprep.subr.bf16.mxu0 0
  %341 = vmatpush1.bf16.msra.mxu0 0
  %342 = vmatprep.subr.bf16.mxu0 0
  %343 = vmatpush1.bf16.msra.mxu0 0
  %344 = vmatprep.subr.bf16.mxu0 0
  %345 = vmatpush1.bf16.msra.mxu0 0
  %346 = vmatprep.subr.bf16.mxu0 0
  %347 = vmatpush1.bf16.msra.mxu0 0
  %348 = vmatprep.subr.bf16.mxu0 0
  %349 = vmatpush1.bf16.msra.mxu0 0
  %350 = vmatprep.subr.bf16.mxu0 0
  %351 = vmatpush1.bf16.msra.mxu0 0
  %352 = vmatprep.subr.bf16.mxu0 0
  %353 = vmatpush1.bf16.msra.mxu0 0
  %354 = vmatprep.subr.bf16.mxu0 0
  %355 = vmatpush1.bf16.msra.mxu0 0
  %356 = vmatprep.mubr.bf16.mxu0 0
  %357 = vmatmul.mubr.bf16.gmra.mrb[0].mxu0 %v166
  %v358 = vpop.f32.mrb[0].mxu0
  %v359 = vadd.f32 %v63, %v358
  %v360 = vpop.f32.mrb[0].mxu0
  %v361 = vadd.f32 %v67, %v360
  %v362 = vpop.f32.mrb[0].mxu0
  %v363 = vadd.f32 %v63, %v362
  %v364 = vpop.f32.mrb[0].mxu0
  %v365 = vadd.f32 %v67, %v364
  %366 = vmatprep.mubr.bf16.mxu0 0
  %367 = vmatmul.mubr.bf16.gmra.mrb[0].mxu0 %v169
  %v368 = vpop.f32.mrb[0].mxu0
  %v369 = vadd.f32 %v63, %v368
  %v370 = vpop.f32.mrb[0].mxu0
  %v371 = vadd.f32 %v67, %v370
  %v372 = vpop.f32.mrb[0].mxu0
  %v373 = vpop.f32.mrb[0].mxu0
  %374 = vdwg.mxu0
  %375 = vst [vmem:[%s3] sm:$0xff] %v206
  %376 = vst [vmem:[%s3 + $0x8] sm:$0xff] %v208
  %377 = vst [vmem:[%s3 + $0x10] sm:$0xff] %v257
  %378 = vst [vmem:[%s3 + $0x18] sm:$0xff] %v259
  %379 = vst [vmem:[%s3 + $0x20] sm:$0xff] %v308
  %380 = vst [vmem:[%s3 + $0x28] sm:$0xff] %v310
  %381 = vst [vmem:[%s3 + $0x30] sm:$0xff] %v359
  %382 = vst [vmem:[%s3 + $0x38] sm:$0xff] %v361
  %383 = vst [vmem:[%s3 + $0x40] sm:$0xff] %v210
  %384 = vst [vmem:[%s3 + $0x48] sm:$0xff] %v212
  %385 = vst [vmem:[%s3 + $0x50] sm:$0xff] %v261
  %386 = vst [vmem:[%s3 + $0x58] sm:$0xff] %v263
  %387 = vst [vmem:[%s3 + $0x60] sm:$0xff] %v312
  %388 = vst [vmem:[%s3 + $0x68] sm:$0xff] %v314
  %389 = vst [vmem:[%s3 + $0x70] sm:$0xff] %v363
  %390 = vst [vmem:[%s3 + $0x78] sm:$0xff] %v365
  %391 = vst [vmem:[%s3 + $0x80] sm:$0xff] %v216
  %392 = vst [vmem:[%s3 + $0x88] sm:$0xff] %v218
  %393 = vst [vmem:[%s3 + $0x90] sm:$0xff] %v267
  %394 = vst [vmem:[%s3 + $0x98] sm:$0xff] %v269
  %395 = vst [vmem:[%s3 + $0xa0] sm:$0xff] %v318
  %396 = vst [vmem:[%s3 + $0xa8] sm:$0xff] %v320
  %397 = vst [vmem:[%s3 + $0xb0] sm:$0xff] %v369
  %398 = vst [vmem:[%s3 + $0xb8] sm:$0xff] %v371
  // Predicated region
  $region14: #{generator_forward.18} parent=0 // pred_check
    _
  $region15: #{generator_forward.18} parent=0 // pred_check_branch
    %400 = sbr.rel (0) target = $region17
  $region16: #{generator_forward.18} parent=0 // pred_region
    _
  $region17: #{generator_forward.18} parent=0 // pred_fallthru
    _
  // Predicated region
  $region18: #{generator_forward.18} parent=0 // pred_check
    _
  $region19: #{generator_forward.18} parent=0 // pred_check_branch
    %402 = sbr.rel (0) target = $region21
  $region20: #{generator_forward.18} parent=0 // pred_region
    _
  $region21: #{generator_forward.18} parent=0 // pred_fallthru
    _

// kernel: tile.28
$region0: #{tile.28}
  #allocation0 [shape = 's32[1]{0}', space=sflag, size = 0x4, scoped, tag = 'scoped memory for tile.28']
  %s0 = inlined_call_operand.vmem [shape: f32[16], index: 0, kind: input, shape index: {}]
  %s1 = inlined_call_operand.vmem [shape: f32[8,16], index: 1, kind: output, shape index: {}]
  // Predicated region
  $region2: #{tile.28} parent=0 // pred_check
    _
  $region3: #{tile.28} parent=0 // pred_check_branch
    %3 = sbr.rel (0) target = $region5
  $region4: #{tile.28} parent=0 // pred_region
    _
  $region5: #{tile.28} parent=0 // pred_fallthru
    _
  %v4 = vld [vmem:[%s0] ss:$0 sm:$0xff]
  %5 = vst [vmem:[%s1] sm:$0xff] %v4

// kernel: tile.29
$region0: #{tile.29}
  %s0 = inlined_call_operand.vmem [shape: f32[8,16], index: 0, kind: input, shape index: {}]
  %s1 = inlined_call_operand.vmem [shape: f32[1,128], index: 1, kind: output, shape index: {}]
  $region1: #{tile.29} parent=0
    #allocation0 [shape = 'u8[4096]{0}', space=vmem, size = 0x1000, scoped, tag = 'scoped mem for output reshape']
    %v2 = vld [vmem:[%s0] sm:$0x1]
    %vm3 = vcmask 130048
    %4 = vst.msk [vmem:[#allocation0] sm:$0x1] %vm3, %v2
    %s5 = scalar_lea.vmem %s0, 7
    %v6 = vld [vmem:[%s5] sm:$0x1]
    %7 = vrot.lane.b32.xlu0 %v6, 112
    %v8 = vpop.permute.xlu0 %7
    %vm9 = vcmask 1048448
    %10 = vst.msk [vmem:[#allocation0] sm:$0x1] %vm9, %v8
    %s11 = scalar_lea.vmem %s0, 6
    %v12 = vld [vmem:[%s11] sm:$0x1]
    %13 = vrot.lane.b32.xlu0 %v12, 96
    %v14 = vpop.permute.xlu0 %13
    %vm15 = vcmask 917248
    %16 = vst.msk [vmem:[#allocation0] sm:$0x1] %vm15, %v14
    %s17 = scalar_lea.vmem %s0, 5
    %v18 = vld [vmem:[%s17] sm:$0x1]
    %19 = vrot.lane.b32.xlu0 %v18, 80
    %v20 = vpop.permute.xlu0 %19
    %vm21 = vcmask 786048
    %22 = vst.msk [vmem:[#allocation0] sm:$0x1] %vm21, %v20
    %s23 = scalar_lea.vmem %s0, 4
    %v24 = vld [vmem:[%s23] sm:$0x1]
    %25 = vrot.lane.b32.xlu0 %v24, 64
    %v26 = vpop.permute.xlu0 %25
    %vm27 = vcmask 654848
    %28 = vst.msk [vmem:[#allocation0] sm:$0x1] %vm27, %v26
    %s29 = scalar_lea.vmem %s0, 3
    %v30 = vld [vmem:[%s29] sm:$0x1]
    %31 = vrot.lane.b32.xlu0 %v30, 48
    %v32 = vpop.permute.xlu0 %31
    %vm33 = vcmask 523648
    %34 = vst.msk [vmem:[#allocation0] sm:$0x1] %vm33, %v32
    %s35 = scalar_lea.vmem %s0, 2
    %v36 = vld [vmem:[%s35] sm:$0x1]
    %37 = vrot.lane.b32.xlu0 %v36, 32
    %v38 = vpop.permute.xlu0 %37
    %vm39 = vcmask 392448
    %40 = vst.msk [vmem:[#allocation0] sm:$0x1] %vm39, %v38
    %s41 = scalar_lea.vmem %s0, 1
    %v42 = vld [vmem:[%s41] sm:$0x1]
    %43 = vrot.lane.b32.xlu0 %v42, 16
    %v44 = vpop.permute.xlu0 %43
    %vm45 = vcmask 261248
    %46 = vst.msk [vmem:[#allocation0] sm:$0x1] %vm45, %v44
    %s48 = sshllo.u32 0, 1
    %v50 = vld [vmem:[#allocation0] sm:%s48]
    %s51 = sshllo.u32 0, 1
    %52 = vst [vmem:[%s1] sm:%s51] %v50

// kernel: generator_forward.19
$region0: #{generator_forward.19}
  #allocation0 [shape = 'u32[]', space=smem, size = 0x4, offset = 0x4, fixed_abs, tag = 'smem constant byte address 0x4 - core index']
  #allocation1 [shape = 'u32[144,128]{1,0:T(1,128)}', space=vmem, size = 0x12000, scoped, tag = 'internal scratch']
  %s0 = inlined_call_operand.vmem [shape: f32[24,128], index: 0, kind: input, shape index: {}]
  %s1 = inlined_call_operand.vmem [shape: f32[1,128], index: 1, kind: input, shape index: {}]
  %s2 = inlined_call_operand.vmem [shape: f32[24,128], index: 2, kind: output, shape index: {}]
  %s3 = sld [smem:[#allocation0]]
  $region18: #{generator_forward.19} parent=0
    _
  %s5 = ssub.s32 1, %s3
  %s6 = scalar_select 0, %s5, %s3
  // Predicated region
  $region2: #{generator_forward.19} parent=0 // pred_check
    _
  $region3: #{generator_forward.19} parent=0 // pred_check_branch
    %8 = sbr.rel (0) target = $region5
  $region4: #{generator_forward.19} parent=0 // pred_region
    _
  $region5: #{generator_forward.19} parent=0 // pred_fallthru
    _
  // Predicated region
  $region6: #{generator_forward.19} parent=0 // pred_check
    _
  $region7: #{generator_forward.19} parent=0 // pred_check_branch
    %10 = sbr.rel (0) target = $region9
  $region8: #{generator_forward.19} parent=0 // pred_region
    _
  $region9: #{generator_forward.19} parent=0 // pred_fallthru
    _
  %v11 = vld [vmem:[%s0] sm:$0xff]
  %v12 = vld [vmem:[%s0 + $0x8] sm:$0xff]
  %v13 = vld [vmem:[%s0 + $0x10] sm:$0xff]
  %v14 = vld [vmem:[%s1] sm:$0x1]
  %v16 = vlaneseq
  %v17 = vshrl.u32 %v16, 7
  %v18 = vsub.s32 0, %v17
  %v19 = vrot.slane %v14, %v18
  %v21 = vadd.f32 %v11, %v19
  %v22 = vadd.f32 %v12, %v19
  %v23 = vadd.f32 %v13, %v19
  %v24 = vmax.f32 %v21, 0.0
  %v25 = vmax.f32 %v22, 0.0
  %v26 = vmax.f32 %v23, 0.0
  %27 = vst [vmem:[%s2] sm:$0xff] %v24
  %28 = vst [vmem:[%s2 + $0x8] sm:$0xff] %v25
  %29 = vst [vmem:[%s2 + $0x10] sm:$0xff] %v26
  // Predicated region
  $region10: #{generator_forward.19} parent=0 // pred_check
    _
  $region11: #{generator_forward.19} parent=0 // pred_check_branch
    %31 = sbr.rel (0) target = $region13
  $region12: #{generator_forward.19} parent=0 // pred_region
    _
  $region13: #{generator_forward.19} parent=0 // pred_fallthru
    _
  // Predicated region
  $region14: #{generator_forward.19} parent=0 // pred_check
    _
  $region15: #{generator_forward.19} parent=0 // pred_check_branch
    %33 = sbr.rel (0) target = $region17
  $region16: #{generator_forward.19} parent=0 // pred_region
    _
  $region17: #{generator_forward.19} parent=0 // pred_fallthru
    _

// kernel: generator_forward.20
$region0: #{generator_forward.20}
  #allocation0 [shape = 'u32[]', space=smem, size = 0x4, offset = 0x4, fixed_abs, tag = 'smem constant byte address 0x4 - core index']
  #allocation1 [shape = 'u32[144,128]{1,0:T(1,128)}', space=vmem, size = 0x12000, scoped, tag = 'internal scratch']
  %s0 = inlined_call_operand.vmem [shape: bf16[192,16], index: 0, kind: input, shape index: {}]
  %s1 = inlined_call_operand.vmem [shape: bf16[16,512], index: 1, kind: input, shape index: {}]
  %s2 = inlined_call_operand.vmem [shape: f32[1,512], index: 2, kind: input, shape index: {}]
  %s3 = inlined_call_operand.vmem [shape: f32[192,512], index: 3, kind: output, shape index: {}]
  %s4 = sld [smem:[#allocation0]]
  $region22: #{generator_forward.20} parent=0
    _
  %s6 = ssub.s32 1, %s4
  %s7 = scalar_select 0, %s6, %s4
  // Predicated region
  $region2: #{generator_forward.20} parent=0 // pred_check
    _
  $region3: #{generator_forward.20} parent=0 // pred_check_branch
    %9 = sbr.rel (0) target = $region5
  $region4: #{generator_forward.20} parent=0 // pred_region
    _
  $region5: #{generator_forward.20} parent=0 // pred_fallthru
    _
  // Predicated region
  $region6: #{generator_forward.20} parent=0 // pred_check
    _
  $region7: #{generator_forward.20} parent=0 // pred_check_branch
    %11 = sbr.rel (0) target = $region9
  $region8: #{generator_forward.20} parent=0 // pred_region
    _
  $region9: #{generator_forward.20} parent=0 // pred_fallthru
    _
  // Predicated region
  $region10: #{generator_forward.20} parent=0 // pred_check
    _
  $region11: #{generator_forward.20} parent=0 // pred_check_branch
    %13 = sbr.rel (0) target = $region13
  $region12: #{generator_forward.20} parent=0 // pred_region
    _
  $region13: #{generator_forward.20} parent=0 // pred_fallthru
    _
  %v15 = vld [vmem:[%s0] sm:$0xf]
  %v16 = vld [vmem:[%s0 + $0x4] sm:$0xf]
  %v17 = vld [vmem:[%s0 + $0x8] sm:$0xf]
  %v18 = vld [vmem:[%s0 + $0xc] sm:$0xf]
  %v19 = vld [vmem:[%s0 + $0x10] sm:$0xf]
  %v20 = vld [vmem:[%s0 + $0x14] sm:$0xf]
  %v21 = vld [vmem:[%s0 + $0x18] sm:$0xf]
  %v22 = vld [vmem:[%s0 + $0x1c] sm:$0xf]
  %v23 = vld [vmem:[%s0 + $0x20] sm:$0xf]
  %v24 = vld [vmem:[%s0 + $0x24] sm:$0xf]
  %v25 = vld [vmem:[%s0 + $0x28] sm:$0xf]
  %v26 = vld [vmem:[%s0 + $0x2c] sm:$0xf]
  %v27 = vld [vmem:[%s0 + $0x30] sm:$0xf]
  %v28 = vld [vmem:[%s0 + $0x34] sm:$0xf]
  %v29 = vld [vmem:[%s0 + $0x38] sm:$0xf]
  %v30 = vld [vmem:[%s0 + $0x3c] sm:$0xf]
  %v31 = vld [vmem:[%s0 + $0x40] sm:$0xf]
  %v32 = vld [vmem:[%s0 + $0x44] sm:$0xf]
  %v33 = vld [vmem:[%s0 + $0x48] sm:$0xf]
  %v34 = vld [vmem:[%s0 + $0x4c] sm:$0xf]
  %v35 = vld [vmem:[%s0 + $0x50] sm:$0xf]
  %v36 = vld [vmem:[%s0 + $0x54] sm:$0xf]
  %v37 = vld [vmem:[%s0 + $0x58] sm:$0xf]
  %v38 = vld [vmem:[%s0 + $0x5c] sm:$0xf]
  %v39 = vld [vmem:[%s1] sm:$0xff]
  %v40 = vld [vmem:[%s1 + $0x8] sm:$0xff]
  %v41 = vld [vmem:[%s1 + $0x10] sm:$0xff]
  %v42 = vld [vmem:[%s1 + $0x18] sm:$0xff]
  %v43 = vld [vmem:[%s2] sm:$0xf]
  %v45 = vlaneseq
  %v46 = vshrl.u32 %v45, 7
  %v47 = vsub.s32 0, %v46
  %v48 = vrot.slane %v43, %v47
  %v49 = vlaneseq
  %v50 = vshrl.u32 %v49, 7
  %v51 = vsub.s32 1, %v50
  %v52 = vrot.slane %v43, %v51
  %v53 = vlaneseq
  %v54 = vshrl.u32 %v53, 7
  %v55 = vsub.s32 2, %v54
  %v56 = vrot.slane %v43, %v55
  %v57 = vlaneseq
  %v58 = vshrl.u32 %v57, 7
  %v59 = vsub.s32 3, %v58
  %v60 = vrot.slane %v43, %v59
  %v89 = vunpack.c.l.b16 %v15
  %v90 = vunpack.c.l.b16 %v16
  %v91 = vunpack.c.l.b16 %v17
  %v92 = vunpack.c.l.b16 %v18
  %v93 = vunpack.c.l.b16 %v19
  %v94 = vunpack.c.l.b16 %v20
  %v95 = vunpack.c.l.b16 %v21
  %v96 = vunpack.c.l.b16 %v22
  %v97 = vunpack.c.l.b16 %v23
  %v98 = vunpack.c.l.b16 %v24
  %v99 = vunpack.c.l.b16 %v25
  %v100 = vunpack.c.l.b16 %v26
  %v101 = vunpack.c.l.b16 %v27
  %v102 = vunpack.c.l.b16 %v28
  %v103 = vunpack.c.l.b16 %v29
  %v104 = vunpack.c.l.b16 %v30
  %v105 = vunpack.c.l.b16 %v31
  %v106 = vunpack.c.l.b16 %v32
  %v107 = vunpack.c.l.b16 %v33
  %v108 = vunpack.c.l.b16 %v34
  %v109 = vunpack.c.l.b16 %v35
  %v110 = vunpack.c.l.b16 %v36
  %v111 = vunpack.c.l.b16 %v37
  %v112 = vunpack.c.l.b16 %v38
  %v113 = vpack.c.b16 %v90, %v89
  %v114 = vpack.c.b16 %v92, %v91
  %v115 = vpack.c.b16 %v94, %v93
  %v116 = vpack.c.b16 %v96, %v95
  %v117 = vpack.c.b16 %v98, %v97
  %v118 = vpack.c.b16 %v100, %v99
  %v119 = vpack.c.b16 %v102, %v101
  %v120 = vpack.c.b16 %v104, %v103
  %v121 = vpack.c.b16 %v106, %v105
  %v122 = vpack.c.b16 %v108, %v107
  %v123 = vpack.c.b16 %v110, %v109
  %v124 = vpack.c.b16 %v112, %v111
  %v129 = vunpack.c.l.b16 %v39
  %v130 = vunpack.c.h.b16 %v39
  %v131 = vunpack.c.l.b16 %v40
  %v132 = vunpack.c.h.b16 %v40
  %v133 = vunpack.c.l.b16 %v41
  %v134 = vunpack.c.h.b16 %v41
  %v135 = vunpack.c.l.b16 %v42
  %v136 = vunpack.c.h.b16 %v42
  %v137 = vpack.c.b16 %v133, %v129
  %v138 = vpack.c.b16 %v134, %v130
  %v139 = vpack.c.b16 %v135, %v131
  %v140 = vpack.c.b16 %v136, %v132
  %vm145 = vcmask 130048
  %v147 = vsel %vm145, %v113, 0
  %v150 = vsel %vm145, %v114, 0
  %v153 = vsel %vm145, %v115, 0
  %v156 = vsel %vm145, %v116, 0
  %v159 = vsel %vm145, %v117, 0
  %v162 = vsel %vm145, %v118, 0
  %v165 = vsel %vm145, %v119, 0
  %v168 = vsel %vm145, %v120, 0
  %v171 = vsel %vm145, %v121, 0
  %v174 = vsel %vm145, %v122, 0
  %v177 = vsel %vm145, %v123, 0
  %v180 = vsel %vm145, %v124, 0
  %182 = vmatprep.subr.bf16.mxu0 %v138
  %183 = vmatpush1.bf16.msra.mxu0 %v137
  %184 = vmatprep.subr.bf16.mxu0 0
  %185 = vmatpush1.bf16.msra.mxu0 0
  %186 = vmatprep.subr.bf16.mxu0 0
  %187 = vmatpush1.bf16.msra.mxu0 0
  %188 = vmatprep.subr.bf16.mxu0 0
  %189 = vmatpush1.bf16.msra.mxu0 0
  %190 = vmatprep.subr.bf16.mxu0 0
  %191 = vmatpush1.bf16.msra.mxu0 0
  %192 = vmatprep.subr.bf16.mxu0 0
  %193 = vmatpush1.bf16.msra.mxu0 0
  %194 = vmatprep.subr.bf16.mxu0 0
  %195 = vmatpush1.bf16.msra.mxu0 0
  %196 = vmatprep.subr.bf16.mxu0 0
  %197 = vmatpush1.bf16.msra.mxu0 0
  %198 = vmatprep.subr.bf16.mxu0 0
  %199 = vmatpush1.bf16.msra.mxu0 0
  %200 = vmatprep.subr.bf16.mxu0 0
  %201 = vmatpush1.bf16.msra.mxu0 0
  %202 = vmatprep.subr.bf16.mxu0 0
  %203 = vmatpush1.bf16.msra.mxu0 0
  %204 = vmatprep.subr.bf16.mxu0 0
  %205 = vmatpush1.bf16.msra.mxu0 0
  %206 = vmatprep.subr.bf16.mxu0 0
  %207 = vmatpush1.bf16.msra.mxu0 0
  %208 = vmatprep.subr.bf16.mxu0 0
  %209 = vmatpush1.bf16.msra.mxu0 0
  %210 = vmatprep.subr.bf16.mxu0 0
  %211 = vmatpush1.bf16.msra.mxu0 0
  %212 = vmatprep.subr.bf16.mxu0 0
  %213 = vmatpush1.bf16.msra.mxu0 0
  %214 = vmatprep.mubr.bf16.mxu0 0
  %215 = vmatmul.mubr.bf16.gmra.mrb[0].mxu0 %v147
  %v216 = vpop.f32.mrb[0].mxu0
  %v217 = vadd.f32 %v48, %v216
  %v218 = vpop.f32.mrb[0].mxu0
  %v219 = vadd.f32 %v52, %v218
  %v220 = vpop.f32.mrb[0].mxu0
  %v221 = vadd.f32 %v48, %v220
  %v222 = vpop.f32.mrb[0].mxu0
  %v223 = vadd.f32 %v52, %v222
  %224 = vmatprep.mubr.bf16.mxu0 0
  %225 = vmatmul.mubr.bf16.gmra.mrb[0].mxu0 %v150
  %v226 = vpop.f32.mrb[0].mxu0
  %v227 = vadd.f32 %v48, %v226
  %v228 = vpop.f32.mrb[0].mxu0
  %v229 = vadd.f32 %v52, %v228
  %v230 = vpop.f32.mrb[0].mxu0
  %v231 = vadd.f32 %v48, %v230
  %v232 = vpop.f32.mrb[0].mxu0
  %v233 = vadd.f32 %v52, %v232
  %234 = vmatprep.mubr.bf16.mxu0 0
  %235 = vmatmul.mubr.bf16.gmra.mrb[0].mxu0 %v153
  %v236 = vpop.f32.mrb[0].mxu0
  %v237 = vadd.f32 %v48, %v236
  %v238 = vpop.f32.mrb[0].mxu0
  %v239 = vadd.f32 %v52, %v238
  %v240 = vpop.f32.mrb[0].mxu0
  %v241 = vadd.f32 %v48, %v240
  %v242 = vpop.f32.mrb[0].mxu0
  %v243 = vadd.f32 %v52, %v242
  %244 = vmatprep.mubr.bf16.mxu0 0
  %245 = vmatmul.mubr.bf16.gmra.mrb[0].mxu0 %v156
  %v246 = vpop.f32.mrb[0].mxu0
  %v247 = vadd.f32 %v48, %v246
  %v248 = vpop.f32.mrb[0].mxu0
  %v249 = vadd.f32 %v52, %v248
  %v250 = vpop.f32.mrb[0].mxu0
  %v251 = vadd.f32 %v48, %v250
  %v252 = vpop.f32.mrb[0].mxu0
  %v253 = vadd.f32 %v52, %v252
  %254 = vmatprep.mubr.bf16.mxu0 0
  %255 = vmatmul.mubr.bf16.gmra.mrb[0].mxu0 %v159
  %v256 = vpop.f32.mrb[0].mxu0
  %v257 = vadd.f32 %v48, %v256
  %v258 = vpop.f32.mrb[0].mxu0
  %v259 = vadd.f32 %v52, %v258
  %v260 = vpop.f32.mrb[0].mxu0
  %v261 = vadd.f32 %v48, %v260
  %v262 = vpop.f32.mrb[0].mxu0
  %v263 = vadd.f32 %v52, %v262
  %264 = vmatprep.mubr.bf16.mxu0 0
  %265 = vmatmul.mubr.bf16.gmra.mrb[0].mxu0 %v162
  %v266 = vpop.f32.mrb[0].mxu0
  %v267 = vadd.f32 %v48, %v266
  %v268 = vpop.f32.mrb[0].mxu0
  %v269 = vadd.f32 %v52, %v268
  %v270 = vpop.f32.mrb[0].mxu0
  %v271 = vadd.f32 %v48, %v270
  %v272 = vpop.f32.mrb[0].mxu0
  %v273 = vadd.f32 %v52, %v272
  %274 = vmatprep.mubr.bf16.mxu0 0
  %275 = vmatmul.mubr.bf16.gmra.mrb[0].mxu0 %v165
  %v276 = vpop.f32.mrb[0].mxu0
  %v277 = vadd.f32 %v48, %v276
  %v278 = vpop.f32.mrb[0].mxu0
  %v279 = vadd.f32 %v52, %v278
  %v280 = vpop.f32.mrb[0].mxu0
  %v281 = vadd.f32 %v48, %v280
  %v282 = vpop.f32.mrb[0].mxu0
  %v283 = vadd.f32 %v52, %v282
  %284 = vmatprep.mubr.bf16.mxu0 0
  %285 = vmatmul.mubr.bf16.gmra.mrb[0].mxu0 %v168
  %v286 = vpop.f32.mrb[0].mxu0
  %v287 = vadd.f32 %v48, %v286
  %v288 = vpop.f32.mrb[0].mxu0
  %v289 = vadd.f32 %v52, %v288
  %v290 = vpop.f32.mrb[0].mxu0
  %v291 = vadd.f32 %v48, %v290
  %v292 = vpop.f32.mrb[0].mxu0
  %v293 = vadd.f32 %v52, %v292
  %294 = vmatprep.mubr.bf16.mxu0 0
  %295 = vmatmul.mubr.bf16.gmra.mrb[0].mxu0 %v171
  %v296 = vpop.f32.mrb[0].mxu0
  %v297 = vadd.f32 %v48, %v296
  %v298 = vpop.f32.mrb[0].mxu0
  %v299 = vadd.f32 %v52, %v298
  %v300 = vpop.f32.mrb[0].mxu0
  %v301 = vadd.f32 %v48, %v300
  %v302 = vpop.f32.mrb[0].mxu0
  %v303 = vadd.f32 %v52, %v302
  %304 = vmatprep.mubr.bf16.mxu0 0
  %305 = vmatmul.mubr.bf16.gmra.mrb[0].mxu0 %v174
  %v306 = vpop.f32.mrb[0].mxu0
  %v307 = vadd.f32 %v48, %v306
  %v308 = vpop.f32.mrb[0].mxu0
  %v309 = vadd.f32 %v52, %v308
  %v310 = vpop.f32.mrb[0].mxu0
  %v311 = vadd.f32 %v48, %v310
  %v312 = vpop.f32.mrb[0].mxu0
  %v313 = vadd.f32 %v52, %v312
  %314 = vmatprep.mubr.bf16.mxu0 0
  %315 = vmatmul.mubr.bf16.gmra.mrb[0].mxu0 %v177
  %v316 = vpop.f32.mrb[0].mxu0
  %v317 = vadd.f32 %v48, %v316
  %v318 = vpop.f32.mrb[0].mxu0
  %v319 = vadd.f32 %v52, %v318
  %v320 = vpop.f32.mrb[0].mxu0
  %v321 = vadd.f32 %v48, %v320
  %v322 = vpop.f32.mrb[0].mxu0
  %v323 = vadd.f32 %v52, %v322
  %324 = vmatprep.mubr.bf16.mxu0 0
  %325 = vmatmul.mubr.bf16.gmra.mrb[0].mxu0 %v180
  %v326 = vpop.f32.mrb[0].mxu0
  %v327 = vadd.f32 %v48, %v326
  %v328 = vpop.f32.mrb[0].mxu0
  %v329 = vadd.f32 %v52, %v328
  %v330 = vpop.f32.mrb[0].mxu0
  %v331 = vadd.f32 %v48, %v330
  %v332 = vpop.f32.mrb[0].mxu0
  %v333 = vadd.f32 %v52, %v332
  %334 = vdwg.mxu0
  %335 = vmatprep.subr.bf16.mxu0 %v140
  %336 = vmatpush1.bf16.msra.mxu0 %v139
  %337 = vmatprep.subr.bf16.mxu0 0
  %338 = vmatpush1.bf16.msra.mxu0 0
  %339 = vmatprep.subr.bf16.mxu0 0
  %340 = vmatpush1.bf16.msra.mxu0 0
  %341 = vmatprep.subr.bf16.mxu0 0
  %342 = vmatpush1.bf16.msra.mxu0 0
  %343 = vmatprep.subr.bf16.mxu0 0
  %344 = vmatpush1.bf16.msra.mxu0 0
  %345 = vmatprep.subr.bf16.mxu0 0
  %346 = vmatpush1.bf16.msra.mxu0 0
  %347 = vmatprep.subr.bf16.mxu0 0
  %348 = vmatpush1.bf16.msra.mxu0 0
  %349 = vmatprep.subr.bf16.mxu0 0
  %350 = vmatpush1.bf16.msra.mxu0 0
  %351 = vmatprep.subr.bf16.mxu0 0
  %352 = vmatpush1.bf16.msra.mxu0 0
  %353 = vmatprep.subr.bf16.mxu0 0
  %354 = vmatpush1.bf16.msra.mxu0 0
  %355 = vmatprep.subr.bf16.mxu0 0
  %356 = vmatpush1.bf16.msra.mxu0 0
  %357 = vmatprep.subr.bf16.mxu0 0
  %358 = vmatpush1.bf16.msra.mxu0 0
  %359 = vmatprep.subr.bf16.mxu0 0
  %360 = vmatpush1.bf16.msra.mxu0 0
  %361 = vmatprep.subr.bf16.mxu0 0
  %362 = vmatpush1.bf16.msra.mxu0 0
  %363 = vmatprep.subr.bf16.mxu0 0
  %364 = vmatpush1.bf16.msra.mxu0 0
  %365 = vmatprep.subr.bf16.mxu0 0
  %366 = vmatpush1.bf16.msra.mxu0 0
  %367 = vmatprep.mubr.bf16.mxu0 0
  %368 = vmatmul.mubr.bf16.gmra.mrb[0].mxu0 %v147
  %v369 = vpop.f32.mrb[0].mxu0
  %v370 = vadd.f32 %v56, %v369
  %v371 = vpop.f32.mrb[0].mxu0
  %v372 = vadd.f32 %v60, %v371
  %v373 = vpop.f32.mrb[0].mxu0
  %v374 = vadd.f32 %v56, %v373
  %v375 = vpop.f32.mrb[0].mxu0
  %v376 = vadd.f32 %v60, %v375
  %377 = vmatprep.mubr.bf16.mxu0 0
  %378 = vmatmul.mubr.bf16.gmra.mrb[0].mxu0 %v150
  %v379 = vpop.f32.mrb[0].mxu0
  %v380 = vadd.f32 %v56, %v379
  %v381 = vpop.f32.mrb[0].mxu0
  %v382 = vadd.f32 %v60, %v381
  %v383 = vpop.f32.mrb[0].mxu0
  %v384 = vadd.f32 %v56, %v383
  %v385 = vpop.f32.mrb[0].mxu0
  %v386 = vadd.f32 %v60, %v385
  %387 = vmatprep.mubr.bf16.mxu0 0
  %388 = vmatmul.mubr.bf16.gmra.mrb[0].mxu0 %v153
  %v389 = vpop.f32.mrb[0].mxu0
  %v390 = vadd.f32 %v56, %v389
  %v391 = vpop.f32.mrb[0].mxu0
  %v392 = vadd.f32 %v60, %v391
  %v393 = vpop.f32.mrb[0].mxu0
  %v394 = vadd.f32 %v56, %v393
  %v395 = vpop.f32.mrb[0].mxu0
  %v396 = vadd.f32 %v60, %v395
  %397 = vmatprep.mubr.bf16.mxu0 0
  %398 = vmatmul.mubr.bf16.gmra.mrb[0].mxu0 %v156
  %v399 = vpop.f32.mrb[0].mxu0
  %v400 = vadd.f32 %v56, %v399
  %v401 = vpop.f32.mrb[0].mxu0
  %v402 = vadd.f32 %v60, %v401
  %v403 = vpop.f32.mrb[0].mxu0
  %v404 = vadd.f32 %v56, %v403
  %v405 = vpop.f32.mrb[0].mxu0
  %v406 = vadd.f32 %v60, %v405
  %407 = vmatprep.mubr.bf16.mxu0 0
  %408 = vmatmul.mubr.bf16.gmra.mrb[0].mxu0 %v159
  %v409 = vpop.f32.mrb[0].mxu0
  %v410 = vadd.f32 %v56, %v409
  %v411 = vpop.f32.mrb[0].mxu0
  %v412 = vadd.f32 %v60, %v411
  %v413 = vpop.f32.mrb[0].mxu0
  %v414 = vadd.f32 %v56, %v413
  %v415 = vpop.f32.mrb[0].mxu0
  %v416 = vadd.f32 %v60, %v415
  %417 = vmatprep.mubr.bf16.mxu0 0
  %418 = vmatmul.mubr.bf16.gmra.mrb[0].mxu0 %v162
  %v419 = vpop.f32.mrb[0].mxu0
  %v420 = vadd.f32 %v56, %v419
  %v421 = vpop.f32.mrb[0].mxu0
  %v422 = vadd.f32 %v60, %v421
  %v423 = vpop.f32.mrb[0].mxu0
  %v424 = vadd.f32 %v56, %v423
  %v425 = vpop.f32.mrb[0].mxu0
  %v426 = vadd.f32 %v60, %v425
  %427 = vmatprep.mubr.bf16.mxu0 0
  %428 = vmatmul.mubr.bf16.gmra.mrb[0].mxu0 %v165
  %v429 = vpop.f32.mrb[0].mxu0
  %v430 = vadd.f32 %v56, %v429
  %v431 = vpop.f32.mrb[0].mxu0
  %v432 = vadd.f32 %v60, %v431
  %v433 = vpop.f32.mrb[0].mxu0
  %v434 = vadd.f32 %v56, %v433
  %v435 = vpop.f32.mrb[0].mxu0
  %v436 = vadd.f32 %v60, %v435
  %437 = vmatprep.mubr.bf16.mxu0 0
  %438 = vmatmul.mubr.bf16.gmra.mrb[0].mxu0 %v168
  %v439 = vpop.f32.mrb[0].mxu0
  %v440 = vadd.f32 %v56, %v439
  %v441 = vpop.f32.mrb[0].mxu0
  %v442 = vadd.f32 %v60, %v441
  %v443 = vpop.f32.mrb[0].mxu0
  %v444 = vadd.f32 %v56, %v443
  %v445 = vpop.f32.mrb[0].mxu0
  %v446 = vadd.f32 %v60, %v445
  %447 = vmatprep.mubr.bf16.mxu0 0
  %448 = vmatmul.mubr.bf16.gmra.mrb[0].mxu0 %v171
  %v449 = vpop.f32.mrb[0].mxu0
  %v450 = vadd.f32 %v56, %v449
  %v451 = vpop.f32.mrb[0].mxu0
  %v452 = vadd.f32 %v60, %v451
  %v453 = vpop.f32.mrb[0].mxu0
  %v454 = vadd.f32 %v56, %v453
  %v455 = vpop.f32.mrb[0].mxu0
  %v456 = vadd.f32 %v60, %v455
  %457 = vmatprep.mubr.bf16.mxu0 0
  %458 = vmatmul.mubr.bf16.gmra.mrb[0].mxu0 %v174
  %v459 = vpop.f32.mrb[0].mxu0
  %v460 = vadd.f32 %v56, %v459
  %v461 = vpop.f32.mrb[0].mxu0
  %v462 = vadd.f32 %v60, %v461
  %v463 = vpop.f32.mrb[0].mxu0
  %v464 = vadd.f32 %v56, %v463
  %v465 = vpop.f32.mrb[0].mxu0
  %v466 = vadd.f32 %v60, %v465
  %467 = vmatprep.mubr.bf16.mxu0 0
  %468 = vmatmul.mubr.bf16.gmra.mrb[0].mxu0 %v177
  %v469 = vpop.f32.mrb[0].mxu0
  %v470 = vadd.f32 %v56, %v469
  %v471 = vpop.f32.mrb[0].mxu0
  %v472 = vadd.f32 %v60, %v471
  %v473 = vpop.f32.mrb[0].mxu0
  %v474 = vadd.f32 %v56, %v473
  %v475 = vpop.f32.mrb[0].mxu0
  %v476 = vadd.f32 %v60, %v475
  %477 = vmatprep.mubr.bf16.mxu0 0
  %478 = vmatmul.mubr.bf16.gmra.mrb[0].mxu0 %v180
  %v479 = vpop.f32.mrb[0].mxu0
  %v480 = vadd.f32 %v56, %v479
  %v481 = vpop.f32.mrb[0].mxu0
  %v482 = vadd.f32 %v60, %v481
  %v483 = vpop.f32.mrb[0].mxu0
  %v484 = vadd.f32 %v56, %v483
  %v485 = vpop.f32.mrb[0].mxu0
  %v486 = vadd.f32 %v60, %v485
  %487 = vdwg.mxu0
  %488 = vst [vmem:[%s3] sm:$0xff] %v217
  %489 = vst [vmem:[%s3 + $0x8] sm:$0xff] %v219
  %490 = vst [vmem:[%s3 + $0x10] sm:$0xff] %v370
  %491 = vst [vmem:[%s3 + $0x18] sm:$0xff] %v372
  %492 = vst [vmem:[%s3 + $0x20] sm:$0xff] %v221
  %493 = vst [vmem:[%s3 + $0x28] sm:$0xff] %v223
  %494 = vst [vmem:[%s3 + $0x30] sm:$0xff] %v374
  %495 = vst [vmem:[%s3 + $0x38] sm:$0xff] %v376
  %496 = vst [vmem:[%s3 + $0x40] sm:$0xff] %v227
  %497 = vst [vmem:[%s3 + $0x48] sm:$0xff] %v229
  %498 = vst [vmem:[%s3 + $0x50] sm:$0xff] %v380
  %499 = vst [vmem:[%s3 + $0x58] sm:$0xff] %v382
  %500 = vst [vmem:[%s3 + $0x60] sm:$0xff] %v231
  %501 = vst [vmem:[%s3 + $0x68] sm:$0xff] %v233
  %502 = vst [vmem:[%s3 + $0x70] sm:$0xff] %v384
  %503 = vst [vmem:[%s3 + $0x78] sm:$0xff] %v386
  %504 = vst [vmem:[%s3 + $0x80] sm:$0xff] %v237
  %505 = vst [vmem:[%s3 + $0x88] sm:$0xff] %v239
  %506 = vst [vmem:[%s3 + $0x90] sm:$0xff] %v390
  %507 = vst [vmem:[%s3 + $0x98] sm:$0xff] %v392
  %508 = vst [vmem:[%s3 + $0xa0] sm:$0xff] %v241
  %509 = vst [vmem:[%s3 + $0xa8] sm:$0xff] %v243
  %510 = vst [vmem:[%s3 + $0xb0] sm:$0xff] %v394
  %511 = vst [vmem:[%s3 + $0xb8] sm:$0xff] %v396
  %512 = vst [vmem:[%s3 + $0xc0] sm:$0xff] %v247
  %513 = vst [vmem:[%s3 + $0xc8] sm:$0xff] %v249
  %514 = vst [vmem:[%s3 + $0xd0] sm:$0xff] %v400
  %515 = vst [vmem:[%s3 + $0xd8] sm:$0xff] %v402
  %516 = vst [vmem:[%s3 + $0xe0] sm:$0xff] %v251
  %517 = vst [vmem:[%s3 + $0xe8] sm:$0xff] %v253
  %518 = vst [vmem:[%s3 + $0xf0] sm:$0xff] %v404
  %519 = vst [vmem:[%s3 + $0xf8] sm:$0xff] %v406
  %520 = vst [vmem:[%s3 + $0x100] sm:$0xff] %v257
  %521 = vst [vmem:[%s3 + $0x108] sm:$0xff] %v259
  %522 = vst [vmem:[%s3 + $0x110] sm:$0xff] %v410
  %523 = vst [vmem:[%s3 + $0x118] sm:$0xff] %v412
  %524 = vst [vmem:[%s3 + $0x120] sm:$0xff] %v261
  %525 = vst [vmem:[%s3 + $0x128] sm:$0xff] %v263
  %526 = vst [vmem:[%s3 + $0x130] sm:$0xff] %v414
  %527 = vst [vmem:[%s3 + $0x138] sm:$0xff] %v416
  %528 = vst [vmem:[%s3 + $0x140] sm:$0xff] %v267
  %529 = vst [vmem:[%s3 + $0x148] sm:$0xff] %v269
  %530 = vst [vmem:[%s3 + $0x150] sm:$0xff] %v420
  %531 = vst [vmem:[%s3 + $0x158] sm:$0xff] %v422
  %532 = vst [vmem:[%s3 + $0x160] sm:$0xff] %v271
  %533 = vst [vmem:[%s3 + $0x168] sm:$0xff] %v273
  %534 = vst [vmem:[%s3 + $0x170] sm:$0xff] %v424
  %535 = vst [vmem:[%s3 + $0x178] sm:$0xff] %v426
  %536 = vst [vmem:[%s3 + $0x180] sm:$0xff] %v277
  %537 = vst [vmem:[%s3 + $0x188] sm:$0xff] %v279
  %538 = vst [vmem:[%s3 + $0x190] sm:$0xff] %v430
  %539 = vst [vmem:[%s3 + $0x198] sm:$0xff] %v432
  %540 = vst [vmem:[%s3 + $0x1a0] sm:$0xff] %v281
  %541 = vst [vmem:[%s3 + $0x1a8] sm:$0xff] %v283
  %542 = vst [vmem:[%s3 + $0x1b0] sm:$0xff] %v434
  %543 = vst [vmem:[%s3 + $0x1b8] sm:$0xff] %v436
  %544 = vst [vmem:[%s3 + $0x1c0] sm:$0xff] %v287
  %545 = vst [vmem:[%s3 + $0x1c8] sm:$0xff] %v289
  %546 = vst [vmem:[%s3 + $0x1d0] sm:$0xff] %v440
  %547 = vst [vmem:[%s3 + $0x1d8] sm:$0xff] %v442
  %548 = vst [vmem:[%s3 + $0x1e0] sm:$0xff] %v291
  %549 = vst [vmem:[%s3 + $0x1e8] sm:$0xff] %v293
  %550 = vst [vmem:[%s3 + $0x1f0] sm:$0xff] %v444
  %551 = vst [vmem:[%s3 + $0x1f8] sm:$0xff] %v446
  %552 = vst [vmem:[%s3 + $0x200] sm:$0xff] %v297
  %553 = vst [vmem:[%s3 + $0x208] sm:$0xff] %v299
  %554 = vst [vmem:[%s3 + $0x210] sm:$0xff] %v450
  %555 = vst [vmem:[%s3 + $0x218] sm:$0xff] %v452
  %556 = vst [vmem:[%s3 + $0x220] sm:$0xff] %v301
  %557 = vst [vmem:[%s3 + $0x228] sm:$0xff] %v303
  %558 = vst [vmem:[%s3 + $0x230] sm:$0xff] %v454
  %559 = vst [vmem:[%s3 + $0x238] sm:$0xff] %v456
  %560 = vst [vmem:[%s3 + $0x240] sm:$0xff] %v307
  %561 = vst [vmem:[%s3 + $0x248] sm:$0xff] %v309
  %562 = vst [vmem:[%s3 + $0x250] sm:$0xff] %v460
  %563 = vst [vmem:[%s3 + $0x258] sm:$0xff] %v462
  %564 = vst [vmem:[%s3 + $0x260] sm:$0xff] %v311
  %565 = vst [vmem:[%s3 + $0x268] sm:$0xff] %v313
  %566 = vst [vmem:[%s3 + $0x270] sm:$0xff] %v464
  %567 = vst [vmem:[%s3 + $0x278] sm:$0xff] %v466
  %568 = vst [vmem:[%s3 + $0x280] sm:$0xff] %v317
  %569 = vst [vmem:[%s3 + $0x288] sm:$0xff] %v319
  %570 = vst [vmem:[%s3 + $0x290] sm:$0xff] %v470
  %571 = vst [vmem:[%s3 + $0x298] sm:$0xff] %v472
  %572 = vst [vmem:[%s3 + $0x2a0] sm:$0xff] %v321
  %573 = vst [vmem:[%s3 + $0x2a8] sm:$0xff] %v323
  %574 = vst [vmem:[%s3 + $0x2b0] sm:$0xff] %v474
  %575 = vst [vmem:[%s3 + $0x2b8] sm:$0xff] %v476
  %576 = vst [vmem:[%s3 + $0x2c0] sm:$0xff] %v327
  %577 = vst [vmem:[%s3 + $0x2c8] sm:$0xff] %v329
  %578 = vst [vmem:[%s3 + $0x2d0] sm:$0xff] %v480
  %579 = vst [vmem:[%s3 + $0x2d8] sm:$0xff] %v482
  %580 = vst [vmem:[%s3 + $0x2e0] sm:$0xff] %v331
  %581 = vst [vmem:[%s3 + $0x2e8] sm:$0xff] %v333
  %582 = vst [vmem:[%s3 + $0x2f0] sm:$0xff] %v484
  %583 = vst [vmem:[%s3 + $0x2f8] sm:$0xff] %v486
  // Predicated region
  $region14: #{generator_forward.20} parent=0 // pred_check
    _
  $region15: #{generator_forward.20} parent=0 // pred_check_branch
    %585 = sbr.rel (0) target = $region17
  $region16: #{generator_forward.20} parent=0 // pred_region
    _
  $region17: #{generator_forward.20} parent=0 // pred_fallthru
    _
  // Predicated region
  $region18: #{generator_forward.20} parent=0 // pred_check
    _
  $region19: #{generator_forward.20} parent=0 // pred_check_branch
    %587 = sbr.rel (0) target = $region21
  $region20: #{generator_forward.20} parent=0 // pred_region
    _
  $region21: #{generator_forward.20} parent=0 // pred_fallthru
    _

// kernel: tile.33
$region0: #{tile.33}
  #allocation0 [shape = 's32[1]{0}', space=sflag, size = 0x4, scoped, tag = 'scoped memory for tile.33']
  %s0 = inlined_call_operand.vmem [shape: f32[8], index: 0, kind: input, shape index: {}]
  %s1 = inlined_call_operand.vmem [shape: f32[16,8], index: 1, kind: output, shape index: {}]
  // Predicated region
  $region2: #{tile.33} parent=0 // pred_check
    _
  $region3: #{tile.33} parent=0 // pred_check_branch
    %3 = sbr.rel (0) target = $region5
  $region4: #{tile.33} parent=0 // pred_region
    _
  $region5: #{tile.33} parent=0 // pred_fallthru
    _
  %v4 = vld [vmem:[%s0] ss:$0 sm:$0xff]
  %5 = vst [vmem:[%s1] sm:$0xff] %v4
  %s6 = scalar_lea.vmem %s1, 8
  %7 = vst [vmem:[%s6] sm:$0xff] %v4

// kernel: tile.34
$region0: #{tile.34}
  %s0 = inlined_call_operand.vmem [shape: f32[16,8], index: 0, kind: input, shape index: {}]
  %s1 = inlined_call_operand.vmem [shape: f32[1,128], index: 1, kind: output, shape index: {}]
  $region1: #{tile.34} parent=0
    #allocation0 [shape = 'u8[4096]{0}', space=vmem, size = 0x1000, scoped, tag = 'scoped mem for output reshape']
    %v2 = vld [vmem:[%s0] sm:$0x1]
    %vm3 = vcmask 64512
    %4 = vst.msk [vmem:[#allocation0] sm:$0x1] %vm3, %v2
    %s5 = scalar_lea.vmem %s0, 15
    %v6 = vld [vmem:[%s5] sm:$0x1]
    %7 = vrot.lane.b32.xlu0 %v6, 120
    %v8 = vpop.permute.xlu0 %7
    %vm9 = vcmask 1048512
    %10 = vst.msk [vmem:[#allocation0] sm:$0x1] %vm9, %v8
    %s11 = scalar_lea.vmem %s0, 14
    %v12 = vld [vmem:[%s11] sm:$0x1]
    %13 = vrot.lane.b32.xlu0 %v12, 112
    %v14 = vpop.permute.xlu0 %13
    %vm15 = vcmask 982912
    %16 = vst.msk [vmem:[#allocation0] sm:$0x1] %vm15, %v14
    %s17 = scalar_lea.vmem %s0, 13
    %v18 = vld [vmem:[%s17] sm:$0x1]
    %19 = vrot.lane.b32.xlu0 %v18, 104
    %v20 = vpop.permute.xlu0 %19
    %vm21 = vcmask 917312
    %22 = vst.msk [vmem:[#allocation0] sm:$0x1] %vm21, %v20
    %s23 = scalar_lea.vmem %s0, 12
    %v24 = vld [vmem:[%s23] sm:$0x1]
    %25 = vrot.lane.b32.xlu0 %v24, 96
    %v26 = vpop.permute.xlu0 %25
    %vm27 = vcmask 851712
    %28 = vst.msk [vmem:[#allocation0] sm:$0x1] %vm27, %v26
    %s29 = scalar_lea.vmem %s0, 11
    %v30 = vld [vmem:[%s29] sm:$0x1]
    %31 = vrot.lane.b32.xlu0 %v30, 88
    %v32 = vpop.permute.xlu0 %31
    %vm33 = vcmask 786112
    %34 = vst.msk [vmem:[#allocation0] sm:$0x1] %vm33, %v32
    %s35 = scalar_lea.vmem %s0, 10
    %v36 = vld [vmem:[%s35] sm:$0x1]
    %37 = vrot.lane.b32.xlu0 %v36, 80
    %v38 = vpop.permute.xlu0 %37
    %vm39 = vcmask 720512
    %40 = vst.msk [vmem:[#allocation0] sm:$0x1] %vm39, %v38
    %s41 = scalar_lea.vmem %s0, 9
    %v42 = vld [vmem:[%s41] sm:$0x1]
    %43 = vrot.lane.b32.xlu0 %v42, 72
    %v44 = vpop.permute.xlu0 %43
    %vm45 = vcmask 654912
    %46 = vst.msk [vmem:[#allocation0] sm:$0x1] %vm45, %v44
    %s47 = scalar_lea.vmem %s0, 8
    %v48 = vld [vmem:[%s47] sm:$0x1]
    %49 = vrot.lane.b32.xlu0 %v48, 64
    %v50 = vpop.permute.xlu0 %49
    %vm51 = vcmask 589312
    %52 = vst.msk [vmem:[#allocation0] sm:$0x1] %vm51, %v50
    %s53 = scalar_lea.vmem %s0, 7
    %v54 = vld [vmem:[%s53] sm:$0x1]
    %55 = vrot.lane.b32.xlu0 %v54, 56
    %v56 = vpop.permute.xlu0 %55
    %vm57 = vcmask 523712
    %58 = vst.msk [vmem:[#allocation0] sm:$0x1] %vm57, %v56
    %s59 = scalar_lea.vmem %s0, 6
    %v60 = vld [vmem:[%s59] sm:$0x1]
    %61 = vrot.lane.b32.xlu0 %v60, 48
    %v62 = vpop.permute.xlu0 %61
    %vm63 = vcmask 458112
    %64 = vst.msk [vmem:[#allocation0] sm:$0x1] %vm63, %v62
    %s65 = scalar_lea.vmem %s0, 5
    %v66 = vld [vmem:[%s65] sm:$0x1]
    %67 = vrot.lane.b32.xlu0 %v66, 40
    %v68 = vpop.permute.xlu0 %67
    %vm69 = vcmask 392512
    %70 = vst.msk [vmem:[#allocation0] sm:$0x1] %vm69, %v68
    %s71 = scalar_lea.vmem %s0, 4
    %v72 = vld [vmem:[%s71] sm:$0x1]
    %73 = vrot.lane.b32.xlu0 %v72, 32
    %v74 = vpop.permute.xlu0 %73
    %vm75 = vcmask 326912
    %76 = vst.msk [vmem:[#allocation0] sm:$0x1] %vm75, %v74
    %s77 = scalar_lea.vmem %s0, 3
    %v78 = vld [vmem:[%s77] sm:$0x1]
    %79 = vrot.lane.b32.xlu0 %v78, 24
    %v80 = vpop.permute.xlu0 %79
    %vm81 = vcmask 261312
    %82 = vst.msk [vmem:[#allocation0] sm:$0x1] %vm81, %v80
    %s83 = scalar_lea.vmem %s0, 2
    %v84 = vld [vmem:[%s83] sm:$0x1]
    %85 = vrot.lane.b32.xlu0 %v84, 16
    %v86 = vpop.permute.xlu0 %85
    %vm87 = vcmask 195712
    %88 = vst.msk [vmem:[#allocation0] sm:$0x1] %vm87, %v86
    %s89 = scalar_lea.vmem %s0, 1
    %v90 = vld [vmem:[%s89] sm:$0x1]
    %91 = vrot.lane.b32.xlu0 %v90, 8
    %v92 = vpop.permute.xlu0 %91
    %vm93 = vcmask 130112
    %94 = vst.msk [vmem:[#allocation0] sm:$0x1] %vm93, %v92
    %s96 = sshllo.u32 0, 1
    %v98 = vld [vmem:[#allocation0] sm:%s96]
    %s99 = sshllo.u32 0, 1
    %100 = vst [vmem:[%s1] sm:%s99] %v98

// kernel: generator_forward.21
$region0: #{generator_forward.21}
  #allocation0 [shape = 'u32[]', space=smem, size = 0x4, offset = 0x4, fixed_abs, tag = 'smem constant byte address 0x4 - core index']
  #allocation1 [shape = 'u32[144,128]{1,0:T(1,128)}', space=vmem, size = 0x12000, scoped, tag = 'internal scratch']
  %s0 = inlined_call_operand.vmem [shape: f32[96,128], index: 0, kind: input, shape index: {}]
  %s1 = inlined_call_operand.vmem [shape: f32[1,128], index: 1, kind: input, shape index: {}]
  %s2 = inlined_call_operand.vmem [shape: f32[96,128], index: 2, kind: output, shape index: {}]
  %s3 = sld [smem:[#allocation0]]
  $region18: #{generator_forward.21} parent=0
    _
  %s5 = ssub.s32 1, %s3
  %s6 = scalar_select 0, %s5, %s3
  // Predicated region
  $region2: #{generator_forward.21} parent=0 // pred_check
    _
  $region3: #{generator_forward.21} parent=0 // pred_check_branch
    %8 = sbr.rel (0) target = $region5
  $region4: #{generator_forward.21} parent=0 // pred_region
    _
  $region5: #{generator_forward.21} parent=0 // pred_fallthru
    _
  // Predicated region
  $region6: #{generator_forward.21} parent=0 // pred_check
    _
  $region7: #{generator_forward.21} parent=0 // pred_check_branch
    %10 = sbr.rel (0) target = $region9
  $region8: #{generator_forward.21} parent=0 // pred_region
    _
  $region9: #{generator_forward.21} parent=0 // pred_fallthru
    _
  %v11 = vld [vmem:[%s0] sm:$0xff]
  %v12 = vld [vmem:[%s0 + $0x8] sm:$0xff]
  %v13 = vld [vmem:[%s0 + $0x10] sm:$0xff]
  %v14 = vld [vmem:[%s0 + $0x18] sm:$0xff]
  %v15 = vld [vmem:[%s0 + $0x20] sm:$0xff]
  %v16 = vld [vmem:[%s0 + $0x28] sm:$0xff]
  %v17 = vld [vmem:[%s0 + $0x30] sm:$0xff]
  %v18 = vld [vmem:[%s0 + $0x38] sm:$0xff]
  %v19 = vld [vmem:[%s0 + $0x40] sm:$0xff]
  %v20 = vld [vmem:[%s0 + $0x48] sm:$0xff]
  %v21 = vld [vmem:[%s0 + $0x50] sm:$0xff]
  %v22 = vld [vmem:[%s0 + $0x58] sm:$0xff]
  %v23 = vld [vmem:[%s1] sm:$0x1]
  %v25 = vlaneseq
  %v26 = vshrl.u32 %v25, 7
  %v27 = vsub.s32 0, %v26
  %v28 = vrot.slane %v23, %v27
  %v30 = vadd.f32 %v11, %v28
  %v31 = vadd.f32 %v12, %v28
  %v32 = vadd.f32 %v13, %v28
  %v33 = vadd.f32 %v14, %v28
  %v34 = vadd.f32 %v15, %v28
  %v35 = vadd.f32 %v16, %v28
  %v36 = vadd.f32 %v17, %v28
  %v37 = vadd.f32 %v18, %v28
  %v38 = vadd.f32 %v19, %v28
  %v39 = vadd.f32 %v20, %v28
  %v40 = vadd.f32 %v21, %v28
  %v41 = vadd.f32 %v22, %v28
  %v42 = vmax.f32 %v30, 0.0
  %v43 = vmax.f32 %v31, 0.0
  %v44 = vmax.f32 %v32, 0.0
  %v45 = vmax.f32 %v33, 0.0
  %v46 = vmax.f32 %v34, 0.0
  %v47 = vmax.f32 %v35, 0.0
  %v48 = vmax.f32 %v36, 0.0
  %v49 = vmax.f32 %v37, 0.0
  %v50 = vmax.f32 %v38, 0.0
  %v51 = vmax.f32 %v39, 0.0
  %v52 = vmax.f32 %v40, 0.0
  %v53 = vmax.f32 %v41, 0.0
  %54 = vst [vmem:[%s2] sm:$0xff] %v42
  %55 = vst [vmem:[%s2 + $0x8] sm:$0xff] %v43
  %56 = vst [vmem:[%s2 + $0x10] sm:$0xff] %v44
  %57 = vst [vmem:[%s2 + $0x18] sm:$0xff] %v45
  %58 = vst [vmem:[%s2 + $0x20] sm:$0xff] %v46
  %59 = vst [vmem:[%s2 + $0x28] sm:$0xff] %v47
  %60 = vst [vmem:[%s2 + $0x30] sm:$0xff] %v48
  %61 = vst [vmem:[%s2 + $0x38] sm:$0xff] %v49
  %62 = vst [vmem:[%s2 + $0x40] sm:$0xff] %v50
  %63 = vst [vmem:[%s2 + $0x48] sm:$0xff] %v51
  %64 = vst [vmem:[%s2 + $0x50] sm:$0xff] %v52
  %65 = vst [vmem:[%s2 + $0x58] sm:$0xff] %v53
  // Predicated region
  $region10: #{generator_forward.21} parent=0 // pred_check
    _
  $region11: #{generator_forward.21} parent=0 // pred_check_branch
    %67 = sbr.rel (0) target = $region13
  $region12: #{generator_forward.21} parent=0 // pred_region
    _
  $region13: #{generator_forward.21} parent=0 // pred_fallthru
    _
  // Predicated region
  $region14: #{generator_forward.21} parent=0 // pred_check
    _
  $region15: #{generator_forward.21} parent=0 // pred_check_branch
    %69 = sbr.rel (0) target = $region17
  $region16: #{generator_forward.21} parent=0 // pred_region
    _
  $region17: #{generator_forward.21} parent=0 // pred_fallthru
    _

// kernel: generator_forward.22
$region0: #{generator_forward.22}
  #allocation0 [shape = 'u32[]', space=smem, size = 0x4, offset = 0x4, fixed_abs, tag = 'smem constant byte address 0x4 - core index']
  #allocation1 [shape = 'u32[144,128]{1,0:T(1,128)}', space=vmem, size = 0x12000, scoped, tag = 'internal scratch']
  %s0 = inlined_call_operand.vmem [shape: bf16[2048,8], index: 0, kind: input, shape index: {}]
  %s1 = inlined_call_operand.vmem [shape: bf16[8,128], index: 1, kind: input, shape index: {}]
  %s2 = inlined_call_operand.vmem [shape: f32[1,128], index: 2, kind: input, shape index: {}]
  %s3 = inlined_call_operand.vmem [shape: f32[2048,128], index: 3, kind: output, shape index: {}]
  %s4 = sld [smem:[#allocation0]]
  $region45: #{generator_forward.22} parent=0
    _
  %s6 = ssub.s32 1, %s4
  %s7 = scalar_select 0, %s6, %s4
  loop: start=0, step=1, limit=4
  $region2: #{generator_forward.22} parent=0 // loop_pre_header
    _
  $region3: #{generator_forward.22} parent=0 // loop_header
    %s9 = sphi 0, %s13
    %p10 = scmp.ge.s32.totalorder %s9, 4
    %s19 = sphi 0, %s21
    %s22 = sphi 0, %s19
    %s23 = sphi 0, %s22
    %s39 = sphi 0, %s23
    %s43 = sphi 0, %s43
    %s45 = sphi 0, %s43
    %s46 = sphi 0, %s45
    %s60 = sphi 0, %s46
    %s64 = sphi 0, %s64
    %s66 = sphi 0, %s64
    %s67 = sphi 0, %s66
    %s81 = sphi 0, %s67
    %s87 = sphi 0, %s89
    %s90 = sphi 0, %s87
    %s91 = sphi 0, %s90
    %s107 = sphi 0, %s91
  $region4: #{generator_forward.22} parent=0 // loop_header_branch
    %12 = sbr.rel (%p10) target = $region8
  $region5: #{generator_forward.22} parent=0 // loop_body
    %s14 = ssub.s32 %s9, 1
    %s15 = ssub.s32 %s9, 2
    %s16 = sadd.s32 %s9, 1
    %s17 = ssub.s32 %s9, %s16
    %p18 = scmp.eq.s32.totalorder %s17, 0
    %s20 = sadd.s32 %s19, 1
    %s21 = scalar_select %p18, %s19, %s20
    %p24 = pneg %p18
    %p25 = scmp.eq.s32.totalorder %s9, 1
    %p26 = por %p24, %p25
    %p27 = scmp.ne.s32.totalorder %s19, %s22
    %p28 = scmp.eq.s32.totalorder %s9, 0
    %p29 = por %p27, %p28
    %p30 = scmp.ne.s32.totalorder %s19, %s22
    %p31 = scmp.eq.s32.totalorder %s14, 1
    %p32 = por %p30, %p31
    %p33 = scmp.ne.s32.totalorder %s22, %s23
    %p34 = scmp.eq.s32.totalorder %s14, 0
    %p35 = por %p33, %p34
    %p36 = scmp.ne.s32.totalorder %s22, %s23
    %p37 = scmp.eq.s32.totalorder %s15, 1
    %p38 = por %p36, %p37
    %p40 = scmp.ne.s32.totalorder %s23, %s39
    %p41 = scmp.eq.s32.totalorder %s15, 0
    %p42 = por %p40, %p41
    %s44 = sadd.s32 %s43, 1
    %p47 = scmp.eq.s32.totalorder %s9, 1
    %p48 = scmp.ne.s32.totalorder %s43, %s45
    %p49 = scmp.eq.s32.totalorder %s9, 0
    %p50 = por %p48, %p49
    %p51 = scmp.ne.s32.totalorder %s43, %s45
    %p52 = scmp.eq.s32.totalorder %s14, 1
    %p53 = por %p51, %p52
    %p54 = scmp.ne.s32.totalorder %s45, %s46
    %p55 = scmp.eq.s32.totalorder %s14, 0
    %p56 = por %p54, %p55
    %p57 = scmp.ne.s32.totalorder %s45, %s46
    %p58 = scmp.eq.s32.totalorder %s15, 1
    %p59 = por %p57, %p58
    %p61 = scmp.ne.s32.totalorder %s46, %s60
    %p62 = scmp.eq.s32.totalorder %s15, 0
    %p63 = por %p61, %p62
    %s65 = sadd.s32 %s64, 1
    %p68 = scmp.eq.s32.totalorder %s9, 1
    %p69 = scmp.ne.s32.totalorder %s64, %s66
    %p70 = scmp.eq.s32.totalorder %s9, 0
    %p71 = por %p69, %p70
    %p72 = scmp.ne.s32.totalorder %s64, %s66
    %p73 = scmp.eq.s32.totalorder %s14, 1
    %p74 = por %p72, %p73
    %p75 = scmp.ne.s32.totalorder %s66, %s67
    %p76 = scmp.eq.s32.totalorder %s14, 0
    %p77 = por %p75, %p76
    %p78 = scmp.ne.s32.totalorder %s66, %s67
    %p79 = scmp.eq.s32.totalorder %s15, 1
    %p80 = por %p78, %p79
    %p82 = scmp.ne.s32.totalorder %s67, %s81
    %p83 = scmp.eq.s32.totalorder %s15, 0
    %p84 = por %p82, %p83
    %s85 = ssub.s32 %s9, %s16
    %p86 = scmp.eq.s32.totalorder %s85, 0
    %s88 = sadd.s32 %s87, 1
    %s89 = scalar_select %p86, %s87, %s88
    %p92 = pneg %p86
    %p93 = scmp.eq.s32.totalorder %s9, 1
    %p94 = por %p92, %p93
    %p95 = scmp.ne.s32.totalorder %s87, %s90
    %p96 = scmp.eq.s32.totalorder %s9, 0
    %p97 = por %p95, %p96
    %p98 = scmp.ne.s32.totalorder %s87, %s90
    %p99 = scmp.eq.s32.totalorder %s14, 1
    %p100 = por %p98, %p99
    %p101 = scmp.ne.s32.totalorder %s90, %s91
    %p102 = scmp.eq.s32.totalorder %s14, 0
    %p103 = por %p101, %p102
    %p104 = scmp.ne.s32.totalorder %s90, %s91
    %p105 = scmp.eq.s32.totalorder %s15, 1
    %p106 = por %p104, %p105
    %p108 = scmp.ne.s32.totalorder %s91, %s107
    %p109 = scmp.eq.s32.totalorder %s15, 0
    %p110 = por %p108, %p109
    %p111 = scmp.le.s32.totalorder 1, %s9
    %p112 = scmp.lt.s32.totalorder %s9, 3
    %p113 = pnand %p111, %p112
    %p114 = pneg %p113
    // Predicated region
    $region9: #{generator_forward.22} parent=5 // pred_check
      _
    $region10: #{generator_forward.22} parent=5 // pred_check_branch
      %116 = sbr.rel (%p113) target = $region12
    $region11: #{generator_forward.22} parent=5 // pred_region
      %s117 = ssub.s32 %s9, 1
      // Predicated region
      $region13: #{generator_forward.22} parent=11 // pred_check
        %p118 = pneg %p56
      $region14: #{generator_forward.22} parent=11 // pred_check_branch
        %120 = sbr.rel (%p118) target = $region16
      $region15: #{generator_forward.22} parent=11 // pred_region
        _
      $region16: #{generator_forward.22} parent=11 // pred_fallthru
        _
      // Predicated region
      $region17: #{generator_forward.22} parent=11 // pred_check
        %p121 = pneg %p77
      $region18: #{generator_forward.22} parent=11 // pred_check_branch
        %123 = sbr.rel (%p121) target = $region20
      $region19: #{generator_forward.22} parent=11 // pred_region
        _
      $region20: #{generator_forward.22} parent=11 // pred_fallthru
        _
    $region12: #{generator_forward.22} parent=5 // pred_fallthru
      _
    %p124 = scmp.lt.s32.totalorder %s9, 2
    // Predicated region
    $region21: #{generator_forward.22} parent=5 // pred_check
      %p125 = pneg %p124
    $region22: #{generator_forward.22} parent=5 // pred_check_branch
      %127 = sbr.rel (%p125) target = $region24
    $region23: #{generator_forward.22} parent=5 // pred_region
      // Predicated region
      $region25: #{generator_forward.22} parent=23 // pred_check
        %p128 = pneg %p29
      $region26: #{generator_forward.22} parent=23 // pred_check_branch
        %130 = sbr.rel (%p128) target = $region28
      $region27: #{generator_forward.22} parent=23 // pred_region
        %s131 = smul.u32 128, %s9
        %p132 = scmp.lt.s32.totalorder %s131, 255
        %s133 = scalar_select %p132, %s131, 255
        %s134 = smul.addr %s133, 4
        %s135 = scalar_lea.vmem %s0, %s134
        %s136 = smul.u32 128, %s9
      $region28: #{generator_forward.22} parent=23 // pred_fallthru
        _
    $region24: #{generator_forward.22} parent=5 // pred_fallthru
      _
    %p137 = scmp.le.s32.totalorder 1, %s9
    %p138 = scmp.lt.s32.totalorder %s9, 3
    %p139 = pnand %p137, %p138
    %p140 = pneg %p139
    // Predicated region
    $region29: #{generator_forward.22} parent=5 // pred_check
      _
    $region30: #{generator_forward.22} parent=5 // pred_check_branch
      %142 = sbr.rel (%p139) target = $region32
    $region31: #{generator_forward.22} parent=5 // pred_region
      %s143 = ssub.s32 %s9, 1
      %s144 = smul.u32 128, %s14
      %p145 = scmp.lt.s32.totalorder %s144, 255
      %s146 = scalar_select %p145, %s144, 255
      %s147 = smul.addr %s146, 4
      %s148 = scalar_lea.vmem %s0, %s147
      %p149 = pneg %p35
      %p150 = pneg %p32
      %p151 = pneg %p56
      %p152 = pneg %p53
      %p153 = pneg %p77
      %p154 = pneg %p74
      %p155 = pneg %p103
      %p156 = pneg %p100
      %s157 = smul.u32 128, %s14
      %p158 = scmp.lt.s32.totalorder %s157, 255
      %s159 = scalar_select %p158, %s157, 255
      %s160 = smul.addr %s159, 8
      %s161 = scalar_lea.vmem %s3, %s160
      %s162 = smul.u32 128, %s14
      %p163 = scmp.lt.s32.totalorder %s162, 255
      %s164 = scalar_select %p163, %s162, 255
      %s165 = smul.addr %s164, 4
      %s166 = scalar_lea.vmem %s0, %s165
      %s167 = smul.u32 128, %s14
      %s168 = smul.u32 128, %s14
      %p169 = scmp.lt.s32.totalorder %s168, 255
      %s170 = scalar_select %p169, %s168, 255
      %s171 = smul.addr %s170, 8
      %s172 = scalar_lea.vmem %s3, %s171
      %s173 = smul.u32 128, %s14
      %v175 = vld [vmem:[%s166] sm:$0xf]
      %v176 = vld [vmem:[%s166 + $0x4] sm:$0xf]
      %v177 = vld [vmem:[%s166 + $0x8] sm:$0xf]
      %v178 = vld [vmem:[%s166 + $0xc] sm:$0xf]
      %v179 = vld [vmem:[%s166 + $0x10] sm:$0xf]
      %v180 = vld [vmem:[%s166 + $0x14] sm:$0xf]
      %v181 = vld [vmem:[%s166 + $0x18] sm:$0xf]
      %v182 = vld [vmem:[%s166 + $0x1c] sm:$0xf]
      %v183 = vld [vmem:[%s166 + $0x20] sm:$0xf]
      %v184 = vld [vmem:[%s166 + $0x24] sm:$0xf]
      %v185 = vld [vmem:[%s166 + $0x28] sm:$0xf]
      %v186 = vld [vmem:[%s166 + $0x2c] sm:$0xf]
      %v187 = vld [vmem:[%s166 + $0x30] sm:$0xf]
      %v188 = vld [vmem:[%s166 + $0x34] sm:$0xf]
      %v189 = vld [vmem:[%s166 + $0x38] sm:$0xf]
      %v190 = vld [vmem:[%s166 + $0x3c] sm:$0xf]
      %v191 = vld [vmem:[%s166 + $0x40] sm:$0xf]
      %v192 = vld [vmem:[%s166 + $0x44] sm:$0xf]
      %v193 = vld [vmem:[%s166 + $0x48] sm:$0xf]
      %v194 = vld [vmem:[%s166 + $0x4c] sm:$0xf]
      %v195 = vld [vmem:[%s166 + $0x50] sm:$0xf]
      %v196 = vld [vmem:[%s166 + $0x54] sm:$0xf]
      %v197 = vld [vmem:[%s166 + $0x58] sm:$0xf]
      %v198 = vld [vmem:[%s166 + $0x5c] sm:$0xf]
      %v199 = vld [vmem:[%s166 + $0x60] sm:$0xf]
      %v200 = vld [vmem:[%s166 + $0x64] sm:$0xf]
      %v201 = vld [vmem:[%s166 + $0x68] sm:$0xf]
      %v202 = vld [vmem:[%s166 + $0x6c] sm:$0xf]
      %v203 = vld [vmem:[%s166 + $0x70] sm:$0xf]
      %v204 = vld [vmem:[%s166 + $0x74] sm:$0xf]
      %v205 = vld [vmem:[%s166 + $0x78] sm:$0xf]
      %v206 = vld [vmem:[%s166 + $0x7c] sm:$0xf]
      %v207 = vld [vmem:[%s166 + $0x80] sm:$0xf]
      %v208 = vld [vmem:[%s166 + $0x84] sm:$0xf]
      %v209 = vld [vmem:[%s166 + $0x88] sm:$0xf]
      %v210 = vld [vmem:[%s166 + $0x8c] sm:$0xf]
      %v211 = vld [vmem:[%s166 + $0x90] sm:$0xf]
      %v212 = vld [vmem:[%s166 + $0x94] sm:$0xf]
      %v213 = vld [vmem:[%s166 + $0x98] sm:$0xf]
      %v214 = vld [vmem:[%s166 + $0x9c] sm:$0xf]
      %v215 = vld [vmem:[%s166 + $0xa0] sm:$0xf]
      %v216 = vld [vmem:[%s166 + $0xa4] sm:$0xf]
      %v217 = vld [vmem:[%s166 + $0xa8] sm:$0xf]
      %v218 = vld [vmem:[%s166 + $0xac] sm:$0xf]
      %v219 = vld [vmem:[%s166 + $0xb0] sm:$0xf]
      %v220 = vld [vmem:[%s166 + $0xb4] sm:$0xf]
      %v221 = vld [vmem:[%s166 + $0xb8] sm:$0xf]
      %v222 = vld [vmem:[%s166 + $0xbc] sm:$0xf]
      %v223 = vld [vmem:[%s166 + $0xc0] sm:$0xf]
      %v224 = vld [vmem:[%s166 + $0xc4] sm:$0xf]
      %v225 = vld [vmem:[%s166 + $0xc8] sm:$0xf]
      %v226 = vld [vmem:[%s166 + $0xcc] sm:$0xf]
      %v227 = vld [vmem:[%s166 + $0xd0] sm:$0xf]
      %v228 = vld [vmem:[%s166 + $0xd4] sm:$0xf]
      %v229 = vld [vmem:[%s166 + $0xd8] sm:$0xf]
      %v230 = vld [vmem:[%s166 + $0xdc] sm:$0xf]
      %v231 = vld [vmem:[%s166 + $0xe0] sm:$0xf]
      %v232 = vld [vmem:[%s166 + $0xe4] sm:$0xf]
      %v233 = vld [vmem:[%s166 + $0xe8] sm:$0xf]
      %v234 = vld [vmem:[%s166 + $0xec] sm:$0xf]
      %v235 = vld [vmem:[%s166 + $0xf0] sm:$0xf]
      %v236 = vld [vmem:[%s166 + $0xf4] sm:$0xf]
      %v237 = vld [vmem:[%s166 + $0xf8] sm:$0xf]
      %v238 = vld [vmem:[%s166 + $0xfc] sm:$0xf]
      %v239 = vld [vmem:[%s166 + $0x100] sm:$0xf]
      %v240 = vld [vmem:[%s166 + $0x104] sm:$0xf]
      %v241 = vld [vmem:[%s166 + $0x108] sm:$0xf]
      %v242 = vld [vmem:[%s166 + $0x10c] sm:$0xf]
      %v243 = vld [vmem:[%s166 + $0x110] sm:$0xf]
      %v244 = vld [vmem:[%s166 + $0x114] sm:$0xf]
      %v245 = vld [vmem:[%s166 + $0x118] sm:$0xf]
      %v246 = vld [vmem:[%s166 + $0x11c] sm:$0xf]
      %v247 = vld [vmem:[%s166 + $0x120] sm:$0xf]
      %v248 = vld [vmem:[%s166 + $0x124] sm:$0xf]
      %v249 = vld [vmem:[%s166 + $0x128] sm:$0xf]
      %v250 = vld [vmem:[%s166 + $0x12c] sm:$0xf]
      %v251 = vld [vmem:[%s166 + $0x130] sm:$0xf]
      %v252 = vld [vmem:[%s166 + $0x134] sm:$0xf]
      %v253 = vld [vmem:[%s166 + $0x138] sm:$0xf]
      %v254 = vld [vmem:[%s166 + $0x13c] sm:$0xf]
      %v255 = vld [vmem:[%s166 + $0x140] sm:$0xf]
      %v256 = vld [vmem:[%s166 + $0x144] sm:$0xf]
      %v257 = vld [vmem:[%s166 + $0x148] sm:$0xf]
      %v258 = vld [vmem:[%s166 + $0x14c] sm:$0xf]
      %v259 = vld [vmem:[%s166 + $0x150] sm:$0xf]
      %v260 = vld [vmem:[%s166 + $0x154] sm:$0xf]
      %v261 = vld [vmem:[%s166 + $0x158] sm:$0xf]
      %v262 = vld [vmem:[%s166 + $0x15c] sm:$0xf]
      %v263 = vld [vmem:[%s166 + $0x160] sm:$0xf]
      %v264 = vld [vmem:[%s166 + $0x164] sm:$0xf]
      %v265 = vld [vmem:[%s166 + $0x168] sm:$0xf]
      %v266 = vld [vmem:[%s166 + $0x16c] sm:$0xf]
      %v267 = vld [vmem:[%s166 + $0x170] sm:$0xf]
      %v268 = vld [vmem:[%s166 + $0x174] sm:$0xf]
      %v269 = vld [vmem:[%s166 + $0x178] sm:$0xf]
      %v270 = vld [vmem:[%s166 + $0x17c] sm:$0xf]
      %v271 = vld [vmem:[%s166 + $0x180] sm:$0xf]
      %v272 = vld [vmem:[%s166 + $0x184] sm:$0xf]
      %v273 = vld [vmem:[%s166 + $0x188] sm:$0xf]
      %v274 = vld [vmem:[%s166 + $0x18c] sm:$0xf]
      %v275 = vld [vmem:[%s166 + $0x190] sm:$0xf]
      %v276 = vld [vmem:[%s166 + $0x194] sm:$0xf]
      %v277 = vld [vmem:[%s166 + $0x198] sm:$0xf]
      %v278 = vld [vmem:[%s166 + $0x19c] sm:$0xf]
      %v279 = vld [vmem:[%s166 + $0x1a0] sm:$0xf]
      %v280 = vld [vmem:[%s166 + $0x1a4] sm:$0xf]
      %v281 = vld [vmem:[%s166 + $0x1a8] sm:$0xf]
      %v282 = vld [vmem:[%s166 + $0x1ac] sm:$0xf]
      %v283 = vld [vmem:[%s166 + $0x1b0] sm:$0xf]
      %v284 = vld [vmem:[%s166 + $0x1b4] sm:$0xf]
      %v285 = vld [vmem:[%s166 + $0x1b8] sm:$0xf]
      %v286 = vld [vmem:[%s166 + $0x1bc] sm:$0xf]
      %v287 = vld [vmem:[%s166 + $0x1c0] sm:$0xf]
      %v288 = vld [vmem:[%s166 + $0x1c4] sm:$0xf]
      %v289 = vld [vmem:[%s166 + $0x1c8] sm:$0xf]
      %v290 = vld [vmem:[%s166 + $0x1cc] sm:$0xf]
      %v291 = vld [vmem:[%s166 + $0x1d0] sm:$0xf]
      %v292 = vld [vmem:[%s166 + $0x1d4] sm:$0xf]
      %v293 = vld [vmem:[%s166 + $0x1d8] sm:$0xf]
      %v294 = vld [vmem:[%s166 + $0x1dc] sm:$0xf]
      %v295 = vld [vmem:[%s166 + $0x1e0] sm:$0xf]
      %v296 = vld [vmem:[%s166 + $0x1e4] sm:$0xf]
      %v297 = vld [vmem:[%s166 + $0x1e8] sm:$0xf]
      %v298 = vld [vmem:[%s166 + $0x1ec] sm:$0xf]
      %v299 = vld [vmem:[%s166 + $0x1f0] sm:$0xf]
      %v300 = vld [vmem:[%s166 + $0x1f4] sm:$0xf]
      %v301 = vld [vmem:[%s166 + $0x1f8] sm:$0xf]
      %v302 = vld [vmem:[%s166 + $0x1fc] sm:$0xf]
      %v303 = vld [vmem:[%s1] sm:$0xf]
      %v304 = vld [vmem:[%s2] sm:$0x1]
      %v306 = vlaneseq
      %v307 = vshrl.u32 %v306, 7
      %v308 = vsub.s32 0, %v307
      %v309 = vrot.slane %v304, %v308
      %v439 = vunpack.c.l.b16 %v175
      %v440 = vunpack.c.l.b16 %v176
      %v441 = vunpack.c.l.b16 %v177
      %v442 = vunpack.c.l.b16 %v178
      %v443 = vunpack.c.l.b16 %v179
      %v444 = vunpack.c.l.b16 %v180
      %v445 = vunpack.c.l.b16 %v181
      %v446 = vunpack.c.l.b16 %v182
      %v447 = vunpack.c.l.b16 %v183
      %v448 = vunpack.c.l.b16 %v184
      %v449 = vunpack.c.l.b16 %v185
      %v450 = vunpack.c.l.b16 %v186
      %v451 = vunpack.c.l.b16 %v187
      %v452 = vunpack.c.l.b16 %v188
      %v453 = vunpack.c.l.b16 %v189
      %v454 = vunpack.c.l.b16 %v190
      %v455 = vunpack.c.l.b16 %v191
      %v456 = vunpack.c.l.b16 %v192
      %v457 = vunpack.c.l.b16 %v193
      %v458 = vunpack.c.l.b16 %v194
      %v459 = vunpack.c.l.b16 %v195
      %v460 = vunpack.c.l.b16 %v196
      %v461 = vunpack.c.l.b16 %v197
      %v462 = vunpack.c.l.b16 %v198
      %v463 = vunpack.c.l.b16 %v199
      %v464 = vunpack.c.l.b16 %v200
      %v465 = vunpack.c.l.b16 %v201
      %v466 = vunpack.c.l.b16 %v202
      %v467 = vunpack.c.l.b16 %v203
      %v468 = vunpack.c.l.b16 %v204
      %v469 = vunpack.c.l.b16 %v205
      %v470 = vunpack.c.l.b16 %v206
      %v471 = vunpack.c.l.b16 %v207
      %v472 = vunpack.c.l.b16 %v208
      %v473 = vunpack.c.l.b16 %v209
      %v474 = vunpack.c.l.b16 %v210
      %v475 = vunpack.c.l.b16 %v211
      %v476 = vunpack.c.l.b16 %v212
      %v477 = vunpack.c.l.b16 %v213
      %v478 = vunpack.c.l.b16 %v214
      %v479 = vunpack.c.l.b16 %v215
      %v480 = vunpack.c.l.b16 %v216
      %v481 = vunpack.c.l.b16 %v217
      %v482 = vunpack.c.l.b16 %v218
      %v483 = vunpack.c.l.b16 %v219
      %v484 = vunpack.c.l.b16 %v220
      %v485 = vunpack.c.l.b16 %v221
      %v486 = vunpack.c.l.b16 %v222
      %v487 = vunpack.c.l.b16 %v223
      %v488 = vunpack.c.l.b16 %v224
      %v489 = vunpack.c.l.b16 %v225
      %v490 = vunpack.c.l.b16 %v226
      %v491 = vunpack.c.l.b16 %v227
      %v492 = vunpack.c.l.b16 %v228
      %v493 = vunpack.c.l.b16 %v229
      %v494 = vunpack.c.l.b16 %v230
      %v495 = vunpack.c.l.b16 %v231
      %v496 = vunpack.c.l.b16 %v232
      %v497 = vunpack.c.l.b16 %v233
      %v498 = vunpack.c.l.b16 %v234
      %v499 = vunpack.c.l.b16 %v235
      %v500 = vunpack.c.l.b16 %v236
      %v501 = vunpack.c.l.b16 %v237
      %v502 = vunpack.c.l.b16 %v238
      %v503 = vunpack.c.l.b16 %v239
      %v504 = vunpack.c.l.b16 %v240
      %v505 = vunpack.c.l.b16 %v241
      %v506 = vunpack.c.l.b16 %v242
      %v507 = vunpack.c.l.b16 %v243
      %v508 = vunpack.c.l.b16 %v244
      %v509 = vunpack.c.l.b16 %v245
      %v510 = vunpack.c.l.b16 %v246
      %v511 = vunpack.c.l.b16 %v247
      %v512 = vunpack.c.l.b16 %v248
      %v513 = vunpack.c.l.b16 %v249
      %v514 = vunpack.c.l.b16 %v250
      %v515 = vunpack.c.l.b16 %v251
      %v516 = vunpack.c.l.b16 %v252
      %v517 = vunpack.c.l.b16 %v253
      %v518 = vunpack.c.l.b16 %v254
      %v519 = vunpack.c.l.b16 %v255
      %v520 = vunpack.c.l.b16 %v256
      %v521 = vunpack.c.l.b16 %v257
      %v522 = vunpack.c.l.b16 %v258
      %v523 = vunpack.c.l.b16 %v259
      %v524 = vunpack.c.l.b16 %v260
      %v525 = vunpack.c.l.b16 %v261
      %v526 = vunpack.c.l.b16 %v262
      %v527 = vunpack.c.l.b16 %v263
      %v528 = vunpack.c.l.b16 %v264
      %v529 = vunpack.c.l.b16 %v265
      %v530 = vunpack.c.l.b16 %v266
      %v531 = vunpack.c.l.b16 %v267
      %v532 = vunpack.c.l.b16 %v268
      %v533 = vunpack.c.l.b16 %v269
      %v534 = vunpack.c.l.b16 %v270
      %v535 = vunpack.c.l.b16 %v271
      %v536 = vunpack.c.l.b16 %v272
      %v537 = vunpack.c.l.b16 %v273
      %v538 = vunpack.c.l.b16 %v274
      %v539 = vunpack.c.l.b16 %v275
      %v540 = vunpack.c.l.b16 %v276
      %v541 = vunpack.c.l.b16 %v277
      %v542 = vunpack.c.l.b16 %v278
      %v543 = vunpack.c.l.b16 %v279
      %v544 = vunpack.c.l.b16 %v280
      %v545 = vunpack.c.l.b16 %v281
      %v546 = vunpack.c.l.b16 %v282
      %v547 = vunpack.c.l.b16 %v283
      %v548 = vunpack.c.l.b16 %v284
      %v549 = vunpack.c.l.b16 %v285
      %v550 = vunpack.c.l.b16 %v286
      %v551 = vunpack.c.l.b16 %v287
      %v552 = vunpack.c.l.b16 %v288
      %v553 = vunpack.c.l.b16 %v289
      %v554 = vunpack.c.l.b16 %v290
      %v555 = vunpack.c.l.b16 %v291
      %v556 = vunpack.c.l.b16 %v292
      %v557 = vunpack.c.l.b16 %v293
      %v558 = vunpack.c.l.b16 %v294
      %v559 = vunpack.c.l.b16 %v295
      %v560 = vunpack.c.l.b16 %v296
      %v561 = vunpack.c.l.b16 %v297
      %v562 = vunpack.c.l.b16 %v298
      %v563 = vunpack.c.l.b16 %v299
      %v564 = vunpack.c.l.b16 %v300
      %v565 = vunpack.c.l.b16 %v301
      %v566 = vunpack.c.l.b16 %v302
      %v567 = vpack.c.b16 %v440, %v439
      %v568 = vpack.c.b16 %v442, %v441
      %v569 = vpack.c.b16 %v444, %v443
      %v570 = vpack.c.b16 %v446, %v445
      %v571 = vpack.c.b16 %v448, %v447
      %v572 = vpack.c.b16 %v450, %v449
      %v573 = vpack.c.b16 %v452, %v451
      %v574 = vpack.c.b16 %v454, %v453
      %v575 = vpack.c.b16 %v456, %v455
      %v576 = vpack.c.b16 %v458, %v457
      %v577 = vpack.c.b16 %v460, %v459
      %v578 = vpack.c.b16 %v462, %v461
      %v579 = vpack.c.b16 %v464, %v463
      %v580 = vpack.c.b16 %v466, %v465
      %v581 = vpack.c.b16 %v468, %v467
      %v582 = vpack.c.b16 %v470, %v469
      %v583 = vpack.c.b16 %v472, %v471
      %v584 = vpack.c.b16 %v474, %v473
      %v585 = vpack.c.b16 %v476, %v475
      %v586 = vpack.c.b16 %v478, %v477
      %v587 = vpack.c.b16 %v480, %v479
      %v588 = vpack.c.b16 %v482, %v481
      %v589 = vpack.c.b16 %v484, %v483
      %v590 = vpack.c.b16 %v486, %v485
      %v591 = vpack.c.b16 %v488, %v487
      %v592 = vpack.c.b16 %v490, %v489
      %v593 = vpack.c.b16 %v492, %v491
      %v594 = vpack.c.b16 %v494, %v493
      %v595 = vpack.c.b16 %v496, %v495
      %v596 = vpack.c.b16 %v498, %v497
      %v597 = vpack.c.b16 %v500, %v499
      %v598 = vpack.c.b16 %v502, %v501
      %v599 = vpack.c.b16 %v504, %v503
      %v600 = vpack.c.b16 %v506, %v505
      %v601 = vpack.c.b16 %v508, %v507
      %v602 = vpack.c.b16 %v510, %v509
      %v603 = vpack.c.b16 %v512, %v511
      %v604 = vpack.c.b16 %v514, %v513
      %v605 = vpack.c.b16 %v516, %v515
      %v606 = vpack.c.b16 %v518, %v517
      %v607 = vpack.c.b16 %v520, %v519
      %v608 = vpack.c.b16 %v522, %v521
      %v609 = vpack.c.b16 %v524, %v523
      %v610 = vpack.c.b16 %v526, %v525
      %v611 = vpack.c.b16 %v528, %v527
      %v612 = vpack.c.b16 %v530, %v529
      %v613 = vpack.c.b16 %v532, %v531
      %v614 = vpack.c.b16 %v534, %v533
      %v615 = vpack.c.b16 %v536, %v535
      %v616 = vpack.c.b16 %v538, %v537
      %v617 = vpack.c.b16 %v540, %v539
      %v618 = vpack.c.b16 %v542, %v541
      %v619 = vpack.c.b16 %v544, %v543
      %v620 = vpack.c.b16 %v546, %v545
      %v621 = vpack.c.b16 %v548, %v547
      %v622 = vpack.c.b16 %v550, %v549
      %v623 = vpack.c.b16 %v552, %v551
      %v624 = vpack.c.b16 %v554, %v553
      %v625 = vpack.c.b16 %v556, %v555
      %v626 = vpack.c.b16 %v558, %v557
      %v627 = vpack.c.b16 %v560, %v559
      %v628 = vpack.c.b16 %v562, %v561
      %v629 = vpack.c.b16 %v564, %v563
      %v630 = vpack.c.b16 %v566, %v565
      %vm631 = vcmask 64512
      %v633 = vsel %vm631, %v567, 0
      %v636 = vsel %vm631, %v568, 0
      %v639 = vsel %vm631, %v569, 0
      %v642 = vsel %vm631, %v570, 0
      %v645 = vsel %vm631, %v571, 0
      %v648 = vsel %vm631, %v572, 0
      %v651 = vsel %vm631, %v573, 0
      %v654 = vsel %vm631, %v574, 0
      %v657 = vsel %vm631, %v575, 0
      %v660 = vsel %vm631, %v576, 0
      %v663 = vsel %vm631, %v577, 0
      %v666 = vsel %vm631, %v578, 0
      %v669 = vsel %vm631, %v579, 0
      %v672 = vsel %vm631, %v580, 0
      %v675 = vsel %vm631, %v581, 0
      %v678 = vsel %vm631, %v582, 0
      %v681 = vsel %vm631, %v583, 0
      %v684 = vsel %vm631, %v584, 0
      %v687 = vsel %vm631, %v585, 0
      %v690 = vsel %vm631, %v586, 0
      %v693 = vsel %vm631, %v587, 0
      %v696 = vsel %vm631, %v588, 0
      %v699 = vsel %vm631, %v589, 0
      %v702 = vsel %vm631, %v590, 0
      %v705 = vsel %vm631, %v591, 0
      %v708 = vsel %vm631, %v592, 0
      %v711 = vsel %vm631, %v593, 0
      %v714 = vsel %vm631, %v594, 0
      %v717 = vsel %vm631, %v595, 0
      %v720 = vsel %vm631, %v596, 0
      %v723 = vsel %vm631, %v597, 0
      %v726 = vsel %vm631, %v598, 0
      %v729 = vsel %vm631, %v599, 0
      %v732 = vsel %vm631, %v600, 0
      %v735 = vsel %vm631, %v601, 0
      %v738 = vsel %vm631, %v602, 0
      %v741 = vsel %vm631, %v603, 0
      %v744 = vsel %vm631, %v604, 0
      %v747 = vsel %vm631, %v605, 0
      %v750 = vsel %vm631, %v606, 0
      %v753 = vsel %vm631, %v607, 0
      %v756 = vsel %vm631, %v608, 0
      %v759 = vsel %vm631, %v609, 0
      %v762 = vsel %vm631, %v610, 0
      %v765 = vsel %vm631, %v611, 0
      %v768 = vsel %vm631, %v612, 0
      %v771 = vsel %vm631, %v613, 0
      %v774 = vsel %vm631, %v614, 0
      %v777 = vsel %vm631, %v615, 0
      %v780 = vsel %vm631, %v616, 0
      %v783 = vsel %vm631, %v617, 0
      %v786 = vsel %vm631, %v618, 0
      %v789 = vsel %vm631, %v619, 0
      %v792 = vsel %vm631, %v620, 0
      %v795 = vsel %vm631, %v621, 0
      %v798 = vsel %vm631, %v622, 0
      %v801 = vsel %vm631, %v623, 0
      %v804 = vsel %vm631, %v624, 0
      %v807 = vsel %vm631, %v625, 0
      %v810 = vsel %vm631, %v626, 0
      %v813 = vsel %vm631, %v627, 0
      %v816 = vsel %vm631, %v628, 0
      %v819 = vsel %vm631, %v629, 0
      %v822 = vsel %vm631, %v630, 0
      %vm824 = vcmask 1043456
      %v826 = vsel %vm824, %v303, 0
      %828 = vmatprep.subr.bf16.mxu0 0
      %829 = vmatpush1.bf16.msra.mxu0 %v826
      %830 = vmatprep.subr.bf16.mxu0 0
      %831 = vmatpush1.bf16.msra.mxu0 0
      %832 = vmatprep.subr.bf16.mxu0 0
      %833 = vmatpush1.bf16.msra.mxu0 0
      %834 = vmatprep.subr.bf16.mxu0 0
      %835 = vmatpush1.bf16.msra.mxu0 0
      %836 = vmatprep.subr.bf16.mxu0 0
      %837 = vmatpush1.bf16.msra.mxu0 0
      %838 = vmatprep.subr.bf16.mxu0 0
      %839 = vmatpush1.bf16.msra.mxu0 0
      %840 = vmatprep.subr.bf16.mxu0 0
      %841 = vmatpush1.bf16.msra.mxu0 0
      %842 = vmatprep.subr.bf16.mxu0 0
      %843 = vmatpush1.bf16.msra.mxu0 0
      %844 = vmatprep.subr.bf16.mxu0 0
      %845 = vmatpush1.bf16.msra.mxu0 0
      %846 = vmatprep.subr.bf16.mxu0 0
      %847 = vmatpush1.bf16.msra.mxu0 0
      %848 = vmatprep.subr.bf16.mxu0 0
      %849 = vmatpush1.bf16.msra.mxu0 0
      %850 = vmatprep.subr.bf16.mxu0 0
      %851 = vmatpush1.bf16.msra.mxu0 0
      %852 = vmatprep.subr.bf16.mxu0 0
      %853 = vmatpush1.bf16.msra.mxu0 0
      %854 = vmatprep.subr.bf16.mxu0 0
      %855 = vmatpush1.bf16.msra.mxu0 0
      %856 = vmatprep.subr.bf16.mxu0 0
      %857 = vmatpush1.bf16.msra.mxu0 0
      %858 = vmatprep.subr.bf16.mxu0 0
      %859 = vmatpush1.bf16.msra.mxu0 0
      %860 = vmatprep.mubr.bf16.mxu0 0
      %861 = vmatmul.mubr.bf16.gmra.mrb[0].mxu0 %v633
      %v862 = vpop.f32.mrb[0].mxu0
      %v863 = vadd.f32 %v309, %v862
      %v864 = vpop.f32.mrb[0].mxu0
      %v865 = vpop.f32.mrb[0].mxu0
      %v866 = vadd.f32 %v309, %v865
      %v867 = vpop.f32.mrb[0].mxu0
      %868 = vmatprep.mubr.bf16.mxu0 0
      %869 = vmatmul.mubr.bf16.gmra.mrb[0].mxu0 %v636
      %v870 = vpop.f32.mrb[0].mxu0
      %v871 = vadd.f32 %v309, %v870
      %v872 = vpop.f32.mrb[0].mxu0
      %v873 = vpop.f32.mrb[0].mxu0
      %v874 = vadd.f32 %v309, %v873
      %v875 = vpop.f32.mrb[0].mxu0
      %876 = vmatprep.mubr.bf16.mxu0 0
      %877 = vmatmul.mubr.bf16.gmra.mrb[0].mxu0 %v639
      %v878 = vpop.f32.mrb[0].mxu0
      %v879 = vadd.f32 %v309, %v878
      %v880 = vpop.f32.mrb[0].mxu0
      %v881 = vpop.f32.mrb[0].mxu0
      %v882 = vadd.f32 %v309, %v881
      %v883 = vpop.f32.mrb[0].mxu0
      %884 = vmatprep.mubr.bf16.mxu0 0
      %885 = vmatmul.mubr.bf16.gmra.mrb[0].mxu0 %v642
      %v886 = vpop.f32.mrb[0].mxu0
      %v887 = vadd.f32 %v309, %v886
      %v888 = vpop.f32.mrb[0].mxu0
      %v889 = vpop.f32.mrb[0].mxu0
      %v890 = vadd.f32 %v309, %v889
      %v891 = vpop.f32.mrb[0].mxu0
      %892 = vmatprep.mubr.bf16.mxu0 0
      %893 = vmatmul.mubr.bf16.gmra.mrb[0].mxu0 %v645
      %v894 = vpop.f32.mrb[0].mxu0
      %v895 = vadd.f32 %v309, %v894
      %v896 = vpop.f32.mrb[0].mxu0
      %v897 = vpop.f32.mrb[0].mxu0
      %v898 = vadd.f32 %v309, %v897
      %v899 = vpop.f32.mrb[0].mxu0
      %900 = vmatprep.mubr.bf16.mxu0 0
      %901 = vmatmul.mubr.bf16.gmra.mrb[0].mxu0 %v648
      %v902 = vpop.f32.mrb[0].mxu0
      %v903 = vadd.f32 %v309, %v902
      %v904 = vpop.f32.mrb[0].mxu0
      %v905 = vpop.f32.mrb[0].mxu0
      %v906 = vadd.f32 %v309, %v905
      %v907 = vpop.f32.mrb[0].mxu0
      %908 = vmatprep.mubr.bf16.mxu0 0
      %909 = vmatmul.mubr.bf16.gmra.mrb[0].mxu0 %v651
      %v910 = vpop.f32.mrb[0].mxu0
      %v911 = vadd.f32 %v309, %v910
      %v912 = vpop.f32.mrb[0].mxu0
      %v913 = vpop.f32.mrb[0].mxu0
      %v914 = vadd.f32 %v309, %v913
      %v915 = vpop.f32.mrb[0].mxu0
      %916 = vmatprep.mubr.bf16.mxu0 0
      %917 = vmatmul.mubr.bf16.gmra.mrb[0].mxu0 %v654
      %v918 = vpop.f32.mrb[0].mxu0
      %v919 = vadd.f32 %v309, %v918
      %v920 = vpop.f32.mrb[0].mxu0
      %v921 = vpop.f32.mrb[0].mxu0
      %v922 = vadd.f32 %v309, %v921
      %v923 = vpop.f32.mrb[0].mxu0
      %924 = vmatprep.mubr.bf16.mxu0 0
      %925 = vmatmul.mubr.bf16.gmra.mrb[0].mxu0 %v657
      %v926 = vpop.f32.mrb[0].mxu0
      %v927 = vadd.f32 %v309, %v926
      %v928 = vpop.f32.mrb[0].mxu0
      %v929 = vpop.f32.mrb[0].mxu0
      %v930 = vadd.f32 %v309, %v929
      %v931 = vpop.f32.mrb[0].mxu0
      %932 = vmatprep.mubr.bf16.mxu0 0
      %933 = vmatmul.mubr.bf16.gmra.mrb[0].mxu0 %v660
      %v934 = vpop.f32.mrb[0].mxu0
      %v935 = vadd.f32 %v309, %v934
      %v936 = vpop.f32.mrb[0].mxu0
      %v937 = vpop.f32.mrb[0].mxu0
      %v938 = vadd.f32 %v309, %v937
      %v939 = vpop.f32.mrb[0].mxu0
      %940 = vmatprep.mubr.bf16.mxu0 0
      %941 = vmatmul.mubr.bf16.gmra.mrb[0].mxu0 %v663
      %v942 = vpop.f32.mrb[0].mxu0
      %v943 = vadd.f32 %v309, %v942
      %v944 = vpop.f32.mrb[0].mxu0
      %v945 = vpop.f32.mrb[0].mxu0
      %v946 = vadd.f32 %v309, %v945
      %v947 = vpop.f32.mrb[0].mxu0
      %948 = vmatprep.mubr.bf16.mxu0 0
      %949 = vmatmul.mubr.bf16.gmra.mrb[0].mxu0 %v666
      %v950 = vpop.f32.mrb[0].mxu0
      %v951 = vadd.f32 %v309, %v950
      %v952 = vpop.f32.mrb[0].mxu0
      %v953 = vpop.f32.mrb[0].mxu0
      %v954 = vadd.f32 %v309, %v953
      %v955 = vpop.f32.mrb[0].mxu0
      %956 = vmatprep.mubr.bf16.mxu0 0
      %957 = vmatmul.mubr.bf16.gmra.mrb[0].mxu0 %v669
      %v958 = vpop.f32.mrb[0].mxu0
      %v959 = vadd.f32 %v309, %v958
      %v960 = vpop.f32.mrb[0].mxu0
      %v961 = vpop.f32.mrb[0].mxu0
      %v962 = vadd.f32 %v309, %v961
      %v963 = vpop.f32.mrb[0].mxu0
      %964 = vmatprep.mubr.bf16.mxu0 0
      %965 = vmatmul.mubr.bf16.gmra.mrb[0].mxu0 %v672
      %v966 = vpop.f32.mrb[0].mxu0
      %v967 = vadd.f32 %v309, %v966
      %v968 = vpop.f32.mrb[0].mxu0
      %v969 = vpop.f32.mrb[0].mxu0
      %v970 = vadd.f32 %v309, %v969
      %v971 = vpop.f32.mrb[0].mxu0
      %972 = vmatprep.mubr.bf16.mxu0 0
      %973 = vmatmul.mubr.bf16.gmra.mrb[0].mxu0 %v675
      %v974 = vpop.f32.mrb[0].mxu0
      %v975 = vadd.f32 %v309, %v974
      %v976 = vpop.f32.mrb[0].mxu0
      %v977 = vpop.f32.mrb[0].mxu0
      %v978 = vadd.f32 %v309, %v977
      %v979 = vpop.f32.mrb[0].mxu0
      %980 = vmatprep.mubr.bf16.mxu0 0
      %981 = vmatmul.mubr.bf16.gmra.mrb[0].mxu0 %v678
      %v982 = vpop.f32.mrb[0].mxu0
      %v983 = vadd.f32 %v309, %v982
      %v984 = vpop.f32.mrb[0].mxu0
      %v985 = vpop.f32.mrb[0].mxu0
      %v986 = vadd.f32 %v309, %v985
      %v987 = vpop.f32.mrb[0].mxu0
      %988 = vmatprep.mubr.bf16.mxu0 0
      %989 = vmatmul.mubr.bf16.gmra.mrb[0].mxu0 %v681
      %v990 = vpop.f32.mrb[0].mxu0
      %v991 = vadd.f32 %v309, %v990
      %v992 = vpop.f32.mrb[0].mxu0
      %v993 = vpop.f32.mrb[0].mxu0
      %v994 = vadd.f32 %v309, %v993
      %v995 = vpop.f32.mrb[0].mxu0
      %996 = vmatprep.mubr.bf16.mxu0 0
      %997 = vmatmul.mubr.bf16.gmra.mrb[0].mxu0 %v684
      %v998 = vpop.f32.mrb[0].mxu0
      %v999 = vadd.f32 %v309, %v998
      %v1000 = vpop.f32.mrb[0].mxu0
      %v1001 = vpop.f32.mrb[0].mxu0
      %v1002 = vadd.f32 %v309, %v1001
      %v1003 = vpop.f32.mrb[0].mxu0
      %1004 = vmatprep.mubr.bf16.mxu0 0
      %1005 = vmatmul.mubr.bf16.gmra.mrb[0].mxu0 %v687
      %v1006 = vpop.f32.mrb[0].mxu0
      %v1007 = vadd.f32 %v309, %v1006
      %v1008 = vpop.f32.mrb[0].mxu0
      %v1009 = vpop.f32.mrb[0].mxu0
      %v1010 = vadd.f32 %v309, %v1009
      %v1011 = vpop.f32.mrb[0].mxu0
      %1012 = vmatprep.mubr.bf16.mxu0 0
      %1013 = vmatmul.mubr.bf16.gmra.mrb[0].mxu0 %v690
      %v1014 = vpop.f32.mrb[0].mxu0
      %v1015 = vadd.f32 %v309, %v1014
      %v1016 = vpop.f32.mrb[0].mxu0
      %v1017 = vpop.f32.mrb[0].mxu0
      %v1018 = vadd.f32 %v309, %v1017
      %v1019 = vpop.f32.mrb[0].mxu0
      %1020 = vmatprep.mubr.bf16.mxu0 0
      %1021 = vmatmul.mubr.bf16.gmra.mrb[0].mxu0 %v693
      %v1022 = vpop.f32.mrb[0].mxu0
      %v1023 = vadd.f32 %v309, %v1022
      %v1024 = vpop.f32.mrb[0].mxu0
      %v1025 = vpop.f32.mrb[0].mxu0
      %v1026 = vadd.f32 %v309, %v1025
      %v1027 = vpop.f32.mrb[0].mxu0
      %1028 = vmatprep.mubr.bf16.mxu0 0
      %1029 = vmatmul.mubr.bf16.gmra.mrb[0].mxu0 %v696
      %v1030 = vpop.f32.mrb[0].mxu0
      %v1031 = vadd.f32 %v309, %v1030
      %v1032 = vpop.f32.mrb[0].mxu0
      %v1033 = vpop.f32.mrb[0].mxu0
      %v1034 = vadd.f32 %v309, %v1033
      %v1035 = vpop.f32.mrb[0].mxu0
      %1036 = vmatprep.mubr.bf16.mxu0 0
      %1037 = vmatmul.mubr.bf16.gmra.mrb[0].mxu0 %v699
      %v1038 = vpop.f32.mrb[0].mxu0
      %v1039 = vadd.f32 %v309, %v1038
      %v1040 = vpop.f32.mrb[0].mxu0
      %v1041 = vpop.f32.mrb[0].mxu0
      %v1042 = vadd.f32 %v309, %v1041
      %v1043 = vpop.f32.mrb[0].mxu0
      %1044 = vmatprep.mubr.bf16.mxu0 0
      %1045 = vmatmul.mubr.bf16.gmra.mrb[0].mxu0 %v702
      %v1046 = vpop.f32.mrb[0].mxu0
      %v1047 = vadd.f32 %v309, %v1046
      %v1048 = vpop.f32.mrb[0].mxu0
      %v1049 = vpop.f32.mrb[0].mxu0
      %v1050 = vadd.f32 %v309, %v1049
      %v1051 = vpop.f32.mrb[0].mxu0
      %1052 = vmatprep.mubr.bf16.mxu0 0
      %1053 = vmatmul.mubr.bf16.gmra.mrb[0].mxu0 %v705
      %v1054 = vpop.f32.mrb[0].mxu0
      %v1055 = vadd.f32 %v309, %v1054
      %v1056 = vpop.f32.mrb[0].mxu0
      %v1057 = vpop.f32.mrb[0].mxu0
      %v1058 = vadd.f32 %v309, %v1057
      %v1059 = vpop.f32.mrb[0].mxu0
      %1060 = vmatprep.mubr.bf16.mxu0 0
      %1061 = vmatmul.mubr.bf16.gmra.mrb[0].mxu0 %v708
      %v1062 = vpop.f32.mrb[0].mxu0
      %v1063 = vadd.f32 %v309, %v1062
      %v1064 = vpop.f32.mrb[0].mxu0
      %v1065 = vpop.f32.mrb[0].mxu0
      %v1066 = vadd.f32 %v309, %v1065
      %v1067 = vpop.f32.mrb[0].mxu0
      %1068 = vmatprep.mubr.bf16.mxu0 0
      %1069 = vmatmul.mubr.bf16.gmra.mrb[0].mxu0 %v711
      %v1070 = vpop.f32.mrb[0].mxu0
      %v1071 = vadd.f32 %v309, %v1070
      %v1072 = vpop.f32.mrb[0].mxu0
      %v1073 = vpop.f32.mrb[0].mxu0
      %v1074 = vadd.f32 %v309, %v1073
      %v1075 = vpop.f32.mrb[0].mxu0
      %1076 = vmatprep.mubr.bf16.mxu0 0
      %1077 = vmatmul.mubr.bf16.gmra.mrb[0].mxu0 %v714
      %v1078 = vpop.f32.mrb[0].mxu0
      %v1079 = vadd.f32 %v309, %v1078
      %v1080 = vpop.f32.mrb[0].mxu0
      %v1081 = vpop.f32.mrb[0].mxu0
      %v1082 = vadd.f32 %v309, %v1081
      %v1083 = vpop.f32.mrb[0].mxu0
      %1084 = vmatprep.mubr.bf16.mxu0 0
      %1085 = vmatmul.mubr.bf16.gmra.mrb[0].mxu0 %v717
      %v1086 = vpop.f32.mrb[0].mxu0
      %v1087 = vadd.f32 %v309, %v1086
      %v1088 = vpop.f32.mrb[0].mxu0
      %v1089 = vpop.f32.mrb[0].mxu0
      %v1090 = vadd.f32 %v309, %v1089
      %v1091 = vpop.f32.mrb[0].mxu0
      %1092 = vmatprep.mubr.bf16.mxu0 0
      %1093 = vmatmul.mubr.bf16.gmra.mrb[0].mxu0 %v720
      %v1094 = vpop.f32.mrb[0].mxu0
      %v1095 = vadd.f32 %v309, %v1094
      %v1096 = vpop.f32.mrb[0].mxu0
      %v1097 = vpop.f32.mrb[0].mxu0
      %v1098 = vadd.f32 %v309, %v1097
      %v1099 = vpop.f32.mrb[0].mxu0
      %1100 = vmatprep.mubr.bf16.mxu0 0
      %1101 = vmatmul.mubr.bf16.gmra.mrb[0].mxu0 %v723
      %v1102 = vpop.f32.mrb[0].mxu0
      %v1103 = vadd.f32 %v309, %v1102
      %v1104 = vpop.f32.mrb[0].mxu0
      %v1105 = vpop.f32.mrb[0].mxu0
      %v1106 = vadd.f32 %v309, %v1105
      %v1107 = vpop.f32.mrb[0].mxu0
      %1108 = vmatprep.mubr.bf16.mxu0 0
      %1109 = vmatmul.mubr.bf16.gmra.mrb[0].mxu0 %v726
      %v1110 = vpop.f32.mrb[0].mxu0
      %v1111 = vadd.f32 %v309, %v1110
      %v1112 = vpop.f32.mrb[0].mxu0
      %v1113 = vpop.f32.mrb[0].mxu0
      %v1114 = vadd.f32 %v309, %v1113
      %v1115 = vpop.f32.mrb[0].mxu0
      %1116 = vmatprep.mubr.bf16.mxu0 0
      %1117 = vmatmul.mubr.bf16.gmra.mrb[0].mxu0 %v729
      %v1118 = vpop.f32.mrb[0].mxu0
      %v1119 = vadd.f32 %v309, %v1118
      %v1120 = vpop.f32.mrb[0].mxu0
      %v1121 = vpop.f32.mrb[0].mxu0
      %v1122 = vadd.f32 %v309, %v1121
      %v1123 = vpop.f32.mrb[0].mxu0
      %1124 = vmatprep.mubr.bf16.mxu0 0
      %1125 = vmatmul.mubr.bf16.gmra.mrb[0].mxu0 %v732
      %v1126 = vpop.f32.mrb[0].mxu0
      %v1127 = vadd.f32 %v309, %v1126
      %v1128 = vpop.f32.mrb[0].mxu0
      %v1129 = vpop.f32.mrb[0].mxu0
      %v1130 = vadd.f32 %v309, %v1129
      %v1131 = vpop.f32.mrb[0].mxu0
      %1132 = vmatprep.mubr.bf16.mxu0 0
      %1133 = vmatmul.mubr.bf16.gmra.mrb[0].mxu0 %v735
      %v1134 = vpop.f32.mrb[0].mxu0
      %v1135 = vadd.f32 %v309, %v1134
      %v1136 = vpop.f32.mrb[0].mxu0
      %v1137 = vpop.f32.mrb[0].mxu0
      %v1138 = vadd.f32 %v309, %v1137
      %v1139 = vpop.f32.mrb[0].mxu0
      %1140 = vmatprep.mubr.bf16.mxu0 0
      %1141 = vmatmul.mubr.bf16.gmra.mrb[0].mxu0 %v738
      %v1142 = vpop.f32.mrb[0].mxu0
      %v1143 = vadd.f32 %v309, %v1142
      %v1144 = vpop.f32.mrb[0].mxu0
      %v1145 = vpop.f32.mrb[0].mxu0
      %v1146 = vadd.f32 %v309, %v1145
      %v1147 = vpop.f32.mrb[0].mxu0
      %1148 = vmatprep.mubr.bf16.mxu0 0
      %1149 = vmatmul.mubr.bf16.gmra.mrb[0].mxu0 %v741
      %v1150 = vpop.f32.mrb[0].mxu0
      %v1151 = vadd.f32 %v309, %v1150
      %v1152 = vpop.f32.mrb[0].mxu0
      %v1153 = vpop.f32.mrb[0].mxu0
      %v1154 = vadd.f32 %v309, %v1153
      %v1155 = vpop.f32.mrb[0].mxu0
      %1156 = vmatprep.mubr.bf16.mxu0 0
      %1157 = vmatmul.mubr.bf16.gmra.mrb[0].mxu0 %v744
      %v1158 = vpop.f32.mrb[0].mxu0
      %v1159 = vadd.f32 %v309, %v1158
      %v1160 = vpop.f32.mrb[0].mxu0
      %v1161 = vpop.f32.mrb[0].mxu0
      %v1162 = vadd.f32 %v309, %v1161
      %v1163 = vpop.f32.mrb[0].mxu0
      %1164 = vmatprep.mubr.bf16.mxu0 0
      %1165 = vmatmul.mubr.bf16.gmra.mrb[0].mxu0 %v747
      %v1166 = vpop.f32.mrb[0].mxu0
      %v1167 = vadd.f32 %v309, %v1166
      %v1168 = vpop.f32.mrb[0].mxu0
      %v1169 = vpop.f32.mrb[0].mxu0
      %v1170 = vadd.f32 %v309, %v1169
      %v1171 = vpop.f32.mrb[0].mxu0
      %1172 = vmatprep.mubr.bf16.mxu0 0
      %1173 = vmatmul.mubr.bf16.gmra.mrb[0].mxu0 %v750
      %v1174 = vpop.f32.mrb[0].mxu0
      %v1175 = vadd.f32 %v309, %v1174
      %v1176 = vpop.f32.mrb[0].mxu0
      %v1177 = vpop.f32.mrb[0].mxu0
      %v1178 = vadd.f32 %v309, %v1177
      %v1179 = vpop.f32.mrb[0].mxu0
      %1180 = vmatprep.mubr.bf16.mxu0 0
      %1181 = vmatmul.mubr.bf16.gmra.mrb[0].mxu0 %v753
      %v1182 = vpop.f32.mrb[0].mxu0
      %v1183 = vadd.f32 %v309, %v1182
      %v1184 = vpop.f32.mrb[0].mxu0
      %v1185 = vpop.f32.mrb[0].mxu0
      %v1186 = vadd.f32 %v309, %v1185
      %v1187 = vpop.f32.mrb[0].mxu0
      %1188 = vmatprep.mubr.bf16.mxu0 0
      %1189 = vmatmul.mubr.bf16.gmra.mrb[0].mxu0 %v756
      %v1190 = vpop.f32.mrb[0].mxu0
      %v1191 = vadd.f32 %v309, %v1190
      %v1192 = vpop.f32.mrb[0].mxu0
      %v1193 = vpop.f32.mrb[0].mxu0
      %v1194 = vadd.f32 %v309, %v1193
      %v1195 = vpop.f32.mrb[0].mxu0
      %1196 = vmatprep.mubr.bf16.mxu0 0
      %1197 = vmatmul.mubr.bf16.gmra.mrb[0].mxu0 %v759
      %v1198 = vpop.f32.mrb[0].mxu0
      %v1199 = vadd.f32 %v309, %v1198
      %v1200 = vpop.f32.mrb[0].mxu0
      %v1201 = vpop.f32.mrb[0].mxu0
      %v1202 = vadd.f32 %v309, %v1201
      %v1203 = vpop.f32.mrb[0].mxu0
      %1204 = vmatprep.mubr.bf16.mxu0 0
      %1205 = vmatmul.mubr.bf16.gmra.mrb[0].mxu0 %v762
      %v1206 = vpop.f32.mrb[0].mxu0
      %v1207 = vadd.f32 %v309, %v1206
      %v1208 = vpop.f32.mrb[0].mxu0
      %v1209 = vpop.f32.mrb[0].mxu0
      %v1210 = vadd.f32 %v309, %v1209
      %v1211 = vpop.f32.mrb[0].mxu0
      %1212 = vmatprep.mubr.bf16.mxu0 0
      %1213 = vmatmul.mubr.bf16.gmra.mrb[0].mxu0 %v765
      %v1214 = vpop.f32.mrb[0].mxu0
      %v1215 = vadd.f32 %v309, %v1214
      %v1216 = vpop.f32.mrb[0].mxu0
      %v1217 = vpop.f32.mrb[0].mxu0
      %v1218 = vadd.f32 %v309, %v1217
      %v1219 = vpop.f32.mrb[0].mxu0
      %1220 = vmatprep.mubr.bf16.mxu0 0
      %1221 = vmatmul.mubr.bf16.gmra.mrb[0].mxu0 %v768
      %v1222 = vpop.f32.mrb[0].mxu0
      %v1223 = vadd.f32 %v309, %v1222
      %v1224 = vpop.f32.mrb[0].mxu0
      %v1225 = vpop.f32.mrb[0].mxu0
      %v1226 = vadd.f32 %v309, %v1225
      %v1227 = vpop.f32.mrb[0].mxu0
      %1228 = vmatprep.mubr.bf16.mxu0 0
      %1229 = vmatmul.mubr.bf16.gmra.mrb[0].mxu0 %v771
      %v1230 = vpop.f32.mrb[0].mxu0
      %v1231 = vadd.f32 %v309, %v1230
      %v1232 = vpop.f32.mrb[0].mxu0
      %v1233 = vpop.f32.mrb[0].mxu0
      %v1234 = vadd.f32 %v309, %v1233
      %v1235 = vpop.f32.mrb[0].mxu0
      %1236 = vmatprep.mubr.bf16.mxu0 0
      %1237 = vmatmul.mubr.bf16.gmra.mrb[0].mxu0 %v774
      %v1238 = vpop.f32.mrb[0].mxu0
      %v1239 = vadd.f32 %v309, %v1238
      %v1240 = vpop.f32.mrb[0].mxu0
      %v1241 = vpop.f32.mrb[0].mxu0
      %v1242 = vadd.f32 %v309, %v1241
      %v1243 = vpop.f32.mrb[0].mxu0
      %1244 = vmatprep.mubr.bf16.mxu0 0
      %1245 = vmatmul.mubr.bf16.gmra.mrb[0].mxu0 %v777
      %v1246 = vpop.f32.mrb[0].mxu0
      %v1247 = vadd.f32 %v309, %v1246
      %v1248 = vpop.f32.mrb[0].mxu0
      %v1249 = vpop.f32.mrb[0].mxu0
      %v1250 = vadd.f32 %v309, %v1249
      %v1251 = vpop.f32.mrb[0].mxu0
      %1252 = vmatprep.mubr.bf16.mxu0 0
      %1253 = vmatmul.mubr.bf16.gmra.mrb[0].mxu0 %v780
      %v1254 = vpop.f32.mrb[0].mxu0
      %v1255 = vadd.f32 %v309, %v1254
      %v1256 = vpop.f32.mrb[0].mxu0
      %v1257 = vpop.f32.mrb[0].mxu0
      %v1258 = vadd.f32 %v309, %v1257
      %v1259 = vpop.f32.mrb[0].mxu0
      %1260 = vmatprep.mubr.bf16.mxu0 0
      %1261 = vmatmul.mubr.bf16.gmra.mrb[0].mxu0 %v783
      %v1262 = vpop.f32.mrb[0].mxu0
      %v1263 = vadd.f32 %v309, %v1262
      %v1264 = vpop.f32.mrb[0].mxu0
      %v1265 = vpop.f32.mrb[0].mxu0
      %v1266 = vadd.f32 %v309, %v1265
      %v1267 = vpop.f32.mrb[0].mxu0
      %1268 = vmatprep.mubr.bf16.mxu0 0
      %1269 = vmatmul.mubr.bf16.gmra.mrb[0].mxu0 %v786
      %v1270 = vpop.f32.mrb[0].mxu0
      %v1271 = vadd.f32 %v309, %v1270
      %v1272 = vpop.f32.mrb[0].mxu0
      %v1273 = vpop.f32.mrb[0].mxu0
      %v1274 = vadd.f32 %v309, %v1273
      %v1275 = vpop.f32.mrb[0].mxu0
      %1276 = vmatprep.mubr.bf16.mxu0 0
      %1277 = vmatmul.mubr.bf16.gmra.mrb[0].mxu0 %v789
      %v1278 = vpop.f32.mrb[0].mxu0
      %v1279 = vadd.f32 %v309, %v1278
      %v1280 = vpop.f32.mrb[0].mxu0
      %v1281 = vpop.f32.mrb[0].mxu0
      %v1282 = vadd.f32 %v309, %v1281
      %v1283 = vpop.f32.mrb[0].mxu0
      %1284 = vmatprep.mubr.bf16.mxu0 0
      %1285 = vmatmul.mubr.bf16.gmra.mrb[0].mxu0 %v792
      %v1286 = vpop.f32.mrb[0].mxu0
      %v1287 = vadd.f32 %v309, %v1286
      %v1288 = vpop.f32.mrb[0].mxu0
      %v1289 = vpop.f32.mrb[0].mxu0
      %v1290 = vadd.f32 %v309, %v1289
      %v1291 = vpop.f32.mrb[0].mxu0
      %1292 = vmatprep.mubr.bf16.mxu0 0
      %1293 = vmatmul.mubr.bf16.gmra.mrb[0].mxu0 %v795
      %v1294 = vpop.f32.mrb[0].mxu0
      %v1295 = vadd.f32 %v309, %v1294
      %v1296 = vpop.f32.mrb[0].mxu0
      %v1297 = vpop.f32.mrb[0].mxu0
      %v1298 = vadd.f32 %v309, %v1297
      %v1299 = vpop.f32.mrb[0].mxu0
      %1300 = vmatprep.mubr.bf16.mxu0 0
      %1301 = vmatmul.mubr.bf16.gmra.mrb[0].mxu0 %v798
      %v1302 = vpop.f32.mrb[0].mxu0
      %v1303 = vadd.f32 %v309, %v1302
      %v1304 = vpop.f32.mrb[0].mxu0
      %v1305 = vpop.f32.mrb[0].mxu0
      %v1306 = vadd.f32 %v309, %v1305
      %v1307 = vpop.f32.mrb[0].mxu0
      %1308 = vmatprep.mubr.bf16.mxu0 0
      %1309 = vmatmul.mubr.bf16.gmra.mrb[0].mxu0 %v801
      %v1310 = vpop.f32.mrb[0].mxu0
      %v1311 = vadd.f32 %v309, %v1310
      %v1312 = vpop.f32.mrb[0].mxu0
      %v1313 = vpop.f32.mrb[0].mxu0
      %v1314 = vadd.f32 %v309, %v1313
      %v1315 = vpop.f32.mrb[0].mxu0
      %1316 = vmatprep.mubr.bf16.mxu0 0
      %1317 = vmatmul.mubr.bf16.gmra.mrb[0].mxu0 %v804
      %v1318 = vpop.f32.mrb[0].mxu0
      %v1319 = vadd.f32 %v309, %v1318
      %v1320 = vpop.f32.mrb[0].mxu0
      %v1321 = vpop.f32.mrb[0].mxu0
      %v1322 = vadd.f32 %v309, %v1321
      %v1323 = vpop.f32.mrb[0].mxu0
      %1324 = vmatprep.mubr.bf16.mxu0 0
      %1325 = vmatmul.mubr.bf16.gmra.mrb[0].mxu0 %v807
      %v1326 = vpop.f32.mrb[0].mxu0
      %v1327 = vadd.f32 %v309, %v1326
      %v1328 = vpop.f32.mrb[0].mxu0
      %v1329 = vpop.f32.mrb[0].mxu0
      %v1330 = vadd.f32 %v309, %v1329
      %v1331 = vpop.f32.mrb[0].mxu0
      %1332 = vmatprep.mubr.bf16.mxu0 0
      %1333 = vmatmul.mubr.bf16.gmra.mrb[0].mxu0 %v810
      %v1334 = vpop.f32.mrb[0].mxu0
      %v1335 = vadd.f32 %v309, %v1334
      %v1336 = vpop.f32.mrb[0].mxu0
      %v1337 = vpop.f32.mrb[0].mxu0
      %v1338 = vadd.f32 %v309, %v1337
      %v1339 = vpop.f32.mrb[0].mxu0
      %1340 = vmatprep.mubr.bf16.mxu0 0
      %1341 = vmatmul.mubr.bf16.gmra.mrb[0].mxu0 %v813
      %v1342 = vpop.f32.mrb[0].mxu0
      %v1343 = vadd.f32 %v309, %v1342
      %v1344 = vpop.f32.mrb[0].mxu0
      %v1345 = vpop.f32.mrb[0].mxu0
      %v1346 = vadd.f32 %v309, %v1345
      %v1347 = vpop.f32.mrb[0].mxu0
      %1348 = vmatprep.mubr.bf16.mxu0 0
      %1349 = vmatmul.mubr.bf16.gmra.mrb[0].mxu0 %v816
      %v1350 = vpop.f32.mrb[0].mxu0
      %v1351 = vadd.f32 %v309, %v1350
      %v1352 = vpop.f32.mrb[0].mxu0
      %v1353 = vpop.f32.mrb[0].mxu0
      %v1354 = vadd.f32 %v309, %v1353
      %v1355 = vpop.f32.mrb[0].mxu0
      %1356 = vmatprep.mubr.bf16.mxu0 0
      %1357 = vmatmul.mubr.bf16.gmra.mrb[0].mxu0 %v819
      %v1358 = vpop.f32.mrb[0].mxu0
      %v1359 = vadd.f32 %v309, %v1358
      %v1360 = vpop.f32.mrb[0].mxu0
      %v1361 = vpop.f32.mrb[0].mxu0
      %v1362 = vadd.f32 %v309, %v1361
      %v1363 = vpop.f32.mrb[0].mxu0
      %1364 = vmatprep.mubr.bf16.mxu0 0
      %1365 = vmatmul.mubr.bf16.gmra.mrb[0].mxu0 %v822
      %v1366 = vpop.f32.mrb[0].mxu0
      %v1367 = vadd.f32 %v309, %v1366
      %v1368 = vpop.f32.mrb[0].mxu0
      %v1369 = vpop.f32.mrb[0].mxu0
      %v1370 = vadd.f32 %v309, %v1369
      %v1371 = vpop.f32.mrb[0].mxu0
      %1372 = vdwg.mxu0
      %1373 = vst [vmem:[%s172] sm:$0xff] %v863
      %1374 = vst [vmem:[%s172 + $0x8] sm:$0xff] %v866
      %1375 = vst [vmem:[%s172 + $0x10] sm:$0xff] %v871
      %1376 = vst [vmem:[%s172 + $0x18] sm:$0xff] %v874
      %1377 = vst [vmem:[%s172 + $0x20] sm:$0xff] %v879
      %1378 = vst [vmem:[%s172 + $0x28] sm:$0xff] %v882
      %1379 = vst [vmem:[%s172 + $0x30] sm:$0xff] %v887
      %1380 = vst [vmem:[%s172 + $0x38] sm:$0xff] %v890
      %1381 = vst [vmem:[%s172 + $0x40] sm:$0xff] %v895
      %1382 = vst [vmem:[%s172 + $0x48] sm:$0xff] %v898
      %1383 = vst [vmem:[%s172 + $0x50] sm:$0xff] %v903
      %1384 = vst [vmem:[%s172 + $0x58] sm:$0xff] %v906
      %1385 = vst [vmem:[%s172 + $0x60] sm:$0xff] %v911
      %1386 = vst [vmem:[%s172 + $0x68] sm:$0xff] %v914
      %1387 = vst [vmem:[%s172 + $0x70] sm:$0xff] %v919
      %1388 = vst [vmem:[%s172 + $0x78] sm:$0xff] %v922
      %1389 = vst [vmem:[%s172 + $0x80] sm:$0xff] %v927
      %1390 = vst [vmem:[%s172 + $0x88] sm:$0xff] %v930
      %1391 = vst [vmem:[%s172 + $0x90] sm:$0xff] %v935
      %1392 = vst [vmem:[%s172 + $0x98] sm:$0xff] %v938
      %1393 = vst [vmem:[%s172 + $0xa0] sm:$0xff] %v943
      %1394 = vst [vmem:[%s172 + $0xa8] sm:$0xff] %v946
      %1395 = vst [vmem:[%s172 + $0xb0] sm:$0xff] %v951
      %1396 = vst [vmem:[%s172 + $0xb8] sm:$0xff] %v954
      %1397 = vst [vmem:[%s172 + $0xc0] sm:$0xff] %v959
      %1398 = vst [vmem:[%s172 + $0xc8] sm:$0xff] %v962
      %1399 = vst [vmem:[%s172 + $0xd0] sm:$0xff] %v967
      %1400 = vst [vmem:[%s172 + $0xd8] sm:$0xff] %v970
      %1401 = vst [vmem:[%s172 + $0xe0] sm:$0xff] %v975
      %1402 = vst [vmem:[%s172 + $0xe8] sm:$0xff] %v978
      %1403 = vst [vmem:[%s172 + $0xf0] sm:$0xff] %v983
      %1404 = vst [vmem:[%s172 + $0xf8] sm:$0xff] %v986
      %1405 = vst [vmem:[%s172 + $0x100] sm:$0xff] %v991
      %1406 = vst [vmem:[%s172 + $0x108] sm:$0xff] %v994
      %1407 = vst [vmem:[%s172 + $0x110] sm:$0xff] %v999
      %1408 = vst [vmem:[%s172 + $0x118] sm:$0xff] %v1002
      %1409 = vst [vmem:[%s172 + $0x120] sm:$0xff] %v1007
      %1410 = vst [vmem:[%s172 + $0x128] sm:$0xff] %v1010
      %1411 = vst [vmem:[%s172 + $0x130] sm:$0xff] %v1015
      %1412 = vst [vmem:[%s172 + $0x138] sm:$0xff] %v1018
      %1413 = vst [vmem:[%s172 + $0x140] sm:$0xff] %v1023
      %1414 = vst [vmem:[%s172 + $0x148] sm:$0xff] %v1026
      %1415 = vst [vmem:[%s172 + $0x150] sm:$0xff] %v1031
      %1416 = vst [vmem:[%s172 + $0x158] sm:$0xff] %v1034
      %1417 = vst [vmem:[%s172 + $0x160] sm:$0xff] %v1039
      %1418 = vst [vmem:[%s172 + $0x168] sm:$0xff] %v1042
      %1419 = vst [vmem:[%s172 + $0x170] sm:$0xff] %v1047
      %1420 = vst [vmem:[%s172 + $0x178] sm:$0xff] %v1050
      %1421 = vst [vmem:[%s172 + $0x180] sm:$0xff] %v1055
      %1422 = vst [vmem:[%s172 + $0x188] sm:$0xff] %v1058
      %1423 = vst [vmem:[%s172 + $0x190] sm:$0xff] %v1063
      %1424 = vst [vmem:[%s172 + $0x198] sm:$0xff] %v1066
      %1425 = vst [vmem:[%s172 + $0x1a0] sm:$0xff] %v1071
      %1426 = vst [vmem:[%s172 + $0x1a8] sm:$0xff] %v1074
      %1427 = vst [vmem:[%s172 + $0x1b0] sm:$0xff] %v1079
      %1428 = vst [vmem:[%s172 + $0x1b8] sm:$0xff] %v1082
      %1429 = vst [vmem:[%s172 + $0x1c0] sm:$0xff] %v1087
      %1430 = vst [vmem:[%s172 + $0x1c8] sm:$0xff] %v1090
      %1431 = vst [vmem:[%s172 + $0x1d0] sm:$0xff] %v1095
      %1432 = vst [vmem:[%s172 + $0x1d8] sm:$0xff] %v1098
      %1433 = vst [vmem:[%s172 + $0x1e0] sm:$0xff] %v1103
      %1434 = vst [vmem:[%s172 + $0x1e8] sm:$0xff] %v1106
      %1435 = vst [vmem:[%s172 + $0x1f0] sm:$0xff] %v1111
      %1436 = vst [vmem:[%s172 + $0x1f8] sm:$0xff] %v1114
      %1437 = vst [vmem:[%s172 + $0x200] sm:$0xff] %v1119
      %1438 = vst [vmem:[%s172 + $0x208] sm:$0xff] %v1122
      %1439 = vst [vmem:[%s172 + $0x210] sm:$0xff] %v1127
      %1440 = vst [vmem:[%s172 + $0x218] sm:$0xff] %v1130
      %1441 = vst [vmem:[%s172 + $0x220] sm:$0xff] %v1135
      %1442 = vst [vmem:[%s172 + $0x228] sm:$0xff] %v1138
      %1443 = vst [vmem:[%s172 + $0x230] sm:$0xff] %v1143
      %1444 = vst [vmem:[%s172 + $0x238] sm:$0xff] %v1146
      %1445 = vst [vmem:[%s172 + $0x240] sm:$0xff] %v1151
      %1446 = vst [vmem:[%s172 + $0x248] sm:$0xff] %v1154
      %1447 = vst [vmem:[%s172 + $0x250] sm:$0xff] %v1159
      %1448 = vst [vmem:[%s172 + $0x258] sm:$0xff] %v1162
      %1449 = vst [vmem:[%s172 + $0x260] sm:$0xff] %v1167
      %1450 = vst [vmem:[%s172 + $0x268] sm:$0xff] %v1170
      %1451 = vst [vmem:[%s172 + $0x270] sm:$0xff] %v1175
      %1452 = vst [vmem:[%s172 + $0x278] sm:$0xff] %v1178
      %1453 = vst [vmem:[%s172 + $0x280] sm:$0xff] %v1183
      %1454 = vst [vmem:[%s172 + $0x288] sm:$0xff] %v1186
      %1455 = vst [vmem:[%s172 + $0x290] sm:$0xff] %v1191
      %1456 = vst [vmem:[%s172 + $0x298] sm:$0xff] %v1194
      %1457 = vst [vmem:[%s172 + $0x2a0] sm:$0xff] %v1199
      %1458 = vst [vmem:[%s172 + $0x2a8] sm:$0xff] %v1202
      %1459 = vst [vmem:[%s172 + $0x2b0] sm:$0xff] %v1207
      %1460 = vst [vmem:[%s172 + $0x2b8] sm:$0xff] %v1210
      %1461 = vst [vmem:[%s172 + $0x2c0] sm:$0xff] %v1215
      %1462 = vst [vmem:[%s172 + $0x2c8] sm:$0xff] %v1218
      %1463 = vst [vmem:[%s172 + $0x2d0] sm:$0xff] %v1223
      %1464 = vst [vmem:[%s172 + $0x2d8] sm:$0xff] %v1226
      %1465 = vst [vmem:[%s172 + $0x2e0] sm:$0xff] %v1231
      %1466 = vst [vmem:[%s172 + $0x2e8] sm:$0xff] %v1234
      %1467 = vst [vmem:[%s172 + $0x2f0] sm:$0xff] %v1239
      %1468 = vst [vmem:[%s172 + $0x2f8] sm:$0xff] %v1242
      %1469 = vst [vmem:[%s172 + $0x300] sm:$0xff] %v1247
      %1470 = vst [vmem:[%s172 + $0x308] sm:$0xff] %v1250
      %1471 = vst [vmem:[%s172 + $0x310] sm:$0xff] %v1255
      %1472 = vst [vmem:[%s172 + $0x318] sm:$0xff] %v1258
      %1473 = vst [vmem:[%s172 + $0x320] sm:$0xff] %v1263
      %1474 = vst [vmem:[%s172 + $0x328] sm:$0xff] %v1266
      %1475 = vst [vmem:[%s172 + $0x330] sm:$0xff] %v1271
      %1476 = vst [vmem:[%s172 + $0x338] sm:$0xff] %v1274
      %1477 = vst [vmem:[%s172 + $0x340] sm:$0xff] %v1279
      %1478 = vst [vmem:[%s172 + $0x348] sm:$0xff] %v1282
      %1479 = vst [vmem:[%s172 + $0x350] sm:$0xff] %v1287
      %1480 = vst [vmem:[%s172 + $0x358] sm:$0xff] %v1290
      %1481 = vst [vmem:[%s172 + $0x360] sm:$0xff] %v1295
      %1482 = vst [vmem:[%s172 + $0x368] sm:$0xff] %v1298
      %1483 = vst [vmem:[%s172 + $0x370] sm:$0xff] %v1303
      %1484 = vst [vmem:[%s172 + $0x378] sm:$0xff] %v1306
      %1485 = vst [vmem:[%s172 + $0x380] sm:$0xff] %v1311
      %1486 = vst [vmem:[%s172 + $0x388] sm:$0xff] %v1314
      %1487 = vst [vmem:[%s172 + $0x390] sm:$0xff] %v1319
      %1488 = vst [vmem:[%s172 + $0x398] sm:$0xff] %v1322
      %1489 = vst [vmem:[%s172 + $0x3a0] sm:$0xff] %v1327
      %1490 = vst [vmem:[%s172 + $0x3a8] sm:$0xff] %v1330
      %1491 = vst [vmem:[%s172 + $0x3b0] sm:$0xff] %v1335
      %1492 = vst [vmem:[%s172 + $0x3b8] sm:$0xff] %v1338
      %1493 = vst [vmem:[%s172 + $0x3c0] sm:$0xff] %v1343
      %1494 = vst [vmem:[%s172 + $0x3c8] sm:$0xff] %v1346
      %1495 = vst [vmem:[%s172 + $0x3d0] sm:$0xff] %v1351
      %1496 = vst [vmem:[%s172 + $0x3d8] sm:$0xff] %v1354
      %1497 = vst [vmem:[%s172 + $0x3e0] sm:$0xff] %v1359
      %1498 = vst [vmem:[%s172 + $0x3e8] sm:$0xff] %v1362
      %1499 = vst [vmem:[%s172 + $0x3f0] sm:$0xff] %v1367
      %1500 = vst [vmem:[%s172 + $0x3f8] sm:$0xff] %v1370
      %s1501 = smul.u32 128, %s14
      %p1502 = scmp.lt.s32.totalorder %s1501, 255
      %s1503 = scalar_select %p1502, %s1501, 255
      %s1504 = smul.addr %s1503, 8
      %s1505 = scalar_lea.vmem %s3, %s1504
      // Predicated region
      $region33: #{generator_forward.22} parent=31 // pred_check
        %p1506 = pneg %p100
      $region34: #{generator_forward.22} parent=31 // pred_check_branch
        %1508 = sbr.rel (%p1506) target = $region36
      $region35: #{generator_forward.22} parent=31 // pred_region
        %s1509 = smul.u32 128, %s14
      $region36: #{generator_forward.22} parent=31 // pred_fallthru
        _
    $region32: #{generator_forward.22} parent=5 // pred_fallthru
      _
    %p1510 = scmp.le.s32.totalorder 2, %s9
    // Predicated region
    $region37: #{generator_forward.22} parent=5 // pred_check
      %p1511 = pneg %p1510
    $region38: #{generator_forward.22} parent=5 // pred_check_branch
      %1513 = sbr.rel (%p1511) target = $region40
    $region39: #{generator_forward.22} parent=5 // pred_region
      %s1514 = ssub.s32 %s9, 2
      // Predicated region
      $region41: #{generator_forward.22} parent=39 // pred_check
        %p1515 = pneg %p106
      $region42: #{generator_forward.22} parent=39 // pred_check_branch
        %1517 = sbr.rel (%p1515) target = $region44
      $region43: #{generator_forward.22} parent=39 // pred_region
        %s1518 = smul.u32 128, %s15
        %p1519 = scmp.lt.s32.totalorder %s1518, 255
        %s1520 = scalar_select %p1519, %s1518, 255
        %s1521 = smul.addr %s1520, 8
        %s1522 = scalar_lea.vmem %s3, %s1521
      $region44: #{generator_forward.22} parent=39 // pred_fallthru
        _
    $region40: #{generator_forward.22} parent=5 // pred_fallthru
      _
  $region6: #{generator_forward.22} parent=0 // loop_footer
    %s13 = sadd.s32 1, %s9
  $region7: #{generator_forward.22} parent=0 // loop_footer_branch
    %8 = sbr.rel target = $region3
  $region8: #{generator_forward.22} parent=0 // loop_exit
    _

// kernel: generator_forward.23
$region0: #{generator_forward.23}
  #allocation0 [shape = 'u32[]', space=smem, size = 0x4, offset = 0x4, fixed_abs, tag = 'smem constant byte address 0x4 - core index']
  #allocation1 [shape = 'u32[144,128]{1,0:T(1,128)}', space=vmem, size = 0x12000, scoped, tag = 'internal scratch']
  %s0 = inlined_call_operand.vmem [shape: f32[109,128], index: 0, kind: input, shape index: {}]
  %s1 = inlined_call_operand.vmem [shape: f32[1,128], index: 1, kind: input, shape index: {}]
  %s2 = inlined_call_operand.vmem [shape: f32[109,128], index: 2, kind: output, shape index: {}]
  %s3 = sld [smem:[#allocation0]]
  $region18: #{generator_forward.23} parent=0
    _
  %s5 = ssub.s32 1, %s3
  %s6 = scalar_select 0, %s5, %s3
  // Predicated region
  $region2: #{generator_forward.23} parent=0 // pred_check
    _
  $region3: #{generator_forward.23} parent=0 // pred_check_branch
    %8 = sbr.rel (0) target = $region5
  $region4: #{generator_forward.23} parent=0 // pred_region
    _
  $region5: #{generator_forward.23} parent=0 // pred_fallthru
    _
  // Predicated region
  $region6: #{generator_forward.23} parent=0 // pred_check
    _
  $region7: #{generator_forward.23} parent=0 // pred_check_branch
    %10 = sbr.rel (0) target = $region9
  $region8: #{generator_forward.23} parent=0 // pred_region
    _
  $region9: #{generator_forward.23} parent=0 // pred_fallthru
    _
  %v11 = vld [vmem:[%s0] sm:$0xff]
  %v12 = vld [vmem:[%s0 + $0x8] sm:$0xff]
  %v13 = vld [vmem:[%s0 + $0x10] sm:$0xff]
  %v14 = vld [vmem:[%s0 + $0x18] sm:$0xff]
  %v15 = vld [vmem:[%s0 + $0x20] sm:$0xff]
  %v16 = vld [vmem:[%s0 + $0x28] sm:$0xff]
  %v17 = vld [vmem:[%s0 + $0x30] sm:$0xff]
  %v18 = vld [vmem:[%s0 + $0x38] sm:$0xff]
  %v19 = vld [vmem:[%s0 + $0x40] sm:$0xff]
  %v20 = vld [vmem:[%s0 + $0x48] sm:$0xff]
  %v21 = vld [vmem:[%s0 + $0x50] sm:$0xff]
  %v22 = vld [vmem:[%s0 + $0x58] sm:$0xff]
  %v23 = vld [vmem:[%s0 + $0x60] sm:$0xff]
  %v24 = vld [vmem:[%s0 + $0x68] sm:$0x1f]
  %v25 = vld [vmem:[%s1] sm:$0x1]
  %v27 = vlaneseq
  %v28 = vshrl.u32 %v27, 7
  %v29 = vsub.s32 0, %v28
  %v30 = vrot.slane %v25, %v29
  %v32 = vadd.f32 %v11, %v30
  %v33 = vadd.f32 %v12, %v30
  %v34 = vadd.f32 %v13, %v30
  %v35 = vadd.f32 %v14, %v30
  %v36 = vadd.f32 %v15, %v30
  %v37 = vadd.f32 %v16, %v30
  %v38 = vadd.f32 %v17, %v30
  %v39 = vadd.f32 %v18, %v30
  %v40 = vadd.f32 %v19, %v30
  %v41 = vadd.f32 %v20, %v30
  %v42 = vadd.f32 %v21, %v30
  %v43 = vadd.f32 %v22, %v30
  %v44 = vadd.f32 %v23, %v30
  %v45 = vadd.f32 %v24, %v30
  %v46 = vtanh.pop %v32
  %v47 = vtanh.pop %v33
  %v48 = vtanh.pop %v34
  %v49 = vtanh.pop %v35
  %v50 = vtanh.pop %v36
  %v51 = vtanh.pop %v37
  %v52 = vtanh.pop %v38
  %v53 = vtanh.pop %v39
  %v54 = vtanh.pop %v40
  %v55 = vtanh.pop %v41
  %v56 = vtanh.pop %v42
  %v57 = vtanh.pop %v43
  %v58 = vtanh.pop %v44
  %v59 = vtanh.pop %v45
  %60 = vst [vmem:[%s2] sm:$0xff] %v46
  %61 = vst [vmem:[%s2 + $0x8] sm:$0xff] %v47
  %62 = vst [vmem:[%s2 + $0x10] sm:$0xff] %v48
  %63 = vst [vmem:[%s2 + $0x18] sm:$0xff] %v49
  %64 = vst [vmem:[%s2 + $0x20] sm:$0xff] %v50
  %65 = vst [vmem:[%s2 + $0x28] sm:$0xff] %v51
  %66 = vst [vmem:[%s2 + $0x30] sm:$0xff] %v52
  %67 = vst [vmem:[%s2 + $0x38] sm:$0xff] %v53
  %68 = vst [vmem:[%s2 + $0x40] sm:$0xff] %v54
  %69 = vst [vmem:[%s2 + $0x48] sm:$0xff] %v55
  %70 = vst [vmem:[%s2 + $0x50] sm:$0xff] %v56
  %71 = vst [vmem:[%s2 + $0x58] sm:$0xff] %v57
  %72 = vst [vmem:[%s2 + $0x60] sm:$0xff] %v58
  %73 = vst [vmem:[%s2 + $0x68] sm:$0x1f] %v59
  // Predicated region
  $region10: #{generator_forward.23} parent=0 // pred_check
    _
  $region11: #{generator_forward.23} parent=0 // pred_check_branch
    %75 = sbr.rel (0) target = $region13
  $region12: #{generator_forward.23} parent=0 // pred_region
    _
  $region13: #{generator_forward.23} parent=0 // pred_fallthru
    _
  // Predicated region
  $region14: #{generator_forward.23} parent=0 // pred_check
    _
  $region15: #{generator_forward.23} parent=0 // pred_check_branch
    %77 = sbr.rel (0) target = $region17
  $region16: #{generator_forward.23} parent=0 // pred_region
    _
  $region17: #{generator_forward.23} parent=0 // pred_fallthru
    _

</llo_original>
